<compile_context>
chip_gen: v6e
topology: v6e:2x2x1
jax: 0.10.0
libtpu: 0.0.40
codegen_flags: <defaults>
</compile_context>

<pallas_src>
import functools

import numpy as np
import jax
import jax.numpy as jnp
from jax.experimental import pallas as pl
from jax.experimental.pallas import tpu as pltpu


# ----------------------------- fused Pallas kernel --------------------------------------

def _fused_vision_kernel(xee_ref, xeo_ref, xoe_ref, xoo_ref,
                         wconv_ref, bnb_ref, wfc_ref, bfc_ref, o_ref,
                         *, OH, OW, C, P):
    """One grid step == one image.

    xee/xeo/xoe/xoo : [1, PH, PW, C]  stride-2 phases of the 3-padded image
    wconv_ref       : [7, 7, C, 64]   conv1 weight (BN scale folded in), (kh, kw, c, o)
    bnb_ref         : [1, 64]         folded BatchNorm bias
    wfc_ref         : [64, M*P]       fc weight, wfc[co, m*P + p] = fc_w[p, co*M + m]
    bfc_ref         : [1, P]          fc bias
    o_ref           : [1, 1, P]       projection output
    """
    M = OH * OW
    phases = ((xee_ref, xeo_ref), (xoe_ref, xoo_ref))

    # -- conv1 (7x7, stride 2) as 49 shifted-and-accumulated matmuls.
    #    Thanks to the phase decomposition, every window slice is stride-1 and static.
    acc = jnp.zeros((M, 64), jnp.float32)
    for kh in range(7):
        for kw in range(7):
            ph = phases[kh % 2][kw % 2]
            win = ph[0, kh // 2:kh // 2 + OH, kw // 2:kw // 2 + OW, :]   # [OH, OW, C]
            acc = acc + jnp.dot(win.reshape(M, C), wconv_ref[kh, kw],
                                preferred_element_type=jnp.float32)

    # -- fused BatchNorm bias + ReLU (scale already folded into the conv weight)
    y = jnp.maximum(acc + bnb_ref[...], 0.0)                             # [M, 64]

    # -- Flatten(NCHW) + Linear without any activation relayout:
    #    out[p] = sum_{m, co} y[m, co] * wfc[co, m*P + p]
    z = jnp.dot(y, wfc_ref[...], preferred_element_type=jnp.float32)     # [M, M*P]
    m_ids = jax.lax.broadcasted_iota(jnp.int32, (M, M * P), 0)
    q_ids = jax.lax.broadcasted_iota(jnp.int32, (M, M * P), 1)
    keep = (q_ids >= m_ids * P) & (q_ids < (m_ids + 1) * P)              # block diagonal
    colsum = jnp.sum(jnp.where(keep, z, 0.0), axis=0, keepdims=True)     # [1, M*P]

    # fold the M groups of P lanes: proj[p] = sum_m colsum[m*P + p]
    if (M & (M - 1)) == 0:                      # power of two -> log2(M) XLU lane rolls
        r = colsum
        sh = P
        while sh < M * P:
            r = r + pltpu.roll(r, sh, axis=1)
            sh *= 2
        proj = r[:, :P]
    else:                                       # generic fallback: static lane slices
        proj = colsum[:, :P]
        for m in range(1, M):
            proj = proj + colsum[:, m * P:(m + 1) * P]

    o_ref[...] = (proj + bfc_ref[...]).astype(o_ref.dtype)[None]


# ----------------------------- one-time parameter preparation ---------------------------

def prepare_vision_params(params, eps=1e-5):
    """BN folding + all weight relayouts, done once outside the hot path."""
    w_conv = params["conv_w"].astype(jnp.float32)            # [64, C, 7, 7]  (OIHW)
    C = w_conv.shape[1]
    C_pad = -(-C // 8) * 8                                    # sublane multiple

    inv_std = 1.0 / jnp.sqrt(params["bn_var"].astype(jnp.float32) + eps)
    scale = params["bn_gamma"].astype(jnp.float32) * inv_std  # [64]
    bn_bias = (params["bn_beta"].astype(jnp.float32)
               - params["bn_mean"].astype(jnp.float32) * scale).reshape(1, 64)

    # fold BN scale into the conv weight, reorder to (kh, kw, c, o), zero-pad channels
    w_taps = (w_conv * scale[:, None, None, None]).transpose(2, 3, 1, 0)  # [7,7,C,64]
    w_taps = jnp.pad(w_taps, ((0, 0), (0, 0), (0, C_pad - C), (0, 0)))

    # FC weight: torch layout [P, F] with F in NCHW flatten order (co, oh, ow).
    # Permute once so the kernel contracts over channels: wfc[co, m*P + p].
    fc_w = params["fc_w"].astype(jnp.float32)                 # [P, 64*M]
    fc_b = params["fc_b"].astype(jnp.float32)
    P = fc_w.shape[0]
    M = fc_w.shape[1] // 64
    wfc = fc_w.reshape(P, 64, M).transpose(1, 2, 0).reshape(64, M * P)

    return {"w_taps": w_taps, "bn_bias": bn_bias, "wfc": wfc,
            "fc_b": fc_b.reshape(1, P)}


# ----------------------------- forward wrapper -------------------------------------------

@jax.jit
def vision_core_forward(obs, prepped):
    """obs: [..., H, W, C] float32 (channels-last, as fed to the torch module)."""
    front_shape = obs.shape[:-3]
    obs = obs.reshape((-1,) + obs.shape[-3:])                 # combine_dims
    B, H, W, C = obs.shape

    OH = (H + 2 * 3 - 7) // 2 + 1
    OW = (W + 2 * 3 - 7) // 2 + 1
    M = OH * OW
    w_taps = prepped["w_taps"]
    C_pad = w_taps.shape[2]
    P = prepped["fc_b"].shape[1]
    assert prepped["wfc"].shape == (64, M * P), (prepped["wfc"].shape, M, P)

    # conv padding (=3), make the padded extent even for the stride-2 phase split,
    # and pad channels up to a sublane multiple (zeros, weights padded to match).
    Hp, Wp = H + 6, W + 6
    x = jnp.pad(obs.astype(jnp.float32),
                ((0, 0), (3, 3 + Hp % 2), (3, 3 + Wp % 2), (0, C_pad - C)))
    PH, PW = x.shape[1] // 2, x.shape[2] // 2
    xee = x[:, 0::2, 0::2, :]                                 # [B, PH, PW, C_pad]
    xeo = x[:, 0::2, 1::2, :]
    xoe = x[:, 1::2, 0::2, :]
    xoo = x[:, 1::2, 1::2, :]

    kernel = functools.partial(_fused_vision_kernel, OH=OH, OW=OW, C=C_pad, P=P)
    phase_spec = pl.BlockSpec((1, PH, PW, C_pad), lambda b: (b, 0, 0, 0))
    const4 = lambda b: (0, 0, 0, 0)
    const2 = lambda b: (0, 0)

    out = pl.pallas_call(
        kernel,
        out_shape=jax.ShapeDtypeStruct((B, 1, P), jnp.float32),
        grid_spec=pltpu.PrefetchScalarGridSpec(
            num_scalar_prefetch=0,
            grid=(B,),
            in_specs=[phase_spec, phase_spec, phase_spec, phase_spec,
                      pl.BlockSpec((7, 7, C_pad, 64), const4),
                      pl.BlockSpec((1, 64), const2),
                      pl.BlockSpec((64, M * P), const2),
                      pl.BlockSpec((1, P), const2)],
            out_specs=pl.BlockSpec((1, 1, P), lambda b: (b, 0, 0))),
        compiler_params=pltpu.CompilerParams(
            dimension_semantics=("parallel",)),
    )(xee, xeo, xoe, xoo, w_taps, prepped["bn_bias"], prepped["wfc"], prepped["fc_b"])

    return out.reshape(front_shape + (P,))                    # split_dim


# ----------------------------- reference (plain JAX) --------------------------------------

def vision_core_reference(obs, params):
    front_shape = obs.shape[:-3]
    obs = obs.reshape((-1,) + obs.shape[-3:])
    eps = 1e-5
    y = jax.lax.conv_general_dilated(
        obs, params["conv_w"], window_strides=(2, 2), padding=((3, 3), (3, 3)),
        dimension_numbers=("NHWC", "OIHW", "NHWC"))
    inv_std = 1.0 / jnp.sqrt(params["bn_var"] + eps)
    y = (y - params["bn_mean"]) * inv_std * params["bn_gamma"] + params["bn_beta"]
    y = jnp.maximum(y, 0.0)
    y = y.transpose(0, 3, 1, 2)                               # NCHW
    y = y.reshape(y.shape[0], -1)                             # Flatten
    y = y @ params["fc_w"].T + params["fc_b"]                 # Linear
    return y.reshape(front_shape + (y.shape[-1],))


# ----------------------------- main --------------------------------------------------------

if __name__ == "__main__":
    B, H, W, C_in = 2, 16, 16, 4
    OH = OW = (H + 6 - 7) // 2 + 1                            # 8
    F = 64 * OH * OW                                          # 4096
    P = 32                                                    # projection_size

    key = jax.random.PRNGKey(0)
    k_obs, k_conv, k_g, k_b, k_m, k_v, k_fw, k_fb = jax.random.split(key, 8)

    obs = jax.random.normal(k_obs, (B, H, W, C_in), dtype=jnp.float32)

    params = {
        "conv_w": jax.random.normal(k_conv, (64, C_in, 7, 7), dtype=jnp.float32)
                  * (1.0 / np.sqrt(C_in * 49)),
        "bn_gamma": jax.random.uniform(k_g, (64,), minval=0.5, maxval=1.5,
                                       dtype=jnp.float32),
        "bn_beta": 0.1 * jax.random.normal(k_b, (64,), dtype=jnp.float32),
        "bn_mean": 0.1 * jax.random.normal(k_m, (64,), dtype=jnp.float32),
        "bn_var": jax.random.uniform(k_v, (64,), minval=0.5, maxval=1.5,
                                     dtype=jnp.float32),
        "fc_w": jax.random.normal(k_fw, (P, F), dtype=jnp.float32) * (1.0 / np.sqrt(F)),
        "fc_b": 0.1 * jax.random.normal(k_fb, (P,), dtype=jnp.float32),
    }

    # TODO(synk): ImageRandomizer transforms / extra_conv_layers are not part of this
    # instantiation (randomizers=None, extra_conv_layers=[]) and are not implemented.
    prepped = prepare_vision_params(params)

    out = jax.block_until_ready(vision_core_forward(obs, prepped))
    ref = jax.block_until_ready(vision_core_reference(obs, params))

    assert out.shape == (B, P), out.shape
    np.testing.assert_allclose(np.asarray(out), np.asarray(ref), rtol=2e-3, atol=2e-3)

    print("KERNEL_OK")
</pallas_src>

<mosaic_0001>
module attributes {stable_mosaic.version = 11 : i64} {
  func.func @_fused_vision_kernel(%arg0: i32, %arg1: memref<1x11x11x8xf32, #tpu.memory_space<vmem>>, %arg2: memref<1x11x11x8xf32, #tpu.memory_space<vmem>>, %arg3: memref<1x11x11x8xf32, #tpu.memory_space<vmem>>, %arg4: memref<1x11x11x8xf32, #tpu.memory_space<vmem>>, %arg5: memref<7x7x8x64xf32, #tpu.memory_space<vmem>>, %arg6: memref<1x64xf32, #tpu.memory_space<vmem>>, %arg7: memref<64x2048xf32, #tpu.memory_space<vmem>>, %arg8: memref<1x32xf32, #tpu.memory_space<vmem>>, %arg9: memref<1x1x32xf32, #tpu.memory_space<vmem>>) attributes {dimension_semantics = [#tpu.dimension_semantics<parallel>], iteration_bounds = array<i64: 2>, scalar_prefetch = 0 : i64, scratch_operands = 0 : i64, tpu.core_type = #tpu.core_type<tc>, window_params = [{transform_indices = @transform_0, window_bounds = array<i64: 1, 11, 11, 8>}, {transform_indices = @transform_1, window_bounds = array<i64: 1, 11, 11, 8>}, {transform_indices = @transform_2, window_bounds = array<i64: 1, 11, 11, 8>}, {transform_indices = @transform_3, window_bounds = array<i64: 1, 11, 11, 8>}, {pipeline_mode = #tpu.pipeline_mode<synchronous>, transform_indices = @transform_4, window_bounds = array<i64: 7, 7, 8, 64>}, {pipeline_mode = #tpu.pipeline_mode<synchronous>, transform_indices = @transform_5, window_bounds = array<i64: 1, 64>}, {pipeline_mode = #tpu.pipeline_mode<synchronous>, transform_indices = @transform_6, window_bounds = array<i64: 64, 2048>}, {pipeline_mode = #tpu.pipeline_mode<synchronous>, transform_indices = @transform_7, window_bounds = array<i64: 1, 32>}, {transform_indices = @transform_8, window_bounds = array<i64: 1, 1, 32>}]} {
    %cst = arith.constant 0.000000e+00 : f32
    %0 = vector.broadcast %cst : f32 to vector<64x64xf32>
    %c0 = arith.constant 0 : index
    %c0_0 = arith.constant 0 : index
    %c0_1 = arith.constant 0 : index
    %c0_2 = arith.constant 0 : index
    %1 = vector.load %arg1[%c0, %c0_0, %c0_1, %c0_2] : memref<1x11x11x8xf32, #tpu.memory_space<vmem>>, vector<1x8x8x8xf32>
    %2 = vector.shape_cast %1 : vector<1x8x8x8xf32> to vector<8x8x8xf32>
    %3 = vector.shape_cast %2 : vector<8x8x8xf32> to vector<64x8xf32>
    %c0_3 = arith.constant 0 : index
    %c0_4 = arith.constant 0 : index
    %c0_5 = arith.constant 0 : index
    %c0_6 = arith.constant 0 : index
    %4 = vector.load %arg5[%c0_3, %c0_4, %c0_5, %c0_6] : memref<7x7x8x64xf32, #tpu.memory_space<vmem>>, vector<1x1x8x64xf32>
    %5 = vector.shape_cast %4 : vector<1x1x8x64xf32> to vector<8x64xf32>
    %cst_7 = arith.constant dense<0.000000e+00> : vector<64x64xf32>
    %6 = tpu.matmul %3, %5, %cst_7 {dimension_numbers = #tpu.dot_dimension_numbers<[1], [0], [0], [1], [0, 0, 1, 1], [], []>} : vector<64x8xf32>, vector<8x64xf32>, vector<64x64xf32> -> vector<64x64xf32>
    %7 = arith.addf %0, %6 : vector<64x64xf32>
    %c0_8 = arith.constant 0 : index
    %c0_9 = arith.constant 0 : index
    %c0_10 = arith.constant 0 : index
    %c0_11 = arith.constant 0 : index
    %8 = vector.load %arg2[%c0_8, %c0_9, %c0_10, %c0_11] : memref<1x11x11x8xf32, #tpu.memory_space<vmem>>, vector<1x8x8x8xf32>
    %9 = vector.shape_cast %8 : vector<1x8x8x8xf32> to vector<8x8x8xf32>
    %10 = vector.shape_cast %9 : vector<8x8x8xf32> to vector<64x8xf32>
    %c0_12 = arith.constant 0 : index
    %c1 = arith.constant 1 : index
    %c0_13 = arith.constant 0 : index
    %c0_14 = arith.constant 0 : index
    %11 = vector.load %arg5[%c0_12, %c1, %c0_13, %c0_14] : memref<7x7x8x64xf32, #tpu.memory_space<vmem>>, vector<1x1x8x64xf32>
    %12 = vector.shape_cast %11 : vector<1x1x8x64xf32> to vector<8x64xf32>
    %cst_15 = arith.constant dense<0.000000e+00> : vector<64x64xf32>
    %13 = tpu.matmul %10, %12, %cst_15 {dimension_numbers = #tpu.dot_dimension_numbers<[1], [0], [0], [1], [0, 0, 1, 1], [], []>} : vector<64x8xf32>, vector<8x64xf32>, vector<64x64xf32> -> vector<64x64xf32>
    %14 = arith.addf %7, %13 : vector<64x64xf32>
    %c0_16 = arith.constant 0 : index
    %c0_17 = arith.constant 0 : index
    %c1_18 = arith.constant 1 : index
    %c0_19 = arith.constant 0 : index
    %15 = vector.load %arg1[%c0_16, %c0_17, %c1_18, %c0_19] : memref<1x11x11x8xf32, #tpu.memory_space<vmem>>, vector<1x8x8x8xf32>
    %16 = vector.shape_cast %15 : vector<1x8x8x8xf32> to vector<8x8x8xf32>
    %17 = vector.shape_cast %16 : vector<8x8x8xf32> to vector<64x8xf32>
    %c0_20 = arith.constant 0 : index
    %c2 = arith.constant 2 : index
    %c0_21 = arith.constant 0 : index
    %c0_22 = arith.constant 0 : index
    %18 = vector.load %arg5[%c0_20, %c2, %c0_21, %c0_22] : memref<7x7x8x64xf32, #tpu.memory_space<vmem>>, vector<1x1x8x64xf32>
    %19 = vector.shape_cast %18 : vector<1x1x8x64xf32> to vector<8x64xf32>
    %cst_23 = arith.constant dense<0.000000e+00> : vector<64x64xf32>
    %20 = tpu.matmul %17, %19, %cst_23 {dimension_numbers = #tpu.dot_dimension_numbers<[1], [0], [0], [1], [0, 0, 1, 1], [], []>} : vector<64x8xf32>, vector<8x64xf32>, vector<64x64xf32> -> vector<64x64xf32>
    %21 = arith.addf %14, %20 : vector<64x64xf32>
    %c0_24 = arith.constant 0 : index
    %c0_25 = arith.constant 0 : index
    %c1_26 = arith.constant 1 : index
    %c0_27 = arith.constant 0 : index
    %22 = vector.load %arg2[%c0_24, %c0_25, %c1_26, %c0_27] : memref<1x11x11x8xf32, #tpu.memory_space<vmem>>, vector<1x8x8x8xf32>
    %23 = vector.shape_cast %22 : vector<1x8x8x8xf32> to vector<8x8x8xf32>
    %24 = vector.shape_cast %23 : vector<8x8x8xf32> to vector<64x8xf32>
    %c0_28 = arith.constant 0 : index
    %c3 = arith.constant 3 : index
    %c0_29 = arith.constant 0 : index
    %c0_30 = arith.constant 0 : index
    %25 = vector.load %arg5[%c0_28, %c3, %c0_29, %c0_30] : memref<7x7x8x64xf32, #tpu.memory_space<vmem>>, vector<1x1x8x64xf32>
    %26 = vector.shape_cast %25 : vector<1x1x8x64xf32> to vector<8x64xf32>
    %cst_31 = arith.constant dense<0.000000e+00> : vector<64x64xf32>
    %27 = tpu.matmul %24, %26, %cst_31 {dimension_numbers = #tpu.dot_dimension_numbers<[1], [0], [0], [1], [0, 0, 1, 1], [], []>} : vector<64x8xf32>, vector<8x64xf32>, vector<64x64xf32> -> vector<64x64xf32>
    %28 = arith.addf %21, %27 : vector<64x64xf32>
    %c0_32 = arith.constant 0 : index
    %c0_33 = arith.constant 0 : index
    %c2_34 = arith.constant 2 : index
    %c0_35 = arith.constant 0 : index
    %29 = vector.load %arg1[%c0_32, %c0_33, %c2_34, %c0_35] : memref<1x11x11x8xf32, #tpu.memory_space<vmem>>, vector<1x8x8x8xf32>
    %30 = vector.shape_cast %29 : vector<1x8x8x8xf32> to vector<8x8x8xf32>
    %31 = vector.shape_cast %30 : vector<8x8x8xf32> to vector<64x8xf32>
    %c0_36 = arith.constant 0 : index
    %c4 = arith.constant 4 : index
    %c0_37 = arith.constant 0 : index
    %c0_38 = arith.constant 0 : index
    %32 = vector.load %arg5[%c0_36, %c4, %c0_37, %c0_38] : memref<7x7x8x64xf32, #tpu.memory_space<vmem>>, vector<1x1x8x64xf32>
    %33 = vector.shape_cast %32 : vector<1x1x8x64xf32> to vector<8x64xf32>
    %cst_39 = arith.constant dense<0.000000e+00> : vector<64x64xf32>
    %34 = tpu.matmul %31, %33, %cst_39 {dimension_numbers = #tpu.dot_dimension_numbers<[1], [0], [0], [1], [0, 0, 1, 1], [], []>} : vector<64x8xf32>, vector<8x64xf32>, vector<64x64xf32> -> vector<64x64xf32>
    %35 = arith.addf %28, %34 : vector<64x64xf32>
    %c0_40 = arith.constant 0 : index
    %c0_41 = arith.constant 0 : index
    %c2_42 = arith.constant 2 : index
    %c0_43 = arith.constant 0 : index
    %36 = vector.load %arg2[%c0_40, %c0_41, %c2_42, %c0_43] : memref<1x11x11x8xf32, #tpu.memory_space<vmem>>, vector<1x8x8x8xf32>
    %37 = vector.shape_cast %36 : vector<1x8x8x8xf32> to vector<8x8x8xf32>
    %38 = vector.shape_cast %37 : vector<8x8x8xf32> to vector<64x8xf32>
    %c0_44 = arith.constant 0 : index
    %c5 = arith.constant 5 : index
    %c0_45 = arith.constant 0 : index
    %c0_46 = arith.constant 0 : index
    %39 = vector.load %arg5[%c0_44, %c5, %c0_45, %c0_46] : memref<7x7x8x64xf32, #tpu.memory_space<vmem>>, vector<1x1x8x64xf32>
    %40 = vector.shape_cast %39 : vector<1x1x8x64xf32> to vector<8x64xf32>
    %cst_47 = arith.constant dense<0.000000e+00> : vector<64x64xf32>
    %41 = tpu.matmul %38, %40, %cst_47 {dimension_numbers = #tpu.dot_dimension_numbers<[1], [0], [0], [1], [0, 0, 1, 1], [], []>} : vector<64x8xf32>, vector<8x64xf32>, vector<64x64xf32> -> vector<64x64xf32>
    %42 = arith.addf %35, %41 : vector<64x64xf32>
    %c0_48 = arith.constant 0 : index
    %c0_49 = arith.constant 0 : index
    %c3_50 = arith.constant 3 : index
    %c0_51 = arith.constant 0 : index
    %43 = vector.load %arg1[%c0_48, %c0_49, %c3_50, %c0_51] : memref<1x11x11x8xf32, #tpu.memory_space<vmem>>, vector<1x8x8x8xf32>
    %44 = vector.shape_cast %43 : vector<1x8x8x8xf32> to vector<8x8x8xf32>
    %45 = vector.shape_cast %44 : vector<8x8x8xf32> to vector<64x8xf32>
    %c0_52 = arith.constant 0 : index
    %c6 = arith.constant 6 : index
    %c0_53 = arith.constant 0 : index
    %c0_54 = arith.constant 0 : index
    %46 = vector.load %arg5[%c0_52, %c6, %c0_53, %c0_54] : memref<7x7x8x64xf32, #tpu.memory_space<vmem>>, vector<1x1x8x64xf32>
    %47 = vector.shape_cast %46 : vector<1x1x8x64xf32> to vector<8x64xf32>
    %cst_55 = arith.constant dense<0.000000e+00> : vector<64x64xf32>
    %48 = tpu.matmul %45, %47, %cst_55 {dimension_numbers = #tpu.dot_dimension_numbers<[1], [0], [0], [1], [0, 0, 1, 1], [], []>} : vector<64x8xf32>, vector<8x64xf32>, vector<64x64xf32> -> vector<64x64xf32>
    %49 = arith.addf %42, %48 : vector<64x64xf32>
    %c0_56 = arith.constant 0 : index
    %c0_57 = arith.constant 0 : index
    %c0_58 = arith.constant 0 : index
    %c0_59 = arith.constant 0 : index
    %50 = vector.load %arg3[%c0_56, %c0_57, %c0_58, %c0_59] : memref<1x11x11x8xf32, #tpu.memory_space<vmem>>, vector<1x8x8x8xf32>
    %51 = vector.shape_cast %50 : vector<1x8x8x8xf32> to vector<8x8x8xf32>
    %52 = vector.shape_cast %51 : vector<8x8x8xf32> to vector<64x8xf32>
    %c1_60 = arith.constant 1 : index
    %c0_61 = arith.constant 0 : index
    %c0_62 = arith.constant 0 : index
    %c0_63 = arith.constant 0 : index
    %53 = vector.load %arg5[%c1_60, %c0_61, %c0_62, %c0_63] : memref<7x7x8x64xf32, #tpu.memory_space<vmem>>, vector<1x1x8x64xf32>
    %54 = vector.shape_cast %53 : vector<1x1x8x64xf32> to vector<8x64xf32>
    %cst_64 = arith.constant dense<0.000000e+00> : vector<64x64xf32>
    %55 = tpu.matmul %52, %54, %cst_64 {dimension_numbers = #tpu.dot_dimension_numbers<[1], [0], [0], [1], [0, 0, 1, 1], [], []>} : vector<64x8xf32>, vector<8x64xf32>, vector<64x64xf32> -> vector<64x64xf32>
    %56 = arith.addf %49, %55 : vector<64x64xf32>
    %c0_65 = arith.constant 0 : index
    %c0_66 = arith.constant 0 : index
    %c0_67 = arith.constant 0 : index
    %c0_68 = arith.constant 0 : index
    %57 = vector.load %arg4[%c0_65, %c0_66, %c0_67, %c0_68] : memref<1x11x11x8xf32, #tpu.memory_space<vmem>>, vector<1x8x8x8xf32>
    %58 = vector.shape_cast %57 : vector<1x8x8x8xf32> to vector<8x8x8xf32>
    %59 = vector.shape_cast %58 : vector<8x8x8xf32> to vector<64x8xf32>
    %c1_69 = arith.constant 1 : index
    %c1_70 = arith.constant 1 : index
    %c0_71 = arith.constant 0 : index
    %c0_72 = arith.constant 0 : index
    %60 = vector.load %arg5[%c1_69, %c1_70, %c0_71, %c0_72] : memref<7x7x8x64xf32, #tpu.memory_space<vmem>>, vector<1x1x8x64xf32>
    %61 = vector.shape_cast %60 : vector<1x1x8x64xf32> to vector<8x64xf32>
    %cst_73 = arith.constant dense<0.000000e+00> : vector<64x64xf32>
    %62 = tpu.matmul %59, %61, %cst_73 {dimension_numbers = #tpu.dot_dimension_numbers<[1], [0], [0], [1], [0, 0, 1, 1], [], []>} : vector<64x8xf32>, vector<8x64xf32>, vector<64x64xf32> -> vector<64x64xf32>
    %63 = arith.addf %56, %62 : vector<64x64xf32>
    %c0_74 = arith.constant 0 : index
    %c0_75 = arith.constant 0 : index
    %c1_76 = arith.constant 1 : index
    %c0_77 = arith.constant 0 : index
    %64 = vector.load %arg3[%c0_74, %c0_75, %c1_76, %c0_77] : memref<1x11x11x8xf32, #tpu.memory_space<vmem>>, vector<1x8x8x8xf32>
    %65 = vector.shape_cast %64 : vector<1x8x8x8xf32> to vector<8x8x8xf32>
    %66 = vector.shape_cast %65 : vector<8x8x8xf32> to vector<64x8xf32>
    %c1_78 = arith.constant 1 : index
    %c2_79 = arith.constant 2 : index
    %c0_80 = arith.constant 0 : index
    %c0_81 = arith.constant 0 : index
    %67 = vector.load %arg5[%c1_78, %c2_79, %c0_80, %c0_81] : memref<7x7x8x64xf32, #tpu.memory_space<vmem>>, vector<1x1x8x64xf32>
    %68 = vector.shape_cast %67 : vector<1x1x8x64xf32> to vector<8x64xf32>
    %cst_82 = arith.constant dense<0.000000e+00> : vector<64x64xf32>
    %69 = tpu.matmul %66, %68, %cst_82 {dimension_numbers = #tpu.dot_dimension_numbers<[1], [0], [0], [1], [0, 0, 1, 1], [], []>} : vector<64x8xf32>, vector<8x64xf32>, vector<64x64xf32> -> vector<64x64xf32>
    %70 = arith.addf %63, %69 : vector<64x64xf32>
    %c0_83 = arith.constant 0 : index
    %c0_84 = arith.constant 0 : index
    %c1_85 = arith.constant 1 : index
    %c0_86 = arith.constant 0 : index
    %71 = vector.load %arg4[%c0_83, %c0_84, %c1_85, %c0_86] : memref<1x11x11x8xf32, #tpu.memory_space<vmem>>, vector<1x8x8x8xf32>
    %72 = vector.shape_cast %71 : vector<1x8x8x8xf32> to vector<8x8x8xf32>
    %73 = vector.shape_cast %72 : vector<8x8x8xf32> to vector<64x8xf32>
    %c1_87 = arith.constant 1 : index
    %c3_88 = arith.constant 3 : index
    %c0_89 = arith.constant 0 : index
    %c0_90 = arith.constant 0 : index
    %74 = vector.load %arg5[%c1_87, %c3_88, %c0_89, %c0_90] : memref<7x7x8x64xf32, #tpu.memory_space<vmem>>, vector<1x1x8x64xf32>
    %75 = vector.shape_cast %74 : vector<1x1x8x64xf32> to vector<8x64xf32>
    %cst_91 = arith.constant dense<0.000000e+00> : vector<64x64xf32>
    %76 = tpu.matmul %73, %75, %cst_91 {dimension_numbers = #tpu.dot_dimension_numbers<[1], [0], [0], [1], [0, 0, 1, 1], [], []>} : vector<64x8xf32>, vector<8x64xf32>, vector<64x64xf32> -> vector<64x64xf32>
    %77 = arith.addf %70, %76 : vector<64x64xf32>
    %c0_92 = arith.constant 0 : index
    %c0_93 = arith.constant 0 : index
    %c2_94 = arith.constant 2 : index
    %c0_95 = arith.constant 0 : index
    %78 = vector.load %arg3[%c0_92, %c0_93, %c2_94, %c0_95] : memref<1x11x11x8xf32, #tpu.memory_space<vmem>>, vector<1x8x8x8xf32>
    %79 = vector.shape_cast %78 : vector<1x8x8x8xf32> to vector<8x8x8xf32>
    %80 = vector.shape_cast %79 : vector<8x8x8xf32> to vector<64x8xf32>
    %c1_96 = arith.constant 1 : index
    %c4_97 = arith.constant 4 : index
    %c0_98 = arith.constant 0 : index
    %c0_99 = arith.constant 0 : index
    %81 = vector.load %arg5[%c1_96, %c4_97, %c0_98, %c0_99] : memref<7x7x8x64xf32, #tpu.memory_space<vmem>>, vector<1x1x8x64xf32>
    %82 = vector.shape_cast %81 : vector<1x1x8x64xf32> to vector<8x64xf32>
    %cst_100 = arith.constant dense<0.000000e+00> : vector<64x64xf32>
    %83 = tpu.matmul %80, %82, %cst_100 {dimension_numbers = #tpu.dot_dimension_numbers<[1], [0], [0], [1], [0, 0, 1, 1], [], []>} : vector<64x8xf32>, vector<8x64xf32>, vector<64x64xf32> -> vector<64x64xf32>
    %84 = arith.addf %77, %83 : vector<64x64xf32>
    %c0_101 = arith.constant 0 : index
    %c0_102 = arith.constant 0 : index
    %c2_103 = arith.constant 2 : index
    %c0_104 = arith.constant 0 : index
    %85 = vector.load %arg4[%c0_101, %c0_102, %c2_103, %c0_104] : memref<1x11x11x8xf32, #tpu.memory_space<vmem>>, vector<1x8x8x8xf32>
    %86 = vector.shape_cast %85 : vector<1x8x8x8xf32> to vector<8x8x8xf32>
    %87 = vector.shape_cast %86 : vector<8x8x8xf32> to vector<64x8xf32>
    %c1_105 = arith.constant 1 : index
    %c5_106 = arith.constant 5 : index
    %c0_107 = arith.constant 0 : index
    %c0_108 = arith.constant 0 : index
    %88 = vector.load %arg5[%c1_105, %c5_106, %c0_107, %c0_108] : memref<7x7x8x64xf32, #tpu.memory_space<vmem>>, vector<1x1x8x64xf32>
    %89 = vector.shape_cast %88 : vector<1x1x8x64xf32> to vector<8x64xf32>
    %cst_109 = arith.constant dense<0.000000e+00> : vector<64x64xf32>
    %90 = tpu.matmul %87, %89, %cst_109 {dimension_numbers = #tpu.dot_dimension_numbers<[1], [0], [0], [1], [0, 0, 1, 1], [], []>} : vector<64x8xf32>, vector<8x64xf32>, vector<64x64xf32> -> vector<64x64xf32>
    %91 = arith.addf %84, %90 : vector<64x64xf32>
    %c0_110 = arith.constant 0 : index
    %c0_111 = arith.constant 0 : index
    %c3_112 = arith.constant 3 : index
    %c0_113 = arith.constant 0 : index
    %92 = vector.load %arg3[%c0_110, %c0_111, %c3_112, %c0_113] : memref<1x11x11x8xf32, #tpu.memory_space<vmem>>, vector<1x8x8x8xf32>
    %93 = vector.shape_cast %92 : vector<1x8x8x8xf32> to vector<8x8x8xf32>
    %94 = vector.shape_cast %93 : vector<8x8x8xf32> to vector<64x8xf32>
    %c1_114 = arith.constant 1 : index
    %c6_115 = arith.constant 6 : index
    %c0_116 = arith.constant 0 : index
    %c0_117 = arith.constant 0 : index
    %95 = vector.load %arg5[%c1_114, %c6_115, %c0_116, %c0_117] : memref<7x7x8x64xf32, #tpu.memory_space<vmem>>, vector<1x1x8x64xf32>
    %96 = vector.shape_cast %95 : vector<1x1x8x64xf32> to vector<8x64xf32>
    %cst_118 = arith.constant dense<0.000000e+00> : vector<64x64xf32>
    %97 = tpu.matmul %94, %96, %cst_118 {dimension_numbers = #tpu.dot_dimension_numbers<[1], [0], [0], [1], [0, 0, 1, 1], [], []>} : vector<64x8xf32>, vector<8x64xf32>, vector<64x64xf32> -> vector<64x64xf32>
    %98 = arith.addf %91, %97 : vector<64x64xf32>
    %c0_119 = arith.constant 0 : index
    %c1_120 = arith.constant 1 : index
    %c0_121 = arith.constant 0 : index
    %c0_122 = arith.constant 0 : index
    %99 = vector.load %arg1[%c0_119, %c1_120, %c0_121, %c0_122] : memref<1x11x11x8xf32, #tpu.memory_space<vmem>>, vector<1x8x8x8xf32>
    %100 = vector.shape_cast %99 : vector<1x8x8x8xf32> to vector<8x8x8xf32>
    %101 = vector.shape_cast %100 : vector<8x8x8xf32> to vector<64x8xf32>
    %c2_123 = arith.constant 2 : index
    %c0_124 = arith.constant 0 : index
    %c0_125 = arith.constant 0 : index
    %c0_126 = arith.constant 0 : index
    %102 = vector.load %arg5[%c2_123, %c0_124, %c0_125, %c0_126] : memref<7x7x8x64xf32, #tpu.memory_space<vmem>>, vector<1x1x8x64xf32>
    %103 = vector.shape_cast %102 : vector<1x1x8x64xf32> to vector<8x64xf32>
    %cst_127 = arith.constant dense<0.000000e+00> : vector<64x64xf32>
    %104 = tpu.matmul %101, %103, %cst_127 {dimension_numbers = #tpu.dot_dimension_numbers<[1], [0], [0], [1], [0, 0, 1, 1], [], []>} : vector<64x8xf32>, vector<8x64xf32>, vector<64x64xf32> -> vector<64x64xf32>
    %105 = arith.addf %98, %104 : vector<64x64xf32>
    %c0_128 = arith.constant 0 : index
    %c1_129 = arith.constant 1 : index
    %c0_130 = arith.constant 0 : index
    %c0_131 = arith.constant 0 : index
    %106 = vector.load %arg2[%c0_128, %c1_129, %c0_130, %c0_131] : memref<1x11x11x8xf32, #tpu.memory_space<vmem>>, vector<1x8x8x8xf32>
    %107 = vector.shape_cast %106 : vector<1x8x8x8xf32> to vector<8x8x8xf32>
    %108 = vector.shape_cast %107 : vector<8x8x8xf32> to vector<64x8xf32>
    %c2_132 = arith.constant 2 : index
    %c1_133 = arith.constant 1 : index
    %c0_134 = arith.constant 0 : index
    %c0_135 = arith.constant 0 : index
    %109 = vector.load %arg5[%c2_132, %c1_133, %c0_134, %c0_135] : memref<7x7x8x64xf32, #tpu.memory_space<vmem>>, vector<1x1x8x64xf32>
    %110 = vector.shape_cast %109 : vector<1x1x8x64xf32> to vector<8x64xf32>
    %cst_136 = arith.constant dense<0.000000e+00> : vector<64x64xf32>
    %111 = tpu.matmul %108, %110, %cst_136 {dimension_numbers = #tpu.dot_dimension_numbers<[1], [0], [0], [1], [0, 0, 1, 1], [], []>} : vector<64x8xf32>, vector<8x64xf32>, vector<64x64xf32> -> vector<64x64xf32>
    %112 = arith.addf %105, %111 : vector<64x64xf32>
    %c0_137 = arith.constant 0 : index
    %c1_138 = arith.constant 1 : index
    %c1_139 = arith.constant 1 : index
    %c0_140 = arith.constant 0 : index
    %113 = vector.load %arg1[%c0_137, %c1_138, %c1_139, %c0_140] : memref<1x11x11x8xf32, #tpu.memory_space<vmem>>, vector<1x8x8x8xf32>
    %114 = vector.shape_cast %113 : vector<1x8x8x8xf32> to vector<8x8x8xf32>
    %115 = vector.shape_cast %114 : vector<8x8x8xf32> to vector<64x8xf32>
    %c2_141 = arith.constant 2 : index
    %c2_142 = arith.constant 2 : index
    %c0_143 = arith.constant 0 : index
    %c0_144 = arith.constant 0 : index
    %116 = vector.load %arg5[%c2_141, %c2_142, %c0_143, %c0_144] : memref<7x7x8x64xf32, #tpu.memory_space<vmem>>, vector<1x1x8x64xf32>
    %117 = vector.shape_cast %116 : vector<1x1x8x64xf32> to vector<8x64xf32>
    %cst_145 = arith.constant dense<0.000000e+00> : vector<64x64xf32>
    %118 = tpu.matmul %115, %117, %cst_145 {dimension_numbers = #tpu.dot_dimension_numbers<[1], [0], [0], [1], [0, 0, 1, 1], [], []>} : vector<64x8xf32>, vector<8x64xf32>, vector<64x64xf32> -> vector<64x64xf32>
    %119 = arith.addf %112, %118 : vector<64x64xf32>
    %c0_146 = arith.constant 0 : index
    %c1_147 = arith.constant 1 : index
    %c1_148 = arith.constant 1 : index
    %c0_149 = arith.constant 0 : index
    %120 = vector.load %arg2[%c0_146, %c1_147, %c1_148, %c0_149] : memref<1x11x11x8xf32, #tpu.memory_space<vmem>>, vector<1x8x8x8xf32>
    %121 = vector.shape_cast %120 : vector<1x8x8x8xf32> to vector<8x8x8xf32>
    %122 = vector.shape_cast %121 : vector<8x8x8xf32> to vector<64x8xf32>
    %c2_150 = arith.constant 2 : index
    %c3_151 = arith.constant 3 : index
    %c0_152 = arith.constant 0 : index
    %c0_153 = arith.constant 0 : index
    %123 = vector.load %arg5[%c2_150, %c3_151, %c0_152, %c0_153] : memref<7x7x8x64xf32, #tpu.memory_space<vmem>>, vector<1x1x8x64xf32>
    %124 = vector.shape_cast %123 : vector<1x1x8x64xf32> to vector<8x64xf32>
    %cst_154 = arith.constant dense<0.000000e+00> : vector<64x64xf32>
    %125 = tpu.matmul %122, %124, %cst_154 {dimension_numbers = #tpu.dot_dimension_numbers<[1], [0], [0], [1], [0, 0, 1, 1], [], []>} : vector<64x8xf32>, vector<8x64xf32>, vector<64x64xf32> -> vector<64x64xf32>
    %126 = arith.addf %119, %125 : vector<64x64xf32>
    %c0_155 = arith.constant 0 : index
    %c1_156 = arith.constant 1 : index
    %c2_157 = arith.constant 2 : index
    %c0_158 = arith.constant 0 : index
    %127 = vector.load %arg1[%c0_155, %c1_156, %c2_157, %c0_158] : memref<1x11x11x8xf32, #tpu.memory_space<vmem>>, vector<1x8x8x8xf32>
    %128 = vector.shape_cast %127 : vector<1x8x8x8xf32> to vector<8x8x8xf32>
    %129 = vector.shape_cast %128 : vector<8x8x8xf32> to vector<64x8xf32>
    %c2_159 = arith.constant 2 : index
    %c4_160 = arith.constant 4 : index
    %c0_161 = arith.constant 0 : index
    %c0_162 = arith.constant 0 : index
    %130 = vector.load %arg5[%c2_159, %c4_160, %c0_161, %c0_162] : memref<7x7x8x64xf32, #tpu.memory_space<vmem>>, vector<1x1x8x64xf32>
    %131 = vector.shape_cast %130 : vector<1x1x8x64xf32> to vector<8x64xf32>
    %cst_163 = arith.constant dense<0.000000e+00> : vector<64x64xf32>
    %132 = tpu.matmul %129, %131, %cst_163 {dimension_numbers = #tpu.dot_dimension_numbers<[1], [0], [0], [1], [0, 0, 1, 1], [], []>} : vector<64x8xf32>, vector<8x64xf32>, vector<64x64xf32> -> vector<64x64xf32>
    %133 = arith.addf %126, %132 : vector<64x64xf32>
    %c0_164 = arith.constant 0 : index
    %c1_165 = arith.constant 1 : index
    %c2_166 = arith.constant 2 : index
    %c0_167 = arith.constant 0 : index
    %134 = vector.load %arg2[%c0_164, %c1_165, %c2_166, %c0_167] : memref<1x11x11x8xf32, #tpu.memory_space<vmem>>, vector<1x8x8x8xf32>
    %135 = vector.shape_cast %134 : vector<1x8x8x8xf32> to vector<8x8x8xf32>
    %136 = vector.shape_cast %135 : vector<8x8x8xf32> to vector<64x8xf32>
    %c2_168 = arith.constant 2 : index
    %c5_169 = arith.constant 5 : index
    %c0_170 = arith.constant 0 : index
    %c0_171 = arith.constant 0 : index
    %137 = vector.load %arg5[%c2_168, %c5_169, %c0_170, %c0_171] : memref<7x7x8x64xf32, #tpu.memory_space<vmem>>, vector<1x1x8x64xf32>
    %138 = vector.shape_cast %137 : vector<1x1x8x64xf32> to vector<8x64xf32>
    %cst_172 = arith.constant dense<0.000000e+00> : vector<64x64xf32>
    %139 = tpu.matmul %136, %138, %cst_172 {dimension_numbers = #tpu.dot_dimension_numbers<[1], [0], [0], [1], [0, 0, 1, 1], [], []>} : vector<64x8xf32>, vector<8x64xf32>, vector<64x64xf32> -> vector<64x64xf32>
    %140 = arith.addf %133, %139 : vector<64x64xf32>
    %c0_173 = arith.constant 0 : index
    %c1_174 = arith.constant 1 : index
    %c3_175 = arith.constant 3 : index
    %c0_176 = arith.constant 0 : index
    %141 = vector.load %arg1[%c0_173, %c1_174, %c3_175, %c0_176] : memref<1x11x11x8xf32, #tpu.memory_space<vmem>>, vector<1x8x8x8xf32>
    %142 = vector.shape_cast %141 : vector<1x8x8x8xf32> to vector<8x8x8xf32>
    %143 = vector.shape_cast %142 : vector<8x8x8xf32> to vector<64x8xf32>
    %c2_177 = arith.constant 2 : index
    %c6_178 = arith.constant 6 : index
    %c0_179 = arith.constant 0 : index
    %c0_180 = arith.constant 0 : index
    %144 = vector.load %arg5[%c2_177, %c6_178, %c0_179, %c0_180] : memref<7x7x8x64xf32, #tpu.memory_space<vmem>>, vector<1x1x8x64xf32>
    %145 = vector.shape_cast %144 : vector<1x1x8x64xf32> to vector<8x64xf32>
    %cst_181 = arith.constant dense<0.000000e+00> : vector<64x64xf32>
    %146 = tpu.matmul %143, %145, %cst_181 {dimension_numbers = #tpu.dot_dimension_numbers<[1], [0], [0], [1], [0, 0, 1, 1], [], []>} : vector<64x8xf32>, vector<8x64xf32>, vector<64x64xf32> -> vector<64x64xf32>
    %147 = arith.addf %140, %146 : vector<64x64xf32>
    %c0_182 = arith.constant 0 : index
    %c1_183 = arith.constant 1 : index
    %c0_184 = arith.constant 0 : index
    %c0_185 = arith.constant 0 : index
    %148 = vector.load %arg3[%c0_182, %c1_183, %c0_184, %c0_185] : memref<1x11x11x8xf32, #tpu.memory_space<vmem>>, vector<1x8x8x8xf32>
    %149 = vector.shape_cast %148 : vector<1x8x8x8xf32> to vector<8x8x8xf32>
    %150 = vector.shape_cast %149 : vector<8x8x8xf32> to vector<64x8xf32>
    %c3_186 = arith.constant 3 : index
    %c0_187 = arith.constant 0 : index
    %c0_188 = arith.constant 0 : index
    %c0_189 = arith.constant 0 : index
    %151 = vector.load %arg5[%c3_186, %c0_187, %c0_188, %c0_189] : memref<7x7x8x64xf32, #tpu.memory_space<vmem>>, vector<1x1x8x64xf32>
    %152 = vector.shape_cast %151 : vector<1x1x8x64xf32> to vector<8x64xf32>
    %cst_190 = arith.constant dense<0.000000e+00> : vector<64x64xf32>
    %153 = tpu.matmul %150, %152, %cst_190 {dimension_numbers = #tpu.dot_dimension_numbers<[1], [0], [0], [1], [0, 0, 1, 1], [], []>} : vector<64x8xf32>, vector<8x64xf32>, vector<64x64xf32> -> vector<64x64xf32>
    %154 = arith.addf %147, %153 : vector<64x64xf32>
    %c0_191 = arith.constant 0 : index
    %c1_192 = arith.constant 1 : index
    %c0_193 = arith.constant 0 : index
    %c0_194 = arith.constant 0 : index
    %155 = vector.load %arg4[%c0_191, %c1_192, %c0_193, %c0_194] : memref<1x11x11x8xf32, #tpu.memory_space<vmem>>, vector<1x8x8x8xf32>
    %156 = vector.shape_cast %155 : vector<1x8x8x8xf32> to vector<8x8x8xf32>
    %157 = vector.shape_cast %156 : vector<8x8x8xf32> to vector<64x8xf32>
    %c3_195 = arith.constant 3 : index
    %c1_196 = arith.constant 1 : index
    %c0_197 = arith.constant 0 : index
    %c0_198 = arith.constant 0 : index
    %158 = vector.load %arg5[%c3_195, %c1_196, %c0_197, %c0_198] : memref<7x7x8x64xf32, #tpu.memory_space<vmem>>, vector<1x1x8x64xf32>
    %159 = vector.shape_cast %158 : vector<1x1x8x64xf32> to vector<8x64xf32>
    %cst_199 = arith.constant dense<0.000000e+00> : vector<64x64xf32>
    %160 = tpu.matmul %157, %159, %cst_199 {dimension_numbers = #tpu.dot_dimension_numbers<[1], [0], [0], [1], [0, 0, 1, 1], [], []>} : vector<64x8xf32>, vector<8x64xf32>, vector<64x64xf32> -> vector<64x64xf32>
    %161 = arith.addf %154, %160 : vector<64x64xf32>
    %c0_200 = arith.constant 0 : index
    %c1_201 = arith.constant 1 : index
    %c1_202 = arith.constant 1 : index
    %c0_203 = arith.constant 0 : index
    %162 = vector.load %arg3[%c0_200, %c1_201, %c1_202, %c0_203] : memref<1x11x11x8xf32, #tpu.memory_space<vmem>>, vector<1x8x8x8xf32>
    %163 = vector.shape_cast %162 : vector<1x8x8x8xf32> to vector<8x8x8xf32>
    %164 = vector.shape_cast %163 : vector<8x8x8xf32> to vector<64x8xf32>
    %c3_204 = arith.constant 3 : index
    %c2_205 = arith.constant 2 : index
    %c0_206 = arith.constant 0 : index
    %c0_207 = arith.constant 0 : index
    %165 = vector.load %arg5[%c3_204, %c2_205, %c0_206, %c0_207] : memref<7x7x8x64xf32, #tpu.memory_space<vmem>>, vector<1x1x8x64xf32>
    %166 = vector.shape_cast %165 : vector<1x1x8x64xf32> to vector<8x64xf32>
    %cst_208 = arith.constant dense<0.000000e+00> : vector<64x64xf32>
    %167 = tpu.matmul %164, %166, %cst_208 {dimension_numbers = #tpu.dot_dimension_numbers<[1], [0], [0], [1], [0, 0, 1, 1], [], []>} : vector<64x8xf32>, vector<8x64xf32>, vector<64x64xf32> -> vector<64x64xf32>
    %168 = arith.addf %161, %167 : vector<64x64xf32>
    %c0_209 = arith.constant 0 : index
    %c1_210 = arith.constant 1 : index
    %c1_211 = arith.constant 1 : index
    %c0_212 = arith.constant 0 : index
    %169 = vector.load %arg4[%c0_209, %c1_210, %c1_211, %c0_212] : memref<1x11x11x8xf32, #tpu.memory_space<vmem>>, vector<1x8x8x8xf32>
    %170 = vector.shape_cast %169 : vector<1x8x8x8xf32> to vector<8x8x8xf32>
    %171 = vector.shape_cast %170 : vector<8x8x8xf32> to vector<64x8xf32>
    %c3_213 = arith.constant 3 : index
    %c3_214 = arith.constant 3 : index
    %c0_215 = arith.constant 0 : index
    %c0_216 = arith.constant 0 : index
    %172 = vector.load %arg5[%c3_213, %c3_214, %c0_215, %c0_216] : memref<7x7x8x64xf32, #tpu.memory_space<vmem>>, vector<1x1x8x64xf32>
    %173 = vector.shape_cast %172 : vector<1x1x8x64xf32> to vector<8x64xf32>
    %cst_217 = arith.constant dense<0.000000e+00> : vector<64x64xf32>
    %174 = tpu.matmul %171, %173, %cst_217 {dimension_numbers = #tpu.dot_dimension_numbers<[1], [0], [0], [1], [0, 0, 1, 1], [], []>} : vector<64x8xf32>, vector<8x64xf32>, vector<64x64xf32> -> vector<64x64xf32>
    %175 = arith.addf %168, %174 : vector<64x64xf32>
    %c0_218 = arith.constant 0 : index
    %c1_219 = arith.constant 1 : index
    %c2_220 = arith.constant 2 : index
    %c0_221 = arith.constant 0 : index
    %176 = vector.load %arg3[%c0_218, %c1_219, %c2_220, %c0_221] : memref<1x11x11x8xf32, #tpu.memory_space<vmem>>, vector<1x8x8x8xf32>
    %177 = vector.shape_cast %176 : vector<1x8x8x8xf32> to vector<8x8x8xf32>
    %178 = vector.shape_cast %177 : vector<8x8x8xf32> to vector<64x8xf32>
    %c3_222 = arith.constant 3 : index
    %c4_223 = arith.constant 4 : index
    %c0_224 = arith.constant 0 : index
    %c0_225 = arith.constant 0 : index
    %179 = vector.load %arg5[%c3_222, %c4_223, %c0_224, %c0_225] : memref<7x7x8x64xf32, #tpu.memory_space<vmem>>, vector<1x1x8x64xf32>
    %180 = vector.shape_cast %179 : vector<1x1x8x64xf32> to vector<8x64xf32>
    %cst_226 = arith.constant dense<0.000000e+00> : vector<64x64xf32>
    %181 = tpu.matmul %178, %180, %cst_226 {dimension_numbers = #tpu.dot_dimension_numbers<[1], [0], [0], [1], [0, 0, 1, 1], [], []>} : vector<64x8xf32>, vector<8x64xf32>, vector<64x64xf32> -> vector<64x64xf32>
    %182 = arith.addf %175, %181 : vector<64x64xf32>
    %c0_227 = arith.constant 0 : index
    %c1_228 = arith.constant 1 : index
    %c2_229 = arith.constant 2 : index
    %c0_230 = arith.constant 0 : index
    %183 = vector.load %arg4[%c0_227, %c1_228, %c2_229, %c0_230] : memref<1x11x11x8xf32, #tpu.memory_space<vmem>>, vector<1x8x8x8xf32>
    %184 = vector.shape_cast %183 : vector<1x8x8x8xf32> to vector<8x8x8xf32>
    %185 = vector.shape_cast %184 : vector<8x8x8xf32> to vector<64x8xf32>
    %c3_231 = arith.constant 3 : index
    %c5_232 = arith.constant 5 : index
    %c0_233 = arith.constant 0 : index
    %c0_234 = arith.constant 0 : index
    %186 = vector.load %arg5[%c3_231, %c5_232, %c0_233, %c0_234] : memref<7x7x8x64xf32, #tpu.memory_space<vmem>>, vector<1x1x8x64xf32>
    %187 = vector.shape_cast %186 : vector<1x1x8x64xf32> to vector<8x64xf32>
    %cst_235 = arith.constant dense<0.000000e+00> : vector<64x64xf32>
    %188 = tpu.matmul %185, %187, %cst_235 {dimension_numbers = #tpu.dot_dimension_numbers<[1], [0], [0], [1], [0, 0, 1, 1], [], []>} : vector<64x8xf32>, vector<8x64xf32>, vector<64x64xf32> -> vector<64x64xf32>
    %189 = arith.addf %182, %188 : vector<64x64xf32>
    %c0_236 = arith.constant 0 : index
    %c1_237 = arith.constant 1 : index
    %c3_238 = arith.constant 3 : index
    %c0_239 = arith.constant 0 : index
    %190 = vector.load %arg3[%c0_236, %c1_237, %c3_238, %c0_239] : memref<1x11x11x8xf32, #tpu.memory_space<vmem>>, vector<1x8x8x8xf32>
    %191 = vector.shape_cast %190 : vector<1x8x8x8xf32> to vector<8x8x8xf32>
    %192 = vector.shape_cast %191 : vector<8x8x8xf32> to vector<64x8xf32>
    %c3_240 = arith.constant 3 : index
    %c6_241 = arith.constant 6 : index
    %c0_242 = arith.constant 0 : index
    %c0_243 = arith.constant 0 : index
    %193 = vector.load %arg5[%c3_240, %c6_241, %c0_242, %c0_243] : memref<7x7x8x64xf32, #tpu.memory_space<vmem>>, vector<1x1x8x64xf32>
    %194 = vector.shape_cast %193 : vector<1x1x8x64xf32> to vector<8x64xf32>
    %cst_244 = arith.constant dense<0.000000e+00> : vector<64x64xf32>
    %195 = tpu.matmul %192, %194, %cst_244 {dimension_numbers = #tpu.dot_dimension_numbers<[1], [0], [0], [1], [0, 0, 1, 1], [], []>} : vector<64x8xf32>, vector<8x64xf32>, vector<64x64xf32> -> vector<64x64xf32>
    %196 = arith.addf %189, %195 : vector<64x64xf32>
    %c0_245 = arith.constant 0 : index
    %c2_246 = arith.constant 2 : index
    %c0_247 = arith.constant 0 : index
    %c0_248 = arith.constant 0 : index
    %197 = vector.load %arg1[%c0_245, %c2_246, %c0_247, %c0_248] : memref<1x11x11x8xf32, #tpu.memory_space<vmem>>, vector<1x8x8x8xf32>
    %198 = vector.shape_cast %197 : vector<1x8x8x8xf32> to vector<8x8x8xf32>
    %199 = vector.shape_cast %198 : vector<8x8x8xf32> to vector<64x8xf32>
    %c4_249 = arith.constant 4 : index
    %c0_250 = arith.constant 0 : index
    %c0_251 = arith.constant 0 : index
    %c0_252 = arith.constant 0 : index
    %200 = vector.load %arg5[%c4_249, %c0_250, %c0_251, %c0_252] : memref<7x7x8x64xf32, #tpu.memory_space<vmem>>, vector<1x1x8x64xf32>
    %201 = vector.shape_cast %200 : vector<1x1x8x64xf32> to vector<8x64xf32>
    %cst_253 = arith.constant dense<0.000000e+00> : vector<64x64xf32>
    %202 = tpu.matmul %199, %201, %cst_253 {dimension_numbers = #tpu.dot_dimension_numbers<[1], [0], [0], [1], [0, 0, 1, 1], [], []>} : vector<64x8xf32>, vector<8x64xf32>, vector<64x64xf32> -> vector<64x64xf32>
    %203 = arith.addf %196, %202 : vector<64x64xf32>
    %c0_254 = arith.constant 0 : index
    %c2_255 = arith.constant 2 : index
    %c0_256 = arith.constant 0 : index
    %c0_257 = arith.constant 0 : index
    %204 = vector.load %arg2[%c0_254, %c2_255, %c0_256, %c0_257] : memref<1x11x11x8xf32, #tpu.memory_space<vmem>>, vector<1x8x8x8xf32>
    %205 = vector.shape_cast %204 : vector<1x8x8x8xf32> to vector<8x8x8xf32>
    %206 = vector.shape_cast %205 : vector<8x8x8xf32> to vector<64x8xf32>
    %c4_258 = arith.constant 4 : index
    %c1_259 = arith.constant 1 : index
    %c0_260 = arith.constant 0 : index
    %c0_261 = arith.constant 0 : index
    %207 = vector.load %arg5[%c4_258, %c1_259, %c0_260, %c0_261] : memref<7x7x8x64xf32, #tpu.memory_space<vmem>>, vector<1x1x8x64xf32>
    %208 = vector.shape_cast %207 : vector<1x1x8x64xf32> to vector<8x64xf32>
    %cst_262 = arith.constant dense<0.000000e+00> : vector<64x64xf32>
    %209 = tpu.matmul %206, %208, %cst_262 {dimension_numbers = #tpu.dot_dimension_numbers<[1], [0], [0], [1], [0, 0, 1, 1], [], []>} : vector<64x8xf32>, vector<8x64xf32>, vector<64x64xf32> -> vector<64x64xf32>
    %210 = arith.addf %203, %209 : vector<64x64xf32>
    %c0_263 = arith.constant 0 : index
    %c2_264 = arith.constant 2 : index
    %c1_265 = arith.constant 1 : index
    %c0_266 = arith.constant 0 : index
    %211 = vector.load %arg1[%c0_263, %c2_264, %c1_265, %c0_266] : memref<1x11x11x8xf32, #tpu.memory_space<vmem>>, vector<1x8x8x8xf32>
    %212 = vector.shape_cast %211 : vector<1x8x8x8xf32> to vector<8x8x8xf32>
    %213 = vector.shape_cast %212 : vector<8x8x8xf32> to vector<64x8xf32>
    %c4_267 = arith.constant 4 : index
    %c2_268 = arith.constant 2 : index
    %c0_269 = arith.constant 0 : index
    %c0_270 = arith.constant 0 : index
    %214 = vector.load %arg5[%c4_267, %c2_268, %c0_269, %c0_270] : memref<7x7x8x64xf32, #tpu.memory_space<vmem>>, vector<1x1x8x64xf32>
    %215 = vector.shape_cast %214 : vector<1x1x8x64xf32> to vector<8x64xf32>
    %cst_271 = arith.constant dense<0.000000e+00> : vector<64x64xf32>
    %216 = tpu.matmul %213, %215, %cst_271 {dimension_numbers = #tpu.dot_dimension_numbers<[1], [0], [0], [1], [0, 0, 1, 1], [], []>} : vector<64x8xf32>, vector<8x64xf32>, vector<64x64xf32> -> vector<64x64xf32>
    %217 = arith.addf %210, %216 : vector<64x64xf32>
    %c0_272 = arith.constant 0 : index
    %c2_273 = arith.constant 2 : index
    %c1_274 = arith.constant 1 : index
    %c0_275 = arith.constant 0 : index
    %218 = vector.load %arg2[%c0_272, %c2_273, %c1_274, %c0_275] : memref<1x11x11x8xf32, #tpu.memory_space<vmem>>, vector<1x8x8x8xf32>
    %219 = vector.shape_cast %218 : vector<1x8x8x8xf32> to vector<8x8x8xf32>
    %220 = vector.shape_cast %219 : vector<8x8x8xf32> to vector<64x8xf32>
    %c4_276 = arith.constant 4 : index
    %c3_277 = arith.constant 3 : index
    %c0_278 = arith.constant 0 : index
    %c0_279 = arith.constant 0 : index
    %221 = vector.load %arg5[%c4_276, %c3_277, %c0_278, %c0_279] : memref<7x7x8x64xf32, #tpu.memory_space<vmem>>, vector<1x1x8x64xf32>
    %222 = vector.shape_cast %221 : vector<1x1x8x64xf32> to vector<8x64xf32>
    %cst_280 = arith.constant dense<0.000000e+00> : vector<64x64xf32>
    %223 = tpu.matmul %220, %222, %cst_280 {dimension_numbers = #tpu.dot_dimension_numbers<[1], [0], [0], [1], [0, 0, 1, 1], [], []>} : vector<64x8xf32>, vector<8x64xf32>, vector<64x64xf32> -> vector<64x64xf32>
    %224 = arith.addf %217, %223 : vector<64x64xf32>
    %c0_281 = arith.constant 0 : index
    %c2_282 = arith.constant 2 : index
    %c2_283 = arith.constant 2 : index
    %c0_284 = arith.constant 0 : index
    %225 = vector.load %arg1[%c0_281, %c2_282, %c2_283, %c0_284] : memref<1x11x11x8xf32, #tpu.memory_space<vmem>>, vector<1x8x8x8xf32>
    %226 = vector.shape_cast %225 : vector<1x8x8x8xf32> to vector<8x8x8xf32>
    %227 = vector.shape_cast %226 : vector<8x8x8xf32> to vector<64x8xf32>
    %c4_285 = arith.constant 4 : index
    %c4_286 = arith.constant 4 : index
    %c0_287 = arith.constant 0 : index
    %c0_288 = arith.constant 0 : index
    %228 = vector.load %arg5[%c4_285, %c4_286, %c0_287, %c0_288] : memref<7x7x8x64xf32, #tpu.memory_space<vmem>>, vector<1x1x8x64xf32>
    %229 = vector.shape_cast %228 : vector<1x1x8x64xf32> to vector<8x64xf32>
    %cst_289 = arith.constant dense<0.000000e+00> : vector<64x64xf32>
    %230 = tpu.matmul %227, %229, %cst_289 {dimension_numbers = #tpu.dot_dimension_numbers<[1], [0], [0], [1], [0, 0, 1, 1], [], []>} : vector<64x8xf32>, vector<8x64xf32>, vector<64x64xf32> -> vector<64x64xf32>
    %231 = arith.addf %224, %230 : vector<64x64xf32>
    %c0_290 = arith.constant 0 : index
    %c2_291 = arith.constant 2 : index
    %c2_292 = arith.constant 2 : index
    %c0_293 = arith.constant 0 : index
    %232 = vector.load %arg2[%c0_290, %c2_291, %c2_292, %c0_293] : memref<1x11x11x8xf32, #tpu.memory_space<vmem>>, vector<1x8x8x8xf32>
    %233 = vector.shape_cast %232 : vector<1x8x8x8xf32> to vector<8x8x8xf32>
    %234 = vector.shape_cast %233 : vector<8x8x8xf32> to vector<64x8xf32>
    %c4_294 = arith.constant 4 : index
    %c5_295 = arith.constant 5 : index
    %c0_296 = arith.constant 0 : index
    %c0_297 = arith.constant 0 : index
    %235 = vector.load %arg5[%c4_294, %c5_295, %c0_296, %c0_297] : memref<7x7x8x64xf32, #tpu.memory_space<vmem>>, vector<1x1x8x64xf32>
    %236 = vector.shape_cast %235 : vector<1x1x8x64xf32> to vector<8x64xf32>
    %cst_298 = arith.constant dense<0.000000e+00> : vector<64x64xf32>
    %237 = tpu.matmul %234, %236, %cst_298 {dimension_numbers = #tpu.dot_dimension_numbers<[1], [0], [0], [1], [0, 0, 1, 1], [], []>} : vector<64x8xf32>, vector<8x64xf32>, vector<64x64xf32> -> vector<64x64xf32>
    %238 = arith.addf %231, %237 : vector<64x64xf32>
    %c0_299 = arith.constant 0 : index
    %c2_300 = arith.constant 2 : index
    %c3_301 = arith.constant 3 : index
    %c0_302 = arith.constant 0 : index
    %239 = vector.load %arg1[%c0_299, %c2_300, %c3_301, %c0_302] : memref<1x11x11x8xf32, #tpu.memory_space<vmem>>, vector<1x8x8x8xf32>
    %240 = vector.shape_cast %239 : vector<1x8x8x8xf32> to vector<8x8x8xf32>
    %241 = vector.shape_cast %240 : vector<8x8x8xf32> to vector<64x8xf32>
    %c4_303 = arith.constant 4 : index
    %c6_304 = arith.constant 6 : index
    %c0_305 = arith.constant 0 : index
    %c0_306 = arith.constant 0 : index
    %242 = vector.load %arg5[%c4_303, %c6_304, %c0_305, %c0_306] : memref<7x7x8x64xf32, #tpu.memory_space<vmem>>, vector<1x1x8x64xf32>
    %243 = vector.shape_cast %242 : vector<1x1x8x64xf32> to vector<8x64xf32>
    %cst_307 = arith.constant dense<0.000000e+00> : vector<64x64xf32>
    %244 = tpu.matmul %241, %243, %cst_307 {dimension_numbers = #tpu.dot_dimension_numbers<[1], [0], [0], [1], [0, 0, 1, 1], [], []>} : vector<64x8xf32>, vector<8x64xf32>, vector<64x64xf32> -> vector<64x64xf32>
    %245 = arith.addf %238, %244 : vector<64x64xf32>
    %c0_308 = arith.constant 0 : index
    %c2_309 = arith.constant 2 : index
    %c0_310 = arith.constant 0 : index
    %c0_311 = arith.constant 0 : index
    %246 = vector.load %arg3[%c0_308, %c2_309, %c0_310, %c0_311] : memref<1x11x11x8xf32, #tpu.memory_space<vmem>>, vector<1x8x8x8xf32>
    %247 = vector.shape_cast %246 : vector<1x8x8x8xf32> to vector<8x8x8xf32>
    %248 = vector.shape_cast %247 : vector<8x8x8xf32> to vector<64x8xf32>
    %c5_312 = arith.constant 5 : index
    %c0_313 = arith.constant 0 : index
    %c0_314 = arith.constant 0 : index
    %c0_315 = arith.constant 0 : index
    %249 = vector.load %arg5[%c5_312, %c0_313, %c0_314, %c0_315] : memref<7x7x8x64xf32, #tpu.memory_space<vmem>>, vector<1x1x8x64xf32>
    %250 = vector.shape_cast %249 : vector<1x1x8x64xf32> to vector<8x64xf32>
    %cst_316 = arith.constant dense<0.000000e+00> : vector<64x64xf32>
    %251 = tpu.matmul %248, %250, %cst_316 {dimension_numbers = #tpu.dot_dimension_numbers<[1], [0], [0], [1], [0, 0, 1, 1], [], []>} : vector<64x8xf32>, vector<8x64xf32>, vector<64x64xf32> -> vector<64x64xf32>
    %252 = arith.addf %245, %251 : vector<64x64xf32>
    %c0_317 = arith.constant 0 : index
    %c2_318 = arith.constant 2 : index
    %c0_319 = arith.constant 0 : index
    %c0_320 = arith.constant 0 : index
    %253 = vector.load %arg4[%c0_317, %c2_318, %c0_319, %c0_320] : memref<1x11x11x8xf32, #tpu.memory_space<vmem>>, vector<1x8x8x8xf32>
    %254 = vector.shape_cast %253 : vector<1x8x8x8xf32> to vector<8x8x8xf32>
    %255 = vector.shape_cast %254 : vector<8x8x8xf32> to vector<64x8xf32>
    %c5_321 = arith.constant 5 : index
    %c1_322 = arith.constant 1 : index
    %c0_323 = arith.constant 0 : index
    %c0_324 = arith.constant 0 : index
    %256 = vector.load %arg5[%c5_321, %c1_322, %c0_323, %c0_324] : memref<7x7x8x64xf32, #tpu.memory_space<vmem>>, vector<1x1x8x64xf32>
    %257 = vector.shape_cast %256 : vector<1x1x8x64xf32> to vector<8x64xf32>
    %cst_325 = arith.constant dense<0.000000e+00> : vector<64x64xf32>
    %258 = tpu.matmul %255, %257, %cst_325 {dimension_numbers = #tpu.dot_dimension_numbers<[1], [0], [0], [1], [0, 0, 1, 1], [], []>} : vector<64x8xf32>, vector<8x64xf32>, vector<64x64xf32> -> vector<64x64xf32>
    %259 = arith.addf %252, %258 : vector<64x64xf32>
    %c0_326 = arith.constant 0 : index
    %c2_327 = arith.constant 2 : index
    %c1_328 = arith.constant 1 : index
    %c0_329 = arith.constant 0 : index
    %260 = vector.load %arg3[%c0_326, %c2_327, %c1_328, %c0_329] : memref<1x11x11x8xf32, #tpu.memory_space<vmem>>, vector<1x8x8x8xf32>
    %261 = vector.shape_cast %260 : vector<1x8x8x8xf32> to vector<8x8x8xf32>
    %262 = vector.shape_cast %261 : vector<8x8x8xf32> to vector<64x8xf32>
    %c5_330 = arith.constant 5 : index
    %c2_331 = arith.constant 2 : index
    %c0_332 = arith.constant 0 : index
    %c0_333 = arith.constant 0 : index
    %263 = vector.load %arg5[%c5_330, %c2_331, %c0_332, %c0_333] : memref<7x7x8x64xf32, #tpu.memory_space<vmem>>, vector<1x1x8x64xf32>
    %264 = vector.shape_cast %263 : vector<1x1x8x64xf32> to vector<8x64xf32>
    %cst_334 = arith.constant dense<0.000000e+00> : vector<64x64xf32>
    %265 = tpu.matmul %262, %264, %cst_334 {dimension_numbers = #tpu.dot_dimension_numbers<[1], [0], [0], [1], [0, 0, 1, 1], [], []>} : vector<64x8xf32>, vector<8x64xf32>, vector<64x64xf32> -> vector<64x64xf32>
    %266 = arith.addf %259, %265 : vector<64x64xf32>
    %c0_335 = arith.constant 0 : index
    %c2_336 = arith.constant 2 : index
    %c1_337 = arith.constant 1 : index
    %c0_338 = arith.constant 0 : index
    %267 = vector.load %arg4[%c0_335, %c2_336, %c1_337, %c0_338] : memref<1x11x11x8xf32, #tpu.memory_space<vmem>>, vector<1x8x8x8xf32>
    %268 = vector.shape_cast %267 : vector<1x8x8x8xf32> to vector<8x8x8xf32>
    %269 = vector.shape_cast %268 : vector<8x8x8xf32> to vector<64x8xf32>
    %c5_339 = arith.constant 5 : index
    %c3_340 = arith.constant 3 : index
    %c0_341 = arith.constant 0 : index
    %c0_342 = arith.constant 0 : index
    %270 = vector.load %arg5[%c5_339, %c3_340, %c0_341, %c0_342] : memref<7x7x8x64xf32, #tpu.memory_space<vmem>>, vector<1x1x8x64xf32>
    %271 = vector.shape_cast %270 : vector<1x1x8x64xf32> to vector<8x64xf32>
    %cst_343 = arith.constant dense<0.000000e+00> : vector<64x64xf32>
    %272 = tpu.matmul %269, %271, %cst_343 {dimension_numbers = #tpu.dot_dimension_numbers<[1], [0], [0], [1], [0, 0, 1, 1], [], []>} : vector<64x8xf32>, vector<8x64xf32>, vector<64x64xf32> -> vector<64x64xf32>
    %273 = arith.addf %266, %272 : vector<64x64xf32>
    %c0_344 = arith.constant 0 : index
    %c2_345 = arith.constant 2 : index
    %c2_346 = arith.constant 2 : index
    %c0_347 = arith.constant 0 : index
    %274 = vector.load %arg3[%c0_344, %c2_345, %c2_346, %c0_347] : memref<1x11x11x8xf32, #tpu.memory_space<vmem>>, vector<1x8x8x8xf32>
    %275 = vector.shape_cast %274 : vector<1x8x8x8xf32> to vector<8x8x8xf32>
    %276 = vector.shape_cast %275 : vector<8x8x8xf32> to vector<64x8xf32>
    %c5_348 = arith.constant 5 : index
    %c4_349 = arith.constant 4 : index
    %c0_350 = arith.constant 0 : index
    %c0_351 = arith.constant 0 : index
    %277 = vector.load %arg5[%c5_348, %c4_349, %c0_350, %c0_351] : memref<7x7x8x64xf32, #tpu.memory_space<vmem>>, vector<1x1x8x64xf32>
    %278 = vector.shape_cast %277 : vector<1x1x8x64xf32> to vector<8x64xf32>
    %cst_352 = arith.constant dense<0.000000e+00> : vector<64x64xf32>
    %279 = tpu.matmul %276, %278, %cst_352 {dimension_numbers = #tpu.dot_dimension_numbers<[1], [0], [0], [1], [0, 0, 1, 1], [], []>} : vector<64x8xf32>, vector<8x64xf32>, vector<64x64xf32> -> vector<64x64xf32>
    %280 = arith.addf %273, %279 : vector<64x64xf32>
    %c0_353 = arith.constant 0 : index
    %c2_354 = arith.constant 2 : index
    %c2_355 = arith.constant 2 : index
    %c0_356 = arith.constant 0 : index
    %281 = vector.load %arg4[%c0_353, %c2_354, %c2_355, %c0_356] : memref<1x11x11x8xf32, #tpu.memory_space<vmem>>, vector<1x8x8x8xf32>
    %282 = vector.shape_cast %281 : vector<1x8x8x8xf32> to vector<8x8x8xf32>
    %283 = vector.shape_cast %282 : vector<8x8x8xf32> to vector<64x8xf32>
    %c5_357 = arith.constant 5 : index
    %c5_358 = arith.constant 5 : index
    %c0_359 = arith.constant 0 : index
    %c0_360 = arith.constant 0 : index
    %284 = vector.load %arg5[%c5_357, %c5_358, %c0_359, %c0_360] : memref<7x7x8x64xf32, #tpu.memory_space<vmem>>, vector<1x1x8x64xf32>
    %285 = vector.shape_cast %284 : vector<1x1x8x64xf32> to vector<8x64xf32>
    %cst_361 = arith.constant dense<0.000000e+00> : vector<64x64xf32>
    %286 = tpu.matmul %283, %285, %cst_361 {dimension_numbers = #tpu.dot_dimension_numbers<[1], [0], [0], [1], [0, 0, 1, 1], [], []>} : vector<64x8xf32>, vector<8x64xf32>, vector<64x64xf32> -> vector<64x64xf32>
    %287 = arith.addf %280, %286 : vector<64x64xf32>
    %c0_362 = arith.constant 0 : index
    %c2_363 = arith.constant 2 : index
    %c3_364 = arith.constant 3 : index
    %c0_365 = arith.constant 0 : index
    %288 = vector.load %arg3[%c0_362, %c2_363, %c3_364, %c0_365] : memref<1x11x11x8xf32, #tpu.memory_space<vmem>>, vector<1x8x8x8xf32>
    %289 = vector.shape_cast %288 : vector<1x8x8x8xf32> to vector<8x8x8xf32>
    %290 = vector.shape_cast %289 : vector<8x8x8xf32> to vector<64x8xf32>
    %c5_366 = arith.constant 5 : index
    %c6_367 = arith.constant 6 : index
    %c0_368 = arith.constant 0 : index
    %c0_369 = arith.constant 0 : index
    %291 = vector.load %arg5[%c5_366, %c6_367, %c0_368, %c0_369] : memref<7x7x8x64xf32, #tpu.memory_space<vmem>>, vector<1x1x8x64xf32>
    %292 = vector.shape_cast %291 : vector<1x1x8x64xf32> to vector<8x64xf32>
    %cst_370 = arith.constant dense<0.000000e+00> : vector<64x64xf32>
    %293 = tpu.matmul %290, %292, %cst_370 {dimension_numbers = #tpu.dot_dimension_numbers<[1], [0], [0], [1], [0, 0, 1, 1], [], []>} : vector<64x8xf32>, vector<8x64xf32>, vector<64x64xf32> -> vector<64x64xf32>
    %294 = arith.addf %287, %293 : vector<64x64xf32>
    %c0_371 = arith.constant 0 : index
    %c3_372 = arith.constant 3 : index
    %c0_373 = arith.constant 0 : index
    %c0_374 = arith.constant 0 : index
    %295 = vector.load %arg1[%c0_371, %c3_372, %c0_373, %c0_374] : memref<1x11x11x8xf32, #tpu.memory_space<vmem>>, vector<1x8x8x8xf32>
    %296 = vector.shape_cast %295 : vector<1x8x8x8xf32> to vector<8x8x8xf32>
    %297 = vector.shape_cast %296 : vector<8x8x8xf32> to vector<64x8xf32>
    %c6_375 = arith.constant 6 : index
    %c0_376 = arith.constant 0 : index
    %c0_377 = arith.constant 0 : index
    %c0_378 = arith.constant 0 : index
    %298 = vector.load %arg5[%c6_375, %c0_376, %c0_377, %c0_378] : memref<7x7x8x64xf32, #tpu.memory_space<vmem>>, vector<1x1x8x64xf32>
    %299 = vector.shape_cast %298 : vector<1x1x8x64xf32> to vector<8x64xf32>
    %cst_379 = arith.constant dense<0.000000e+00> : vector<64x64xf32>
    %300 = tpu.matmul %297, %299, %cst_379 {dimension_numbers = #tpu.dot_dimension_numbers<[1], [0], [0], [1], [0, 0, 1, 1], [], []>} : vector<64x8xf32>, vector<8x64xf32>, vector<64x64xf32> -> vector<64x64xf32>
    %301 = arith.addf %294, %300 : vector<64x64xf32>
    %c0_380 = arith.constant 0 : index
    %c3_381 = arith.constant 3 : index
    %c0_382 = arith.constant 0 : index
    %c0_383 = arith.constant 0 : index
    %302 = vector.load %arg2[%c0_380, %c3_381, %c0_382, %c0_383] : memref<1x11x11x8xf32, #tpu.memory_space<vmem>>, vector<1x8x8x8xf32>
    %303 = vector.shape_cast %302 : vector<1x8x8x8xf32> to vector<8x8x8xf32>
    %304 = vector.shape_cast %303 : vector<8x8x8xf32> to vector<64x8xf32>
    %c6_384 = arith.constant 6 : index
    %c1_385 = arith.constant 1 : index
    %c0_386 = arith.constant 0 : index
    %c0_387 = arith.constant 0 : index
    %305 = vector.load %arg5[%c6_384, %c1_385, %c0_386, %c0_387] : memref<7x7x8x64xf32, #tpu.memory_space<vmem>>, vector<1x1x8x64xf32>
    %306 = vector.shape_cast %305 : vector<1x1x8x64xf32> to vector<8x64xf32>
    %cst_388 = arith.constant dense<0.000000e+00> : vector<64x64xf32>
    %307 = tpu.matmul %304, %306, %cst_388 {dimension_numbers = #tpu.dot_dimension_numbers<[1], [0], [0], [1], [0, 0, 1, 1], [], []>} : vector<64x8xf32>, vector<8x64xf32>, vector<64x64xf32> -> vector<64x64xf32>
    %308 = arith.addf %301, %307 : vector<64x64xf32>
    %c0_389 = arith.constant 0 : index
    %c3_390 = arith.constant 3 : index
    %c1_391 = arith.constant 1 : index
    %c0_392 = arith.constant 0 : index
    %309 = vector.load %arg1[%c0_389, %c3_390, %c1_391, %c0_392] : memref<1x11x11x8xf32, #tpu.memory_space<vmem>>, vector<1x8x8x8xf32>
    %310 = vector.shape_cast %309 : vector<1x8x8x8xf32> to vector<8x8x8xf32>
    %311 = vector.shape_cast %310 : vector<8x8x8xf32> to vector<64x8xf32>
    %c6_393 = arith.constant 6 : index
    %c2_394 = arith.constant 2 : index
    %c0_395 = arith.constant 0 : index
    %c0_396 = arith.constant 0 : index
    %312 = vector.load %arg5[%c6_393, %c2_394, %c0_395, %c0_396] : memref<7x7x8x64xf32, #tpu.memory_space<vmem>>, vector<1x1x8x64xf32>
    %313 = vector.shape_cast %312 : vector<1x1x8x64xf32> to vector<8x64xf32>
    %cst_397 = arith.constant dense<0.000000e+00> : vector<64x64xf32>
    %314 = tpu.matmul %311, %313, %cst_397 {dimension_numbers = #tpu.dot_dimension_numbers<[1], [0], [0], [1], [0, 0, 1, 1], [], []>} : vector<64x8xf32>, vector<8x64xf32>, vector<64x64xf32> -> vector<64x64xf32>
    %315 = arith.addf %308, %314 : vector<64x64xf32>
    %c0_398 = arith.constant 0 : index
    %c3_399 = arith.constant 3 : index
    %c1_400 = arith.constant 1 : index
    %c0_401 = arith.constant 0 : index
    %316 = vector.load %arg2[%c0_398, %c3_399, %c1_400, %c0_401] : memref<1x11x11x8xf32, #tpu.memory_space<vmem>>, vector<1x8x8x8xf32>
    %317 = vector.shape_cast %316 : vector<1x8x8x8xf32> to vector<8x8x8xf32>
    %318 = vector.shape_cast %317 : vector<8x8x8xf32> to vector<64x8xf32>
    %c6_402 = arith.constant 6 : index
    %c3_403 = arith.constant 3 : index
    %c0_404 = arith.constant 0 : index
    %c0_405 = arith.constant 0 : index
    %319 = vector.load %arg5[%c6_402, %c3_403, %c0_404, %c0_405] : memref<7x7x8x64xf32, #tpu.memory_space<vmem>>, vector<1x1x8x64xf32>
    %320 = vector.shape_cast %319 : vector<1x1x8x64xf32> to vector<8x64xf32>
    %cst_406 = arith.constant dense<0.000000e+00> : vector<64x64xf32>
    %321 = tpu.matmul %318, %320, %cst_406 {dimension_numbers = #tpu.dot_dimension_numbers<[1], [0], [0], [1], [0, 0, 1, 1], [], []>} : vector<64x8xf32>, vector<8x64xf32>, vector<64x64xf32> -> vector<64x64xf32>
    %322 = arith.addf %315, %321 : vector<64x64xf32>
    %c0_407 = arith.constant 0 : index
    %c3_408 = arith.constant 3 : index
    %c2_409 = arith.constant 2 : index
    %c0_410 = arith.constant 0 : index
    %323 = vector.load %arg1[%c0_407, %c3_408, %c2_409, %c0_410] : memref<1x11x11x8xf32, #tpu.memory_space<vmem>>, vector<1x8x8x8xf32>
    %324 = vector.shape_cast %323 : vector<1x8x8x8xf32> to vector<8x8x8xf32>
    %325 = vector.shape_cast %324 : vector<8x8x8xf32> to vector<64x8xf32>
    %c6_411 = arith.constant 6 : index
    %c4_412 = arith.constant 4 : index
    %c0_413 = arith.constant 0 : index
    %c0_414 = arith.constant 0 : index
    %326 = vector.load %arg5[%c6_411, %c4_412, %c0_413, %c0_414] : memref<7x7x8x64xf32, #tpu.memory_space<vmem>>, vector<1x1x8x64xf32>
    %327 = vector.shape_cast %326 : vector<1x1x8x64xf32> to vector<8x64xf32>
    %cst_415 = arith.constant dense<0.000000e+00> : vector<64x64xf32>
    %328 = tpu.matmul %325, %327, %cst_415 {dimension_numbers = #tpu.dot_dimension_numbers<[1], [0], [0], [1], [0, 0, 1, 1], [], []>} : vector<64x8xf32>, vector<8x64xf32>, vector<64x64xf32> -> vector<64x64xf32>
    %329 = arith.addf %322, %328 : vector<64x64xf32>
    %c0_416 = arith.constant 0 : index
    %c3_417 = arith.constant 3 : index
    %c2_418 = arith.constant 2 : index
    %c0_419 = arith.constant 0 : index
    %330 = vector.load %arg2[%c0_416, %c3_417, %c2_418, %c0_419] : memref<1x11x11x8xf32, #tpu.memory_space<vmem>>, vector<1x8x8x8xf32>
    %331 = vector.shape_cast %330 : vector<1x8x8x8xf32> to vector<8x8x8xf32>
    %332 = vector.shape_cast %331 : vector<8x8x8xf32> to vector<64x8xf32>
    %c6_420 = arith.constant 6 : index
    %c5_421 = arith.constant 5 : index
    %c0_422 = arith.constant 0 : index
    %c0_423 = arith.constant 0 : index
    %333 = vector.load %arg5[%c6_420, %c5_421, %c0_422, %c0_423] : memref<7x7x8x64xf32, #tpu.memory_space<vmem>>, vector<1x1x8x64xf32>
    %334 = vector.shape_cast %333 : vector<1x1x8x64xf32> to vector<8x64xf32>
    %cst_424 = arith.constant dense<0.000000e+00> : vector<64x64xf32>
    %335 = tpu.matmul %332, %334, %cst_424 {dimension_numbers = #tpu.dot_dimension_numbers<[1], [0], [0], [1], [0, 0, 1, 1], [], []>} : vector<64x8xf32>, vector<8x64xf32>, vector<64x64xf32> -> vector<64x64xf32>
    %336 = arith.addf %329, %335 : vector<64x64xf32>
    %c0_425 = arith.constant 0 : index
    %c3_426 = arith.constant 3 : index
    %c3_427 = arith.constant 3 : index
    %c0_428 = arith.constant 0 : index
    %337 = vector.load %arg1[%c0_425, %c3_426, %c3_427, %c0_428] : memref<1x11x11x8xf32, #tpu.memory_space<vmem>>, vector<1x8x8x8xf32>
    %338 = vector.shape_cast %337 : vector<1x8x8x8xf32> to vector<8x8x8xf32>
    %339 = vector.shape_cast %338 : vector<8x8x8xf32> to vector<64x8xf32>
    %c6_429 = arith.constant 6 : index
    %c6_430 = arith.constant 6 : index
    %c0_431 = arith.constant 0 : index
    %c0_432 = arith.constant 0 : index
    %340 = vector.load %arg5[%c6_429, %c6_430, %c0_431, %c0_432] : memref<7x7x8x64xf32, #tpu.memory_space<vmem>>, vector<1x1x8x64xf32>
    %341 = vector.shape_cast %340 : vector<1x1x8x64xf32> to vector<8x64xf32>
    %cst_433 = arith.constant dense<0.000000e+00> : vector<64x64xf32>
    %342 = tpu.matmul %339, %341, %cst_433 {dimension_numbers = #tpu.dot_dimension_numbers<[1], [0], [0], [1], [0, 0, 1, 1], [], []>} : vector<64x8xf32>, vector<8x64xf32>, vector<64x64xf32> -> vector<64x64xf32>
    %343 = arith.addf %336, %342 : vector<64x64xf32>
    %c0_434 = arith.constant 0 : index
    %c0_435 = arith.constant 0 : index
    %344 = vector.load %arg6[%c0_434, %c0_435] : memref<1x64xf32, #tpu.memory_space<vmem>>, vector<1x64xf32>
    %345 = vector.broadcast %344 : vector<1x64xf32> to vector<64x64xf32>
    %346 = arith.addf %343, %345 : vector<64x64xf32>
    %cst_436 = arith.constant 0.000000e+00 : f32
    %347 = vector.broadcast %cst_436 : f32 to vector<64x64xf32>
    %348 = arith.maximumf %346, %347 : vector<64x64xf32>
    %c0_437 = arith.constant 0 : index
    %c0_438 = arith.constant 0 : index
    %349 = vector.load %arg7[%c0_437, %c0_438] : memref<64x2048xf32, #tpu.memory_space<vmem>>, vector<64x2048xf32>
    %cst_439 = arith.constant dense<0.000000e+00> : vector<64x2048xf32>
    %350 = tpu.matmul %348, %349, %cst_439 {dimension_numbers = #tpu.dot_dimension_numbers<[1], [0], [0], [1], [0, 0, 1, 1], [], []>} : vector<64x64xf32>, vector<64x2048xf32>, vector<64x2048xf32> -> vector<64x2048xf32>
    %351 = tpu.iota {dimensions = array<i32: 0>} : vector<64x2048xi32>
    %352 = tpu.iota {dimensions = array<i32: 1>} : vector<64x2048xi32>
    %c32_i32 = arith.constant 32 : i32
    %353 = vector.broadcast %c32_i32 : i32 to vector<64x2048xi32>
    %354 = arith.muli %351, %353 : vector<64x2048xi32>
    %355 = arith.cmpi sge, %352, %354 : vector<64x2048xi32>
    %c1_i32 = arith.constant 1 : i32
    %356 = vector.broadcast %c1_i32 : i32 to vector<64x2048xi32>
    %357 = arith.addi %351, %356 : vector<64x2048xi32>
    %c32_i32_440 = arith.constant 32 : i32
    %358 = vector.broadcast %c32_i32_440 : i32 to vector<64x2048xi32>
    %359 = arith.muli %357, %358 : vector<64x2048xi32>
    %360 = arith.cmpi slt, %352, %359 : vector<64x2048xi32>
    %361 = arith.andi %355, %360 : vector<64x2048xi1>
    %cst_441 = arith.constant 0.000000e+00 : f32
    %362 = vector.broadcast %cst_441 : f32 to vector<64x2048xf32>
    %363 = arith.select %361, %350, %362 : vector<64x2048xi1>, vector<64x2048xf32>
    %cst_442 = arith.constant dense<0.000000e+00> : vector<2048xf32>
    %364 = vector.multi_reduction <add>, %363, %cst_442 [0] : vector<64x2048xf32> to vector<2048xf32>
    %365 = vector.shape_cast %364 : vector<2048xf32> to vector<1x2048xf32>
    %c32_i32_443 = arith.constant 32 : i32
    %366 = tpu.dynamic_rotate %365 by %c32_i32_443 dim 1 : vector<1x2048xf32>, i32 -> vector<1x2048xf32>
    %367 = arith.addf %365, %366 : vector<1x2048xf32>
    %c64_i32 = arith.constant 64 : i32
    %368 = tpu.dynamic_rotate %367 by %c64_i32 dim 1 : vector<1x2048xf32>, i32 -> vector<1x2048xf32>
    %369 = arith.addf %367, %368 : vector<1x2048xf32>
    %c128_i32 = arith.constant 128 : i32
    %370 = tpu.dynamic_rotate %369 by %c128_i32 dim 1 : vector<1x2048xf32>, i32 -> vector<1x2048xf32>
    %371 = arith.addf %369, %370 : vector<1x2048xf32>
    %c256_i32 = arith.constant 256 : i32
    %372 = tpu.dynamic_rotate %371 by %c256_i32 dim 1 : vector<1x2048xf32>, i32 -> vector<1x2048xf32>
    %373 = arith.addf %371, %372 : vector<1x2048xf32>
    %c512_i32 = arith.constant 512 : i32
    %374 = tpu.dynamic_rotate %373 by %c512_i32 dim 1 : vector<1x2048xf32>, i32 -> vector<1x2048xf32>
    %375 = arith.addf %373, %374 : vector<1x2048xf32>
    %c1024_i32 = arith.constant 1024 : i32
    %376 = tpu.dynamic_rotate %375 by %c1024_i32 dim 1 : vector<1x2048xf32>, i32 -> vector<1x2048xf32>
    %377 = arith.addf %375, %376 : vector<1x2048xf32>
    %378 = vector.extract_strided_slice %377 {offsets = [0, 0], sizes = [1, 32], strides = [1, 1]} : vector<1x2048xf32> to vector<1x32xf32>
    %c0_444 = arith.constant 0 : index
    %c0_445 = arith.constant 0 : index
    %379 = vector.load %arg8[%c0_444, %c0_445] : memref<1x32xf32, #tpu.memory_space<vmem>>, vector<1x32xf32>
    %380 = arith.addf %378, %379 : vector<1x32xf32>
    %381 = vector.shape_cast %380 : vector<1x32xf32> to vector<1x1x32xf32>
    %c0_446 = arith.constant 0 : index
    %c0_447 = arith.constant 0 : index
    %c0_448 = arith.constant 0 : index
    %382 = vector.load %arg9[%c0_446, %c0_447, %c0_448] : memref<1x1x32xf32, #tpu.memory_space<vmem>>, vector<1x1x32xf32>
    tpu.vector_store %arg9[%c0_446, %c0_447, %c0_448], %381 {strides = array<i32>} : memref<1x1x32xf32, #tpu.memory_space<vmem>>, vector<1x1x32xf32>,
    return
  }
  func.func @transform_0(%arg0: i32) -> (i32, i32, i32, i32) {
    %c0_i32 = arith.constant 0 : i32
    %c0_i32_0 = arith.constant 0 : i32
    %c0_i32_1 = arith.constant 0 : i32
    %c0_i32_2 = arith.constant 0 : i32
    return %arg0, %c0_i32, %c0_i32_0, %c0_i32_1 : i32, i32, i32, i32
  }
  func.func @transform_1(%arg0: i32) -> (i32, i32, i32, i32) {
    %c0_i32 = arith.constant 0 : i32
    %c0_i32_0 = arith.constant 0 : i32
    %c0_i32_1 = arith.constant 0 : i32
    %c0_i32_2 = arith.constant 0 : i32
    return %arg0, %c0_i32, %c0_i32_0, %c0_i32_1 : i32, i32, i32, i32
  }
  func.func @transform_2(%arg0: i32) -> (i32, i32, i32, i32) {
    %c0_i32 = arith.constant 0 : i32
    %c0_i32_0 = arith.constant 0 : i32
    %c0_i32_1 = arith.constant 0 : i32
    %c0_i32_2 = arith.constant 0 : i32
    return %arg0, %c0_i32, %c0_i32_0, %c0_i32_1 : i32, i32, i32, i32
  }
  func.func @transform_3(%arg0: i32) -> (i32, i32, i32, i32) {
    %c0_i32 = arith.constant 0 : i32
    %c0_i32_0 = arith.constant 0 : i32
    %c0_i32_1 = arith.constant 0 : i32
    %c0_i32_2 = arith.constant 0 : i32
    return %arg0, %c0_i32, %c0_i32_0, %c0_i32_1 : i32, i32, i32, i32
  }
  func.func @transform_4(%arg0: i32) -> (i32, i32, i32, i32) {
    %c0_i32 = arith.constant 0 : i32
    %c0_i32_0 = arith.constant 0 : i32
    %c0_i32_1 = arith.constant 0 : i32
    %c0_i32_2 = arith.constant 0 : i32
    %c0_i32_3 = arith.constant 0 : i32
    return %c0_i32, %c0_i32_0, %c0_i32_1, %c0_i32_2 : i32, i32, i32, i32
  }
  func.func @transform_5(%arg0: i32) -> (i32, i32) {
    %c0_i32 = arith.constant 0 : i32
    %c0_i32_0 = arith.constant 0 : i32
    %c0_i32_1 = arith.constant 0 : i32
    return %c0_i32, %c0_i32_0 : i32, i32
  }
  func.func @transform_6(%arg0: i32) -> (i32, i32) {
    %c0_i32 = arith.constant 0 : i32
    %c0_i32_0 = arith.constant 0 : i32
    %c0_i32_1 = arith.constant 0 : i32
    return %c0_i32, %c0_i32_0 : i32, i32
  }
  func.func @transform_7(%arg0: i32) -> (i32, i32) {
    %c0_i32 = arith.constant 0 : i32
    %c0_i32_0 = arith.constant 0 : i32
    %c0_i32_1 = arith.constant 0 : i32
    return %c0_i32, %c0_i32_0 : i32, i32
  }
  func.func @transform_8(%arg0: i32) -> (i32, i32, i32) {
    %c0_i32 = arith.constant 0 : i32
    %c0_i32_0 = arith.constant 0 : i32
    %c0_i32_1 = arith.constant 0 : i32
    return %arg0, %c0_i32, %c0_i32_0 : i32, i32, i32
  }
}

</mosaic_0001>

<llo_original>
// kernel: vision_core_forward.1
$region0: #{vision_core_forward.1}
  #allocation0 [shape = 'u32[]', space=smem, size = 0x4, offset = 0x4, fixed_abs, tag = 'smem constant byte address 0x4 - core index']
  #allocation1 [shape = 'u32[144,128]{1,0:T(1,128)}', space=vmem, size = 0x12000, scoped, tag = 'internal scratch']
  %s0 = inlined_call_operand.vmem [shape: f32[2,11,11,8], index: 0, kind: input, shape index: {}]
  %s1 = inlined_call_operand.vmem [shape: f32[2,11,11,8], index: 1, kind: input, shape index: {}]
  %s2 = inlined_call_operand.vmem [shape: f32[2,11,11,8], index: 2, kind: input, shape index: {}]
  %s3 = inlined_call_operand.vmem [shape: f32[2,11,11,8], index: 3, kind: input, shape index: {}]
  %s4 = inlined_call_operand.vmem [shape: f32[7,7,8,64], index: 4, kind: input, shape index: {}]
  %s5 = inlined_call_operand.vmem [shape: f32[1,64], index: 5, kind: input, shape index: {}]
  %s6 = inlined_call_operand.vmem [shape: f32[64,2048], index: 6, kind: input, shape index: {}]
  %s7 = inlined_call_operand.vmem [shape: f32[1,32], index: 7, kind: input, shape index: {}]
  %s8 = inlined_call_operand.hbm [shape: f32[2,1,32], index: 8, kind: output, shape index: {}]
  %s9 = sld [smem:[#allocation0]]
  $region65: #{vision_core_forward.1} parent=0
    _
  %s11 = ssub.s32 1, %s9
  %s12 = scalar_select 0, %s11, %s9
  $region1: #{vision_core_forward.1} parent=0
    #allocation2 [shape = 'u8[1024]{0}', space=vmem, size = 0x400, scoped, tag = 'output window, operand 0']
    #allocation3 [shape = 's32[2]{0}', space=sflag, size = 0x8, scoped, tag = 'scoped memory for vision_core_forward.1']
    %13 = vsyncpa [#allocation3], 0
    %s14 = scalar_lea.sflag [#allocation3], 1
    %15 = vsyncpa %s14, 0
    loop: start=0, step=1, limit=4
    $region2: #{vision_core_forward.1} parent=1 // loop_pre_header
      _
    $region3: #{vision_core_forward.1} parent=1 // loop_header
      %s17 = sphi 0, %s21
      %p18 = scmp.ge.s32.totalorder %s17, 4
      %s27 = sphi 0, %s29
      %s30 = sphi 0, %s27
      %s31 = sphi 0, %s30
      %s47 = sphi 0, %s31
      %s53 = sphi 0, %s55
      %s56 = sphi 0, %s53
      %s57 = sphi 0, %s56
      %s73 = sphi 0, %s57
      %s79 = sphi 0, %s81
      %s82 = sphi 0, %s79
      %s83 = sphi 0, %s82
      %s99 = sphi 0, %s83
      %s105 = sphi 0, %s107
      %s108 = sphi 0, %s105
      %s109 = sphi 0, %s108
      %s125 = sphi 0, %s109
      %s129 = sphi 0, %s129
      %s131 = sphi 0, %s129
      %s132 = sphi 0, %s131
      %s146 = sphi 0, %s132
      %s150 = sphi 0, %s150
      %s152 = sphi 0, %s150
      %s153 = sphi 0, %s152
      %s167 = sphi 0, %s153
      %s171 = sphi 0, %s171
      %s173 = sphi 0, %s171
      %s174 = sphi 0, %s173
      %s188 = sphi 0, %s174
      %s192 = sphi 0, %s192
      %s194 = sphi 0, %s192
      %s195 = sphi 0, %s194
      %s209 = sphi 0, %s195
      %s215 = sphi 0, %s217
      %s218 = sphi 0, %s215
      %s219 = sphi 0, %s218
      %s235 = sphi 0, %s219
    $region4: #{vision_core_forward.1} parent=1 // loop_header_branch
      %20 = sbr.rel (%p18) target = $region8
    $region5: #{vision_core_forward.1} parent=1 // loop_body
      %s22 = ssub.s32 %s17, 1
      %s23 = ssub.s32 %s17, 2
      %s24 = sadd.s32 %s17, 1
      %s25 = ssub.s32 %s17, %s24
      %p26 = scmp.eq.s32.totalorder %s25, 0
      %s28 = sadd.s32 %s27, 1
      %s29 = scalar_select %p26, %s27, %s28
      %p32 = pneg %p26
      %p33 = scmp.eq.s32.totalorder %s17, 1
      %p34 = por %p32, %p33
      %p35 = scmp.ne.s32.totalorder %s27, %s30
      %p36 = scmp.eq.s32.totalorder %s17, 0
      %p37 = por %p35, %p36
      %p38 = scmp.ne.s32.totalorder %s27, %s30
      %p39 = scmp.eq.s32.totalorder %s22, 1
      %p40 = por %p38, %p39
      %p41 = scmp.ne.s32.totalorder %s30, %s31
      %p42 = scmp.eq.s32.totalorder %s22, 0
      %p43 = por %p41, %p42
      %p44 = scmp.ne.s32.totalorder %s30, %s31
      %p45 = scmp.eq.s32.totalorder %s23, 1
      %p46 = por %p44, %p45
      %p48 = scmp.ne.s32.totalorder %s31, %s47
      %p49 = scmp.eq.s32.totalorder %s23, 0
      %p50 = por %p48, %p49
      %s51 = ssub.s32 %s17, %s24
      %p52 = scmp.eq.s32.totalorder %s51, 0
      %s54 = sadd.s32 %s53, 1
      %s55 = scalar_select %p52, %s53, %s54
      %p58 = pneg %p52
      %p59 = scmp.eq.s32.totalorder %s17, 1
      %p60 = por %p58, %p59
      %p61 = scmp.ne.s32.totalorder %s53, %s56
      %p62 = scmp.eq.s32.totalorder %s17, 0
      %p63 = por %p61, %p62
      %p64 = scmp.ne.s32.totalorder %s53, %s56
      %p65 = scmp.eq.s32.totalorder %s22, 1
      %p66 = por %p64, %p65
      %p67 = scmp.ne.s32.totalorder %s56, %s57
      %p68 = scmp.eq.s32.totalorder %s22, 0
      %p69 = por %p67, %p68
      %p70 = scmp.ne.s32.totalorder %s56, %s57
      %p71 = scmp.eq.s32.totalorder %s23, 1
      %p72 = por %p70, %p71
      %p74 = scmp.ne.s32.totalorder %s57, %s73
      %p75 = scmp.eq.s32.totalorder %s23, 0
      %p76 = por %p74, %p75
      %s77 = ssub.s32 %s17, %s24
      %p78 = scmp.eq.s32.totalorder %s77, 0
      %s80 = sadd.s32 %s79, 1
      %s81 = scalar_select %p78, %s79, %s80
      %p84 = pneg %p78
      %p85 = scmp.eq.s32.totalorder %s17, 1
      %p86 = por %p84, %p85
      %p87 = scmp.ne.s32.totalorder %s79, %s82
      %p88 = scmp.eq.s32.totalorder %s17, 0
      %p89 = por %p87, %p88
      %p90 = scmp.ne.s32.totalorder %s79, %s82
      %p91 = scmp.eq.s32.totalorder %s22, 1
      %p92 = por %p90, %p91
      %p93 = scmp.ne.s32.totalorder %s82, %s83
      %p94 = scmp.eq.s32.totalorder %s22, 0
      %p95 = por %p93, %p94
      %p96 = scmp.ne.s32.totalorder %s82, %s83
      %p97 = scmp.eq.s32.totalorder %s23, 1
      %p98 = por %p96, %p97
      %p100 = scmp.ne.s32.totalorder %s83, %s99
      %p101 = scmp.eq.s32.totalorder %s23, 0
      %p102 = por %p100, %p101
      %s103 = ssub.s32 %s17, %s24
      %p104 = scmp.eq.s32.totalorder %s103, 0
      %s106 = sadd.s32 %s105, 1
      %s107 = scalar_select %p104, %s105, %s106
      %p110 = pneg %p104
      %p111 = scmp.eq.s32.totalorder %s17, 1
      %p112 = por %p110, %p111
      %p113 = scmp.ne.s32.totalorder %s105, %s108
      %p114 = scmp.eq.s32.totalorder %s17, 0
      %p115 = por %p113, %p114
      %p116 = scmp.ne.s32.totalorder %s105, %s108
      %p117 = scmp.eq.s32.totalorder %s22, 1
      %p118 = por %p116, %p117
      %p119 = scmp.ne.s32.totalorder %s108, %s109
      %p120 = scmp.eq.s32.totalorder %s22, 0
      %p121 = por %p119, %p120
      %p122 = scmp.ne.s32.totalorder %s108, %s109
      %p123 = scmp.eq.s32.totalorder %s23, 1
      %p124 = por %p122, %p123
      %p126 = scmp.ne.s32.totalorder %s109, %s125
      %p127 = scmp.eq.s32.totalorder %s23, 0
      %p128 = por %p126, %p127
      %s130 = sadd.s32 %s129, 1
      %p133 = scmp.eq.s32.totalorder %s17, 1
      %p134 = scmp.ne.s32.totalorder %s129, %s131
      %p135 = scmp.eq.s32.totalorder %s17, 0
      %p136 = por %p134, %p135
      %p137 = scmp.ne.s32.totalorder %s129, %s131
      %p138 = scmp.eq.s32.totalorder %s22, 1
      %p139 = por %p137, %p138
      %p140 = scmp.ne.s32.totalorder %s131, %s132
      %p141 = scmp.eq.s32.totalorder %s22, 0
      %p142 = por %p140, %p141
      %p143 = scmp.ne.s32.totalorder %s131, %s132
      %p144 = scmp.eq.s32.totalorder %s23, 1
      %p145 = por %p143, %p144
      %p147 = scmp.ne.s32.totalorder %s132, %s146
      %p148 = scmp.eq.s32.totalorder %s23, 0
      %p149 = por %p147, %p148
      %s151 = sadd.s32 %s150, 1
      %p154 = scmp.eq.s32.totalorder %s17, 1
      %p155 = scmp.ne.s32.totalorder %s150, %s152
      %p156 = scmp.eq.s32.totalorder %s17, 0
      %p157 = por %p155, %p156
      %p158 = scmp.ne.s32.totalorder %s150, %s152
      %p159 = scmp.eq.s32.totalorder %s22, 1
      %p160 = por %p158, %p159
      %p161 = scmp.ne.s32.totalorder %s152, %s153
      %p162 = scmp.eq.s32.totalorder %s22, 0
      %p163 = por %p161, %p162
      %p164 = scmp.ne.s32.totalorder %s152, %s153
      %p165 = scmp.eq.s32.totalorder %s23, 1
      %p166 = por %p164, %p165
      %p168 = scmp.ne.s32.totalorder %s153, %s167
      %p169 = scmp.eq.s32.totalorder %s23, 0
      %p170 = por %p168, %p169
      %s172 = sadd.s32 %s171, 1
      %p175 = scmp.eq.s32.totalorder %s17, 1
      %p176 = scmp.ne.s32.totalorder %s171, %s173
      %p177 = scmp.eq.s32.totalorder %s17, 0
      %p178 = por %p176, %p177
      %p179 = scmp.ne.s32.totalorder %s171, %s173
      %p180 = scmp.eq.s32.totalorder %s22, 1
      %p181 = por %p179, %p180
      %p182 = scmp.ne.s32.totalorder %s173, %s174
      %p183 = scmp.eq.s32.totalorder %s22, 0
      %p184 = por %p182, %p183
      %p185 = scmp.ne.s32.totalorder %s173, %s174
      %p186 = scmp.eq.s32.totalorder %s23, 1
      %p187 = por %p185, %p186
      %p189 = scmp.ne.s32.totalorder %s174, %s188
      %p190 = scmp.eq.s32.totalorder %s23, 0
      %p191 = por %p189, %p190
      %s193 = sadd.s32 %s192, 1
      %p196 = scmp.eq.s32.totalorder %s17, 1
      %p197 = scmp.ne.s32.totalorder %s192, %s194
      %p198 = scmp.eq.s32.totalorder %s17, 0
      %p199 = por %p197, %p198
      %p200 = scmp.ne.s32.totalorder %s192, %s194
      %p201 = scmp.eq.s32.totalorder %s22, 1
      %p202 = por %p200, %p201
      %p203 = scmp.ne.s32.totalorder %s194, %s195
      %p204 = scmp.eq.s32.totalorder %s22, 0
      %p205 = por %p203, %p204
      %p206 = scmp.ne.s32.totalorder %s194, %s195
      %p207 = scmp.eq.s32.totalorder %s23, 1
      %p208 = por %p206, %p207
      %p210 = scmp.ne.s32.totalorder %s195, %s209
      %p211 = scmp.eq.s32.totalorder %s23, 0
      %p212 = por %p210, %p211
      %s213 = ssub.s32 %s17, %s24
      %p214 = scmp.eq.s32.totalorder %s213, 0
      %s216 = sadd.s32 %s215, 1
      %s217 = scalar_select %p214, %s215, %s216
      %p220 = pneg %p214
      %p221 = scmp.eq.s32.totalorder %s17, 1
      %p222 = por %p220, %p221
      %p223 = scmp.ne.s32.totalorder %s215, %s218
      %p224 = scmp.eq.s32.totalorder %s17, 0
      %p225 = por %p223, %p224
      %p226 = scmp.ne.s32.totalorder %s215, %s218
      %p227 = scmp.eq.s32.totalorder %s22, 1
      %p228 = por %p226, %p227
      %p229 = scmp.ne.s32.totalorder %s218, %s219
      %p230 = scmp.eq.s32.totalorder %s22, 0
      %p231 = por %p229, %p230
      %p232 = scmp.ne.s32.totalorder %s218, %s219
      %p233 = scmp.eq.s32.totalorder %s23, 1
      %p234 = por %p232, %p233
      %p236 = scmp.ne.s32.totalorder %s219, %s235
      %p237 = scmp.eq.s32.totalorder %s23, 0
      %p238 = por %p236, %p237
      %p239 = scmp.le.s32.totalorder 1, %s17
      %p240 = scmp.lt.s32.totalorder %s17, 3
      %p241 = pnand %p239, %p240
      %p242 = pneg %p241
      // Predicated region
      $region9: #{vision_core_forward.1} parent=5 // pred_check
        _
      $region10: #{vision_core_forward.1} parent=5 // pred_check_branch
        %244 = sbr.rel (%p241) target = $region12
      $region11: #{vision_core_forward.1} parent=5 // pred_region
        %s245 = ssub.s32 %s17, 1
        // Predicated region
        $region13: #{vision_core_forward.1} parent=11 // pred_check
          %p246 = pneg %p142
        $region14: #{vision_core_forward.1} parent=11 // pred_check_branch
          %248 = sbr.rel (%p246) target = $region16
        $region15: #{vision_core_forward.1} parent=11 // pred_region
          _
        $region16: #{vision_core_forward.1} parent=11 // pred_fallthru
          _
        // Predicated region
        $region17: #{vision_core_forward.1} parent=11 // pred_check
          %p249 = pneg %p163
        $region18: #{vision_core_forward.1} parent=11 // pred_check_branch
          %251 = sbr.rel (%p249) target = $region20
        $region19: #{vision_core_forward.1} parent=11 // pred_region
          _
        $region20: #{vision_core_forward.1} parent=11 // pred_fallthru
          _
        // Predicated region
        $region21: #{vision_core_forward.1} parent=11 // pred_check
          %p252 = pneg %p184
        $region22: #{vision_core_forward.1} parent=11 // pred_check_branch
          %254 = sbr.rel (%p252) target = $region24
        $region23: #{vision_core_forward.1} parent=11 // pred_region
          _
        $region24: #{vision_core_forward.1} parent=11 // pred_fallthru
          _
        // Predicated region
        $region25: #{vision_core_forward.1} parent=11 // pred_check
          %p255 = pneg %p205
        $region26: #{vision_core_forward.1} parent=11 // pred_check_branch
          %257 = sbr.rel (%p255) target = $region28
        $region27: #{vision_core_forward.1} parent=11 // pred_region
          _
        $region28: #{vision_core_forward.1} parent=11 // pred_fallthru
          _
      $region12: #{vision_core_forward.1} parent=5 // pred_fallthru
        _
      %p258 = scmp.lt.s32.totalorder %s17, 2
      // Predicated region
      $region29: #{vision_core_forward.1} parent=5 // pred_check
        %p259 = pneg %p258
      $region30: #{vision_core_forward.1} parent=5 // pred_check_branch
        %261 = sbr.rel (%p259) target = $region32
      $region31: #{vision_core_forward.1} parent=5 // pred_region
        // Predicated region
        $region33: #{vision_core_forward.1} parent=31 // pred_check
          %p262 = pneg %p37
        $region34: #{vision_core_forward.1} parent=31 // pred_check_branch
          %264 = sbr.rel (%p262) target = $region36
        $region35: #{vision_core_forward.1} parent=31 // pred_region
          %p265 = scmp.lt.s32.totalorder %s17, 1
          %s266 = scalar_select %p265, %s17, 1
          %s267 = smul.addr %s266, 22
          %s268 = smul.addr %s267, 8
          %s269 = scalar_lea.vmem %s0, %s268
        $region36: #{vision_core_forward.1} parent=31 // pred_fallthru
          _
        // Predicated region
        $region37: #{vision_core_forward.1} parent=31 // pred_check
          %p270 = pneg %p63
        $region38: #{vision_core_forward.1} parent=31 // pred_check_branch
          %272 = sbr.rel (%p270) target = $region40
        $region39: #{vision_core_forward.1} parent=31 // pred_region
          %p273 = scmp.lt.s32.totalorder %s17, 1
          %s274 = scalar_select %p273, %s17, 1
          %s275 = smul.addr %s274, 22
          %s276 = smul.addr %s275, 8
          %s277 = scalar_lea.vmem %s1, %s276
        $region40: #{vision_core_forward.1} parent=31 // pred_fallthru
          _
        // Predicated region
        $region41: #{vision_core_forward.1} parent=31 // pred_check
          %p278 = pneg %p89
        $region42: #{vision_core_forward.1} parent=31 // pred_check_branch
          %280 = sbr.rel (%p278) target = $region44
        $region43: #{vision_core_forward.1} parent=31 // pred_region
          %p281 = scmp.lt.s32.totalorder %s17, 1
          %s282 = scalar_select %p281, %s17, 1
          %s283 = smul.addr %s282, 22
          %s284 = smul.addr %s283, 8
          %s285 = scalar_lea.vmem %s2, %s284
        $region44: #{vision_core_forward.1} parent=31 // pred_fallthru
          _
        // Predicated region
        $region45: #{vision_core_forward.1} parent=31 // pred_check
          %p286 = pneg %p115
        $region46: #{vision_core_forward.1} parent=31 // pred_check_branch
          %288 = sbr.rel (%p286) target = $region48
        $region47: #{vision_core_forward.1} parent=31 // pred_region
          %p289 = scmp.lt.s32.totalorder %s17, 1
          %s290 = scalar_select %p289, %s17, 1
          %s291 = smul.addr %s290, 22
          %s292 = smul.addr %s291, 8
          %s293 = scalar_lea.vmem %s3, %s292
        $region48: #{vision_core_forward.1} parent=31 // pred_fallthru
          _
      $region32: #{vision_core_forward.1} parent=5 // pred_fallthru
        _
      %p294 = scmp.le.s32.totalorder 1, %s17
      %p295 = scmp.lt.s32.totalorder %s17, 3
      %p296 = pnand %p294, %p295
      %p297 = pneg %p296
      // Predicated region
      $region49: #{vision_core_forward.1} parent=5 // pred_check
        _
      $region50: #{vision_core_forward.1} parent=5 // pred_check_branch
        %299 = sbr.rel (%p296) target = $region52
      $region51: #{vision_core_forward.1} parent=5 // pred_region
        %s300 = ssub.s32 %s17, 1
        %p301 = scmp.lt.s32.totalorder %s22, 1
        %s302 = scalar_select %p301, %s22, 1
        %s303 = smul.addr %s302, 22
        %s304 = smul.addr %s303, 8
        %s305 = scalar_lea.vmem %s0, %s304
        %p306 = pneg %p43
        %p307 = pneg %p40
        %p308 = scmp.lt.s32.totalorder %s22, 1
        %s309 = scalar_select %p308, %s22, 1
        %s310 = smul.addr %s309, 22
        %s311 = smul.addr %s310, 8
        %s312 = scalar_lea.vmem %s1, %s311
        %p313 = pneg %p69
        %p314 = pneg %p66
        %p315 = scmp.lt.s32.totalorder %s22, 1
        %s316 = scalar_select %p315, %s22, 1
        %s317 = smul.addr %s316, 22
        %s318 = smul.addr %s317, 8
        %s319 = scalar_lea.vmem %s2, %s318
        %p320 = pneg %p95
        %p321 = pneg %p92
        %p322 = scmp.lt.s32.totalorder %s22, 1
        %s323 = scalar_select %p322, %s22, 1
        %s324 = smul.addr %s323, 22
        %s325 = smul.addr %s324, 8
        %s326 = scalar_lea.vmem %s3, %s325
        %p327 = pneg %p121
        %p328 = pneg %p118
        %p329 = pneg %p142
        %p330 = pneg %p139
        %p331 = pneg %p163
        %p332 = pneg %p160
        %p333 = pneg %p184
        %p334 = pneg %p181
        %p335 = pneg %p205
        %p336 = pneg %p202
        %p337 = pneg %p231
        %p338 = pneg %p228
        %s339 = sand.u32 %s218, 1
        %s340 = scalar_lea.sflag [#allocation3], %s339
        %s341 = sand.u32 %s218, 1
        %s342 = scalar_lea.vmem [#allocation2], %s341
        %p343 = scmp.lt.s32.totalorder %s22, 1
        %s344 = scalar_select %p343, %s22, 1
        %s345 = smul.addr %s344, 22
        %s346 = smul.addr %s345, 8
        %s347 = scalar_lea.vmem %s0, %s346
        %p348 = scmp.lt.s32.totalorder %s22, 1
        %s349 = scalar_select %p348, %s22, 1
        %s350 = smul.addr %s349, 22
        %s351 = smul.addr %s350, 8
        %s352 = scalar_lea.vmem %s1, %s351
        %p353 = scmp.lt.s32.totalorder %s22, 1
        %s354 = scalar_select %p353, %s22, 1
        %s355 = smul.addr %s354, 22
        %s356 = smul.addr %s355, 8
        %s357 = scalar_lea.vmem %s2, %s356
        %p358 = scmp.lt.s32.totalorder %s22, 1
        %s359 = scalar_select %p358, %s22, 1
        %s360 = smul.addr %s359, 22
        %s361 = smul.addr %s360, 8
        %s362 = scalar_lea.vmem %s3, %s361
        %v363 = vld [vmem:[%s347] sm:$0xff]
        %v364 = vld [vmem:[%s347 + $0x10] sm:$0xff]
        %v365 = vld [vmem:[%s347 + $0x20] sm:$0xff]
        %v366 = vld [vmem:[%s347 + $0x30] sm:$0xff]
        %v367 = vld [vmem:[%s347 + $0x40] sm:$0xff]
        %v368 = vld [vmem:[%s347 + $0x50] sm:$0xff]
        %v369 = vld [vmem:[%s347 + $0x60] sm:$0xff]
        %v370 = vld [vmem:[%s347 + $0x70] sm:$0xff]
        %v371 = vld [vmem:[%s4] sm:$0xff]
        %v372 = vld [vmem:[%s352] sm:$0xff]
        %v373 = vld [vmem:[%s352 + $0x10] sm:$0xff]
        %v374 = vld [vmem:[%s352 + $0x20] sm:$0xff]
        %v375 = vld [vmem:[%s352 + $0x30] sm:$0xff]
        %v376 = vld [vmem:[%s352 + $0x40] sm:$0xff]
        %v377 = vld [vmem:[%s352 + $0x50] sm:$0xff]
        %v378 = vld [vmem:[%s352 + $0x60] sm:$0xff]
        %v379 = vld [vmem:[%s352 + $0x70] sm:$0xff]
        %s380 = scalar_lea.vmem %s4, 8
        %v381 = vld [vmem:[%s380] sm:$0xff]
        %vm382 = vcmask 64512
        %v384 = vsel %vm382, %v372, 0
        %v387 = vsel %vm382, %v373, 0
        %v390 = vsel %vm382, %v374, 0
        %v393 = vsel %vm382, %v375, 0
        %v396 = vsel %vm382, %v376, 0
        %v399 = vsel %vm382, %v377, 0
        %v402 = vsel %vm382, %v378, 0
        %v405 = vsel %vm382, %v379, 0
        %407 = vmatprep.subr.mxu0 0.0
        %408 = vmatpush1.msra.mxu0 0.0
        %409 = vmatprep.subr.mxu0 0.0
        %410 = vmatpush1.msra.mxu0 0.0
        %411 = vmatprep.subr.mxu0 0.0
        %412 = vmatpush1.msra.mxu0 0.0
        %413 = vmatprep.subr.mxu0 0.0
        %414 = vmatpush1.msra.mxu0 0.0
        %415 = vmatprep.subr.mxu0 0.0
        %416 = vmatpush1.msra.mxu0 0.0
        %417 = vmatprep.subr.mxu0 0.0
        %418 = vmatpush1.msra.mxu0 0.0
        %419 = vmatprep.subr.mxu0 0.0
        %420 = vmatpush1.msra.mxu0 0.0
        %421 = vmatprep.subr.mxu0 0.0
        %422 = vmatpush1.msra.mxu0 0.0
        %423 = vmatprep.subr.mxu0 0.0
        %424 = vmatpush1.msra.mxu0 0.0
        %425 = vmatprep.subr.mxu0 0.0
        %426 = vmatpush1.msra.mxu0 0.0
        %427 = vmatprep.subr.mxu0 0.0
        %428 = vmatpush1.msra.mxu0 0.0
        %429 = vmatprep.subr.mxu0 0.0
        %430 = vmatpush1.msra.mxu0 0.0
        %431 = vmatprep.subr.mxu0 0.0
        %432 = vmatpush1.msra.mxu0 0.0
        %433 = vmatprep.subr.mxu0 0.0
        %434 = vmatpush1.msra.mxu0 0.0
        %435 = vmatprep.subr.mxu0 0.0
        %436 = vmatpush1.msra.mxu0 0.0
        %437 = vmatprep.subr.mxu0 0.0
        %438 = vmatpush1.msra.mxu0 %v381
        %439 = vmatprep.subr.mxu0 0.0
        %440 = vmatpush2.msra.mxu0 0.0
        %441 = vmatprep.subr.mxu0 0.0
        %442 = vmatpush2.msra.mxu0 0.0
        %443 = vmatprep.subr.mxu0 0.0
        %444 = vmatpush2.msra.mxu0 0.0
        %445 = vmatprep.subr.mxu0 0.0
        %446 = vmatpush2.msra.mxu0 0.0
        %447 = vmatprep.subr.mxu0 0.0
        %448 = vmatpush2.msra.mxu0 0.0
        %449 = vmatprep.subr.mxu0 0.0
        %450 = vmatpush2.msra.mxu0 0.0
        %451 = vmatprep.subr.mxu0 0.0
        %452 = vmatpush2.msra.mxu0 0.0
        %453 = vmatprep.subr.mxu0 0.0
        %454 = vmatpush2.msra.mxu0 0.0
        %455 = vmatprep.subr.mxu0 0.0
        %456 = vmatpush2.msra.mxu0 0.0
        %457 = vmatprep.subr.mxu0 0.0
        %458 = vmatpush2.msra.mxu0 0.0
        %459 = vmatprep.subr.mxu0 0.0
        %460 = vmatpush2.msra.mxu0 0.0
        %461 = vmatprep.subr.mxu0 0.0
        %462 = vmatpush2.msra.mxu0 0.0
        %463 = vmatprep.subr.mxu0 0.0
        %464 = vmatpush2.msra.mxu0 0.0
        %465 = vmatprep.subr.mxu0 0.0
        %466 = vmatpush2.msra.mxu0 0.0
        %467 = vmatprep.subr.mxu0 0.0
        %468 = vmatpush2.msra.mxu0 0.0
        %469 = vmatprep.subr.mxu0 0.0
        %470 = vmatpush2.msra.mxu0 0.0
        %471 = vmatprep.mubr.f32.mxu0 0.0
        %472 = vmatmul.mubr.f32.gmra.mxu0 %v384
        %v473 = vpop.f32.mrf.mxu0
        %v474 = vadd.f32 0.0, %v473
        %v475 = vpop.f32.mrf.mxu0
        %476 = vmatprep.mubr.f32.mxu0 0.0
        %477 = vmatmul.mubr.f32.gmra.mxu0 %v387
        %v478 = vpop.f32.mrf.mxu0
        %v479 = vadd.f32 0.0, %v478
        %v480 = vpop.f32.mrf.mxu0
        %481 = vmatprep.mubr.f32.mxu0 0.0
        %482 = vmatmul.mubr.f32.gmra.mxu0 %v390
        %v483 = vpop.f32.mrf.mxu0
        %v484 = vadd.f32 0.0, %v483
        %v485 = vpop.f32.mrf.mxu0
        %486 = vmatprep.mubr.f32.mxu0 0.0
        %487 = vmatmul.mubr.f32.gmra.mxu0 %v393
        %v488 = vpop.f32.mrf.mxu0
        %v489 = vadd.f32 0.0, %v488
        %v490 = vpop.f32.mrf.mxu0
        %491 = vmatprep.mubr.f32.mxu0 0.0
        %492 = vmatmul.mubr.f32.gmra.mxu0 %v396
        %v493 = vpop.f32.mrf.mxu0
        %v494 = vadd.f32 0.0, %v493
        %v495 = vpop.f32.mrf.mxu0
        %496 = vmatprep.mubr.f32.mxu0 0.0
        %497 = vmatmul.mubr.f32.gmra.mxu0 %v399
        %v498 = vpop.f32.mrf.mxu0
        %v499 = vadd.f32 0.0, %v498
        %v500 = vpop.f32.mrf.mxu0
        %501 = vmatprep.mubr.f32.mxu0 0.0
        %502 = vmatmul.mubr.f32.gmra.mxu0 %v402
        %v503 = vpop.f32.mrf.mxu0
        %v504 = vadd.f32 0.0, %v503
        %v505 = vpop.f32.mrf.mxu0
        %506 = vmatprep.mubr.f32.mxu0 0.0
        %507 = vmatmul.mubr.f32.gmra.mxu0 %v405
        %v508 = vpop.f32.mrf.mxu0
        %v509 = vadd.f32 0.0, %v508
        %v510 = vpop.f32.mrf.mxu0
        %511 = vdwg.mxu0
        %v513 = vsel %vm382, %v363, 0
        %v516 = vsel %vm382, %v364, 0
        %v519 = vsel %vm382, %v365, 0
        %v522 = vsel %vm382, %v366, 0
        %v525 = vsel %vm382, %v367, 0
        %v528 = vsel %vm382, %v368, 0
        %v531 = vsel %vm382, %v369, 0
        %v534 = vsel %vm382, %v370, 0
        %536 = vmatprep.subr.mxu0 0.0
        %537 = vmatpush1.msra.mxu0 0.0
        %538 = vmatprep.subr.mxu0 0.0
        %539 = vmatpush1.msra.mxu0 0.0
        %540 = vmatprep.subr.mxu0 0.0
        %541 = vmatpush1.msra.mxu0 0.0
        %542 = vmatprep.subr.mxu0 0.0
        %543 = vmatpush1.msra.mxu0 0.0
        %544 = vmatprep.subr.mxu0 0.0
        %545 = vmatpush1.msra.mxu0 0.0
        %546 = vmatprep.subr.mxu0 0.0
        %547 = vmatpush1.msra.mxu0 0.0
        %548 = vmatprep.subr.mxu0 0.0
        %549 = vmatpush1.msra.mxu0 0.0
        %550 = vmatprep.subr.mxu0 0.0
        %551 = vmatpush1.msra.mxu0 0.0
        %552 = vmatprep.subr.mxu0 0.0
        %553 = vmatpush1.msra.mxu0 0.0
        %554 = vmatprep.subr.mxu0 0.0
        %555 = vmatpush1.msra.mxu0 0.0
        %556 = vmatprep.subr.mxu0 0.0
        %557 = vmatpush1.msra.mxu0 0.0
        %558 = vmatprep.subr.mxu0 0.0
        %559 = vmatpush1.msra.mxu0 0.0
        %560 = vmatprep.subr.mxu0 0.0
        %561 = vmatpush1.msra.mxu0 0.0
        %562 = vmatprep.subr.mxu0 0.0
        %563 = vmatpush1.msra.mxu0 0.0
        %564 = vmatprep.subr.mxu0 0.0
        %565 = vmatpush1.msra.mxu0 0.0
        %566 = vmatprep.subr.mxu0 0.0
        %567 = vmatpush1.msra.mxu0 %v371
        %568 = vmatprep.subr.mxu0 0.0
        %569 = vmatpush2.msra.mxu0 0.0
        %570 = vmatprep.subr.mxu0 0.0
        %571 = vmatpush2.msra.mxu0 0.0
        %572 = vmatprep.subr.mxu0 0.0
        %573 = vmatpush2.msra.mxu0 0.0
        %574 = vmatprep.subr.mxu0 0.0
        %575 = vmatpush2.msra.mxu0 0.0
        %576 = vmatprep.subr.mxu0 0.0
        %577 = vmatpush2.msra.mxu0 0.0
        %578 = vmatprep.subr.mxu0 0.0
        %579 = vmatpush2.msra.mxu0 0.0
        %580 = vmatprep.subr.mxu0 0.0
        %581 = vmatpush2.msra.mxu0 0.0
        %582 = vmatprep.subr.mxu0 0.0
        %583 = vmatpush2.msra.mxu0 0.0
        %584 = vmatprep.subr.mxu0 0.0
        %585 = vmatpush2.msra.mxu0 0.0
        %586 = vmatprep.subr.mxu0 0.0
        %587 = vmatpush2.msra.mxu0 0.0
        %588 = vmatprep.subr.mxu0 0.0
        %589 = vmatpush2.msra.mxu0 0.0
        %590 = vmatprep.subr.mxu0 0.0
        %591 = vmatpush2.msra.mxu0 0.0
        %592 = vmatprep.subr.mxu0 0.0
        %593 = vmatpush2.msra.mxu0 0.0
        %594 = vmatprep.subr.mxu0 0.0
        %595 = vmatpush2.msra.mxu0 0.0
        %596 = vmatprep.subr.mxu0 0.0
        %597 = vmatpush2.msra.mxu0 0.0
        %598 = vmatprep.subr.mxu0 0.0
        %599 = vmatpush2.msra.mxu0 0.0
        %600 = vmatprep.mubr.f32.mxu0 0.0
        %601 = vmatmul.mubr.f32.gmra.mxu0 %v513
        %v602 = vpop.f32.mrf.mxu0
        %v603 = vadd.f32 %v474, %v602
        %v604 = vpop.f32.mrf.mxu0
        %605 = vmatprep.mubr.f32.mxu0 0.0
        %606 = vmatmul.mubr.f32.gmra.mxu0 %v516
        %v607 = vpop.f32.mrf.mxu0
        %v608 = vadd.f32 %v479, %v607
        %v609 = vpop.f32.mrf.mxu0
        %610 = vmatprep.mubr.f32.mxu0 0.0
        %611 = vmatmul.mubr.f32.gmra.mxu0 %v519
        %v612 = vpop.f32.mrf.mxu0
        %v613 = vadd.f32 %v484, %v612
        %v614 = vpop.f32.mrf.mxu0
        %615 = vmatprep.mubr.f32.mxu0 0.0
        %616 = vmatmul.mubr.f32.gmra.mxu0 %v522
        %v617 = vpop.f32.mrf.mxu0
        %v618 = vadd.f32 %v489, %v617
        %v619 = vpop.f32.mrf.mxu0
        %620 = vmatprep.mubr.f32.mxu0 0.0
        %621 = vmatmul.mubr.f32.gmra.mxu0 %v525
        %v622 = vpop.f32.mrf.mxu0
        %v623 = vadd.f32 %v494, %v622
        %v624 = vpop.f32.mrf.mxu0
        %625 = vmatprep.mubr.f32.mxu0 0.0
        %626 = vmatmul.mubr.f32.gmra.mxu0 %v528
        %v627 = vpop.f32.mrf.mxu0
        %v628 = vadd.f32 %v499, %v627
        %v629 = vpop.f32.mrf.mxu0
        %630 = vmatprep.mubr.f32.mxu0 0.0
        %631 = vmatmul.mubr.f32.gmra.mxu0 %v531
        %v632 = vpop.f32.mrf.mxu0
        %v633 = vadd.f32 %v504, %v632
        %v634 = vpop.f32.mrf.mxu0
        %635 = vmatprep.mubr.f32.mxu0 0.0
        %636 = vmatmul.mubr.f32.gmra.mxu0 %v534
        %v637 = vpop.f32.mrf.mxu0
        %v638 = vadd.f32 %v509, %v637
        %v639 = vpop.f32.mrf.mxu0
        %640 = vdwg.mxu0
        %v641 = vld [vmem:[%s347 + $0x1] sm:$0xff]
        %v642 = vld [vmem:[%s347 + $0x11] sm:$0xff]
        %v643 = vld [vmem:[%s347 + $0x21] sm:$0xff]
        %v644 = vld [vmem:[%s347 + $0x31] sm:$0xff]
        %v645 = vld [vmem:[%s347 + $0x41] sm:$0xff]
        %v646 = vld [vmem:[%s347 + $0x51] sm:$0xff]
        %v647 = vld [vmem:[%s347 + $0x61] sm:$0xff]
        %v648 = vld [vmem:[%s347 + $0x71] sm:$0xff]
        %s649 = scalar_lea.vmem %s4, 16
        %v650 = vld [vmem:[%s649] sm:$0xff]
        %v652 = vsel %vm382, %v641, 0
        %v655 = vsel %vm382, %v642, 0
        %v658 = vsel %vm382, %v643, 0
        %v661 = vsel %vm382, %v644, 0
        %v664 = vsel %vm382, %v645, 0
        %v667 = vsel %vm382, %v646, 0
        %v670 = vsel %vm382, %v647, 0
        %v673 = vsel %vm382, %v648, 0
        %675 = vmatprep.subr.mxu0 0.0
        %676 = vmatpush1.msra.mxu0 0.0
        %677 = vmatprep.subr.mxu0 0.0
        %678 = vmatpush1.msra.mxu0 0.0
        %679 = vmatprep.subr.mxu0 0.0
        %680 = vmatpush1.msra.mxu0 0.0
        %681 = vmatprep.subr.mxu0 0.0
        %682 = vmatpush1.msra.mxu0 0.0
        %683 = vmatprep.subr.mxu0 0.0
        %684 = vmatpush1.msra.mxu0 0.0
        %685 = vmatprep.subr.mxu0 0.0
        %686 = vmatpush1.msra.mxu0 0.0
        %687 = vmatprep.subr.mxu0 0.0
        %688 = vmatpush1.msra.mxu0 0.0
        %689 = vmatprep.subr.mxu0 0.0
        %690 = vmatpush1.msra.mxu0 0.0
        %691 = vmatprep.subr.mxu0 0.0
        %692 = vmatpush1.msra.mxu0 0.0
        %693 = vmatprep.subr.mxu0 0.0
        %694 = vmatpush1.msra.mxu0 0.0
        %695 = vmatprep.subr.mxu0 0.0
        %696 = vmatpush1.msra.mxu0 0.0
        %697 = vmatprep.subr.mxu0 0.0
        %698 = vmatpush1.msra.mxu0 0.0
        %699 = vmatprep.subr.mxu0 0.0
        %700 = vmatpush1.msra.mxu0 0.0
        %701 = vmatprep.subr.mxu0 0.0
        %702 = vmatpush1.msra.mxu0 0.0
        %703 = vmatprep.subr.mxu0 0.0
        %704 = vmatpush1.msra.mxu0 0.0
        %705 = vmatprep.subr.mxu0 0.0
        %706 = vmatpush1.msra.mxu0 %v650
        %707 = vmatprep.subr.mxu0 0.0
        %708 = vmatpush2.msra.mxu0 0.0
        %709 = vmatprep.subr.mxu0 0.0
        %710 = vmatpush2.msra.mxu0 0.0
        %711 = vmatprep.subr.mxu0 0.0
        %712 = vmatpush2.msra.mxu0 0.0
        %713 = vmatprep.subr.mxu0 0.0
        %714 = vmatpush2.msra.mxu0 0.0
        %715 = vmatprep.subr.mxu0 0.0
        %716 = vmatpush2.msra.mxu0 0.0
        %717 = vmatprep.subr.mxu0 0.0
        %718 = vmatpush2.msra.mxu0 0.0
        %719 = vmatprep.subr.mxu0 0.0
        %720 = vmatpush2.msra.mxu0 0.0
        %721 = vmatprep.subr.mxu0 0.0
        %722 = vmatpush2.msra.mxu0 0.0
        %723 = vmatprep.subr.mxu0 0.0
        %724 = vmatpush2.msra.mxu0 0.0
        %725 = vmatprep.subr.mxu0 0.0
        %726 = vmatpush2.msra.mxu0 0.0
        %727 = vmatprep.subr.mxu0 0.0
        %728 = vmatpush2.msra.mxu0 0.0
        %729 = vmatprep.subr.mxu0 0.0
        %730 = vmatpush2.msra.mxu0 0.0
        %731 = vmatprep.subr.mxu0 0.0
        %732 = vmatpush2.msra.mxu0 0.0
        %733 = vmatprep.subr.mxu0 0.0
        %734 = vmatpush2.msra.mxu0 0.0
        %735 = vmatprep.subr.mxu0 0.0
        %736 = vmatpush2.msra.mxu0 0.0
        %737 = vmatprep.subr.mxu0 0.0
        %738 = vmatpush2.msra.mxu0 0.0
        %739 = vmatprep.mubr.f32.mxu0 0.0
        %740 = vmatmul.mubr.f32.gmra.mxu0 %v652
        %v741 = vpop.f32.mrf.mxu0
        %v742 = vadd.f32 0.0, %v741
        %v743 = vpop.f32.mrf.mxu0
        %744 = vmatprep.mubr.f32.mxu0 0.0
        %745 = vmatmul.mubr.f32.gmra.mxu0 %v655
        %v746 = vpop.f32.mrf.mxu0
        %v747 = vadd.f32 0.0, %v746
        %v748 = vpop.f32.mrf.mxu0
        %749 = vmatprep.mubr.f32.mxu0 0.0
        %750 = vmatmul.mubr.f32.gmra.mxu0 %v658
        %v751 = vpop.f32.mrf.mxu0
        %v752 = vadd.f32 0.0, %v751
        %v753 = vpop.f32.mrf.mxu0
        %754 = vmatprep.mubr.f32.mxu0 0.0
        %755 = vmatmul.mubr.f32.gmra.mxu0 %v661
        %v756 = vpop.f32.mrf.mxu0
        %v757 = vadd.f32 0.0, %v756
        %v758 = vpop.f32.mrf.mxu0
        %759 = vmatprep.mubr.f32.mxu0 0.0
        %760 = vmatmul.mubr.f32.gmra.mxu0 %v664
        %v761 = vpop.f32.mrf.mxu0
        %v762 = vadd.f32 0.0, %v761
        %v763 = vpop.f32.mrf.mxu0
        %764 = vmatprep.mubr.f32.mxu0 0.0
        %765 = vmatmul.mubr.f32.gmra.mxu0 %v667
        %v766 = vpop.f32.mrf.mxu0
        %v767 = vadd.f32 0.0, %v766
        %v768 = vpop.f32.mrf.mxu0
        %769 = vmatprep.mubr.f32.mxu0 0.0
        %770 = vmatmul.mubr.f32.gmra.mxu0 %v670
        %v771 = vpop.f32.mrf.mxu0
        %v772 = vadd.f32 0.0, %v771
        %v773 = vpop.f32.mrf.mxu0
        %774 = vmatprep.mubr.f32.mxu0 0.0
        %775 = vmatmul.mubr.f32.gmra.mxu0 %v673
        %v776 = vpop.f32.mrf.mxu0
        %v777 = vadd.f32 0.0, %v776
        %v778 = vpop.f32.mrf.mxu0
        %779 = vdwg.mxu0
        %v780 = vadd.f32 %v603, %v742
        %v781 = vadd.f32 %v608, %v747
        %v782 = vadd.f32 %v613, %v752
        %v783 = vadd.f32 %v618, %v757
        %v784 = vadd.f32 %v623, %v762
        %v785 = vadd.f32 %v628, %v767
        %v786 = vadd.f32 %v633, %v772
        %v787 = vadd.f32 %v638, %v777
        %v788 = vld [vmem:[%s352 + $0x1] sm:$0xff]
        %v789 = vld [vmem:[%s352 + $0x11] sm:$0xff]
        %v790 = vld [vmem:[%s352 + $0x21] sm:$0xff]
        %v791 = vld [vmem:[%s352 + $0x31] sm:$0xff]
        %v792 = vld [vmem:[%s352 + $0x41] sm:$0xff]
        %v793 = vld [vmem:[%s352 + $0x51] sm:$0xff]
        %v794 = vld [vmem:[%s352 + $0x61] sm:$0xff]
        %v795 = vld [vmem:[%s352 + $0x71] sm:$0xff]
        %s796 = scalar_lea.vmem %s4, 24
        %v797 = vld [vmem:[%s796] sm:$0xff]
        %v799 = vsel %vm382, %v788, 0
        %v802 = vsel %vm382, %v789, 0
        %v805 = vsel %vm382, %v790, 0
        %v808 = vsel %vm382, %v791, 0
        %v811 = vsel %vm382, %v792, 0
        %v814 = vsel %vm382, %v793, 0
        %v817 = vsel %vm382, %v794, 0
        %v820 = vsel %vm382, %v795, 0
        %822 = vmatprep.subr.mxu0 0.0
        %823 = vmatpush1.msra.mxu0 0.0
        %824 = vmatprep.subr.mxu0 0.0
        %825 = vmatpush1.msra.mxu0 0.0
        %826 = vmatprep.subr.mxu0 0.0
        %827 = vmatpush1.msra.mxu0 0.0
        %828 = vmatprep.subr.mxu0 0.0
        %829 = vmatpush1.msra.mxu0 0.0
        %830 = vmatprep.subr.mxu0 0.0
        %831 = vmatpush1.msra.mxu0 0.0
        %832 = vmatprep.subr.mxu0 0.0
        %833 = vmatpush1.msra.mxu0 0.0
        %834 = vmatprep.subr.mxu0 0.0
        %835 = vmatpush1.msra.mxu0 0.0
        %836 = vmatprep.subr.mxu0 0.0
        %837 = vmatpush1.msra.mxu0 0.0
        %838 = vmatprep.subr.mxu0 0.0
        %839 = vmatpush1.msra.mxu0 0.0
        %840 = vmatprep.subr.mxu0 0.0
        %841 = vmatpush1.msra.mxu0 0.0
        %842 = vmatprep.subr.mxu0 0.0
        %843 = vmatpush1.msra.mxu0 0.0
        %844 = vmatprep.subr.mxu0 0.0
        %845 = vmatpush1.msra.mxu0 0.0
        %846 = vmatprep.subr.mxu0 0.0
        %847 = vmatpush1.msra.mxu0 0.0
        %848 = vmatprep.subr.mxu0 0.0
        %849 = vmatpush1.msra.mxu0 0.0
        %850 = vmatprep.subr.mxu0 0.0
        %851 = vmatpush1.msra.mxu0 0.0
        %852 = vmatprep.subr.mxu0 0.0
        %853 = vmatpush1.msra.mxu0 %v797
        %854 = vmatprep.subr.mxu0 0.0
        %855 = vmatpush2.msra.mxu0 0.0
        %856 = vmatprep.subr.mxu0 0.0
        %857 = vmatpush2.msra.mxu0 0.0
        %858 = vmatprep.subr.mxu0 0.0
        %859 = vmatpush2.msra.mxu0 0.0
        %860 = vmatprep.subr.mxu0 0.0
        %861 = vmatpush2.msra.mxu0 0.0
        %862 = vmatprep.subr.mxu0 0.0
        %863 = vmatpush2.msra.mxu0 0.0
        %864 = vmatprep.subr.mxu0 0.0
        %865 = vmatpush2.msra.mxu0 0.0
        %866 = vmatprep.subr.mxu0 0.0
        %867 = vmatpush2.msra.mxu0 0.0
        %868 = vmatprep.subr.mxu0 0.0
        %869 = vmatpush2.msra.mxu0 0.0
        %870 = vmatprep.subr.mxu0 0.0
        %871 = vmatpush2.msra.mxu0 0.0
        %872 = vmatprep.subr.mxu0 0.0
        %873 = vmatpush2.msra.mxu0 0.0
        %874 = vmatprep.subr.mxu0 0.0
        %875 = vmatpush2.msra.mxu0 0.0
        %876 = vmatprep.subr.mxu0 0.0
        %877 = vmatpush2.msra.mxu0 0.0
        %878 = vmatprep.subr.mxu0 0.0
        %879 = vmatpush2.msra.mxu0 0.0
        %880 = vmatprep.subr.mxu0 0.0
        %881 = vmatpush2.msra.mxu0 0.0
        %882 = vmatprep.subr.mxu0 0.0
        %883 = vmatpush2.msra.mxu0 0.0
        %884 = vmatprep.subr.mxu0 0.0
        %885 = vmatpush2.msra.mxu0 0.0
        %886 = vmatprep.mubr.f32.mxu0 0.0
        %887 = vmatmul.mubr.f32.gmra.mxu0 %v799
        %v888 = vpop.f32.mrf.mxu0
        %v889 = vadd.f32 0.0, %v888
        %v890 = vpop.f32.mrf.mxu0
        %891 = vmatprep.mubr.f32.mxu0 0.0
        %892 = vmatmul.mubr.f32.gmra.mxu0 %v802
        %v893 = vpop.f32.mrf.mxu0
        %v894 = vadd.f32 0.0, %v893
        %v895 = vpop.f32.mrf.mxu0
        %896 = vmatprep.mubr.f32.mxu0 0.0
        %897 = vmatmul.mubr.f32.gmra.mxu0 %v805
        %v898 = vpop.f32.mrf.mxu0
        %v899 = vadd.f32 0.0, %v898
        %v900 = vpop.f32.mrf.mxu0
        %901 = vmatprep.mubr.f32.mxu0 0.0
        %902 = vmatmul.mubr.f32.gmra.mxu0 %v808
        %v903 = vpop.f32.mrf.mxu0
        %v904 = vadd.f32 0.0, %v903
        %v905 = vpop.f32.mrf.mxu0
        %906 = vmatprep.mubr.f32.mxu0 0.0
        %907 = vmatmul.mubr.f32.gmra.mxu0 %v811
        %v908 = vpop.f32.mrf.mxu0
        %v909 = vadd.f32 0.0, %v908
        %v910 = vpop.f32.mrf.mxu0
        %911 = vmatprep.mubr.f32.mxu0 0.0
        %912 = vmatmul.mubr.f32.gmra.mxu0 %v814
        %v913 = vpop.f32.mrf.mxu0
        %v914 = vadd.f32 0.0, %v913
        %v915 = vpop.f32.mrf.mxu0
        %916 = vmatprep.mubr.f32.mxu0 0.0
        %917 = vmatmul.mubr.f32.gmra.mxu0 %v817
        %v918 = vpop.f32.mrf.mxu0
        %v919 = vadd.f32 0.0, %v918
        %v920 = vpop.f32.mrf.mxu0
        %921 = vmatprep.mubr.f32.mxu0 0.0
        %922 = vmatmul.mubr.f32.gmra.mxu0 %v820
        %v923 = vpop.f32.mrf.mxu0
        %v924 = vadd.f32 0.0, %v923
        %v925 = vpop.f32.mrf.mxu0
        %926 = vdwg.mxu0
        %v927 = vadd.f32 %v780, %v889
        %v928 = vadd.f32 %v781, %v894
        %v929 = vadd.f32 %v782, %v899
        %v930 = vadd.f32 %v783, %v904
        %v931 = vadd.f32 %v784, %v909
        %v932 = vadd.f32 %v785, %v914
        %v933 = vadd.f32 %v786, %v919
        %v934 = vadd.f32 %v787, %v924
        %v935 = vld [vmem:[%s347 + $0x2] sm:$0xff]
        %v936 = vld [vmem:[%s347 + $0x12] sm:$0xff]
        %v937 = vld [vmem:[%s347 + $0x22] sm:$0xff]
        %v938 = vld [vmem:[%s347 + $0x32] sm:$0xff]
        %v939 = vld [vmem:[%s347 + $0x42] sm:$0xff]
        %v940 = vld [vmem:[%s347 + $0x52] sm:$0xff]
        %v941 = vld [vmem:[%s347 + $0x62] sm:$0xff]
        %v942 = vld [vmem:[%s347 + $0x72] sm:$0xff]
        %s943 = scalar_lea.vmem %s4, 32
        %v944 = vld [vmem:[%s943] sm:$0xff]
        %v946 = vsel %vm382, %v935, 0
        %v949 = vsel %vm382, %v936, 0
        %v952 = vsel %vm382, %v937, 0
        %v955 = vsel %vm382, %v938, 0
        %v958 = vsel %vm382, %v939, 0
        %v961 = vsel %vm382, %v940, 0
        %v964 = vsel %vm382, %v941, 0
        %v967 = vsel %vm382, %v942, 0
        %969 = vmatprep.subr.mxu0 0.0
        %970 = vmatpush1.msra.mxu0 0.0
        %971 = vmatprep.subr.mxu0 0.0
        %972 = vmatpush1.msra.mxu0 0.0
        %973 = vmatprep.subr.mxu0 0.0
        %974 = vmatpush1.msra.mxu0 0.0
        %975 = vmatprep.subr.mxu0 0.0
        %976 = vmatpush1.msra.mxu0 0.0
        %977 = vmatprep.subr.mxu0 0.0
        %978 = vmatpush1.msra.mxu0 0.0
        %979 = vmatprep.subr.mxu0 0.0
        %980 = vmatpush1.msra.mxu0 0.0
        %981 = vmatprep.subr.mxu0 0.0
        %982 = vmatpush1.msra.mxu0 0.0
        %983 = vmatprep.subr.mxu0 0.0
        %984 = vmatpush1.msra.mxu0 0.0
        %985 = vmatprep.subr.mxu0 0.0
        %986 = vmatpush1.msra.mxu0 0.0
        %987 = vmatprep.subr.mxu0 0.0
        %988 = vmatpush1.msra.mxu0 0.0
        %989 = vmatprep.subr.mxu0 0.0
        %990 = vmatpush1.msra.mxu0 0.0
        %991 = vmatprep.subr.mxu0 0.0
        %992 = vmatpush1.msra.mxu0 0.0
        %993 = vmatprep.subr.mxu0 0.0
        %994 = vmatpush1.msra.mxu0 0.0
        %995 = vmatprep.subr.mxu0 0.0
        %996 = vmatpush1.msra.mxu0 0.0
        %997 = vmatprep.subr.mxu0 0.0
        %998 = vmatpush1.msra.mxu0 0.0
        %999 = vmatprep.subr.mxu0 0.0
        %1000 = vmatpush1.msra.mxu0 %v944
        %1001 = vmatprep.subr.mxu0 0.0
        %1002 = vmatpush2.msra.mxu0 0.0
        %1003 = vmatprep.subr.mxu0 0.0
        %1004 = vmatpush2.msra.mxu0 0.0
        %1005 = vmatprep.subr.mxu0 0.0
        %1006 = vmatpush2.msra.mxu0 0.0
        %1007 = vmatprep.subr.mxu0 0.0
        %1008 = vmatpush2.msra.mxu0 0.0
        %1009 = vmatprep.subr.mxu0 0.0
        %1010 = vmatpush2.msra.mxu0 0.0
        %1011 = vmatprep.subr.mxu0 0.0
        %1012 = vmatpush2.msra.mxu0 0.0
        %1013 = vmatprep.subr.mxu0 0.0
        %1014 = vmatpush2.msra.mxu0 0.0
        %1015 = vmatprep.subr.mxu0 0.0
        %1016 = vmatpush2.msra.mxu0 0.0
        %1017 = vmatprep.subr.mxu0 0.0
        %1018 = vmatpush2.msra.mxu0 0.0
        %1019 = vmatprep.subr.mxu0 0.0
        %1020 = vmatpush2.msra.mxu0 0.0
        %1021 = vmatprep.subr.mxu0 0.0
        %1022 = vmatpush2.msra.mxu0 0.0
        %1023 = vmatprep.subr.mxu0 0.0
        %1024 = vmatpush2.msra.mxu0 0.0
        %1025 = vmatprep.subr.mxu0 0.0
        %1026 = vmatpush2.msra.mxu0 0.0
        %1027 = vmatprep.subr.mxu0 0.0
        %1028 = vmatpush2.msra.mxu0 0.0
        %1029 = vmatprep.subr.mxu0 0.0
        %1030 = vmatpush2.msra.mxu0 0.0
        %1031 = vmatprep.subr.mxu0 0.0
        %1032 = vmatpush2.msra.mxu0 0.0
        %1033 = vmatprep.mubr.f32.mxu0 0.0
        %1034 = vmatmul.mubr.f32.gmra.mxu0 %v946
        %v1035 = vpop.f32.mrf.mxu0
        %v1036 = vadd.f32 0.0, %v1035
        %v1037 = vpop.f32.mrf.mxu0
        %1038 = vmatprep.mubr.f32.mxu0 0.0
        %1039 = vmatmul.mubr.f32.gmra.mxu0 %v949
        %v1040 = vpop.f32.mrf.mxu0
        %v1041 = vadd.f32 0.0, %v1040
        %v1042 = vpop.f32.mrf.mxu0
        %1043 = vmatprep.mubr.f32.mxu0 0.0
        %1044 = vmatmul.mubr.f32.gmra.mxu0 %v952
        %v1045 = vpop.f32.mrf.mxu0
        %v1046 = vadd.f32 0.0, %v1045
        %v1047 = vpop.f32.mrf.mxu0
        %1048 = vmatprep.mubr.f32.mxu0 0.0
        %1049 = vmatmul.mubr.f32.gmra.mxu0 %v955
        %v1050 = vpop.f32.mrf.mxu0
        %v1051 = vadd.f32 0.0, %v1050
        %v1052 = vpop.f32.mrf.mxu0
        %1053 = vmatprep.mubr.f32.mxu0 0.0
        %1054 = vmatmul.mubr.f32.gmra.mxu0 %v958
        %v1055 = vpop.f32.mrf.mxu0
        %v1056 = vadd.f32 0.0, %v1055
        %v1057 = vpop.f32.mrf.mxu0
        %1058 = vmatprep.mubr.f32.mxu0 0.0
        %1059 = vmatmul.mubr.f32.gmra.mxu0 %v961
        %v1060 = vpop.f32.mrf.mxu0
        %v1061 = vadd.f32 0.0, %v1060
        %v1062 = vpop.f32.mrf.mxu0
        %1063 = vmatprep.mubr.f32.mxu0 0.0
        %1064 = vmatmul.mubr.f32.gmra.mxu0 %v964
        %v1065 = vpop.f32.mrf.mxu0
        %v1066 = vadd.f32 0.0, %v1065
        %v1067 = vpop.f32.mrf.mxu0
        %1068 = vmatprep.mubr.f32.mxu0 0.0
        %1069 = vmatmul.mubr.f32.gmra.mxu0 %v967
        %v1070 = vpop.f32.mrf.mxu0
        %v1071 = vadd.f32 0.0, %v1070
        %v1072 = vpop.f32.mrf.mxu0
        %1073 = vdwg.mxu0
        %v1074 = vadd.f32 %v927, %v1036
        %v1075 = vadd.f32 %v928, %v1041
        %v1076 = vadd.f32 %v929, %v1046
        %v1077 = vadd.f32 %v930, %v1051
        %v1078 = vadd.f32 %v931, %v1056
        %v1079 = vadd.f32 %v932, %v1061
        %v1080 = vadd.f32 %v933, %v1066
        %v1081 = vadd.f32 %v934, %v1071
        %v1082 = vld [vmem:[%s352 + $0x2] sm:$0xff]
        %v1083 = vld [vmem:[%s352 + $0x12] sm:$0xff]
        %v1084 = vld [vmem:[%s352 + $0x22] sm:$0xff]
        %v1085 = vld [vmem:[%s352 + $0x32] sm:$0xff]
        %v1086 = vld [vmem:[%s352 + $0x42] sm:$0xff]
        %v1087 = vld [vmem:[%s352 + $0x52] sm:$0xff]
        %v1088 = vld [vmem:[%s352 + $0x62] sm:$0xff]
        %v1089 = vld [vmem:[%s352 + $0x72] sm:$0xff]
        %s1090 = scalar_lea.vmem %s4, 40
        %v1091 = vld [vmem:[%s1090] sm:$0xff]
        %v1093 = vsel %vm382, %v1082, 0
        %v1096 = vsel %vm382, %v1083, 0
        %v1099 = vsel %vm382, %v1084, 0
        %v1102 = vsel %vm382, %v1085, 0
        %v1105 = vsel %vm382, %v1086, 0
        %v1108 = vsel %vm382, %v1087, 0
        %v1111 = vsel %vm382, %v1088, 0
        %v1114 = vsel %vm382, %v1089, 0
        %1116 = vmatprep.subr.mxu0 0.0
        %1117 = vmatpush1.msra.mxu0 0.0
        %1118 = vmatprep.subr.mxu0 0.0
        %1119 = vmatpush1.msra.mxu0 0.0
        %1120 = vmatprep.subr.mxu0 0.0
        %1121 = vmatpush1.msra.mxu0 0.0
        %1122 = vmatprep.subr.mxu0 0.0
        %1123 = vmatpush1.msra.mxu0 0.0
        %1124 = vmatprep.subr.mxu0 0.0
        %1125 = vmatpush1.msra.mxu0 0.0
        %1126 = vmatprep.subr.mxu0 0.0
        %1127 = vmatpush1.msra.mxu0 0.0
        %1128 = vmatprep.subr.mxu0 0.0
        %1129 = vmatpush1.msra.mxu0 0.0
        %1130 = vmatprep.subr.mxu0 0.0
        %1131 = vmatpush1.msra.mxu0 0.0
        %1132 = vmatprep.subr.mxu0 0.0
        %1133 = vmatpush1.msra.mxu0 0.0
        %1134 = vmatprep.subr.mxu0 0.0
        %1135 = vmatpush1.msra.mxu0 0.0
        %1136 = vmatprep.subr.mxu0 0.0
        %1137 = vmatpush1.msra.mxu0 0.0
        %1138 = vmatprep.subr.mxu0 0.0
        %1139 = vmatpush1.msra.mxu0 0.0
        %1140 = vmatprep.subr.mxu0 0.0
        %1141 = vmatpush1.msra.mxu0 0.0
        %1142 = vmatprep.subr.mxu0 0.0
        %1143 = vmatpush1.msra.mxu0 0.0
        %1144 = vmatprep.subr.mxu0 0.0
        %1145 = vmatpush1.msra.mxu0 0.0
        %1146 = vmatprep.subr.mxu0 0.0
        %1147 = vmatpush1.msra.mxu0 %v1091
        %1148 = vmatprep.subr.mxu0 0.0
        %1149 = vmatpush2.msra.mxu0 0.0
        %1150 = vmatprep.subr.mxu0 0.0
        %1151 = vmatpush2.msra.mxu0 0.0
        %1152 = vmatprep.subr.mxu0 0.0
        %1153 = vmatpush2.msra.mxu0 0.0
        %1154 = vmatprep.subr.mxu0 0.0
        %1155 = vmatpush2.msra.mxu0 0.0
        %1156 = vmatprep.subr.mxu0 0.0
        %1157 = vmatpush2.msra.mxu0 0.0
        %1158 = vmatprep.subr.mxu0 0.0
        %1159 = vmatpush2.msra.mxu0 0.0
        %1160 = vmatprep.subr.mxu0 0.0
        %1161 = vmatpush2.msra.mxu0 0.0
        %1162 = vmatprep.subr.mxu0 0.0
        %1163 = vmatpush2.msra.mxu0 0.0
        %1164 = vmatprep.subr.mxu0 0.0
        %1165 = vmatpush2.msra.mxu0 0.0
        %1166 = vmatprep.subr.mxu0 0.0
        %1167 = vmatpush2.msra.mxu0 0.0
        %1168 = vmatprep.subr.mxu0 0.0
        %1169 = vmatpush2.msra.mxu0 0.0
        %1170 = vmatprep.subr.mxu0 0.0
        %1171 = vmatpush2.msra.mxu0 0.0
        %1172 = vmatprep.subr.mxu0 0.0
        %1173 = vmatpush2.msra.mxu0 0.0
        %1174 = vmatprep.subr.mxu0 0.0
        %1175 = vmatpush2.msra.mxu0 0.0
        %1176 = vmatprep.subr.mxu0 0.0
        %1177 = vmatpush2.msra.mxu0 0.0
        %1178 = vmatprep.subr.mxu0 0.0
        %1179 = vmatpush2.msra.mxu0 0.0
        %1180 = vmatprep.mubr.f32.mxu0 0.0
        %1181 = vmatmul.mubr.f32.gmra.mxu0 %v1093
        %v1182 = vpop.f32.mrf.mxu0
        %v1183 = vadd.f32 0.0, %v1182
        %v1184 = vpop.f32.mrf.mxu0
        %1185 = vmatprep.mubr.f32.mxu0 0.0
        %1186 = vmatmul.mubr.f32.gmra.mxu0 %v1096
        %v1187 = vpop.f32.mrf.mxu0
        %v1188 = vadd.f32 0.0, %v1187
        %v1189 = vpop.f32.mrf.mxu0
        %1190 = vmatprep.mubr.f32.mxu0 0.0
        %1191 = vmatmul.mubr.f32.gmra.mxu0 %v1099
        %v1192 = vpop.f32.mrf.mxu0
        %v1193 = vadd.f32 0.0, %v1192
        %v1194 = vpop.f32.mrf.mxu0
        %1195 = vmatprep.mubr.f32.mxu0 0.0
        %1196 = vmatmul.mubr.f32.gmra.mxu0 %v1102
        %v1197 = vpop.f32.mrf.mxu0
        %v1198 = vadd.f32 0.0, %v1197
        %v1199 = vpop.f32.mrf.mxu0
        %1200 = vmatprep.mubr.f32.mxu0 0.0
        %1201 = vmatmul.mubr.f32.gmra.mxu0 %v1105
        %v1202 = vpop.f32.mrf.mxu0
        %v1203 = vadd.f32 0.0, %v1202
        %v1204 = vpop.f32.mrf.mxu0
        %1205 = vmatprep.mubr.f32.mxu0 0.0
        %1206 = vmatmul.mubr.f32.gmra.mxu0 %v1108
        %v1207 = vpop.f32.mrf.mxu0
        %v1208 = vadd.f32 0.0, %v1207
        %v1209 = vpop.f32.mrf.mxu0
        %1210 = vmatprep.mubr.f32.mxu0 0.0
        %1211 = vmatmul.mubr.f32.gmra.mxu0 %v1111
        %v1212 = vpop.f32.mrf.mxu0
        %v1213 = vadd.f32 0.0, %v1212
        %v1214 = vpop.f32.mrf.mxu0
        %1215 = vmatprep.mubr.f32.mxu0 0.0
        %1216 = vmatmul.mubr.f32.gmra.mxu0 %v1114
        %v1217 = vpop.f32.mrf.mxu0
        %v1218 = vadd.f32 0.0, %v1217
        %v1219 = vpop.f32.mrf.mxu0
        %1220 = vdwg.mxu0
        %v1221 = vadd.f32 %v1074, %v1183
        %v1222 = vadd.f32 %v1075, %v1188
        %v1223 = vadd.f32 %v1076, %v1193
        %v1224 = vadd.f32 %v1077, %v1198
        %v1225 = vadd.f32 %v1078, %v1203
        %v1226 = vadd.f32 %v1079, %v1208
        %v1227 = vadd.f32 %v1080, %v1213
        %v1228 = vadd.f32 %v1081, %v1218
        %v1229 = vld [vmem:[%s347 + $0x3] sm:$0xff]
        %v1230 = vld [vmem:[%s347 + $0x13] sm:$0xff]
        %v1231 = vld [vmem:[%s347 + $0x23] sm:$0xff]
        %v1232 = vld [vmem:[%s347 + $0x33] sm:$0xff]
        %v1233 = vld [vmem:[%s347 + $0x43] sm:$0xff]
        %v1234 = vld [vmem:[%s347 + $0x53] sm:$0xff]
        %v1235 = vld [vmem:[%s347 + $0x63] sm:$0xff]
        %v1236 = vld [vmem:[%s347 + $0x73] sm:$0xff]
        %s1237 = scalar_lea.vmem %s4, 48
        %v1238 = vld [vmem:[%s1237] sm:$0xff]
        %v1240 = vsel %vm382, %v1229, 0
        %v1243 = vsel %vm382, %v1230, 0
        %v1246 = vsel %vm382, %v1231, 0
        %v1249 = vsel %vm382, %v1232, 0
        %v1252 = vsel %vm382, %v1233, 0
        %v1255 = vsel %vm382, %v1234, 0
        %v1258 = vsel %vm382, %v1235, 0
        %v1261 = vsel %vm382, %v1236, 0
        %1263 = vmatprep.subr.mxu0 0.0
        %1264 = vmatpush1.msra.mxu0 0.0
        %1265 = vmatprep.subr.mxu0 0.0
        %1266 = vmatpush1.msra.mxu0 0.0
        %1267 = vmatprep.subr.mxu0 0.0
        %1268 = vmatpush1.msra.mxu0 0.0
        %1269 = vmatprep.subr.mxu0 0.0
        %1270 = vmatpush1.msra.mxu0 0.0
        %1271 = vmatprep.subr.mxu0 0.0
        %1272 = vmatpush1.msra.mxu0 0.0
        %1273 = vmatprep.subr.mxu0 0.0
        %1274 = vmatpush1.msra.mxu0 0.0
        %1275 = vmatprep.subr.mxu0 0.0
        %1276 = vmatpush1.msra.mxu0 0.0
        %1277 = vmatprep.subr.mxu0 0.0
        %1278 = vmatpush1.msra.mxu0 0.0
        %1279 = vmatprep.subr.mxu0 0.0
        %1280 = vmatpush1.msra.mxu0 0.0
        %1281 = vmatprep.subr.mxu0 0.0
        %1282 = vmatpush1.msra.mxu0 0.0
        %1283 = vmatprep.subr.mxu0 0.0
        %1284 = vmatpush1.msra.mxu0 0.0
        %1285 = vmatprep.subr.mxu0 0.0
        %1286 = vmatpush1.msra.mxu0 0.0
        %1287 = vmatprep.subr.mxu0 0.0
        %1288 = vmatpush1.msra.mxu0 0.0
        %1289 = vmatprep.subr.mxu0 0.0
        %1290 = vmatpush1.msra.mxu0 0.0
        %1291 = vmatprep.subr.mxu0 0.0
        %1292 = vmatpush1.msra.mxu0 0.0
        %1293 = vmatprep.subr.mxu0 0.0
        %1294 = vmatpush1.msra.mxu0 %v1238
        %1295 = vmatprep.subr.mxu0 0.0
        %1296 = vmatpush2.msra.mxu0 0.0
        %1297 = vmatprep.subr.mxu0 0.0
        %1298 = vmatpush2.msra.mxu0 0.0
        %1299 = vmatprep.subr.mxu0 0.0
        %1300 = vmatpush2.msra.mxu0 0.0
        %1301 = vmatprep.subr.mxu0 0.0
        %1302 = vmatpush2.msra.mxu0 0.0
        %1303 = vmatprep.subr.mxu0 0.0
        %1304 = vmatpush2.msra.mxu0 0.0
        %1305 = vmatprep.subr.mxu0 0.0
        %1306 = vmatpush2.msra.mxu0 0.0
        %1307 = vmatprep.subr.mxu0 0.0
        %1308 = vmatpush2.msra.mxu0 0.0
        %1309 = vmatprep.subr.mxu0 0.0
        %1310 = vmatpush2.msra.mxu0 0.0
        %1311 = vmatprep.subr.mxu0 0.0
        %1312 = vmatpush2.msra.mxu0 0.0
        %1313 = vmatprep.subr.mxu0 0.0
        %1314 = vmatpush2.msra.mxu0 0.0
        %1315 = vmatprep.subr.mxu0 0.0
        %1316 = vmatpush2.msra.mxu0 0.0
        %1317 = vmatprep.subr.mxu0 0.0
        %1318 = vmatpush2.msra.mxu0 0.0
        %1319 = vmatprep.subr.mxu0 0.0
        %1320 = vmatpush2.msra.mxu0 0.0
        %1321 = vmatprep.subr.mxu0 0.0
        %1322 = vmatpush2.msra.mxu0 0.0
        %1323 = vmatprep.subr.mxu0 0.0
        %1324 = vmatpush2.msra.mxu0 0.0
        %1325 = vmatprep.subr.mxu0 0.0
        %1326 = vmatpush2.msra.mxu0 0.0
        %1327 = vmatprep.mubr.f32.mxu0 0.0
        %1328 = vmatmul.mubr.f32.gmra.mxu0 %v1240
        %v1329 = vpop.f32.mrf.mxu0
        %v1330 = vadd.f32 0.0, %v1329
        %v1331 = vpop.f32.mrf.mxu0
        %1332 = vmatprep.mubr.f32.mxu0 0.0
        %1333 = vmatmul.mubr.f32.gmra.mxu0 %v1243
        %v1334 = vpop.f32.mrf.mxu0
        %v1335 = vadd.f32 0.0, %v1334
        %v1336 = vpop.f32.mrf.mxu0
        %1337 = vmatprep.mubr.f32.mxu0 0.0
        %1338 = vmatmul.mubr.f32.gmra.mxu0 %v1246
        %v1339 = vpop.f32.mrf.mxu0
        %v1340 = vadd.f32 0.0, %v1339
        %v1341 = vpop.f32.mrf.mxu0
        %1342 = vmatprep.mubr.f32.mxu0 0.0
        %1343 = vmatmul.mubr.f32.gmra.mxu0 %v1249
        %v1344 = vpop.f32.mrf.mxu0
        %v1345 = vadd.f32 0.0, %v1344
        %v1346 = vpop.f32.mrf.mxu0
        %1347 = vmatprep.mubr.f32.mxu0 0.0
        %1348 = vmatmul.mubr.f32.gmra.mxu0 %v1252
        %v1349 = vpop.f32.mrf.mxu0
        %v1350 = vadd.f32 0.0, %v1349
        %v1351 = vpop.f32.mrf.mxu0
        %1352 = vmatprep.mubr.f32.mxu0 0.0
        %1353 = vmatmul.mubr.f32.gmra.mxu0 %v1255
        %v1354 = vpop.f32.mrf.mxu0
        %v1355 = vadd.f32 0.0, %v1354
        %v1356 = vpop.f32.mrf.mxu0
        %1357 = vmatprep.mubr.f32.mxu0 0.0
        %1358 = vmatmul.mubr.f32.gmra.mxu0 %v1258
        %v1359 = vpop.f32.mrf.mxu0
        %v1360 = vadd.f32 0.0, %v1359
        %v1361 = vpop.f32.mrf.mxu0
        %1362 = vmatprep.mubr.f32.mxu0 0.0
        %1363 = vmatmul.mubr.f32.gmra.mxu0 %v1261
        %v1364 = vpop.f32.mrf.mxu0
        %v1365 = vadd.f32 0.0, %v1364
        %v1366 = vpop.f32.mrf.mxu0
        %1367 = vdwg.mxu0
        %v1368 = vadd.f32 %v1221, %v1330
        %v1369 = vadd.f32 %v1222, %v1335
        %v1370 = vadd.f32 %v1223, %v1340
        %v1371 = vadd.f32 %v1224, %v1345
        %v1372 = vadd.f32 %v1225, %v1350
        %v1373 = vadd.f32 %v1226, %v1355
        %v1374 = vadd.f32 %v1227, %v1360
        %v1375 = vadd.f32 %v1228, %v1365
        %v1376 = vld [vmem:[%s357] sm:$0xff]
        %v1377 = vld [vmem:[%s357 + $0x10] sm:$0xff]
        %v1378 = vld [vmem:[%s357 + $0x20] sm:$0xff]
        %v1379 = vld [vmem:[%s357 + $0x30] sm:$0xff]
        %v1380 = vld [vmem:[%s357 + $0x40] sm:$0xff]
        %v1381 = vld [vmem:[%s357 + $0x50] sm:$0xff]
        %v1382 = vld [vmem:[%s357 + $0x60] sm:$0xff]
        %v1383 = vld [vmem:[%s357 + $0x70] sm:$0xff]
        %s1384 = scalar_lea.vmem %s4, 56
        %v1385 = vld [vmem:[%s1384] sm:$0xff]
        %v1387 = vsel %vm382, %v1376, 0
        %v1390 = vsel %vm382, %v1377, 0
        %v1393 = vsel %vm382, %v1378, 0
        %v1396 = vsel %vm382, %v1379, 0
        %v1399 = vsel %vm382, %v1380, 0
        %v1402 = vsel %vm382, %v1381, 0
        %v1405 = vsel %vm382, %v1382, 0
        %v1408 = vsel %vm382, %v1383, 0
        %1410 = vmatprep.subr.mxu0 0.0
        %1411 = vmatpush1.msra.mxu0 0.0
        %1412 = vmatprep.subr.mxu0 0.0
        %1413 = vmatpush1.msra.mxu0 0.0
        %1414 = vmatprep.subr.mxu0 0.0
        %1415 = vmatpush1.msra.mxu0 0.0
        %1416 = vmatprep.subr.mxu0 0.0
        %1417 = vmatpush1.msra.mxu0 0.0
        %1418 = vmatprep.subr.mxu0 0.0
        %1419 = vmatpush1.msra.mxu0 0.0
        %1420 = vmatprep.subr.mxu0 0.0
        %1421 = vmatpush1.msra.mxu0 0.0
        %1422 = vmatprep.subr.mxu0 0.0
        %1423 = vmatpush1.msra.mxu0 0.0
        %1424 = vmatprep.subr.mxu0 0.0
        %1425 = vmatpush1.msra.mxu0 0.0
        %1426 = vmatprep.subr.mxu0 0.0
        %1427 = vmatpush1.msra.mxu0 0.0
        %1428 = vmatprep.subr.mxu0 0.0
        %1429 = vmatpush1.msra.mxu0 0.0
        %1430 = vmatprep.subr.mxu0 0.0
        %1431 = vmatpush1.msra.mxu0 0.0
        %1432 = vmatprep.subr.mxu0 0.0
        %1433 = vmatpush1.msra.mxu0 0.0
        %1434 = vmatprep.subr.mxu0 0.0
        %1435 = vmatpush1.msra.mxu0 0.0
        %1436 = vmatprep.subr.mxu0 0.0
        %1437 = vmatpush1.msra.mxu0 0.0
        %1438 = vmatprep.subr.mxu0 0.0
        %1439 = vmatpush1.msra.mxu0 0.0
        %1440 = vmatprep.subr.mxu0 0.0
        %1441 = vmatpush1.msra.mxu0 %v1385
        %1442 = vmatprep.subr.mxu0 0.0
        %1443 = vmatpush2.msra.mxu0 0.0
        %1444 = vmatprep.subr.mxu0 0.0
        %1445 = vmatpush2.msra.mxu0 0.0
        %1446 = vmatprep.subr.mxu0 0.0
        %1447 = vmatpush2.msra.mxu0 0.0
        %1448 = vmatprep.subr.mxu0 0.0
        %1449 = vmatpush2.msra.mxu0 0.0
        %1450 = vmatprep.subr.mxu0 0.0
        %1451 = vmatpush2.msra.mxu0 0.0
        %1452 = vmatprep.subr.mxu0 0.0
        %1453 = vmatpush2.msra.mxu0 0.0
        %1454 = vmatprep.subr.mxu0 0.0
        %1455 = vmatpush2.msra.mxu0 0.0
        %1456 = vmatprep.subr.mxu0 0.0
        %1457 = vmatpush2.msra.mxu0 0.0
        %1458 = vmatprep.subr.mxu0 0.0
        %1459 = vmatpush2.msra.mxu0 0.0
        %1460 = vmatprep.subr.mxu0 0.0
        %1461 = vmatpush2.msra.mxu0 0.0
        %1462 = vmatprep.subr.mxu0 0.0
        %1463 = vmatpush2.msra.mxu0 0.0
        %1464 = vmatprep.subr.mxu0 0.0
        %1465 = vmatpush2.msra.mxu0 0.0
        %1466 = vmatprep.subr.mxu0 0.0
        %1467 = vmatpush2.msra.mxu0 0.0
        %1468 = vmatprep.subr.mxu0 0.0
        %1469 = vmatpush2.msra.mxu0 0.0
        %1470 = vmatprep.subr.mxu0 0.0
        %1471 = vmatpush2.msra.mxu0 0.0
        %1472 = vmatprep.subr.mxu0 0.0
        %1473 = vmatpush2.msra.mxu0 0.0
        %1474 = vmatprep.mubr.f32.mxu0 0.0
        %1475 = vmatmul.mubr.f32.gmra.mxu0 %v1387
        %v1476 = vpop.f32.mrf.mxu0
        %v1477 = vadd.f32 0.0, %v1476
        %v1478 = vpop.f32.mrf.mxu0
        %1479 = vmatprep.mubr.f32.mxu0 0.0
        %1480 = vmatmul.mubr.f32.gmra.mxu0 %v1390
        %v1481 = vpop.f32.mrf.mxu0
        %v1482 = vadd.f32 0.0, %v1481
        %v1483 = vpop.f32.mrf.mxu0
        %1484 = vmatprep.mubr.f32.mxu0 0.0
        %1485 = vmatmul.mubr.f32.gmra.mxu0 %v1393
        %v1486 = vpop.f32.mrf.mxu0
        %v1487 = vadd.f32 0.0, %v1486
        %v1488 = vpop.f32.mrf.mxu0
        %1489 = vmatprep.mubr.f32.mxu0 0.0
        %1490 = vmatmul.mubr.f32.gmra.mxu0 %v1396
        %v1491 = vpop.f32.mrf.mxu0
        %v1492 = vadd.f32 0.0, %v1491
        %v1493 = vpop.f32.mrf.mxu0
        %1494 = vmatprep.mubr.f32.mxu0 0.0
        %1495 = vmatmul.mubr.f32.gmra.mxu0 %v1399
        %v1496 = vpop.f32.mrf.mxu0
        %v1497 = vadd.f32 0.0, %v1496
        %v1498 = vpop.f32.mrf.mxu0
        %1499 = vmatprep.mubr.f32.mxu0 0.0
        %1500 = vmatmul.mubr.f32.gmra.mxu0 %v1402
        %v1501 = vpop.f32.mrf.mxu0
        %v1502 = vadd.f32 0.0, %v1501
        %v1503 = vpop.f32.mrf.mxu0
        %1504 = vmatprep.mubr.f32.mxu0 0.0
        %1505 = vmatmul.mubr.f32.gmra.mxu0 %v1405
        %v1506 = vpop.f32.mrf.mxu0
        %v1507 = vadd.f32 0.0, %v1506
        %v1508 = vpop.f32.mrf.mxu0
        %1509 = vmatprep.mubr.f32.mxu0 0.0
        %1510 = vmatmul.mubr.f32.gmra.mxu0 %v1408
        %v1511 = vpop.f32.mrf.mxu0
        %v1512 = vadd.f32 0.0, %v1511
        %v1513 = vpop.f32.mrf.mxu0
        %1514 = vdwg.mxu0
        %v1515 = vadd.f32 %v1368, %v1477
        %v1516 = vadd.f32 %v1369, %v1482
        %v1517 = vadd.f32 %v1370, %v1487
        %v1518 = vadd.f32 %v1371, %v1492
        %v1519 = vadd.f32 %v1372, %v1497
        %v1520 = vadd.f32 %v1373, %v1502
        %v1521 = vadd.f32 %v1374, %v1507
        %v1522 = vadd.f32 %v1375, %v1512
        %v1523 = vld [vmem:[%s362] sm:$0xff]
        %v1524 = vld [vmem:[%s362 + $0x10] sm:$0xff]
        %v1525 = vld [vmem:[%s362 + $0x20] sm:$0xff]
        %v1526 = vld [vmem:[%s362 + $0x30] sm:$0xff]
        %v1527 = vld [vmem:[%s362 + $0x40] sm:$0xff]
        %v1528 = vld [vmem:[%s362 + $0x50] sm:$0xff]
        %v1529 = vld [vmem:[%s362 + $0x60] sm:$0xff]
        %v1530 = vld [vmem:[%s362 + $0x70] sm:$0xff]
        %s1531 = scalar_lea.vmem %s4, 64
        %v1532 = vld [vmem:[%s1531] sm:$0xff]
        %v1534 = vsel %vm382, %v1523, 0
        %v1537 = vsel %vm382, %v1524, 0
        %v1540 = vsel %vm382, %v1525, 0
        %v1543 = vsel %vm382, %v1526, 0
        %v1546 = vsel %vm382, %v1527, 0
        %v1549 = vsel %vm382, %v1528, 0
        %v1552 = vsel %vm382, %v1529, 0
        %v1555 = vsel %vm382, %v1530, 0
        %1557 = vmatprep.subr.mxu0 0.0
        %1558 = vmatpush1.msra.mxu0 0.0
        %1559 = vmatprep.subr.mxu0 0.0
        %1560 = vmatpush1.msra.mxu0 0.0
        %1561 = vmatprep.subr.mxu0 0.0
        %1562 = vmatpush1.msra.mxu0 0.0
        %1563 = vmatprep.subr.mxu0 0.0
        %1564 = vmatpush1.msra.mxu0 0.0
        %1565 = vmatprep.subr.mxu0 0.0
        %1566 = vmatpush1.msra.mxu0 0.0
        %1567 = vmatprep.subr.mxu0 0.0
        %1568 = vmatpush1.msra.mxu0 0.0
        %1569 = vmatprep.subr.mxu0 0.0
        %1570 = vmatpush1.msra.mxu0 0.0
        %1571 = vmatprep.subr.mxu0 0.0
        %1572 = vmatpush1.msra.mxu0 0.0
        %1573 = vmatprep.subr.mxu0 0.0
        %1574 = vmatpush1.msra.mxu0 0.0
        %1575 = vmatprep.subr.mxu0 0.0
        %1576 = vmatpush1.msra.mxu0 0.0
        %1577 = vmatprep.subr.mxu0 0.0
        %1578 = vmatpush1.msra.mxu0 0.0
        %1579 = vmatprep.subr.mxu0 0.0
        %1580 = vmatpush1.msra.mxu0 0.0
        %1581 = vmatprep.subr.mxu0 0.0
        %1582 = vmatpush1.msra.mxu0 0.0
        %1583 = vmatprep.subr.mxu0 0.0
        %1584 = vmatpush1.msra.mxu0 0.0
        %1585 = vmatprep.subr.mxu0 0.0
        %1586 = vmatpush1.msra.mxu0 0.0
        %1587 = vmatprep.subr.mxu0 0.0
        %1588 = vmatpush1.msra.mxu0 %v1532
        %1589 = vmatprep.subr.mxu0 0.0
        %1590 = vmatpush2.msra.mxu0 0.0
        %1591 = vmatprep.subr.mxu0 0.0
        %1592 = vmatpush2.msra.mxu0 0.0
        %1593 = vmatprep.subr.mxu0 0.0
        %1594 = vmatpush2.msra.mxu0 0.0
        %1595 = vmatprep.subr.mxu0 0.0
        %1596 = vmatpush2.msra.mxu0 0.0
        %1597 = vmatprep.subr.mxu0 0.0
        %1598 = vmatpush2.msra.mxu0 0.0
        %1599 = vmatprep.subr.mxu0 0.0
        %1600 = vmatpush2.msra.mxu0 0.0
        %1601 = vmatprep.subr.mxu0 0.0
        %1602 = vmatpush2.msra.mxu0 0.0
        %1603 = vmatprep.subr.mxu0 0.0
        %1604 = vmatpush2.msra.mxu0 0.0
        %1605 = vmatprep.subr.mxu0 0.0
        %1606 = vmatpush2.msra.mxu0 0.0
        %1607 = vmatprep.subr.mxu0 0.0
        %1608 = vmatpush2.msra.mxu0 0.0
        %1609 = vmatprep.subr.mxu0 0.0
        %1610 = vmatpush2.msra.mxu0 0.0
        %1611 = vmatprep.subr.mxu0 0.0
        %1612 = vmatpush2.msra.mxu0 0.0
        %1613 = vmatprep.subr.mxu0 0.0
        %1614 = vmatpush2.msra.mxu0 0.0
        %1615 = vmatprep.subr.mxu0 0.0
        %1616 = vmatpush2.msra.mxu0 0.0
        %1617 = vmatprep.subr.mxu0 0.0
        %1618 = vmatpush2.msra.mxu0 0.0
        %1619 = vmatprep.subr.mxu0 0.0
        %1620 = vmatpush2.msra.mxu0 0.0
        %1621 = vmatprep.mubr.f32.mxu0 0.0
        %1622 = vmatmul.mubr.f32.gmra.mxu0 %v1534
        %v1623 = vpop.f32.mrf.mxu0
        %v1624 = vadd.f32 0.0, %v1623
        %v1625 = vpop.f32.mrf.mxu0
        %1626 = vmatprep.mubr.f32.mxu0 0.0
        %1627 = vmatmul.mubr.f32.gmra.mxu0 %v1537
        %v1628 = vpop.f32.mrf.mxu0
        %v1629 = vadd.f32 0.0, %v1628
        %v1630 = vpop.f32.mrf.mxu0
        %1631 = vmatprep.mubr.f32.mxu0 0.0
        %1632 = vmatmul.mubr.f32.gmra.mxu0 %v1540
        %v1633 = vpop.f32.mrf.mxu0
        %v1634 = vadd.f32 0.0, %v1633
        %v1635 = vpop.f32.mrf.mxu0
        %1636 = vmatprep.mubr.f32.mxu0 0.0
        %1637 = vmatmul.mubr.f32.gmra.mxu0 %v1543
        %v1638 = vpop.f32.mrf.mxu0
        %v1639 = vadd.f32 0.0, %v1638
        %v1640 = vpop.f32.mrf.mxu0
        %1641 = vmatprep.mubr.f32.mxu0 0.0
        %1642 = vmatmul.mubr.f32.gmra.mxu0 %v1546
        %v1643 = vpop.f32.mrf.mxu0
        %v1644 = vadd.f32 0.0, %v1643
        %v1645 = vpop.f32.mrf.mxu0
        %1646 = vmatprep.mubr.f32.mxu0 0.0
        %1647 = vmatmul.mubr.f32.gmra.mxu0 %v1549
        %v1648 = vpop.f32.mrf.mxu0
        %v1649 = vadd.f32 0.0, %v1648
        %v1650 = vpop.f32.mrf.mxu0
        %1651 = vmatprep.mubr.f32.mxu0 0.0
        %1652 = vmatmul.mubr.f32.gmra.mxu0 %v1552
        %v1653 = vpop.f32.mrf.mxu0
        %v1654 = vadd.f32 0.0, %v1653
        %v1655 = vpop.f32.mrf.mxu0
        %1656 = vmatprep.mubr.f32.mxu0 0.0
        %1657 = vmatmul.mubr.f32.gmra.mxu0 %v1555
        %v1658 = vpop.f32.mrf.mxu0
        %v1659 = vadd.f32 0.0, %v1658
        %v1660 = vpop.f32.mrf.mxu0
        %1661 = vdwg.mxu0
        %v1662 = vadd.f32 %v1515, %v1624
        %v1663 = vadd.f32 %v1516, %v1629
        %v1664 = vadd.f32 %v1517, %v1634
        %v1665 = vadd.f32 %v1518, %v1639
        %v1666 = vadd.f32 %v1519, %v1644
        %v1667 = vadd.f32 %v1520, %v1649
        %v1668 = vadd.f32 %v1521, %v1654
        %v1669 = vadd.f32 %v1522, %v1659
        %v1670 = vld [vmem:[%s357 + $0x1] sm:$0xff]
        %v1671 = vld [vmem:[%s357 + $0x11] sm:$0xff]
        %v1672 = vld [vmem:[%s357 + $0x21] sm:$0xff]
        %v1673 = vld [vmem:[%s357 + $0x31] sm:$0xff]
        %v1674 = vld [vmem:[%s357 + $0x41] sm:$0xff]
        %v1675 = vld [vmem:[%s357 + $0x51] sm:$0xff]
        %v1676 = vld [vmem:[%s357 + $0x61] sm:$0xff]
        %v1677 = vld [vmem:[%s357 + $0x71] sm:$0xff]
        %s1678 = scalar_lea.vmem %s4, 72
        %v1679 = vld [vmem:[%s1678] sm:$0xff]
        %v1681 = vsel %vm382, %v1670, 0
        %v1684 = vsel %vm382, %v1671, 0
        %v1687 = vsel %vm382, %v1672, 0
        %v1690 = vsel %vm382, %v1673, 0
        %v1693 = vsel %vm382, %v1674, 0
        %v1696 = vsel %vm382, %v1675, 0
        %v1699 = vsel %vm382, %v1676, 0
        %v1702 = vsel %vm382, %v1677, 0
        %1704 = vmatprep.subr.mxu0 0.0
        %1705 = vmatpush1.msra.mxu0 0.0
        %1706 = vmatprep.subr.mxu0 0.0
        %1707 = vmatpush1.msra.mxu0 0.0
        %1708 = vmatprep.subr.mxu0 0.0
        %1709 = vmatpush1.msra.mxu0 0.0
        %1710 = vmatprep.subr.mxu0 0.0
        %1711 = vmatpush1.msra.mxu0 0.0
        %1712 = vmatprep.subr.mxu0 0.0
        %1713 = vmatpush1.msra.mxu0 0.0
        %1714 = vmatprep.subr.mxu0 0.0
        %1715 = vmatpush1.msra.mxu0 0.0
        %1716 = vmatprep.subr.mxu0 0.0
        %1717 = vmatpush1.msra.mxu0 0.0
        %1718 = vmatprep.subr.mxu0 0.0
        %1719 = vmatpush1.msra.mxu0 0.0
        %1720 = vmatprep.subr.mxu0 0.0
        %1721 = vmatpush1.msra.mxu0 0.0
        %1722 = vmatprep.subr.mxu0 0.0
        %1723 = vmatpush1.msra.mxu0 0.0
        %1724 = vmatprep.subr.mxu0 0.0
        %1725 = vmatpush1.msra.mxu0 0.0
        %1726 = vmatprep.subr.mxu0 0.0
        %1727 = vmatpush1.msra.mxu0 0.0
        %1728 = vmatprep.subr.mxu0 0.0
        %1729 = vmatpush1.msra.mxu0 0.0
        %1730 = vmatprep.subr.mxu0 0.0
        %1731 = vmatpush1.msra.mxu0 0.0
        %1732 = vmatprep.subr.mxu0 0.0
        %1733 = vmatpush1.msra.mxu0 0.0
        %1734 = vmatprep.subr.mxu0 0.0
        %1735 = vmatpush1.msra.mxu0 %v1679
        %1736 = vmatprep.subr.mxu0 0.0
        %1737 = vmatpush2.msra.mxu0 0.0
        %1738 = vmatprep.subr.mxu0 0.0
        %1739 = vmatpush2.msra.mxu0 0.0
        %1740 = vmatprep.subr.mxu0 0.0
        %1741 = vmatpush2.msra.mxu0 0.0
        %1742 = vmatprep.subr.mxu0 0.0
        %1743 = vmatpush2.msra.mxu0 0.0
        %1744 = vmatprep.subr.mxu0 0.0
        %1745 = vmatpush2.msra.mxu0 0.0
        %1746 = vmatprep.subr.mxu0 0.0
        %1747 = vmatpush2.msra.mxu0 0.0
        %1748 = vmatprep.subr.mxu0 0.0
        %1749 = vmatpush2.msra.mxu0 0.0
        %1750 = vmatprep.subr.mxu0 0.0
        %1751 = vmatpush2.msra.mxu0 0.0
        %1752 = vmatprep.subr.mxu0 0.0
        %1753 = vmatpush2.msra.mxu0 0.0
        %1754 = vmatprep.subr.mxu0 0.0
        %1755 = vmatpush2.msra.mxu0 0.0
        %1756 = vmatprep.subr.mxu0 0.0
        %1757 = vmatpush2.msra.mxu0 0.0
        %1758 = vmatprep.subr.mxu0 0.0
        %1759 = vmatpush2.msra.mxu0 0.0
        %1760 = vmatprep.subr.mxu0 0.0
        %1761 = vmatpush2.msra.mxu0 0.0
        %1762 = vmatprep.subr.mxu0 0.0
        %1763 = vmatpush2.msra.mxu0 0.0
        %1764 = vmatprep.subr.mxu0 0.0
        %1765 = vmatpush2.msra.mxu0 0.0
        %1766 = vmatprep.subr.mxu0 0.0
        %1767 = vmatpush2.msra.mxu0 0.0
        %1768 = vmatprep.mubr.f32.mxu0 0.0
        %1769 = vmatmul.mubr.f32.gmra.mxu0 %v1681
        %v1770 = vpop.f32.mrf.mxu0
        %v1771 = vadd.f32 0.0, %v1770
        %v1772 = vpop.f32.mrf.mxu0
        %1773 = vmatprep.mubr.f32.mxu0 0.0
        %1774 = vmatmul.mubr.f32.gmra.mxu0 %v1684
        %v1775 = vpop.f32.mrf.mxu0
        %v1776 = vadd.f32 0.0, %v1775
        %v1777 = vpop.f32.mrf.mxu0
        %1778 = vmatprep.mubr.f32.mxu0 0.0
        %1779 = vmatmul.mubr.f32.gmra.mxu0 %v1687
        %v1780 = vpop.f32.mrf.mxu0
        %v1781 = vadd.f32 0.0, %v1780
        %v1782 = vpop.f32.mrf.mxu0
        %1783 = vmatprep.mubr.f32.mxu0 0.0
        %1784 = vmatmul.mubr.f32.gmra.mxu0 %v1690
        %v1785 = vpop.f32.mrf.mxu0
        %v1786 = vadd.f32 0.0, %v1785
        %v1787 = vpop.f32.mrf.mxu0
        %1788 = vmatprep.mubr.f32.mxu0 0.0
        %1789 = vmatmul.mubr.f32.gmra.mxu0 %v1693
        %v1790 = vpop.f32.mrf.mxu0
        %v1791 = vadd.f32 0.0, %v1790
        %v1792 = vpop.f32.mrf.mxu0
        %1793 = vmatprep.mubr.f32.mxu0 0.0
        %1794 = vmatmul.mubr.f32.gmra.mxu0 %v1696
        %v1795 = vpop.f32.mrf.mxu0
        %v1796 = vadd.f32 0.0, %v1795
        %v1797 = vpop.f32.mrf.mxu0
        %1798 = vmatprep.mubr.f32.mxu0 0.0
        %1799 = vmatmul.mubr.f32.gmra.mxu0 %v1699
        %v1800 = vpop.f32.mrf.mxu0
        %v1801 = vadd.f32 0.0, %v1800
        %v1802 = vpop.f32.mrf.mxu0
        %1803 = vmatprep.mubr.f32.mxu0 0.0
        %1804 = vmatmul.mubr.f32.gmra.mxu0 %v1702
        %v1805 = vpop.f32.mrf.mxu0
        %v1806 = vadd.f32 0.0, %v1805
        %v1807 = vpop.f32.mrf.mxu0
        %1808 = vdwg.mxu0
        %v1809 = vadd.f32 %v1662, %v1771
        %v1810 = vadd.f32 %v1663, %v1776
        %v1811 = vadd.f32 %v1664, %v1781
        %v1812 = vadd.f32 %v1665, %v1786
        %v1813 = vadd.f32 %v1666, %v1791
        %v1814 = vadd.f32 %v1667, %v1796
        %v1815 = vadd.f32 %v1668, %v1801
        %v1816 = vadd.f32 %v1669, %v1806
        %v1817 = vld [vmem:[%s362 + $0x1] sm:$0xff]
        %v1818 = vld [vmem:[%s362 + $0x11] sm:$0xff]
        %v1819 = vld [vmem:[%s362 + $0x21] sm:$0xff]
        %v1820 = vld [vmem:[%s362 + $0x31] sm:$0xff]
        %v1821 = vld [vmem:[%s362 + $0x41] sm:$0xff]
        %v1822 = vld [vmem:[%s362 + $0x51] sm:$0xff]
        %v1823 = vld [vmem:[%s362 + $0x61] sm:$0xff]
        %v1824 = vld [vmem:[%s362 + $0x71] sm:$0xff]
        %s1825 = scalar_lea.vmem %s4, 80
        %v1826 = vld [vmem:[%s1825] sm:$0xff]
        %v1828 = vsel %vm382, %v1817, 0
        %v1831 = vsel %vm382, %v1818, 0
        %v1834 = vsel %vm382, %v1819, 0
        %v1837 = vsel %vm382, %v1820, 0
        %v1840 = vsel %vm382, %v1821, 0
        %v1843 = vsel %vm382, %v1822, 0
        %v1846 = vsel %vm382, %v1823, 0
        %v1849 = vsel %vm382, %v1824, 0
        %1851 = vmatprep.subr.mxu0 0.0
        %1852 = vmatpush1.msra.mxu0 0.0
        %1853 = vmatprep.subr.mxu0 0.0
        %1854 = vmatpush1.msra.mxu0 0.0
        %1855 = vmatprep.subr.mxu0 0.0
        %1856 = vmatpush1.msra.mxu0 0.0
        %1857 = vmatprep.subr.mxu0 0.0
        %1858 = vmatpush1.msra.mxu0 0.0
        %1859 = vmatprep.subr.mxu0 0.0
        %1860 = vmatpush1.msra.mxu0 0.0
        %1861 = vmatprep.subr.mxu0 0.0
        %1862 = vmatpush1.msra.mxu0 0.0
        %1863 = vmatprep.subr.mxu0 0.0
        %1864 = vmatpush1.msra.mxu0 0.0
        %1865 = vmatprep.subr.mxu0 0.0
        %1866 = vmatpush1.msra.mxu0 0.0
        %1867 = vmatprep.subr.mxu0 0.0
        %1868 = vmatpush1.msra.mxu0 0.0
        %1869 = vmatprep.subr.mxu0 0.0
        %1870 = vmatpush1.msra.mxu0 0.0
        %1871 = vmatprep.subr.mxu0 0.0
        %1872 = vmatpush1.msra.mxu0 0.0
        %1873 = vmatprep.subr.mxu0 0.0
        %1874 = vmatpush1.msra.mxu0 0.0
        %1875 = vmatprep.subr.mxu0 0.0
        %1876 = vmatpush1.msra.mxu0 0.0
        %1877 = vmatprep.subr.mxu0 0.0
        %1878 = vmatpush1.msra.mxu0 0.0
        %1879 = vmatprep.subr.mxu0 0.0
        %1880 = vmatpush1.msra.mxu0 0.0
        %1881 = vmatprep.subr.mxu0 0.0
        %1882 = vmatpush1.msra.mxu0 %v1826
        %1883 = vmatprep.subr.mxu0 0.0
        %1884 = vmatpush2.msra.mxu0 0.0
        %1885 = vmatprep.subr.mxu0 0.0
        %1886 = vmatpush2.msra.mxu0 0.0
        %1887 = vmatprep.subr.mxu0 0.0
        %1888 = vmatpush2.msra.mxu0 0.0
        %1889 = vmatprep.subr.mxu0 0.0
        %1890 = vmatpush2.msra.mxu0 0.0
        %1891 = vmatprep.subr.mxu0 0.0
        %1892 = vmatpush2.msra.mxu0 0.0
        %1893 = vmatprep.subr.mxu0 0.0
        %1894 = vmatpush2.msra.mxu0 0.0
        %1895 = vmatprep.subr.mxu0 0.0
        %1896 = vmatpush2.msra.mxu0 0.0
        %1897 = vmatprep.subr.mxu0 0.0
        %1898 = vmatpush2.msra.mxu0 0.0
        %1899 = vmatprep.subr.mxu0 0.0
        %1900 = vmatpush2.msra.mxu0 0.0
        %1901 = vmatprep.subr.mxu0 0.0
        %1902 = vmatpush2.msra.mxu0 0.0
        %1903 = vmatprep.subr.mxu0 0.0
        %1904 = vmatpush2.msra.mxu0 0.0
        %1905 = vmatprep.subr.mxu0 0.0
        %1906 = vmatpush2.msra.mxu0 0.0
        %1907 = vmatprep.subr.mxu0 0.0
        %1908 = vmatpush2.msra.mxu0 0.0
        %1909 = vmatprep.subr.mxu0 0.0
        %1910 = vmatpush2.msra.mxu0 0.0
        %1911 = vmatprep.subr.mxu0 0.0
        %1912 = vmatpush2.msra.mxu0 0.0
        %1913 = vmatprep.subr.mxu0 0.0
        %1914 = vmatpush2.msra.mxu0 0.0
        %1915 = vmatprep.mubr.f32.mxu0 0.0
        %1916 = vmatmul.mubr.f32.gmra.mxu0 %v1828
        %v1917 = vpop.f32.mrf.mxu0
        %v1918 = vadd.f32 0.0, %v1917
        %v1919 = vpop.f32.mrf.mxu0
        %1920 = vmatprep.mubr.f32.mxu0 0.0
        %1921 = vmatmul.mubr.f32.gmra.mxu0 %v1831
        %v1922 = vpop.f32.mrf.mxu0
        %v1923 = vadd.f32 0.0, %v1922
        %v1924 = vpop.f32.mrf.mxu0
        %1925 = vmatprep.mubr.f32.mxu0 0.0
        %1926 = vmatmul.mubr.f32.gmra.mxu0 %v1834
        %v1927 = vpop.f32.mrf.mxu0
        %v1928 = vadd.f32 0.0, %v1927
        %v1929 = vpop.f32.mrf.mxu0
        %1930 = vmatprep.mubr.f32.mxu0 0.0
        %1931 = vmatmul.mubr.f32.gmra.mxu0 %v1837
        %v1932 = vpop.f32.mrf.mxu0
        %v1933 = vadd.f32 0.0, %v1932
        %v1934 = vpop.f32.mrf.mxu0
        %1935 = vmatprep.mubr.f32.mxu0 0.0
        %1936 = vmatmul.mubr.f32.gmra.mxu0 %v1840
        %v1937 = vpop.f32.mrf.mxu0
        %v1938 = vadd.f32 0.0, %v1937
        %v1939 = vpop.f32.mrf.mxu0
        %1940 = vmatprep.mubr.f32.mxu0 0.0
        %1941 = vmatmul.mubr.f32.gmra.mxu0 %v1843
        %v1942 = vpop.f32.mrf.mxu0
        %v1943 = vadd.f32 0.0, %v1942
        %v1944 = vpop.f32.mrf.mxu0
        %1945 = vmatprep.mubr.f32.mxu0 0.0
        %1946 = vmatmul.mubr.f32.gmra.mxu0 %v1846
        %v1947 = vpop.f32.mrf.mxu0
        %v1948 = vadd.f32 0.0, %v1947
        %v1949 = vpop.f32.mrf.mxu0
        %1950 = vmatprep.mubr.f32.mxu0 0.0
        %1951 = vmatmul.mubr.f32.gmra.mxu0 %v1849
        %v1952 = vpop.f32.mrf.mxu0
        %v1953 = vadd.f32 0.0, %v1952
        %v1954 = vpop.f32.mrf.mxu0
        %1955 = vdwg.mxu0
        %v1956 = vadd.f32 %v1809, %v1918
        %v1957 = vadd.f32 %v1810, %v1923
        %v1958 = vadd.f32 %v1811, %v1928
        %v1959 = vadd.f32 %v1812, %v1933
        %v1960 = vadd.f32 %v1813, %v1938
        %v1961 = vadd.f32 %v1814, %v1943
        %v1962 = vadd.f32 %v1815, %v1948
        %v1963 = vadd.f32 %v1816, %v1953
        %v1964 = vld [vmem:[%s357 + $0x2] sm:$0xff]
        %v1965 = vld [vmem:[%s357 + $0x12] sm:$0xff]
        %v1966 = vld [vmem:[%s357 + $0x22] sm:$0xff]
        %v1967 = vld [vmem:[%s357 + $0x32] sm:$0xff]
        %v1968 = vld [vmem:[%s357 + $0x42] sm:$0xff]
        %v1969 = vld [vmem:[%s357 + $0x52] sm:$0xff]
        %v1970 = vld [vmem:[%s357 + $0x62] sm:$0xff]
        %v1971 = vld [vmem:[%s357 + $0x72] sm:$0xff]
        %s1972 = scalar_lea.vmem %s4, 88
        %v1973 = vld [vmem:[%s1972] sm:$0xff]
        %v1975 = vsel %vm382, %v1964, 0
        %v1978 = vsel %vm382, %v1965, 0
        %v1981 = vsel %vm382, %v1966, 0
        %v1984 = vsel %vm382, %v1967, 0
        %v1987 = vsel %vm382, %v1968, 0
        %v1990 = vsel %vm382, %v1969, 0
        %v1993 = vsel %vm382, %v1970, 0
        %v1996 = vsel %vm382, %v1971, 0
        %1998 = vmatprep.subr.mxu0 0.0
        %1999 = vmatpush1.msra.mxu0 0.0
        %2000 = vmatprep.subr.mxu0 0.0
        %2001 = vmatpush1.msra.mxu0 0.0
        %2002 = vmatprep.subr.mxu0 0.0
        %2003 = vmatpush1.msra.mxu0 0.0
        %2004 = vmatprep.subr.mxu0 0.0
        %2005 = vmatpush1.msra.mxu0 0.0
        %2006 = vmatprep.subr.mxu0 0.0
        %2007 = vmatpush1.msra.mxu0 0.0
        %2008 = vmatprep.subr.mxu0 0.0
        %2009 = vmatpush1.msra.mxu0 0.0
        %2010 = vmatprep.subr.mxu0 0.0
        %2011 = vmatpush1.msra.mxu0 0.0
        %2012 = vmatprep.subr.mxu0 0.0
        %2013 = vmatpush1.msra.mxu0 0.0
        %2014 = vmatprep.subr.mxu0 0.0
        %2015 = vmatpush1.msra.mxu0 0.0
        %2016 = vmatprep.subr.mxu0 0.0
        %2017 = vmatpush1.msra.mxu0 0.0
        %2018 = vmatprep.subr.mxu0 0.0
        %2019 = vmatpush1.msra.mxu0 0.0
        %2020 = vmatprep.subr.mxu0 0.0
        %2021 = vmatpush1.msra.mxu0 0.0
        %2022 = vmatprep.subr.mxu0 0.0
        %2023 = vmatpush1.msra.mxu0 0.0
        %2024 = vmatprep.subr.mxu0 0.0
        %2025 = vmatpush1.msra.mxu0 0.0
        %2026 = vmatprep.subr.mxu0 0.0
        %2027 = vmatpush1.msra.mxu0 0.0
        %2028 = vmatprep.subr.mxu0 0.0
        %2029 = vmatpush1.msra.mxu0 %v1973
        %2030 = vmatprep.subr.mxu0 0.0
        %2031 = vmatpush2.msra.mxu0 0.0
        %2032 = vmatprep.subr.mxu0 0.0
        %2033 = vmatpush2.msra.mxu0 0.0
        %2034 = vmatprep.subr.mxu0 0.0
        %2035 = vmatpush2.msra.mxu0 0.0
        %2036 = vmatprep.subr.mxu0 0.0
        %2037 = vmatpush2.msra.mxu0 0.0
        %2038 = vmatprep.subr.mxu0 0.0
        %2039 = vmatpush2.msra.mxu0 0.0
        %2040 = vmatprep.subr.mxu0 0.0
        %2041 = vmatpush2.msra.mxu0 0.0
        %2042 = vmatprep.subr.mxu0 0.0
        %2043 = vmatpush2.msra.mxu0 0.0
        %2044 = vmatprep.subr.mxu0 0.0
        %2045 = vmatpush2.msra.mxu0 0.0
        %2046 = vmatprep.subr.mxu0 0.0
        %2047 = vmatpush2.msra.mxu0 0.0
        %2048 = vmatprep.subr.mxu0 0.0
        %2049 = vmatpush2.msra.mxu0 0.0
        %2050 = vmatprep.subr.mxu0 0.0
        %2051 = vmatpush2.msra.mxu0 0.0
        %2052 = vmatprep.subr.mxu0 0.0
        %2053 = vmatpush2.msra.mxu0 0.0
        %2054 = vmatprep.subr.mxu0 0.0
        %2055 = vmatpush2.msra.mxu0 0.0
        %2056 = vmatprep.subr.mxu0 0.0
        %2057 = vmatpush2.msra.mxu0 0.0
        %2058 = vmatprep.subr.mxu0 0.0
        %2059 = vmatpush2.msra.mxu0 0.0
        %2060 = vmatprep.subr.mxu0 0.0
        %2061 = vmatpush2.msra.mxu0 0.0
        %2062 = vmatprep.mubr.f32.mxu0 0.0
        %2063 = vmatmul.mubr.f32.gmra.mxu0 %v1975
        %v2064 = vpop.f32.mrf.mxu0
        %v2065 = vadd.f32 0.0, %v2064
        %v2066 = vpop.f32.mrf.mxu0
        %2067 = vmatprep.mubr.f32.mxu0 0.0
        %2068 = vmatmul.mubr.f32.gmra.mxu0 %v1978
        %v2069 = vpop.f32.mrf.mxu0
        %v2070 = vadd.f32 0.0, %v2069
        %v2071 = vpop.f32.mrf.mxu0
        %2072 = vmatprep.mubr.f32.mxu0 0.0
        %2073 = vmatmul.mubr.f32.gmra.mxu0 %v1981
        %v2074 = vpop.f32.mrf.mxu0
        %v2075 = vadd.f32 0.0, %v2074
        %v2076 = vpop.f32.mrf.mxu0
        %2077 = vmatprep.mubr.f32.mxu0 0.0
        %2078 = vmatmul.mubr.f32.gmra.mxu0 %v1984
        %v2079 = vpop.f32.mrf.mxu0
        %v2080 = vadd.f32 0.0, %v2079
        %v2081 = vpop.f32.mrf.mxu0
        %2082 = vmatprep.mubr.f32.mxu0 0.0
        %2083 = vmatmul.mubr.f32.gmra.mxu0 %v1987
        %v2084 = vpop.f32.mrf.mxu0
        %v2085 = vadd.f32 0.0, %v2084
        %v2086 = vpop.f32.mrf.mxu0
        %2087 = vmatprep.mubr.f32.mxu0 0.0
        %2088 = vmatmul.mubr.f32.gmra.mxu0 %v1990
        %v2089 = vpop.f32.mrf.mxu0
        %v2090 = vadd.f32 0.0, %v2089
        %v2091 = vpop.f32.mrf.mxu0
        %2092 = vmatprep.mubr.f32.mxu0 0.0
        %2093 = vmatmul.mubr.f32.gmra.mxu0 %v1993
        %v2094 = vpop.f32.mrf.mxu0
        %v2095 = vadd.f32 0.0, %v2094
        %v2096 = vpop.f32.mrf.mxu0
        %2097 = vmatprep.mubr.f32.mxu0 0.0
        %2098 = vmatmul.mubr.f32.gmra.mxu0 %v1996
        %v2099 = vpop.f32.mrf.mxu0
        %v2100 = vadd.f32 0.0, %v2099
        %v2101 = vpop.f32.mrf.mxu0
        %2102 = vdwg.mxu0
        %v2103 = vadd.f32 %v1956, %v2065
        %v2104 = vadd.f32 %v1957, %v2070
        %v2105 = vadd.f32 %v1958, %v2075
        %v2106 = vadd.f32 %v1959, %v2080
        %v2107 = vadd.f32 %v1960, %v2085
        %v2108 = vadd.f32 %v1961, %v2090
        %v2109 = vadd.f32 %v1962, %v2095
        %v2110 = vadd.f32 %v1963, %v2100
        %v2111 = vld [vmem:[%s362 + $0x2] sm:$0xff]
        %v2112 = vld [vmem:[%s362 + $0x12] sm:$0xff]
        %v2113 = vld [vmem:[%s362 + $0x22] sm:$0xff]
        %v2114 = vld [vmem:[%s362 + $0x32] sm:$0xff]
        %v2115 = vld [vmem:[%s362 + $0x42] sm:$0xff]
        %v2116 = vld [vmem:[%s362 + $0x52] sm:$0xff]
        %v2117 = vld [vmem:[%s362 + $0x62] sm:$0xff]
        %v2118 = vld [vmem:[%s362 + $0x72] sm:$0xff]
        %s2119 = scalar_lea.vmem %s4, 96
        %v2120 = vld [vmem:[%s2119] sm:$0xff]
        %v2122 = vsel %vm382, %v2111, 0
        %v2125 = vsel %vm382, %v2112, 0
        %v2128 = vsel %vm382, %v2113, 0
        %v2131 = vsel %vm382, %v2114, 0
        %v2134 = vsel %vm382, %v2115, 0
        %v2137 = vsel %vm382, %v2116, 0
        %v2140 = vsel %vm382, %v2117, 0
        %v2143 = vsel %vm382, %v2118, 0
        %2145 = vmatprep.subr.mxu0 0.0
        %2146 = vmatpush1.msra.mxu0 0.0
        %2147 = vmatprep.subr.mxu0 0.0
        %2148 = vmatpush1.msra.mxu0 0.0
        %2149 = vmatprep.subr.mxu0 0.0
        %2150 = vmatpush1.msra.mxu0 0.0
        %2151 = vmatprep.subr.mxu0 0.0
        %2152 = vmatpush1.msra.mxu0 0.0
        %2153 = vmatprep.subr.mxu0 0.0
        %2154 = vmatpush1.msra.mxu0 0.0
        %2155 = vmatprep.subr.mxu0 0.0
        %2156 = vmatpush1.msra.mxu0 0.0
        %2157 = vmatprep.subr.mxu0 0.0
        %2158 = vmatpush1.msra.mxu0 0.0
        %2159 = vmatprep.subr.mxu0 0.0
        %2160 = vmatpush1.msra.mxu0 0.0
        %2161 = vmatprep.subr.mxu0 0.0
        %2162 = vmatpush1.msra.mxu0 0.0
        %2163 = vmatprep.subr.mxu0 0.0
        %2164 = vmatpush1.msra.mxu0 0.0
        %2165 = vmatprep.subr.mxu0 0.0
        %2166 = vmatpush1.msra.mxu0 0.0
        %2167 = vmatprep.subr.mxu0 0.0
        %2168 = vmatpush1.msra.mxu0 0.0
        %2169 = vmatprep.subr.mxu0 0.0
        %2170 = vmatpush1.msra.mxu0 0.0
        %2171 = vmatprep.subr.mxu0 0.0
        %2172 = vmatpush1.msra.mxu0 0.0
        %2173 = vmatprep.subr.mxu0 0.0
        %2174 = vmatpush1.msra.mxu0 0.0
        %2175 = vmatprep.subr.mxu0 0.0
        %2176 = vmatpush1.msra.mxu0 %v2120
        %2177 = vmatprep.subr.mxu0 0.0
        %2178 = vmatpush2.msra.mxu0 0.0
        %2179 = vmatprep.subr.mxu0 0.0
        %2180 = vmatpush2.msra.mxu0 0.0
        %2181 = vmatprep.subr.mxu0 0.0
        %2182 = vmatpush2.msra.mxu0 0.0
        %2183 = vmatprep.subr.mxu0 0.0
        %2184 = vmatpush2.msra.mxu0 0.0
        %2185 = vmatprep.subr.mxu0 0.0
        %2186 = vmatpush2.msra.mxu0 0.0
        %2187 = vmatprep.subr.mxu0 0.0
        %2188 = vmatpush2.msra.mxu0 0.0
        %2189 = vmatprep.subr.mxu0 0.0
        %2190 = vmatpush2.msra.mxu0 0.0
        %2191 = vmatprep.subr.mxu0 0.0
        %2192 = vmatpush2.msra.mxu0 0.0
        %2193 = vmatprep.subr.mxu0 0.0
        %2194 = vmatpush2.msra.mxu0 0.0
        %2195 = vmatprep.subr.mxu0 0.0
        %2196 = vmatpush2.msra.mxu0 0.0
        %2197 = vmatprep.subr.mxu0 0.0
        %2198 = vmatpush2.msra.mxu0 0.0
        %2199 = vmatprep.subr.mxu0 0.0
        %2200 = vmatpush2.msra.mxu0 0.0
        %2201 = vmatprep.subr.mxu0 0.0
        %2202 = vmatpush2.msra.mxu0 0.0
        %2203 = vmatprep.subr.mxu0 0.0
        %2204 = vmatpush2.msra.mxu0 0.0
        %2205 = vmatprep.subr.mxu0 0.0
        %2206 = vmatpush2.msra.mxu0 0.0
        %2207 = vmatprep.subr.mxu0 0.0
        %2208 = vmatpush2.msra.mxu0 0.0
        %2209 = vmatprep.mubr.f32.mxu0 0.0
        %2210 = vmatmul.mubr.f32.gmra.mxu0 %v2122
        %v2211 = vpop.f32.mrf.mxu0
        %v2212 = vadd.f32 0.0, %v2211
        %v2213 = vpop.f32.mrf.mxu0
        %2214 = vmatprep.mubr.f32.mxu0 0.0
        %2215 = vmatmul.mubr.f32.gmra.mxu0 %v2125
        %v2216 = vpop.f32.mrf.mxu0
        %v2217 = vadd.f32 0.0, %v2216
        %v2218 = vpop.f32.mrf.mxu0
        %2219 = vmatprep.mubr.f32.mxu0 0.0
        %2220 = vmatmul.mubr.f32.gmra.mxu0 %v2128
        %v2221 = vpop.f32.mrf.mxu0
        %v2222 = vadd.f32 0.0, %v2221
        %v2223 = vpop.f32.mrf.mxu0
        %2224 = vmatprep.mubr.f32.mxu0 0.0
        %2225 = vmatmul.mubr.f32.gmra.mxu0 %v2131
        %v2226 = vpop.f32.mrf.mxu0
        %v2227 = vadd.f32 0.0, %v2226
        %v2228 = vpop.f32.mrf.mxu0
        %2229 = vmatprep.mubr.f32.mxu0 0.0
        %2230 = vmatmul.mubr.f32.gmra.mxu0 %v2134
        %v2231 = vpop.f32.mrf.mxu0
        %v2232 = vadd.f32 0.0, %v2231
        %v2233 = vpop.f32.mrf.mxu0
        %2234 = vmatprep.mubr.f32.mxu0 0.0
        %2235 = vmatmul.mubr.f32.gmra.mxu0 %v2137
        %v2236 = vpop.f32.mrf.mxu0
        %v2237 = vadd.f32 0.0, %v2236
        %v2238 = vpop.f32.mrf.mxu0
        %2239 = vmatprep.mubr.f32.mxu0 0.0
        %2240 = vmatmul.mubr.f32.gmra.mxu0 %v2140
        %v2241 = vpop.f32.mrf.mxu0
        %v2242 = vadd.f32 0.0, %v2241
        %v2243 = vpop.f32.mrf.mxu0
        %2244 = vmatprep.mubr.f32.mxu0 0.0
        %2245 = vmatmul.mubr.f32.gmra.mxu0 %v2143
        %v2246 = vpop.f32.mrf.mxu0
        %v2247 = vadd.f32 0.0, %v2246
        %v2248 = vpop.f32.mrf.mxu0
        %2249 = vdwg.mxu0
        %v2250 = vadd.f32 %v2103, %v2212
        %v2251 = vadd.f32 %v2104, %v2217
        %v2252 = vadd.f32 %v2105, %v2222
        %v2253 = vadd.f32 %v2106, %v2227
        %v2254 = vadd.f32 %v2107, %v2232
        %v2255 = vadd.f32 %v2108, %v2237
        %v2256 = vadd.f32 %v2109, %v2242
        %v2257 = vadd.f32 %v2110, %v2247
        %v2258 = vld [vmem:[%s357 + $0x3] sm:$0xff]
        %v2259 = vld [vmem:[%s357 + $0x13] sm:$0xff]
        %v2260 = vld [vmem:[%s357 + $0x23] sm:$0xff]
        %v2261 = vld [vmem:[%s357 + $0x33] sm:$0xff]
        %v2262 = vld [vmem:[%s357 + $0x43] sm:$0xff]
        %v2263 = vld [vmem:[%s357 + $0x53] sm:$0xff]
        %v2264 = vld [vmem:[%s357 + $0x63] sm:$0xff]
        %v2265 = vld [vmem:[%s357 + $0x73] sm:$0xff]
        %s2266 = scalar_lea.vmem %s4, 104
        %v2267 = vld [vmem:[%s2266] sm:$0xff]
        %v2269 = vsel %vm382, %v2258, 0
        %v2272 = vsel %vm382, %v2259, 0
        %v2275 = vsel %vm382, %v2260, 0
        %v2278 = vsel %vm382, %v2261, 0
        %v2281 = vsel %vm382, %v2262, 0
        %v2284 = vsel %vm382, %v2263, 0
        %v2287 = vsel %vm382, %v2264, 0
        %v2290 = vsel %vm382, %v2265, 0
        %2292 = vmatprep.subr.mxu0 0.0
        %2293 = vmatpush1.msra.mxu0 0.0
        %2294 = vmatprep.subr.mxu0 0.0
        %2295 = vmatpush1.msra.mxu0 0.0
        %2296 = vmatprep.subr.mxu0 0.0
        %2297 = vmatpush1.msra.mxu0 0.0
        %2298 = vmatprep.subr.mxu0 0.0
        %2299 = vmatpush1.msra.mxu0 0.0
        %2300 = vmatprep.subr.mxu0 0.0
        %2301 = vmatpush1.msra.mxu0 0.0
        %2302 = vmatprep.subr.mxu0 0.0
        %2303 = vmatpush1.msra.mxu0 0.0
        %2304 = vmatprep.subr.mxu0 0.0
        %2305 = vmatpush1.msra.mxu0 0.0
        %2306 = vmatprep.subr.mxu0 0.0
        %2307 = vmatpush1.msra.mxu0 0.0
        %2308 = vmatprep.subr.mxu0 0.0
        %2309 = vmatpush1.msra.mxu0 0.0
        %2310 = vmatprep.subr.mxu0 0.0
        %2311 = vmatpush1.msra.mxu0 0.0
        %2312 = vmatprep.subr.mxu0 0.0
        %2313 = vmatpush1.msra.mxu0 0.0
        %2314 = vmatprep.subr.mxu0 0.0
        %2315 = vmatpush1.msra.mxu0 0.0
        %2316 = vmatprep.subr.mxu0 0.0
        %2317 = vmatpush1.msra.mxu0 0.0
        %2318 = vmatprep.subr.mxu0 0.0
        %2319 = vmatpush1.msra.mxu0 0.0
        %2320 = vmatprep.subr.mxu0 0.0
        %2321 = vmatpush1.msra.mxu0 0.0
        %2322 = vmatprep.subr.mxu0 0.0
        %2323 = vmatpush1.msra.mxu0 %v2267
        %2324 = vmatprep.subr.mxu0 0.0
        %2325 = vmatpush2.msra.mxu0 0.0
        %2326 = vmatprep.subr.mxu0 0.0
        %2327 = vmatpush2.msra.mxu0 0.0
        %2328 = vmatprep.subr.mxu0 0.0
        %2329 = vmatpush2.msra.mxu0 0.0
        %2330 = vmatprep.subr.mxu0 0.0
        %2331 = vmatpush2.msra.mxu0 0.0
        %2332 = vmatprep.subr.mxu0 0.0
        %2333 = vmatpush2.msra.mxu0 0.0
        %2334 = vmatprep.subr.mxu0 0.0
        %2335 = vmatpush2.msra.mxu0 0.0
        %2336 = vmatprep.subr.mxu0 0.0
        %2337 = vmatpush2.msra.mxu0 0.0
        %2338 = vmatprep.subr.mxu0 0.0
        %2339 = vmatpush2.msra.mxu0 0.0
        %2340 = vmatprep.subr.mxu0 0.0
        %2341 = vmatpush2.msra.mxu0 0.0
        %2342 = vmatprep.subr.mxu0 0.0
        %2343 = vmatpush2.msra.mxu0 0.0
        %2344 = vmatprep.subr.mxu0 0.0
        %2345 = vmatpush2.msra.mxu0 0.0
        %2346 = vmatprep.subr.mxu0 0.0
        %2347 = vmatpush2.msra.mxu0 0.0
        %2348 = vmatprep.subr.mxu0 0.0
        %2349 = vmatpush2.msra.mxu0 0.0
        %2350 = vmatprep.subr.mxu0 0.0
        %2351 = vmatpush2.msra.mxu0 0.0
        %2352 = vmatprep.subr.mxu0 0.0
        %2353 = vmatpush2.msra.mxu0 0.0
        %2354 = vmatprep.subr.mxu0 0.0
        %2355 = vmatpush2.msra.mxu0 0.0
        %2356 = vmatprep.mubr.f32.mxu0 0.0
        %2357 = vmatmul.mubr.f32.gmra.mxu0 %v2269
        %v2358 = vpop.f32.mrf.mxu0
        %v2359 = vadd.f32 0.0, %v2358
        %v2360 = vpop.f32.mrf.mxu0
        %2361 = vmatprep.mubr.f32.mxu0 0.0
        %2362 = vmatmul.mubr.f32.gmra.mxu0 %v2272
        %v2363 = vpop.f32.mrf.mxu0
        %v2364 = vadd.f32 0.0, %v2363
        %v2365 = vpop.f32.mrf.mxu0
        %2366 = vmatprep.mubr.f32.mxu0 0.0
        %2367 = vmatmul.mubr.f32.gmra.mxu0 %v2275
        %v2368 = vpop.f32.mrf.mxu0
        %v2369 = vadd.f32 0.0, %v2368
        %v2370 = vpop.f32.mrf.mxu0
        %2371 = vmatprep.mubr.f32.mxu0 0.0
        %2372 = vmatmul.mubr.f32.gmra.mxu0 %v2278
        %v2373 = vpop.f32.mrf.mxu0
        %v2374 = vadd.f32 0.0, %v2373
        %v2375 = vpop.f32.mrf.mxu0
        %2376 = vmatprep.mubr.f32.mxu0 0.0
        %2377 = vmatmul.mubr.f32.gmra.mxu0 %v2281
        %v2378 = vpop.f32.mrf.mxu0
        %v2379 = vadd.f32 0.0, %v2378
        %v2380 = vpop.f32.mrf.mxu0
        %2381 = vmatprep.mubr.f32.mxu0 0.0
        %2382 = vmatmul.mubr.f32.gmra.mxu0 %v2284
        %v2383 = vpop.f32.mrf.mxu0
        %v2384 = vadd.f32 0.0, %v2383
        %v2385 = vpop.f32.mrf.mxu0
        %2386 = vmatprep.mubr.f32.mxu0 0.0
        %2387 = vmatmul.mubr.f32.gmra.mxu0 %v2287
        %v2388 = vpop.f32.mrf.mxu0
        %v2389 = vadd.f32 0.0, %v2388
        %v2390 = vpop.f32.mrf.mxu0
        %2391 = vmatprep.mubr.f32.mxu0 0.0
        %2392 = vmatmul.mubr.f32.gmra.mxu0 %v2290
        %v2393 = vpop.f32.mrf.mxu0
        %v2394 = vadd.f32 0.0, %v2393
        %v2395 = vpop.f32.mrf.mxu0
        %2396 = vdwg.mxu0
        %v2397 = vadd.f32 %v2250, %v2359
        %v2398 = vadd.f32 %v2251, %v2364
        %v2399 = vadd.f32 %v2252, %v2369
        %v2400 = vadd.f32 %v2253, %v2374
        %v2401 = vadd.f32 %v2254, %v2379
        %v2402 = vadd.f32 %v2255, %v2384
        %v2403 = vadd.f32 %v2256, %v2389
        %v2404 = vadd.f32 %v2257, %v2394
        %s2405 = scalar_lea.vmem %s347, 16
        %v2406 = vld [vmem:[%s2405] sm:$0xff]
        %v2407 = vld [vmem:[%s2405 + $0x10] sm:$0xff]
        %v2408 = vld [vmem:[%s2405 + $0x20] sm:$0xff]
        %v2409 = vld [vmem:[%s2405 + $0x30] sm:$0xff]
        %v2410 = vld [vmem:[%s2405 + $0x40] sm:$0xff]
        %v2411 = vld [vmem:[%s2405 + $0x50] sm:$0xff]
        %v2412 = vld [vmem:[%s2405 + $0x60] sm:$0xff]
        %v2413 = vld [vmem:[%s2405 + $0x70] sm:$0xff]
        %s2414 = scalar_lea.vmem %s4, 112
        %v2415 = vld [vmem:[%s2414] sm:$0xff]
        %v2417 = vsel %vm382, %v2406, 0
        %v2420 = vsel %vm382, %v2407, 0
        %v2423 = vsel %vm382, %v2408, 0
        %v2426 = vsel %vm382, %v2409, 0
        %v2429 = vsel %vm382, %v2410, 0
        %v2432 = vsel %vm382, %v2411, 0
        %v2435 = vsel %vm382, %v2412, 0
        %v2438 = vsel %vm382, %v2413, 0
        %2440 = vmatprep.subr.mxu0 0.0
        %2441 = vmatpush1.msra.mxu0 0.0
        %2442 = vmatprep.subr.mxu0 0.0
        %2443 = vmatpush1.msra.mxu0 0.0
        %2444 = vmatprep.subr.mxu0 0.0
        %2445 = vmatpush1.msra.mxu0 0.0
        %2446 = vmatprep.subr.mxu0 0.0
        %2447 = vmatpush1.msra.mxu0 0.0
        %2448 = vmatprep.subr.mxu0 0.0
        %2449 = vmatpush1.msra.mxu0 0.0
        %2450 = vmatprep.subr.mxu0 0.0
        %2451 = vmatpush1.msra.mxu0 0.0
        %2452 = vmatprep.subr.mxu0 0.0
        %2453 = vmatpush1.msra.mxu0 0.0
        %2454 = vmatprep.subr.mxu0 0.0
        %2455 = vmatpush1.msra.mxu0 0.0
        %2456 = vmatprep.subr.mxu0 0.0
        %2457 = vmatpush1.msra.mxu0 0.0
        %2458 = vmatprep.subr.mxu0 0.0
        %2459 = vmatpush1.msra.mxu0 0.0
        %2460 = vmatprep.subr.mxu0 0.0
        %2461 = vmatpush1.msra.mxu0 0.0
        %2462 = vmatprep.subr.mxu0 0.0
        %2463 = vmatpush1.msra.mxu0 0.0
        %2464 = vmatprep.subr.mxu0 0.0
        %2465 = vmatpush1.msra.mxu0 0.0
        %2466 = vmatprep.subr.mxu0 0.0
        %2467 = vmatpush1.msra.mxu0 0.0
        %2468 = vmatprep.subr.mxu0 0.0
        %2469 = vmatpush1.msra.mxu0 0.0
        %2470 = vmatprep.subr.mxu0 0.0
        %2471 = vmatpush1.msra.mxu0 %v2415
        %2472 = vmatprep.subr.mxu0 0.0
        %2473 = vmatpush2.msra.mxu0 0.0
        %2474 = vmatprep.subr.mxu0 0.0
        %2475 = vmatpush2.msra.mxu0 0.0
        %2476 = vmatprep.subr.mxu0 0.0
        %2477 = vmatpush2.msra.mxu0 0.0
        %2478 = vmatprep.subr.mxu0 0.0
        %2479 = vmatpush2.msra.mxu0 0.0
        %2480 = vmatprep.subr.mxu0 0.0
        %2481 = vmatpush2.msra.mxu0 0.0
        %2482 = vmatprep.subr.mxu0 0.0
        %2483 = vmatpush2.msra.mxu0 0.0
        %2484 = vmatprep.subr.mxu0 0.0
        %2485 = vmatpush2.msra.mxu0 0.0
        %2486 = vmatprep.subr.mxu0 0.0
        %2487 = vmatpush2.msra.mxu0 0.0
        %2488 = vmatprep.subr.mxu0 0.0
        %2489 = vmatpush2.msra.mxu0 0.0
        %2490 = vmatprep.subr.mxu0 0.0
        %2491 = vmatpush2.msra.mxu0 0.0
        %2492 = vmatprep.subr.mxu0 0.0
        %2493 = vmatpush2.msra.mxu0 0.0
        %2494 = vmatprep.subr.mxu0 0.0
        %2495 = vmatpush2.msra.mxu0 0.0
        %2496 = vmatprep.subr.mxu0 0.0
        %2497 = vmatpush2.msra.mxu0 0.0
        %2498 = vmatprep.subr.mxu0 0.0
        %2499 = vmatpush2.msra.mxu0 0.0
        %2500 = vmatprep.subr.mxu0 0.0
        %2501 = vmatpush2.msra.mxu0 0.0
        %2502 = vmatprep.subr.mxu0 0.0
        %2503 = vmatpush2.msra.mxu0 0.0
        %2504 = vmatprep.mubr.f32.mxu0 0.0
        %2505 = vmatmul.mubr.f32.gmra.mxu0 %v2417
        %v2506 = vpop.f32.mrf.mxu0
        %v2507 = vadd.f32 0.0, %v2506
        %v2508 = vpop.f32.mrf.mxu0
        %2509 = vmatprep.mubr.f32.mxu0 0.0
        %2510 = vmatmul.mubr.f32.gmra.mxu0 %v2420
        %v2511 = vpop.f32.mrf.mxu0
        %v2512 = vadd.f32 0.0, %v2511
        %v2513 = vpop.f32.mrf.mxu0
        %2514 = vmatprep.mubr.f32.mxu0 0.0
        %2515 = vmatmul.mubr.f32.gmra.mxu0 %v2423
        %v2516 = vpop.f32.mrf.mxu0
        %v2517 = vadd.f32 0.0, %v2516
        %v2518 = vpop.f32.mrf.mxu0
        %2519 = vmatprep.mubr.f32.mxu0 0.0
        %2520 = vmatmul.mubr.f32.gmra.mxu0 %v2426
        %v2521 = vpop.f32.mrf.mxu0
        %v2522 = vadd.f32 0.0, %v2521
        %v2523 = vpop.f32.mrf.mxu0
        %2524 = vmatprep.mubr.f32.mxu0 0.0
        %2525 = vmatmul.mubr.f32.gmra.mxu0 %v2429
        %v2526 = vpop.f32.mrf.mxu0
        %v2527 = vadd.f32 0.0, %v2526
        %v2528 = vpop.f32.mrf.mxu0
        %2529 = vmatprep.mubr.f32.mxu0 0.0
        %2530 = vmatmul.mubr.f32.gmra.mxu0 %v2432
        %v2531 = vpop.f32.mrf.mxu0
        %v2532 = vadd.f32 0.0, %v2531
        %v2533 = vpop.f32.mrf.mxu0
        %2534 = vmatprep.mubr.f32.mxu0 0.0
        %2535 = vmatmul.mubr.f32.gmra.mxu0 %v2435
        %v2536 = vpop.f32.mrf.mxu0
        %v2537 = vadd.f32 0.0, %v2536
        %v2538 = vpop.f32.mrf.mxu0
        %2539 = vmatprep.mubr.f32.mxu0 0.0
        %2540 = vmatmul.mubr.f32.gmra.mxu0 %v2438
        %v2541 = vpop.f32.mrf.mxu0
        %v2542 = vadd.f32 0.0, %v2541
        %v2543 = vpop.f32.mrf.mxu0
        %2544 = vdwg.mxu0
        %v2545 = vadd.f32 %v2397, %v2507
        %v2546 = vadd.f32 %v2398, %v2512
        %v2547 = vadd.f32 %v2399, %v2517
        %v2548 = vadd.f32 %v2400, %v2522
        %v2549 = vadd.f32 %v2401, %v2527
        %v2550 = vadd.f32 %v2402, %v2532
        %v2551 = vadd.f32 %v2403, %v2537
        %v2552 = vadd.f32 %v2404, %v2542
        %s2553 = scalar_lea.vmem %s352, 16
        %v2554 = vld [vmem:[%s2553] sm:$0xff]
        %v2555 = vld [vmem:[%s2553 + $0x10] sm:$0xff]
        %v2556 = vld [vmem:[%s2553 + $0x20] sm:$0xff]
        %v2557 = vld [vmem:[%s2553 + $0x30] sm:$0xff]
        %v2558 = vld [vmem:[%s2553 + $0x40] sm:$0xff]
        %v2559 = vld [vmem:[%s2553 + $0x50] sm:$0xff]
        %v2560 = vld [vmem:[%s2553 + $0x60] sm:$0xff]
        %v2561 = vld [vmem:[%s2553 + $0x70] sm:$0xff]
        %s2562 = scalar_lea.vmem %s4, 120
        %v2563 = vld [vmem:[%s2562] sm:$0xff]
        %v2565 = vsel %vm382, %v2554, 0
        %v2568 = vsel %vm382, %v2555, 0
        %v2571 = vsel %vm382, %v2556, 0
        %v2574 = vsel %vm382, %v2557, 0
        %v2577 = vsel %vm382, %v2558, 0
        %v2580 = vsel %vm382, %v2559, 0
        %v2583 = vsel %vm382, %v2560, 0
        %v2586 = vsel %vm382, %v2561, 0
        %2588 = vmatprep.subr.mxu0 0.0
        %2589 = vmatpush1.msra.mxu0 0.0
        %2590 = vmatprep.subr.mxu0 0.0
        %2591 = vmatpush1.msra.mxu0 0.0
        %2592 = vmatprep.subr.mxu0 0.0
        %2593 = vmatpush1.msra.mxu0 0.0
        %2594 = vmatprep.subr.mxu0 0.0
        %2595 = vmatpush1.msra.mxu0 0.0
        %2596 = vmatprep.subr.mxu0 0.0
        %2597 = vmatpush1.msra.mxu0 0.0
        %2598 = vmatprep.subr.mxu0 0.0
        %2599 = vmatpush1.msra.mxu0 0.0
        %2600 = vmatprep.subr.mxu0 0.0
        %2601 = vmatpush1.msra.mxu0 0.0
        %2602 = vmatprep.subr.mxu0 0.0
        %2603 = vmatpush1.msra.mxu0 0.0
        %2604 = vmatprep.subr.mxu0 0.0
        %2605 = vmatpush1.msra.mxu0 0.0
        %2606 = vmatprep.subr.mxu0 0.0
        %2607 = vmatpush1.msra.mxu0 0.0
        %2608 = vmatprep.subr.mxu0 0.0
        %2609 = vmatpush1.msra.mxu0 0.0
        %2610 = vmatprep.subr.mxu0 0.0
        %2611 = vmatpush1.msra.mxu0 0.0
        %2612 = vmatprep.subr.mxu0 0.0
        %2613 = vmatpush1.msra.mxu0 0.0
        %2614 = vmatprep.subr.mxu0 0.0
        %2615 = vmatpush1.msra.mxu0 0.0
        %2616 = vmatprep.subr.mxu0 0.0
        %2617 = vmatpush1.msra.mxu0 0.0
        %2618 = vmatprep.subr.mxu0 0.0
        %2619 = vmatpush1.msra.mxu0 %v2563
        %2620 = vmatprep.subr.mxu0 0.0
        %2621 = vmatpush2.msra.mxu0 0.0
        %2622 = vmatprep.subr.mxu0 0.0
        %2623 = vmatpush2.msra.mxu0 0.0
        %2624 = vmatprep.subr.mxu0 0.0
        %2625 = vmatpush2.msra.mxu0 0.0
        %2626 = vmatprep.subr.mxu0 0.0
        %2627 = vmatpush2.msra.mxu0 0.0
        %2628 = vmatprep.subr.mxu0 0.0
        %2629 = vmatpush2.msra.mxu0 0.0
        %2630 = vmatprep.subr.mxu0 0.0
        %2631 = vmatpush2.msra.mxu0 0.0
        %2632 = vmatprep.subr.mxu0 0.0
        %2633 = vmatpush2.msra.mxu0 0.0
        %2634 = vmatprep.subr.mxu0 0.0
        %2635 = vmatpush2.msra.mxu0 0.0
        %2636 = vmatprep.subr.mxu0 0.0
        %2637 = vmatpush2.msra.mxu0 0.0
        %2638 = vmatprep.subr.mxu0 0.0
        %2639 = vmatpush2.msra.mxu0 0.0
        %2640 = vmatprep.subr.mxu0 0.0
        %2641 = vmatpush2.msra.mxu0 0.0
        %2642 = vmatprep.subr.mxu0 0.0
        %2643 = vmatpush2.msra.mxu0 0.0
        %2644 = vmatprep.subr.mxu0 0.0
        %2645 = vmatpush2.msra.mxu0 0.0
        %2646 = vmatprep.subr.mxu0 0.0
        %2647 = vmatpush2.msra.mxu0 0.0
        %2648 = vmatprep.subr.mxu0 0.0
        %2649 = vmatpush2.msra.mxu0 0.0
        %2650 = vmatprep.subr.mxu0 0.0
        %2651 = vmatpush2.msra.mxu0 0.0
        %2652 = vmatprep.mubr.f32.mxu0 0.0
        %2653 = vmatmul.mubr.f32.gmra.mxu0 %v2565
        %v2654 = vpop.f32.mrf.mxu0
        %v2655 = vadd.f32 0.0, %v2654
        %v2656 = vpop.f32.mrf.mxu0
        %2657 = vmatprep.mubr.f32.mxu0 0.0
        %2658 = vmatmul.mubr.f32.gmra.mxu0 %v2568
        %v2659 = vpop.f32.mrf.mxu0
        %v2660 = vadd.f32 0.0, %v2659
        %v2661 = vpop.f32.mrf.mxu0
        %2662 = vmatprep.mubr.f32.mxu0 0.0
        %2663 = vmatmul.mubr.f32.gmra.mxu0 %v2571
        %v2664 = vpop.f32.mrf.mxu0
        %v2665 = vadd.f32 0.0, %v2664
        %v2666 = vpop.f32.mrf.mxu0
        %2667 = vmatprep.mubr.f32.mxu0 0.0
        %2668 = vmatmul.mubr.f32.gmra.mxu0 %v2574
        %v2669 = vpop.f32.mrf.mxu0
        %v2670 = vadd.f32 0.0, %v2669
        %v2671 = vpop.f32.mrf.mxu0
        %2672 = vmatprep.mubr.f32.mxu0 0.0
        %2673 = vmatmul.mubr.f32.gmra.mxu0 %v2577
        %v2674 = vpop.f32.mrf.mxu0
        %v2675 = vadd.f32 0.0, %v2674
        %v2676 = vpop.f32.mrf.mxu0
        %2677 = vmatprep.mubr.f32.mxu0 0.0
        %2678 = vmatmul.mubr.f32.gmra.mxu0 %v2580
        %v2679 = vpop.f32.mrf.mxu0
        %v2680 = vadd.f32 0.0, %v2679
        %v2681 = vpop.f32.mrf.mxu0
        %2682 = vmatprep.mubr.f32.mxu0 0.0
        %2683 = vmatmul.mubr.f32.gmra.mxu0 %v2583
        %v2684 = vpop.f32.mrf.mxu0
        %v2685 = vadd.f32 0.0, %v2684
        %v2686 = vpop.f32.mrf.mxu0
        %2687 = vmatprep.mubr.f32.mxu0 0.0
        %2688 = vmatmul.mubr.f32.gmra.mxu0 %v2586
        %v2689 = vpop.f32.mrf.mxu0
        %v2690 = vadd.f32 0.0, %v2689
        %v2691 = vpop.f32.mrf.mxu0
        %2692 = vdwg.mxu0
        %v2693 = vadd.f32 %v2545, %v2655
        %v2694 = vadd.f32 %v2546, %v2660
        %v2695 = vadd.f32 %v2547, %v2665
        %v2696 = vadd.f32 %v2548, %v2670
        %v2697 = vadd.f32 %v2549, %v2675
        %v2698 = vadd.f32 %v2550, %v2680
        %v2699 = vadd.f32 %v2551, %v2685
        %v2700 = vadd.f32 %v2552, %v2690
        %v2701 = vld [vmem:[%s2405 + $0x1] sm:$0xff]
        %v2702 = vld [vmem:[%s2405 + $0x11] sm:$0xff]
        %v2703 = vld [vmem:[%s2405 + $0x21] sm:$0xff]
        %v2704 = vld [vmem:[%s2405 + $0x31] sm:$0xff]
        %v2705 = vld [vmem:[%s2405 + $0x41] sm:$0xff]
        %v2706 = vld [vmem:[%s2405 + $0x51] sm:$0xff]
        %v2707 = vld [vmem:[%s2405 + $0x61] sm:$0xff]
        %v2708 = vld [vmem:[%s2405 + $0x71] sm:$0xff]
        %s2709 = scalar_lea.vmem %s4, 128
        %v2710 = vld [vmem:[%s2709] sm:$0xff]
        %v2712 = vsel %vm382, %v2701, 0
        %v2715 = vsel %vm382, %v2702, 0
        %v2718 = vsel %vm382, %v2703, 0
        %v2721 = vsel %vm382, %v2704, 0
        %v2724 = vsel %vm382, %v2705, 0
        %v2727 = vsel %vm382, %v2706, 0
        %v2730 = vsel %vm382, %v2707, 0
        %v2733 = vsel %vm382, %v2708, 0
        %2735 = vmatprep.subr.mxu0 0.0
        %2736 = vmatpush1.msra.mxu0 0.0
        %2737 = vmatprep.subr.mxu0 0.0
        %2738 = vmatpush1.msra.mxu0 0.0
        %2739 = vmatprep.subr.mxu0 0.0
        %2740 = vmatpush1.msra.mxu0 0.0
        %2741 = vmatprep.subr.mxu0 0.0
        %2742 = vmatpush1.msra.mxu0 0.0
        %2743 = vmatprep.subr.mxu0 0.0
        %2744 = vmatpush1.msra.mxu0 0.0
        %2745 = vmatprep.subr.mxu0 0.0
        %2746 = vmatpush1.msra.mxu0 0.0
        %2747 = vmatprep.subr.mxu0 0.0
        %2748 = vmatpush1.msra.mxu0 0.0
        %2749 = vmatprep.subr.mxu0 0.0
        %2750 = vmatpush1.msra.mxu0 0.0
        %2751 = vmatprep.subr.mxu0 0.0
        %2752 = vmatpush1.msra.mxu0 0.0
        %2753 = vmatprep.subr.mxu0 0.0
        %2754 = vmatpush1.msra.mxu0 0.0
        %2755 = vmatprep.subr.mxu0 0.0
        %2756 = vmatpush1.msra.mxu0 0.0
        %2757 = vmatprep.subr.mxu0 0.0
        %2758 = vmatpush1.msra.mxu0 0.0
        %2759 = vmatprep.subr.mxu0 0.0
        %2760 = vmatpush1.msra.mxu0 0.0
        %2761 = vmatprep.subr.mxu0 0.0
        %2762 = vmatpush1.msra.mxu0 0.0
        %2763 = vmatprep.subr.mxu0 0.0
        %2764 = vmatpush1.msra.mxu0 0.0
        %2765 = vmatprep.subr.mxu0 0.0
        %2766 = vmatpush1.msra.mxu0 %v2710
        %2767 = vmatprep.subr.mxu0 0.0
        %2768 = vmatpush2.msra.mxu0 0.0
        %2769 = vmatprep.subr.mxu0 0.0
        %2770 = vmatpush2.msra.mxu0 0.0
        %2771 = vmatprep.subr.mxu0 0.0
        %2772 = vmatpush2.msra.mxu0 0.0
        %2773 = vmatprep.subr.mxu0 0.0
        %2774 = vmatpush2.msra.mxu0 0.0
        %2775 = vmatprep.subr.mxu0 0.0
        %2776 = vmatpush2.msra.mxu0 0.0
        %2777 = vmatprep.subr.mxu0 0.0
        %2778 = vmatpush2.msra.mxu0 0.0
        %2779 = vmatprep.subr.mxu0 0.0
        %2780 = vmatpush2.msra.mxu0 0.0
        %2781 = vmatprep.subr.mxu0 0.0
        %2782 = vmatpush2.msra.mxu0 0.0
        %2783 = vmatprep.subr.mxu0 0.0
        %2784 = vmatpush2.msra.mxu0 0.0
        %2785 = vmatprep.subr.mxu0 0.0
        %2786 = vmatpush2.msra.mxu0 0.0
        %2787 = vmatprep.subr.mxu0 0.0
        %2788 = vmatpush2.msra.mxu0 0.0
        %2789 = vmatprep.subr.mxu0 0.0
        %2790 = vmatpush2.msra.mxu0 0.0
        %2791 = vmatprep.subr.mxu0 0.0
        %2792 = vmatpush2.msra.mxu0 0.0
        %2793 = vmatprep.subr.mxu0 0.0
        %2794 = vmatpush2.msra.mxu0 0.0
        %2795 = vmatprep.subr.mxu0 0.0
        %2796 = vmatpush2.msra.mxu0 0.0
        %2797 = vmatprep.subr.mxu0 0.0
        %2798 = vmatpush2.msra.mxu0 0.0
        %2799 = vmatprep.mubr.f32.mxu0 0.0
        %2800 = vmatmul.mubr.f32.gmra.mxu0 %v2712
        %v2801 = vpop.f32.mrf.mxu0
        %v2802 = vadd.f32 0.0, %v2801
        %v2803 = vpop.f32.mrf.mxu0
        %2804 = vmatprep.mubr.f32.mxu0 0.0
        %2805 = vmatmul.mubr.f32.gmra.mxu0 %v2715
        %v2806 = vpop.f32.mrf.mxu0
        %v2807 = vadd.f32 0.0, %v2806
        %v2808 = vpop.f32.mrf.mxu0
        %2809 = vmatprep.mubr.f32.mxu0 0.0
        %2810 = vmatmul.mubr.f32.gmra.mxu0 %v2718
        %v2811 = vpop.f32.mrf.mxu0
        %v2812 = vadd.f32 0.0, %v2811
        %v2813 = vpop.f32.mrf.mxu0
        %2814 = vmatprep.mubr.f32.mxu0 0.0
        %2815 = vmatmul.mubr.f32.gmra.mxu0 %v2721
        %v2816 = vpop.f32.mrf.mxu0
        %v2817 = vadd.f32 0.0, %v2816
        %v2818 = vpop.f32.mrf.mxu0
        %2819 = vmatprep.mubr.f32.mxu0 0.0
        %2820 = vmatmul.mubr.f32.gmra.mxu0 %v2724
        %v2821 = vpop.f32.mrf.mxu0
        %v2822 = vadd.f32 0.0, %v2821
        %v2823 = vpop.f32.mrf.mxu0
        %2824 = vmatprep.mubr.f32.mxu0 0.0
        %2825 = vmatmul.mubr.f32.gmra.mxu0 %v2727
        %v2826 = vpop.f32.mrf.mxu0
        %v2827 = vadd.f32 0.0, %v2826
        %v2828 = vpop.f32.mrf.mxu0
        %2829 = vmatprep.mubr.f32.mxu0 0.0
        %2830 = vmatmul.mubr.f32.gmra.mxu0 %v2730
        %v2831 = vpop.f32.mrf.mxu0
        %v2832 = vadd.f32 0.0, %v2831
        %v2833 = vpop.f32.mrf.mxu0
        %2834 = vmatprep.mubr.f32.mxu0 0.0
        %2835 = vmatmul.mubr.f32.gmra.mxu0 %v2733
        %v2836 = vpop.f32.mrf.mxu0
        %v2837 = vadd.f32 0.0, %v2836
        %v2838 = vpop.f32.mrf.mxu0
        %2839 = vdwg.mxu0
        %v2840 = vadd.f32 %v2693, %v2802
        %v2841 = vadd.f32 %v2694, %v2807
        %v2842 = vadd.f32 %v2695, %v2812
        %v2843 = vadd.f32 %v2696, %v2817
        %v2844 = vadd.f32 %v2697, %v2822
        %v2845 = vadd.f32 %v2698, %v2827
        %v2846 = vadd.f32 %v2699, %v2832
        %v2847 = vadd.f32 %v2700, %v2837
        %v2848 = vld [vmem:[%s2553 + $0x1] sm:$0xff]
        %v2849 = vld [vmem:[%s2553 + $0x11] sm:$0xff]
        %v2850 = vld [vmem:[%s2553 + $0x21] sm:$0xff]
        %v2851 = vld [vmem:[%s2553 + $0x31] sm:$0xff]
        %v2852 = vld [vmem:[%s2553 + $0x41] sm:$0xff]
        %v2853 = vld [vmem:[%s2553 + $0x51] sm:$0xff]
        %v2854 = vld [vmem:[%s2553 + $0x61] sm:$0xff]
        %v2855 = vld [vmem:[%s2553 + $0x71] sm:$0xff]
        %s2856 = scalar_lea.vmem %s4, 136
        %v2857 = vld [vmem:[%s2856] sm:$0xff]
        %v2859 = vsel %vm382, %v2848, 0
        %v2862 = vsel %vm382, %v2849, 0
        %v2865 = vsel %vm382, %v2850, 0
        %v2868 = vsel %vm382, %v2851, 0
        %v2871 = vsel %vm382, %v2852, 0
        %v2874 = vsel %vm382, %v2853, 0
        %v2877 = vsel %vm382, %v2854, 0
        %v2880 = vsel %vm382, %v2855, 0
        %2882 = vmatprep.subr.mxu0 0.0
        %2883 = vmatpush1.msra.mxu0 0.0
        %2884 = vmatprep.subr.mxu0 0.0
        %2885 = vmatpush1.msra.mxu0 0.0
        %2886 = vmatprep.subr.mxu0 0.0
        %2887 = vmatpush1.msra.mxu0 0.0
        %2888 = vmatprep.subr.mxu0 0.0
        %2889 = vmatpush1.msra.mxu0 0.0
        %2890 = vmatprep.subr.mxu0 0.0
        %2891 = vmatpush1.msra.mxu0 0.0
        %2892 = vmatprep.subr.mxu0 0.0
        %2893 = vmatpush1.msra.mxu0 0.0
        %2894 = vmatprep.subr.mxu0 0.0
        %2895 = vmatpush1.msra.mxu0 0.0
        %2896 = vmatprep.subr.mxu0 0.0
        %2897 = vmatpush1.msra.mxu0 0.0
        %2898 = vmatprep.subr.mxu0 0.0
        %2899 = vmatpush1.msra.mxu0 0.0
        %2900 = vmatprep.subr.mxu0 0.0
        %2901 = vmatpush1.msra.mxu0 0.0
        %2902 = vmatprep.subr.mxu0 0.0
        %2903 = vmatpush1.msra.mxu0 0.0
        %2904 = vmatprep.subr.mxu0 0.0
        %2905 = vmatpush1.msra.mxu0 0.0
        %2906 = vmatprep.subr.mxu0 0.0
        %2907 = vmatpush1.msra.mxu0 0.0
        %2908 = vmatprep.subr.mxu0 0.0
        %2909 = vmatpush1.msra.mxu0 0.0
        %2910 = vmatprep.subr.mxu0 0.0
        %2911 = vmatpush1.msra.mxu0 0.0
        %2912 = vmatprep.subr.mxu0 0.0
        %2913 = vmatpush1.msra.mxu0 %v2857
        %2914 = vmatprep.subr.mxu0 0.0
        %2915 = vmatpush2.msra.mxu0 0.0
        %2916 = vmatprep.subr.mxu0 0.0
        %2917 = vmatpush2.msra.mxu0 0.0
        %2918 = vmatprep.subr.mxu0 0.0
        %2919 = vmatpush2.msra.mxu0 0.0
        %2920 = vmatprep.subr.mxu0 0.0
        %2921 = vmatpush2.msra.mxu0 0.0
        %2922 = vmatprep.subr.mxu0 0.0
        %2923 = vmatpush2.msra.mxu0 0.0
        %2924 = vmatprep.subr.mxu0 0.0
        %2925 = vmatpush2.msra.mxu0 0.0
        %2926 = vmatprep.subr.mxu0 0.0
        %2927 = vmatpush2.msra.mxu0 0.0
        %2928 = vmatprep.subr.mxu0 0.0
        %2929 = vmatpush2.msra.mxu0 0.0
        %2930 = vmatprep.subr.mxu0 0.0
        %2931 = vmatpush2.msra.mxu0 0.0
        %2932 = vmatprep.subr.mxu0 0.0
        %2933 = vmatpush2.msra.mxu0 0.0
        %2934 = vmatprep.subr.mxu0 0.0
        %2935 = vmatpush2.msra.mxu0 0.0
        %2936 = vmatprep.subr.mxu0 0.0
        %2937 = vmatpush2.msra.mxu0 0.0
        %2938 = vmatprep.subr.mxu0 0.0
        %2939 = vmatpush2.msra.mxu0 0.0
        %2940 = vmatprep.subr.mxu0 0.0
        %2941 = vmatpush2.msra.mxu0 0.0
        %2942 = vmatprep.subr.mxu0 0.0
        %2943 = vmatpush2.msra.mxu0 0.0
        %2944 = vmatprep.subr.mxu0 0.0
        %2945 = vmatpush2.msra.mxu0 0.0
        %2946 = vmatprep.mubr.f32.mxu0 0.0
        %2947 = vmatmul.mubr.f32.gmra.mxu0 %v2859
        %v2948 = vpop.f32.mrf.mxu0
        %v2949 = vadd.f32 0.0, %v2948
        %v2950 = vpop.f32.mrf.mxu0
        %2951 = vmatprep.mubr.f32.mxu0 0.0
        %2952 = vmatmul.mubr.f32.gmra.mxu0 %v2862
        %v2953 = vpop.f32.mrf.mxu0
        %v2954 = vadd.f32 0.0, %v2953
        %v2955 = vpop.f32.mrf.mxu0
        %2956 = vmatprep.mubr.f32.mxu0 0.0
        %2957 = vmatmul.mubr.f32.gmra.mxu0 %v2865
        %v2958 = vpop.f32.mrf.mxu0
        %v2959 = vadd.f32 0.0, %v2958
        %v2960 = vpop.f32.mrf.mxu0
        %2961 = vmatprep.mubr.f32.mxu0 0.0
        %2962 = vmatmul.mubr.f32.gmra.mxu0 %v2868
        %v2963 = vpop.f32.mrf.mxu0
        %v2964 = vadd.f32 0.0, %v2963
        %v2965 = vpop.f32.mrf.mxu0
        %2966 = vmatprep.mubr.f32.mxu0 0.0
        %2967 = vmatmul.mubr.f32.gmra.mxu0 %v2871
        %v2968 = vpop.f32.mrf.mxu0
        %v2969 = vadd.f32 0.0, %v2968
        %v2970 = vpop.f32.mrf.mxu0
        %2971 = vmatprep.mubr.f32.mxu0 0.0
        %2972 = vmatmul.mubr.f32.gmra.mxu0 %v2874
        %v2973 = vpop.f32.mrf.mxu0
        %v2974 = vadd.f32 0.0, %v2973
        %v2975 = vpop.f32.mrf.mxu0
        %2976 = vmatprep.mubr.f32.mxu0 0.0
        %2977 = vmatmul.mubr.f32.gmra.mxu0 %v2877
        %v2978 = vpop.f32.mrf.mxu0
        %v2979 = vadd.f32 0.0, %v2978
        %v2980 = vpop.f32.mrf.mxu0
        %2981 = vmatprep.mubr.f32.mxu0 0.0
        %2982 = vmatmul.mubr.f32.gmra.mxu0 %v2880
        %v2983 = vpop.f32.mrf.mxu0
        %v2984 = vadd.f32 0.0, %v2983
        %v2985 = vpop.f32.mrf.mxu0
        %2986 = vdwg.mxu0
        %v2987 = vadd.f32 %v2840, %v2949
        %v2988 = vadd.f32 %v2841, %v2954
        %v2989 = vadd.f32 %v2842, %v2959
        %v2990 = vadd.f32 %v2843, %v2964
        %v2991 = vadd.f32 %v2844, %v2969
        %v2992 = vadd.f32 %v2845, %v2974
        %v2993 = vadd.f32 %v2846, %v2979
        %v2994 = vadd.f32 %v2847, %v2984
        %v2995 = vld [vmem:[%s2405 + $0x2] sm:$0xff]
        %v2996 = vld [vmem:[%s2405 + $0x12] sm:$0xff]
        %v2997 = vld [vmem:[%s2405 + $0x22] sm:$0xff]
        %v2998 = vld [vmem:[%s2405 + $0x32] sm:$0xff]
        %v2999 = vld [vmem:[%s2405 + $0x42] sm:$0xff]
        %v3000 = vld [vmem:[%s2405 + $0x52] sm:$0xff]
        %v3001 = vld [vmem:[%s2405 + $0x62] sm:$0xff]
        %v3002 = vld [vmem:[%s2405 + $0x72] sm:$0xff]
        %s3003 = scalar_lea.vmem %s4, 144
        %v3004 = vld [vmem:[%s3003] sm:$0xff]
        %v3006 = vsel %vm382, %v2995, 0
        %v3009 = vsel %vm382, %v2996, 0
        %v3012 = vsel %vm382, %v2997, 0
        %v3015 = vsel %vm382, %v2998, 0
        %v3018 = vsel %vm382, %v2999, 0
        %v3021 = vsel %vm382, %v3000, 0
        %v3024 = vsel %vm382, %v3001, 0
        %v3027 = vsel %vm382, %v3002, 0
        %3029 = vmatprep.subr.mxu0 0.0
        %3030 = vmatpush1.msra.mxu0 0.0
        %3031 = vmatprep.subr.mxu0 0.0
        %3032 = vmatpush1.msra.mxu0 0.0
        %3033 = vmatprep.subr.mxu0 0.0
        %3034 = vmatpush1.msra.mxu0 0.0
        %3035 = vmatprep.subr.mxu0 0.0
        %3036 = vmatpush1.msra.mxu0 0.0
        %3037 = vmatprep.subr.mxu0 0.0
        %3038 = vmatpush1.msra.mxu0 0.0
        %3039 = vmatprep.subr.mxu0 0.0
        %3040 = vmatpush1.msra.mxu0 0.0
        %3041 = vmatprep.subr.mxu0 0.0
        %3042 = vmatpush1.msra.mxu0 0.0
        %3043 = vmatprep.subr.mxu0 0.0
        %3044 = vmatpush1.msra.mxu0 0.0
        %3045 = vmatprep.subr.mxu0 0.0
        %3046 = vmatpush1.msra.mxu0 0.0
        %3047 = vmatprep.subr.mxu0 0.0
        %3048 = vmatpush1.msra.mxu0 0.0
        %3049 = vmatprep.subr.mxu0 0.0
        %3050 = vmatpush1.msra.mxu0 0.0
        %3051 = vmatprep.subr.mxu0 0.0
        %3052 = vmatpush1.msra.mxu0 0.0
        %3053 = vmatprep.subr.mxu0 0.0
        %3054 = vmatpush1.msra.mxu0 0.0
        %3055 = vmatprep.subr.mxu0 0.0
        %3056 = vmatpush1.msra.mxu0 0.0
        %3057 = vmatprep.subr.mxu0 0.0
        %3058 = vmatpush1.msra.mxu0 0.0
        %3059 = vmatprep.subr.mxu0 0.0
        %3060 = vmatpush1.msra.mxu0 %v3004
        %3061 = vmatprep.subr.mxu0 0.0
        %3062 = vmatpush2.msra.mxu0 0.0
        %3063 = vmatprep.subr.mxu0 0.0
        %3064 = vmatpush2.msra.mxu0 0.0
        %3065 = vmatprep.subr.mxu0 0.0
        %3066 = vmatpush2.msra.mxu0 0.0
        %3067 = vmatprep.subr.mxu0 0.0
        %3068 = vmatpush2.msra.mxu0 0.0
        %3069 = vmatprep.subr.mxu0 0.0
        %3070 = vmatpush2.msra.mxu0 0.0
        %3071 = vmatprep.subr.mxu0 0.0
        %3072 = vmatpush2.msra.mxu0 0.0
        %3073 = vmatprep.subr.mxu0 0.0
        %3074 = vmatpush2.msra.mxu0 0.0
        %3075 = vmatprep.subr.mxu0 0.0
        %3076 = vmatpush2.msra.mxu0 0.0
        %3077 = vmatprep.subr.mxu0 0.0
        %3078 = vmatpush2.msra.mxu0 0.0
        %3079 = vmatprep.subr.mxu0 0.0
        %3080 = vmatpush2.msra.mxu0 0.0
        %3081 = vmatprep.subr.mxu0 0.0
        %3082 = vmatpush2.msra.mxu0 0.0
        %3083 = vmatprep.subr.mxu0 0.0
        %3084 = vmatpush2.msra.mxu0 0.0
        %3085 = vmatprep.subr.mxu0 0.0
        %3086 = vmatpush2.msra.mxu0 0.0
        %3087 = vmatprep.subr.mxu0 0.0
        %3088 = vmatpush2.msra.mxu0 0.0
        %3089 = vmatprep.subr.mxu0 0.0
        %3090 = vmatpush2.msra.mxu0 0.0
        %3091 = vmatprep.subr.mxu0 0.0
        %3092 = vmatpush2.msra.mxu0 0.0
        %3093 = vmatprep.mubr.f32.mxu0 0.0
        %3094 = vmatmul.mubr.f32.gmra.mxu0 %v3006
        %v3095 = vpop.f32.mrf.mxu0
        %v3096 = vadd.f32 0.0, %v3095
        %v3097 = vpop.f32.mrf.mxu0
        %3098 = vmatprep.mubr.f32.mxu0 0.0
        %3099 = vmatmul.mubr.f32.gmra.mxu0 %v3009
        %v3100 = vpop.f32.mrf.mxu0
        %v3101 = vadd.f32 0.0, %v3100
        %v3102 = vpop.f32.mrf.mxu0
        %3103 = vmatprep.mubr.f32.mxu0 0.0
        %3104 = vmatmul.mubr.f32.gmra.mxu0 %v3012
        %v3105 = vpop.f32.mrf.mxu0
        %v3106 = vadd.f32 0.0, %v3105
        %v3107 = vpop.f32.mrf.mxu0
        %3108 = vmatprep.mubr.f32.mxu0 0.0
        %3109 = vmatmul.mubr.f32.gmra.mxu0 %v3015
        %v3110 = vpop.f32.mrf.mxu0
        %v3111 = vadd.f32 0.0, %v3110
        %v3112 = vpop.f32.mrf.mxu0
        %3113 = vmatprep.mubr.f32.mxu0 0.0
        %3114 = vmatmul.mubr.f32.gmra.mxu0 %v3018
        %v3115 = vpop.f32.mrf.mxu0
        %v3116 = vadd.f32 0.0, %v3115
        %v3117 = vpop.f32.mrf.mxu0
        %3118 = vmatprep.mubr.f32.mxu0 0.0
        %3119 = vmatmul.mubr.f32.gmra.mxu0 %v3021
        %v3120 = vpop.f32.mrf.mxu0
        %v3121 = vadd.f32 0.0, %v3120
        %v3122 = vpop.f32.mrf.mxu0
        %3123 = vmatprep.mubr.f32.mxu0 0.0
        %3124 = vmatmul.mubr.f32.gmra.mxu0 %v3024
        %v3125 = vpop.f32.mrf.mxu0
        %v3126 = vadd.f32 0.0, %v3125
        %v3127 = vpop.f32.mrf.mxu0
        %3128 = vmatprep.mubr.f32.mxu0 0.0
        %3129 = vmatmul.mubr.f32.gmra.mxu0 %v3027
        %v3130 = vpop.f32.mrf.mxu0
        %v3131 = vadd.f32 0.0, %v3130
        %v3132 = vpop.f32.mrf.mxu0
        %3133 = vdwg.mxu0
        %v3134 = vadd.f32 %v2987, %v3096
        %v3135 = vadd.f32 %v2988, %v3101
        %v3136 = vadd.f32 %v2989, %v3106
        %v3137 = vadd.f32 %v2990, %v3111
        %v3138 = vadd.f32 %v2991, %v3116
        %v3139 = vadd.f32 %v2992, %v3121
        %v3140 = vadd.f32 %v2993, %v3126
        %v3141 = vadd.f32 %v2994, %v3131
        %v3142 = vld [vmem:[%s2553 + $0x2] sm:$0xff]
        %v3143 = vld [vmem:[%s2553 + $0x12] sm:$0xff]
        %v3144 = vld [vmem:[%s2553 + $0x22] sm:$0xff]
        %v3145 = vld [vmem:[%s2553 + $0x32] sm:$0xff]
        %v3146 = vld [vmem:[%s2553 + $0x42] sm:$0xff]
        %v3147 = vld [vmem:[%s2553 + $0x52] sm:$0xff]
        %v3148 = vld [vmem:[%s2553 + $0x62] sm:$0xff]
        %v3149 = vld [vmem:[%s2553 + $0x72] sm:$0xff]
        %s3150 = scalar_lea.vmem %s4, 152
        %v3151 = vld [vmem:[%s3150] sm:$0xff]
        %v3153 = vsel %vm382, %v3142, 0
        %v3156 = vsel %vm382, %v3143, 0
        %v3159 = vsel %vm382, %v3144, 0
        %v3162 = vsel %vm382, %v3145, 0
        %v3165 = vsel %vm382, %v3146, 0
        %v3168 = vsel %vm382, %v3147, 0
        %v3171 = vsel %vm382, %v3148, 0
        %v3174 = vsel %vm382, %v3149, 0
        %3176 = vmatprep.subr.mxu0 0.0
        %3177 = vmatpush1.msra.mxu0 0.0
        %3178 = vmatprep.subr.mxu0 0.0
        %3179 = vmatpush1.msra.mxu0 0.0
        %3180 = vmatprep.subr.mxu0 0.0
        %3181 = vmatpush1.msra.mxu0 0.0
        %3182 = vmatprep.subr.mxu0 0.0
        %3183 = vmatpush1.msra.mxu0 0.0
        %3184 = vmatprep.subr.mxu0 0.0
        %3185 = vmatpush1.msra.mxu0 0.0
        %3186 = vmatprep.subr.mxu0 0.0
        %3187 = vmatpush1.msra.mxu0 0.0
        %3188 = vmatprep.subr.mxu0 0.0
        %3189 = vmatpush1.msra.mxu0 0.0
        %3190 = vmatprep.subr.mxu0 0.0
        %3191 = vmatpush1.msra.mxu0 0.0
        %3192 = vmatprep.subr.mxu0 0.0
        %3193 = vmatpush1.msra.mxu0 0.0
        %3194 = vmatprep.subr.mxu0 0.0
        %3195 = vmatpush1.msra.mxu0 0.0
        %3196 = vmatprep.subr.mxu0 0.0
        %3197 = vmatpush1.msra.mxu0 0.0
        %3198 = vmatprep.subr.mxu0 0.0
        %3199 = vmatpush1.msra.mxu0 0.0
        %3200 = vmatprep.subr.mxu0 0.0
        %3201 = vmatpush1.msra.mxu0 0.0
        %3202 = vmatprep.subr.mxu0 0.0
        %3203 = vmatpush1.msra.mxu0 0.0
        %3204 = vmatprep.subr.mxu0 0.0
        %3205 = vmatpush1.msra.mxu0 0.0
        %3206 = vmatprep.subr.mxu0 0.0
        %3207 = vmatpush1.msra.mxu0 %v3151
        %3208 = vmatprep.subr.mxu0 0.0
        %3209 = vmatpush2.msra.mxu0 0.0
        %3210 = vmatprep.subr.mxu0 0.0
        %3211 = vmatpush2.msra.mxu0 0.0
        %3212 = vmatprep.subr.mxu0 0.0
        %3213 = vmatpush2.msra.mxu0 0.0
        %3214 = vmatprep.subr.mxu0 0.0
        %3215 = vmatpush2.msra.mxu0 0.0
        %3216 = vmatprep.subr.mxu0 0.0
        %3217 = vmatpush2.msra.mxu0 0.0
        %3218 = vmatprep.subr.mxu0 0.0
        %3219 = vmatpush2.msra.mxu0 0.0
        %3220 = vmatprep.subr.mxu0 0.0
        %3221 = vmatpush2.msra.mxu0 0.0
        %3222 = vmatprep.subr.mxu0 0.0
        %3223 = vmatpush2.msra.mxu0 0.0
        %3224 = vmatprep.subr.mxu0 0.0
        %3225 = vmatpush2.msra.mxu0 0.0
        %3226 = vmatprep.subr.mxu0 0.0
        %3227 = vmatpush2.msra.mxu0 0.0
        %3228 = vmatprep.subr.mxu0 0.0
        %3229 = vmatpush2.msra.mxu0 0.0
        %3230 = vmatprep.subr.mxu0 0.0
        %3231 = vmatpush2.msra.mxu0 0.0
        %3232 = vmatprep.subr.mxu0 0.0
        %3233 = vmatpush2.msra.mxu0 0.0
        %3234 = vmatprep.subr.mxu0 0.0
        %3235 = vmatpush2.msra.mxu0 0.0
        %3236 = vmatprep.subr.mxu0 0.0
        %3237 = vmatpush2.msra.mxu0 0.0
        %3238 = vmatprep.subr.mxu0 0.0
        %3239 = vmatpush2.msra.mxu0 0.0
        %3240 = vmatprep.mubr.f32.mxu0 0.0
        %3241 = vmatmul.mubr.f32.gmra.mxu0 %v3153
        %v3242 = vpop.f32.mrf.mxu0
        %v3243 = vadd.f32 0.0, %v3242
        %v3244 = vpop.f32.mrf.mxu0
        %3245 = vmatprep.mubr.f32.mxu0 0.0
        %3246 = vmatmul.mubr.f32.gmra.mxu0 %v3156
        %v3247 = vpop.f32.mrf.mxu0
        %v3248 = vadd.f32 0.0, %v3247
        %v3249 = vpop.f32.mrf.mxu0
        %3250 = vmatprep.mubr.f32.mxu0 0.0
        %3251 = vmatmul.mubr.f32.gmra.mxu0 %v3159
        %v3252 = vpop.f32.mrf.mxu0
        %v3253 = vadd.f32 0.0, %v3252
        %v3254 = vpop.f32.mrf.mxu0
        %3255 = vmatprep.mubr.f32.mxu0 0.0
        %3256 = vmatmul.mubr.f32.gmra.mxu0 %v3162
        %v3257 = vpop.f32.mrf.mxu0
        %v3258 = vadd.f32 0.0, %v3257
        %v3259 = vpop.f32.mrf.mxu0
        %3260 = vmatprep.mubr.f32.mxu0 0.0
        %3261 = vmatmul.mubr.f32.gmra.mxu0 %v3165
        %v3262 = vpop.f32.mrf.mxu0
        %v3263 = vadd.f32 0.0, %v3262
        %v3264 = vpop.f32.mrf.mxu0
        %3265 = vmatprep.mubr.f32.mxu0 0.0
        %3266 = vmatmul.mubr.f32.gmra.mxu0 %v3168
        %v3267 = vpop.f32.mrf.mxu0
        %v3268 = vadd.f32 0.0, %v3267
        %v3269 = vpop.f32.mrf.mxu0
        %3270 = vmatprep.mubr.f32.mxu0 0.0
        %3271 = vmatmul.mubr.f32.gmra.mxu0 %v3171
        %v3272 = vpop.f32.mrf.mxu0
        %v3273 = vadd.f32 0.0, %v3272
        %v3274 = vpop.f32.mrf.mxu0
        %3275 = vmatprep.mubr.f32.mxu0 0.0
        %3276 = vmatmul.mubr.f32.gmra.mxu0 %v3174
        %v3277 = vpop.f32.mrf.mxu0
        %v3278 = vadd.f32 0.0, %v3277
        %v3279 = vpop.f32.mrf.mxu0
        %3280 = vdwg.mxu0
        %v3281 = vadd.f32 %v3134, %v3243
        %v3282 = vadd.f32 %v3135, %v3248
        %v3283 = vadd.f32 %v3136, %v3253
        %v3284 = vadd.f32 %v3137, %v3258
        %v3285 = vadd.f32 %v3138, %v3263
        %v3286 = vadd.f32 %v3139, %v3268
        %v3287 = vadd.f32 %v3140, %v3273
        %v3288 = vadd.f32 %v3141, %v3278
        %v3289 = vld [vmem:[%s2405 + $0x3] sm:$0xff]
        %v3290 = vld [vmem:[%s2405 + $0x13] sm:$0xff]
        %v3291 = vld [vmem:[%s2405 + $0x23] sm:$0xff]
        %v3292 = vld [vmem:[%s2405 + $0x33] sm:$0xff]
        %v3293 = vld [vmem:[%s2405 + $0x43] sm:$0xff]
        %v3294 = vld [vmem:[%s2405 + $0x53] sm:$0xff]
        %v3295 = vld [vmem:[%s2405 + $0x63] sm:$0xff]
        %v3296 = vld [vmem:[%s2405 + $0x73] sm:$0xff]
        %s3297 = scalar_lea.vmem %s4, 160
        %v3298 = vld [vmem:[%s3297] sm:$0xff]
        %v3300 = vsel %vm382, %v3289, 0
        %v3303 = vsel %vm382, %v3290, 0
        %v3306 = vsel %vm382, %v3291, 0
        %v3309 = vsel %vm382, %v3292, 0
        %v3312 = vsel %vm382, %v3293, 0
        %v3315 = vsel %vm382, %v3294, 0
        %v3318 = vsel %vm382, %v3295, 0
        %v3321 = vsel %vm382, %v3296, 0
        %3323 = vmatprep.subr.mxu0 0.0
        %3324 = vmatpush1.msra.mxu0 0.0
        %3325 = vmatprep.subr.mxu0 0.0
        %3326 = vmatpush1.msra.mxu0 0.0
        %3327 = vmatprep.subr.mxu0 0.0
        %3328 = vmatpush1.msra.mxu0 0.0
        %3329 = vmatprep.subr.mxu0 0.0
        %3330 = vmatpush1.msra.mxu0 0.0
        %3331 = vmatprep.subr.mxu0 0.0
        %3332 = vmatpush1.msra.mxu0 0.0
        %3333 = vmatprep.subr.mxu0 0.0
        %3334 = vmatpush1.msra.mxu0 0.0
        %3335 = vmatprep.subr.mxu0 0.0
        %3336 = vmatpush1.msra.mxu0 0.0
        %3337 = vmatprep.subr.mxu0 0.0
        %3338 = vmatpush1.msra.mxu0 0.0
        %3339 = vmatprep.subr.mxu0 0.0
        %3340 = vmatpush1.msra.mxu0 0.0
        %3341 = vmatprep.subr.mxu0 0.0
        %3342 = vmatpush1.msra.mxu0 0.0
        %3343 = vmatprep.subr.mxu0 0.0
        %3344 = vmatpush1.msra.mxu0 0.0
        %3345 = vmatprep.subr.mxu0 0.0
        %3346 = vmatpush1.msra.mxu0 0.0
        %3347 = vmatprep.subr.mxu0 0.0
        %3348 = vmatpush1.msra.mxu0 0.0
        %3349 = vmatprep.subr.mxu0 0.0
        %3350 = vmatpush1.msra.mxu0 0.0
        %3351 = vmatprep.subr.mxu0 0.0
        %3352 = vmatpush1.msra.mxu0 0.0
        %3353 = vmatprep.subr.mxu0 0.0
        %3354 = vmatpush1.msra.mxu0 %v3298
        %3355 = vmatprep.subr.mxu0 0.0
        %3356 = vmatpush2.msra.mxu0 0.0
        %3357 = vmatprep.subr.mxu0 0.0
        %3358 = vmatpush2.msra.mxu0 0.0
        %3359 = vmatprep.subr.mxu0 0.0
        %3360 = vmatpush2.msra.mxu0 0.0
        %3361 = vmatprep.subr.mxu0 0.0
        %3362 = vmatpush2.msra.mxu0 0.0
        %3363 = vmatprep.subr.mxu0 0.0
        %3364 = vmatpush2.msra.mxu0 0.0
        %3365 = vmatprep.subr.mxu0 0.0
        %3366 = vmatpush2.msra.mxu0 0.0
        %3367 = vmatprep.subr.mxu0 0.0
        %3368 = vmatpush2.msra.mxu0 0.0
        %3369 = vmatprep.subr.mxu0 0.0
        %3370 = vmatpush2.msra.mxu0 0.0
        %3371 = vmatprep.subr.mxu0 0.0
        %3372 = vmatpush2.msra.mxu0 0.0
        %3373 = vmatprep.subr.mxu0 0.0
        %3374 = vmatpush2.msra.mxu0 0.0
        %3375 = vmatprep.subr.mxu0 0.0
        %3376 = vmatpush2.msra.mxu0 0.0
        %3377 = vmatprep.subr.mxu0 0.0
        %3378 = vmatpush2.msra.mxu0 0.0
        %3379 = vmatprep.subr.mxu0 0.0
        %3380 = vmatpush2.msra.mxu0 0.0
        %3381 = vmatprep.subr.mxu0 0.0
        %3382 = vmatpush2.msra.mxu0 0.0
        %3383 = vmatprep.subr.mxu0 0.0
        %3384 = vmatpush2.msra.mxu0 0.0
        %3385 = vmatprep.subr.mxu0 0.0
        %3386 = vmatpush2.msra.mxu0 0.0
        %3387 = vmatprep.mubr.f32.mxu0 0.0
        %3388 = vmatmul.mubr.f32.gmra.mxu0 %v3300
        %v3389 = vpop.f32.mrf.mxu0
        %v3390 = vadd.f32 0.0, %v3389
        %v3391 = vpop.f32.mrf.mxu0
        %3392 = vmatprep.mubr.f32.mxu0 0.0
        %3393 = vmatmul.mubr.f32.gmra.mxu0 %v3303
        %v3394 = vpop.f32.mrf.mxu0
        %v3395 = vadd.f32 0.0, %v3394
        %v3396 = vpop.f32.mrf.mxu0
        %3397 = vmatprep.mubr.f32.mxu0 0.0
        %3398 = vmatmul.mubr.f32.gmra.mxu0 %v3306
        %v3399 = vpop.f32.mrf.mxu0
        %v3400 = vadd.f32 0.0, %v3399
        %v3401 = vpop.f32.mrf.mxu0
        %3402 = vmatprep.mubr.f32.mxu0 0.0
        %3403 = vmatmul.mubr.f32.gmra.mxu0 %v3309
        %v3404 = vpop.f32.mrf.mxu0
        %v3405 = vadd.f32 0.0, %v3404
        %v3406 = vpop.f32.mrf.mxu0
        %3407 = vmatprep.mubr.f32.mxu0 0.0
        %3408 = vmatmul.mubr.f32.gmra.mxu0 %v3312
        %v3409 = vpop.f32.mrf.mxu0
        %v3410 = vadd.f32 0.0, %v3409
        %v3411 = vpop.f32.mrf.mxu0
        %3412 = vmatprep.mubr.f32.mxu0 0.0
        %3413 = vmatmul.mubr.f32.gmra.mxu0 %v3315
        %v3414 = vpop.f32.mrf.mxu0
        %v3415 = vadd.f32 0.0, %v3414
        %v3416 = vpop.f32.mrf.mxu0
        %3417 = vmatprep.mubr.f32.mxu0 0.0
        %3418 = vmatmul.mubr.f32.gmra.mxu0 %v3318
        %v3419 = vpop.f32.mrf.mxu0
        %v3420 = vadd.f32 0.0, %v3419
        %v3421 = vpop.f32.mrf.mxu0
        %3422 = vmatprep.mubr.f32.mxu0 0.0
        %3423 = vmatmul.mubr.f32.gmra.mxu0 %v3321
        %v3424 = vpop.f32.mrf.mxu0
        %v3425 = vadd.f32 0.0, %v3424
        %v3426 = vpop.f32.mrf.mxu0
        %3427 = vdwg.mxu0
        %v3428 = vadd.f32 %v3281, %v3390
        %v3429 = vadd.f32 %v3282, %v3395
        %v3430 = vadd.f32 %v3283, %v3400
        %v3431 = vadd.f32 %v3284, %v3405
        %v3432 = vadd.f32 %v3285, %v3410
        %v3433 = vadd.f32 %v3286, %v3415
        %v3434 = vadd.f32 %v3287, %v3420
        %v3435 = vadd.f32 %v3288, %v3425
        %s3436 = scalar_lea.vmem %s357, 16
        %v3437 = vld [vmem:[%s3436] sm:$0xff]
        %v3438 = vld [vmem:[%s3436 + $0x10] sm:$0xff]
        %v3439 = vld [vmem:[%s3436 + $0x20] sm:$0xff]
        %v3440 = vld [vmem:[%s3436 + $0x30] sm:$0xff]
        %v3441 = vld [vmem:[%s3436 + $0x40] sm:$0xff]
        %v3442 = vld [vmem:[%s3436 + $0x50] sm:$0xff]
        %v3443 = vld [vmem:[%s3436 + $0x60] sm:$0xff]
        %v3444 = vld [vmem:[%s3436 + $0x70] sm:$0xff]
        %s3445 = scalar_lea.vmem %s4, 168
        %v3446 = vld [vmem:[%s3445] sm:$0xff]
        %v3448 = vsel %vm382, %v3437, 0
        %v3451 = vsel %vm382, %v3438, 0
        %v3454 = vsel %vm382, %v3439, 0
        %v3457 = vsel %vm382, %v3440, 0
        %v3460 = vsel %vm382, %v3441, 0
        %v3463 = vsel %vm382, %v3442, 0
        %v3466 = vsel %vm382, %v3443, 0
        %v3469 = vsel %vm382, %v3444, 0
        %3471 = vmatprep.subr.mxu0 0.0
        %3472 = vmatpush1.msra.mxu0 0.0
        %3473 = vmatprep.subr.mxu0 0.0
        %3474 = vmatpush1.msra.mxu0 0.0
        %3475 = vmatprep.subr.mxu0 0.0
        %3476 = vmatpush1.msra.mxu0 0.0
        %3477 = vmatprep.subr.mxu0 0.0
        %3478 = vmatpush1.msra.mxu0 0.0
        %3479 = vmatprep.subr.mxu0 0.0
        %3480 = vmatpush1.msra.mxu0 0.0
        %3481 = vmatprep.subr.mxu0 0.0
        %3482 = vmatpush1.msra.mxu0 0.0
        %3483 = vmatprep.subr.mxu0 0.0
        %3484 = vmatpush1.msra.mxu0 0.0
        %3485 = vmatprep.subr.mxu0 0.0
        %3486 = vmatpush1.msra.mxu0 0.0
        %3487 = vmatprep.subr.mxu0 0.0
        %3488 = vmatpush1.msra.mxu0 0.0
        %3489 = vmatprep.subr.mxu0 0.0
        %3490 = vmatpush1.msra.mxu0 0.0
        %3491 = vmatprep.subr.mxu0 0.0
        %3492 = vmatpush1.msra.mxu0 0.0
        %3493 = vmatprep.subr.mxu0 0.0
        %3494 = vmatpush1.msra.mxu0 0.0
        %3495 = vmatprep.subr.mxu0 0.0
        %3496 = vmatpush1.msra.mxu0 0.0
        %3497 = vmatprep.subr.mxu0 0.0
        %3498 = vmatpush1.msra.mxu0 0.0
        %3499 = vmatprep.subr.mxu0 0.0
        %3500 = vmatpush1.msra.mxu0 0.0
        %3501 = vmatprep.subr.mxu0 0.0
        %3502 = vmatpush1.msra.mxu0 %v3446
        %3503 = vmatprep.subr.mxu0 0.0
        %3504 = vmatpush2.msra.mxu0 0.0
        %3505 = vmatprep.subr.mxu0 0.0
        %3506 = vmatpush2.msra.mxu0 0.0
        %3507 = vmatprep.subr.mxu0 0.0
        %3508 = vmatpush2.msra.mxu0 0.0
        %3509 = vmatprep.subr.mxu0 0.0
        %3510 = vmatpush2.msra.mxu0 0.0
        %3511 = vmatprep.subr.mxu0 0.0
        %3512 = vmatpush2.msra.mxu0 0.0
        %3513 = vmatprep.subr.mxu0 0.0
        %3514 = vmatpush2.msra.mxu0 0.0
        %3515 = vmatprep.subr.mxu0 0.0
        %3516 = vmatpush2.msra.mxu0 0.0
        %3517 = vmatprep.subr.mxu0 0.0
        %3518 = vmatpush2.msra.mxu0 0.0
        %3519 = vmatprep.subr.mxu0 0.0
        %3520 = vmatpush2.msra.mxu0 0.0
        %3521 = vmatprep.subr.mxu0 0.0
        %3522 = vmatpush2.msra.mxu0 0.0
        %3523 = vmatprep.subr.mxu0 0.0
        %3524 = vmatpush2.msra.mxu0 0.0
        %3525 = vmatprep.subr.mxu0 0.0
        %3526 = vmatpush2.msra.mxu0 0.0
        %3527 = vmatprep.subr.mxu0 0.0
        %3528 = vmatpush2.msra.mxu0 0.0
        %3529 = vmatprep.subr.mxu0 0.0
        %3530 = vmatpush2.msra.mxu0 0.0
        %3531 = vmatprep.subr.mxu0 0.0
        %3532 = vmatpush2.msra.mxu0 0.0
        %3533 = vmatprep.subr.mxu0 0.0
        %3534 = vmatpush2.msra.mxu0 0.0
        %3535 = vmatprep.mubr.f32.mxu0 0.0
        %3536 = vmatmul.mubr.f32.gmra.mxu0 %v3448
        %v3537 = vpop.f32.mrf.mxu0
        %v3538 = vadd.f32 0.0, %v3537
        %v3539 = vpop.f32.mrf.mxu0
        %3540 = vmatprep.mubr.f32.mxu0 0.0
        %3541 = vmatmul.mubr.f32.gmra.mxu0 %v3451
        %v3542 = vpop.f32.mrf.mxu0
        %v3543 = vadd.f32 0.0, %v3542
        %v3544 = vpop.f32.mrf.mxu0
        %3545 = vmatprep.mubr.f32.mxu0 0.0
        %3546 = vmatmul.mubr.f32.gmra.mxu0 %v3454
        %v3547 = vpop.f32.mrf.mxu0
        %v3548 = vadd.f32 0.0, %v3547
        %v3549 = vpop.f32.mrf.mxu0
        %3550 = vmatprep.mubr.f32.mxu0 0.0
        %3551 = vmatmul.mubr.f32.gmra.mxu0 %v3457
        %v3552 = vpop.f32.mrf.mxu0
        %v3553 = vadd.f32 0.0, %v3552
        %v3554 = vpop.f32.mrf.mxu0
        %3555 = vmatprep.mubr.f32.mxu0 0.0
        %3556 = vmatmul.mubr.f32.gmra.mxu0 %v3460
        %v3557 = vpop.f32.mrf.mxu0
        %v3558 = vadd.f32 0.0, %v3557
        %v3559 = vpop.f32.mrf.mxu0
        %3560 = vmatprep.mubr.f32.mxu0 0.0
        %3561 = vmatmul.mubr.f32.gmra.mxu0 %v3463
        %v3562 = vpop.f32.mrf.mxu0
        %v3563 = vadd.f32 0.0, %v3562
        %v3564 = vpop.f32.mrf.mxu0
        %3565 = vmatprep.mubr.f32.mxu0 0.0
        %3566 = vmatmul.mubr.f32.gmra.mxu0 %v3466
        %v3567 = vpop.f32.mrf.mxu0
        %v3568 = vadd.f32 0.0, %v3567
        %v3569 = vpop.f32.mrf.mxu0
        %3570 = vmatprep.mubr.f32.mxu0 0.0
        %3571 = vmatmul.mubr.f32.gmra.mxu0 %v3469
        %v3572 = vpop.f32.mrf.mxu0
        %v3573 = vadd.f32 0.0, %v3572
        %v3574 = vpop.f32.mrf.mxu0
        %3575 = vdwg.mxu0
        %v3576 = vadd.f32 %v3428, %v3538
        %v3577 = vadd.f32 %v3429, %v3543
        %v3578 = vadd.f32 %v3430, %v3548
        %v3579 = vadd.f32 %v3431, %v3553
        %v3580 = vadd.f32 %v3432, %v3558
        %v3581 = vadd.f32 %v3433, %v3563
        %v3582 = vadd.f32 %v3434, %v3568
        %v3583 = vadd.f32 %v3435, %v3573
        %s3584 = scalar_lea.vmem %s362, 16
        %v3585 = vld [vmem:[%s3584] sm:$0xff]
        %v3586 = vld [vmem:[%s3584 + $0x10] sm:$0xff]
        %v3587 = vld [vmem:[%s3584 + $0x20] sm:$0xff]
        %v3588 = vld [vmem:[%s3584 + $0x30] sm:$0xff]
        %v3589 = vld [vmem:[%s3584 + $0x40] sm:$0xff]
        %v3590 = vld [vmem:[%s3584 + $0x50] sm:$0xff]
        %v3591 = vld [vmem:[%s3584 + $0x60] sm:$0xff]
        %v3592 = vld [vmem:[%s3584 + $0x70] sm:$0xff]
        %s3593 = scalar_lea.vmem %s4, 176
        %v3594 = vld [vmem:[%s3593] sm:$0xff]
        %v3596 = vsel %vm382, %v3585, 0
        %v3599 = vsel %vm382, %v3586, 0
        %v3602 = vsel %vm382, %v3587, 0
        %v3605 = vsel %vm382, %v3588, 0
        %v3608 = vsel %vm382, %v3589, 0
        %v3611 = vsel %vm382, %v3590, 0
        %v3614 = vsel %vm382, %v3591, 0
        %v3617 = vsel %vm382, %v3592, 0
        %3619 = vmatprep.subr.mxu0 0.0
        %3620 = vmatpush1.msra.mxu0 0.0
        %3621 = vmatprep.subr.mxu0 0.0
        %3622 = vmatpush1.msra.mxu0 0.0
        %3623 = vmatprep.subr.mxu0 0.0
        %3624 = vmatpush1.msra.mxu0 0.0
        %3625 = vmatprep.subr.mxu0 0.0
        %3626 = vmatpush1.msra.mxu0 0.0
        %3627 = vmatprep.subr.mxu0 0.0
        %3628 = vmatpush1.msra.mxu0 0.0
        %3629 = vmatprep.subr.mxu0 0.0
        %3630 = vmatpush1.msra.mxu0 0.0
        %3631 = vmatprep.subr.mxu0 0.0
        %3632 = vmatpush1.msra.mxu0 0.0
        %3633 = vmatprep.subr.mxu0 0.0
        %3634 = vmatpush1.msra.mxu0 0.0
        %3635 = vmatprep.subr.mxu0 0.0
        %3636 = vmatpush1.msra.mxu0 0.0
        %3637 = vmatprep.subr.mxu0 0.0
        %3638 = vmatpush1.msra.mxu0 0.0
        %3639 = vmatprep.subr.mxu0 0.0
        %3640 = vmatpush1.msra.mxu0 0.0
        %3641 = vmatprep.subr.mxu0 0.0
        %3642 = vmatpush1.msra.mxu0 0.0
        %3643 = vmatprep.subr.mxu0 0.0
        %3644 = vmatpush1.msra.mxu0 0.0
        %3645 = vmatprep.subr.mxu0 0.0
        %3646 = vmatpush1.msra.mxu0 0.0
        %3647 = vmatprep.subr.mxu0 0.0
        %3648 = vmatpush1.msra.mxu0 0.0
        %3649 = vmatprep.subr.mxu0 0.0
        %3650 = vmatpush1.msra.mxu0 %v3594
        %3651 = vmatprep.subr.mxu0 0.0
        %3652 = vmatpush2.msra.mxu0 0.0
        %3653 = vmatprep.subr.mxu0 0.0
        %3654 = vmatpush2.msra.mxu0 0.0
        %3655 = vmatprep.subr.mxu0 0.0
        %3656 = vmatpush2.msra.mxu0 0.0
        %3657 = vmatprep.subr.mxu0 0.0
        %3658 = vmatpush2.msra.mxu0 0.0
        %3659 = vmatprep.subr.mxu0 0.0
        %3660 = vmatpush2.msra.mxu0 0.0
        %3661 = vmatprep.subr.mxu0 0.0
        %3662 = vmatpush2.msra.mxu0 0.0
        %3663 = vmatprep.subr.mxu0 0.0
        %3664 = vmatpush2.msra.mxu0 0.0
        %3665 = vmatprep.subr.mxu0 0.0
        %3666 = vmatpush2.msra.mxu0 0.0
        %3667 = vmatprep.subr.mxu0 0.0
        %3668 = vmatpush2.msra.mxu0 0.0
        %3669 = vmatprep.subr.mxu0 0.0
        %3670 = vmatpush2.msra.mxu0 0.0
        %3671 = vmatprep.subr.mxu0 0.0
        %3672 = vmatpush2.msra.mxu0 0.0
        %3673 = vmatprep.subr.mxu0 0.0
        %3674 = vmatpush2.msra.mxu0 0.0
        %3675 = vmatprep.subr.mxu0 0.0
        %3676 = vmatpush2.msra.mxu0 0.0
        %3677 = vmatprep.subr.mxu0 0.0
        %3678 = vmatpush2.msra.mxu0 0.0
        %3679 = vmatprep.subr.mxu0 0.0
        %3680 = vmatpush2.msra.mxu0 0.0
        %3681 = vmatprep.subr.mxu0 0.0
        %3682 = vmatpush2.msra.mxu0 0.0
        %3683 = vmatprep.mubr.f32.mxu0 0.0
        %3684 = vmatmul.mubr.f32.gmra.mxu0 %v3596
        %v3685 = vpop.f32.mrf.mxu0
        %v3686 = vadd.f32 0.0, %v3685
        %v3687 = vpop.f32.mrf.mxu0
        %3688 = vmatprep.mubr.f32.mxu0 0.0
        %3689 = vmatmul.mubr.f32.gmra.mxu0 %v3599
        %v3690 = vpop.f32.mrf.mxu0
        %v3691 = vadd.f32 0.0, %v3690
        %v3692 = vpop.f32.mrf.mxu0
        %3693 = vmatprep.mubr.f32.mxu0 0.0
        %3694 = vmatmul.mubr.f32.gmra.mxu0 %v3602
        %v3695 = vpop.f32.mrf.mxu0
        %v3696 = vadd.f32 0.0, %v3695
        %v3697 = vpop.f32.mrf.mxu0
        %3698 = vmatprep.mubr.f32.mxu0 0.0
        %3699 = vmatmul.mubr.f32.gmra.mxu0 %v3605
        %v3700 = vpop.f32.mrf.mxu0
        %v3701 = vadd.f32 0.0, %v3700
        %v3702 = vpop.f32.mrf.mxu0
        %3703 = vmatprep.mubr.f32.mxu0 0.0
        %3704 = vmatmul.mubr.f32.gmra.mxu0 %v3608
        %v3705 = vpop.f32.mrf.mxu0
        %v3706 = vadd.f32 0.0, %v3705
        %v3707 = vpop.f32.mrf.mxu0
        %3708 = vmatprep.mubr.f32.mxu0 0.0
        %3709 = vmatmul.mubr.f32.gmra.mxu0 %v3611
        %v3710 = vpop.f32.mrf.mxu0
        %v3711 = vadd.f32 0.0, %v3710
        %v3712 = vpop.f32.mrf.mxu0
        %3713 = vmatprep.mubr.f32.mxu0 0.0
        %3714 = vmatmul.mubr.f32.gmra.mxu0 %v3614
        %v3715 = vpop.f32.mrf.mxu0
        %v3716 = vadd.f32 0.0, %v3715
        %v3717 = vpop.f32.mrf.mxu0
        %3718 = vmatprep.mubr.f32.mxu0 0.0
        %3719 = vmatmul.mubr.f32.gmra.mxu0 %v3617
        %v3720 = vpop.f32.mrf.mxu0
        %v3721 = vadd.f32 0.0, %v3720
        %v3722 = vpop.f32.mrf.mxu0
        %3723 = vdwg.mxu0
        %v3724 = vadd.f32 %v3576, %v3686
        %v3725 = vadd.f32 %v3577, %v3691
        %v3726 = vadd.f32 %v3578, %v3696
        %v3727 = vadd.f32 %v3579, %v3701
        %v3728 = vadd.f32 %v3580, %v3706
        %v3729 = vadd.f32 %v3581, %v3711
        %v3730 = vadd.f32 %v3582, %v3716
        %v3731 = vadd.f32 %v3583, %v3721
        %v3732 = vld [vmem:[%s3436 + $0x1] sm:$0xff]
        %v3733 = vld [vmem:[%s3436 + $0x11] sm:$0xff]
        %v3734 = vld [vmem:[%s3436 + $0x21] sm:$0xff]
        %v3735 = vld [vmem:[%s3436 + $0x31] sm:$0xff]
        %v3736 = vld [vmem:[%s3436 + $0x41] sm:$0xff]
        %v3737 = vld [vmem:[%s3436 + $0x51] sm:$0xff]
        %v3738 = vld [vmem:[%s3436 + $0x61] sm:$0xff]
        %v3739 = vld [vmem:[%s3436 + $0x71] sm:$0xff]
        %s3740 = scalar_lea.vmem %s4, 184
        %v3741 = vld [vmem:[%s3740] sm:$0xff]
        %v3743 = vsel %vm382, %v3732, 0
        %v3746 = vsel %vm382, %v3733, 0
        %v3749 = vsel %vm382, %v3734, 0
        %v3752 = vsel %vm382, %v3735, 0
        %v3755 = vsel %vm382, %v3736, 0
        %v3758 = vsel %vm382, %v3737, 0
        %v3761 = vsel %vm382, %v3738, 0
        %v3764 = vsel %vm382, %v3739, 0
        %3766 = vmatprep.subr.mxu0 0.0
        %3767 = vmatpush1.msra.mxu0 0.0
        %3768 = vmatprep.subr.mxu0 0.0
        %3769 = vmatpush1.msra.mxu0 0.0
        %3770 = vmatprep.subr.mxu0 0.0
        %3771 = vmatpush1.msra.mxu0 0.0
        %3772 = vmatprep.subr.mxu0 0.0
        %3773 = vmatpush1.msra.mxu0 0.0
        %3774 = vmatprep.subr.mxu0 0.0
        %3775 = vmatpush1.msra.mxu0 0.0
        %3776 = vmatprep.subr.mxu0 0.0
        %3777 = vmatpush1.msra.mxu0 0.0
        %3778 = vmatprep.subr.mxu0 0.0
        %3779 = vmatpush1.msra.mxu0 0.0
        %3780 = vmatprep.subr.mxu0 0.0
        %3781 = vmatpush1.msra.mxu0 0.0
        %3782 = vmatprep.subr.mxu0 0.0
        %3783 = vmatpush1.msra.mxu0 0.0
        %3784 = vmatprep.subr.mxu0 0.0
        %3785 = vmatpush1.msra.mxu0 0.0
        %3786 = vmatprep.subr.mxu0 0.0
        %3787 = vmatpush1.msra.mxu0 0.0
        %3788 = vmatprep.subr.mxu0 0.0
        %3789 = vmatpush1.msra.mxu0 0.0
        %3790 = vmatprep.subr.mxu0 0.0
        %3791 = vmatpush1.msra.mxu0 0.0
        %3792 = vmatprep.subr.mxu0 0.0
        %3793 = vmatpush1.msra.mxu0 0.0
        %3794 = vmatprep.subr.mxu0 0.0
        %3795 = vmatpush1.msra.mxu0 0.0
        %3796 = vmatprep.subr.mxu0 0.0
        %3797 = vmatpush1.msra.mxu0 %v3741
        %3798 = vmatprep.subr.mxu0 0.0
        %3799 = vmatpush2.msra.mxu0 0.0
        %3800 = vmatprep.subr.mxu0 0.0
        %3801 = vmatpush2.msra.mxu0 0.0
        %3802 = vmatprep.subr.mxu0 0.0
        %3803 = vmatpush2.msra.mxu0 0.0
        %3804 = vmatprep.subr.mxu0 0.0
        %3805 = vmatpush2.msra.mxu0 0.0
        %3806 = vmatprep.subr.mxu0 0.0
        %3807 = vmatpush2.msra.mxu0 0.0
        %3808 = vmatprep.subr.mxu0 0.0
        %3809 = vmatpush2.msra.mxu0 0.0
        %3810 = vmatprep.subr.mxu0 0.0
        %3811 = vmatpush2.msra.mxu0 0.0
        %3812 = vmatprep.subr.mxu0 0.0
        %3813 = vmatpush2.msra.mxu0 0.0
        %3814 = vmatprep.subr.mxu0 0.0
        %3815 = vmatpush2.msra.mxu0 0.0
        %3816 = vmatprep.subr.mxu0 0.0
        %3817 = vmatpush2.msra.mxu0 0.0
        %3818 = vmatprep.subr.mxu0 0.0
        %3819 = vmatpush2.msra.mxu0 0.0
        %3820 = vmatprep.subr.mxu0 0.0
        %3821 = vmatpush2.msra.mxu0 0.0
        %3822 = vmatprep.subr.mxu0 0.0
        %3823 = vmatpush2.msra.mxu0 0.0
        %3824 = vmatprep.subr.mxu0 0.0
        %3825 = vmatpush2.msra.mxu0 0.0
        %3826 = vmatprep.subr.mxu0 0.0
        %3827 = vmatpush2.msra.mxu0 0.0
        %3828 = vmatprep.subr.mxu0 0.0
        %3829 = vmatpush2.msra.mxu0 0.0
        %3830 = vmatprep.mubr.f32.mxu0 0.0
        %3831 = vmatmul.mubr.f32.gmra.mxu0 %v3743
        %v3832 = vpop.f32.mrf.mxu0
        %v3833 = vadd.f32 0.0, %v3832
        %v3834 = vpop.f32.mrf.mxu0
        %3835 = vmatprep.mubr.f32.mxu0 0.0
        %3836 = vmatmul.mubr.f32.gmra.mxu0 %v3746
        %v3837 = vpop.f32.mrf.mxu0
        %v3838 = vadd.f32 0.0, %v3837
        %v3839 = vpop.f32.mrf.mxu0
        %3840 = vmatprep.mubr.f32.mxu0 0.0
        %3841 = vmatmul.mubr.f32.gmra.mxu0 %v3749
        %v3842 = vpop.f32.mrf.mxu0
        %v3843 = vadd.f32 0.0, %v3842
        %v3844 = vpop.f32.mrf.mxu0
        %3845 = vmatprep.mubr.f32.mxu0 0.0
        %3846 = vmatmul.mubr.f32.gmra.mxu0 %v3752
        %v3847 = vpop.f32.mrf.mxu0
        %v3848 = vadd.f32 0.0, %v3847
        %v3849 = vpop.f32.mrf.mxu0
        %3850 = vmatprep.mubr.f32.mxu0 0.0
        %3851 = vmatmul.mubr.f32.gmra.mxu0 %v3755
        %v3852 = vpop.f32.mrf.mxu0
        %v3853 = vadd.f32 0.0, %v3852
        %v3854 = vpop.f32.mrf.mxu0
        %3855 = vmatprep.mubr.f32.mxu0 0.0
        %3856 = vmatmul.mubr.f32.gmra.mxu0 %v3758
        %v3857 = vpop.f32.mrf.mxu0
        %v3858 = vadd.f32 0.0, %v3857
        %v3859 = vpop.f32.mrf.mxu0
        %3860 = vmatprep.mubr.f32.mxu0 0.0
        %3861 = vmatmul.mubr.f32.gmra.mxu0 %v3761
        %v3862 = vpop.f32.mrf.mxu0
        %v3863 = vadd.f32 0.0, %v3862
        %v3864 = vpop.f32.mrf.mxu0
        %3865 = vmatprep.mubr.f32.mxu0 0.0
        %3866 = vmatmul.mubr.f32.gmra.mxu0 %v3764
        %v3867 = vpop.f32.mrf.mxu0
        %v3868 = vadd.f32 0.0, %v3867
        %v3869 = vpop.f32.mrf.mxu0
        %3870 = vdwg.mxu0
        %v3871 = vadd.f32 %v3724, %v3833
        %v3872 = vadd.f32 %v3725, %v3838
        %v3873 = vadd.f32 %v3726, %v3843
        %v3874 = vadd.f32 %v3727, %v3848
        %v3875 = vadd.f32 %v3728, %v3853
        %v3876 = vadd.f32 %v3729, %v3858
        %v3877 = vadd.f32 %v3730, %v3863
        %v3878 = vadd.f32 %v3731, %v3868
        %v3879 = vld [vmem:[%s3584 + $0x1] sm:$0xff]
        %v3880 = vld [vmem:[%s3584 + $0x11] sm:$0xff]
        %v3881 = vld [vmem:[%s3584 + $0x21] sm:$0xff]
        %v3882 = vld [vmem:[%s3584 + $0x31] sm:$0xff]
        %v3883 = vld [vmem:[%s3584 + $0x41] sm:$0xff]
        %v3884 = vld [vmem:[%s3584 + $0x51] sm:$0xff]
        %v3885 = vld [vmem:[%s3584 + $0x61] sm:$0xff]
        %v3886 = vld [vmem:[%s3584 + $0x71] sm:$0xff]
        %s3887 = scalar_lea.vmem %s4, 192
        %v3888 = vld [vmem:[%s3887] sm:$0xff]
        %v3890 = vsel %vm382, %v3879, 0
        %v3893 = vsel %vm382, %v3880, 0
        %v3896 = vsel %vm382, %v3881, 0
        %v3899 = vsel %vm382, %v3882, 0
        %v3902 = vsel %vm382, %v3883, 0
        %v3905 = vsel %vm382, %v3884, 0
        %v3908 = vsel %vm382, %v3885, 0
        %v3911 = vsel %vm382, %v3886, 0
        %3913 = vmatprep.subr.mxu0 0.0
        %3914 = vmatpush1.msra.mxu0 0.0
        %3915 = vmatprep.subr.mxu0 0.0
        %3916 = vmatpush1.msra.mxu0 0.0
        %3917 = vmatprep.subr.mxu0 0.0
        %3918 = vmatpush1.msra.mxu0 0.0
        %3919 = vmatprep.subr.mxu0 0.0
        %3920 = vmatpush1.msra.mxu0 0.0
        %3921 = vmatprep.subr.mxu0 0.0
        %3922 = vmatpush1.msra.mxu0 0.0
        %3923 = vmatprep.subr.mxu0 0.0
        %3924 = vmatpush1.msra.mxu0 0.0
        %3925 = vmatprep.subr.mxu0 0.0
        %3926 = vmatpush1.msra.mxu0 0.0
        %3927 = vmatprep.subr.mxu0 0.0
        %3928 = vmatpush1.msra.mxu0 0.0
        %3929 = vmatprep.subr.mxu0 0.0
        %3930 = vmatpush1.msra.mxu0 0.0
        %3931 = vmatprep.subr.mxu0 0.0
        %3932 = vmatpush1.msra.mxu0 0.0
        %3933 = vmatprep.subr.mxu0 0.0
        %3934 = vmatpush1.msra.mxu0 0.0
        %3935 = vmatprep.subr.mxu0 0.0
        %3936 = vmatpush1.msra.mxu0 0.0
        %3937 = vmatprep.subr.mxu0 0.0
        %3938 = vmatpush1.msra.mxu0 0.0
        %3939 = vmatprep.subr.mxu0 0.0
        %3940 = vmatpush1.msra.mxu0 0.0
        %3941 = vmatprep.subr.mxu0 0.0
        %3942 = vmatpush1.msra.mxu0 0.0
        %3943 = vmatprep.subr.mxu0 0.0
        %3944 = vmatpush1.msra.mxu0 %v3888
        %3945 = vmatprep.subr.mxu0 0.0
        %3946 = vmatpush2.msra.mxu0 0.0
        %3947 = vmatprep.subr.mxu0 0.0
        %3948 = vmatpush2.msra.mxu0 0.0
        %3949 = vmatprep.subr.mxu0 0.0
        %3950 = vmatpush2.msra.mxu0 0.0
        %3951 = vmatprep.subr.mxu0 0.0
        %3952 = vmatpush2.msra.mxu0 0.0
        %3953 = vmatprep.subr.mxu0 0.0
        %3954 = vmatpush2.msra.mxu0 0.0
        %3955 = vmatprep.subr.mxu0 0.0
        %3956 = vmatpush2.msra.mxu0 0.0
        %3957 = vmatprep.subr.mxu0 0.0
        %3958 = vmatpush2.msra.mxu0 0.0
        %3959 = vmatprep.subr.mxu0 0.0
        %3960 = vmatpush2.msra.mxu0 0.0
        %3961 = vmatprep.subr.mxu0 0.0
        %3962 = vmatpush2.msra.mxu0 0.0
        %3963 = vmatprep.subr.mxu0 0.0
        %3964 = vmatpush2.msra.mxu0 0.0
        %3965 = vmatprep.subr.mxu0 0.0
        %3966 = vmatpush2.msra.mxu0 0.0
        %3967 = vmatprep.subr.mxu0 0.0
        %3968 = vmatpush2.msra.mxu0 0.0
        %3969 = vmatprep.subr.mxu0 0.0
        %3970 = vmatpush2.msra.mxu0 0.0
        %3971 = vmatprep.subr.mxu0 0.0
        %3972 = vmatpush2.msra.mxu0 0.0
        %3973 = vmatprep.subr.mxu0 0.0
        %3974 = vmatpush2.msra.mxu0 0.0
        %3975 = vmatprep.subr.mxu0 0.0
        %3976 = vmatpush2.msra.mxu0 0.0
        %3977 = vmatprep.mubr.f32.mxu0 0.0
        %3978 = vmatmul.mubr.f32.gmra.mxu0 %v3890
        %v3979 = vpop.f32.mrf.mxu0
        %v3980 = vadd.f32 0.0, %v3979
        %v3981 = vpop.f32.mrf.mxu0
        %3982 = vmatprep.mubr.f32.mxu0 0.0
        %3983 = vmatmul.mubr.f32.gmra.mxu0 %v3893
        %v3984 = vpop.f32.mrf.mxu0
        %v3985 = vadd.f32 0.0, %v3984
        %v3986 = vpop.f32.mrf.mxu0
        %3987 = vmatprep.mubr.f32.mxu0 0.0
        %3988 = vmatmul.mubr.f32.gmra.mxu0 %v3896
        %v3989 = vpop.f32.mrf.mxu0
        %v3990 = vadd.f32 0.0, %v3989
        %v3991 = vpop.f32.mrf.mxu0
        %3992 = vmatprep.mubr.f32.mxu0 0.0
        %3993 = vmatmul.mubr.f32.gmra.mxu0 %v3899
        %v3994 = vpop.f32.mrf.mxu0
        %v3995 = vadd.f32 0.0, %v3994
        %v3996 = vpop.f32.mrf.mxu0
        %3997 = vmatprep.mubr.f32.mxu0 0.0
        %3998 = vmatmul.mubr.f32.gmra.mxu0 %v3902
        %v3999 = vpop.f32.mrf.mxu0
        %v4000 = vadd.f32 0.0, %v3999
        %v4001 = vpop.f32.mrf.mxu0
        %4002 = vmatprep.mubr.f32.mxu0 0.0
        %4003 = vmatmul.mubr.f32.gmra.mxu0 %v3905
        %v4004 = vpop.f32.mrf.mxu0
        %v4005 = vadd.f32 0.0, %v4004
        %v4006 = vpop.f32.mrf.mxu0
        %4007 = vmatprep.mubr.f32.mxu0 0.0
        %4008 = vmatmul.mubr.f32.gmra.mxu0 %v3908
        %v4009 = vpop.f32.mrf.mxu0
        %v4010 = vadd.f32 0.0, %v4009
        %v4011 = vpop.f32.mrf.mxu0
        %4012 = vmatprep.mubr.f32.mxu0 0.0
        %4013 = vmatmul.mubr.f32.gmra.mxu0 %v3911
        %v4014 = vpop.f32.mrf.mxu0
        %v4015 = vadd.f32 0.0, %v4014
        %v4016 = vpop.f32.mrf.mxu0
        %4017 = vdwg.mxu0
        %v4018 = vadd.f32 %v3871, %v3980
        %v4019 = vadd.f32 %v3872, %v3985
        %v4020 = vadd.f32 %v3873, %v3990
        %v4021 = vadd.f32 %v3874, %v3995
        %v4022 = vadd.f32 %v3875, %v4000
        %v4023 = vadd.f32 %v3876, %v4005
        %v4024 = vadd.f32 %v3877, %v4010
        %v4025 = vadd.f32 %v3878, %v4015
        %v4026 = vld [vmem:[%s3436 + $0x2] sm:$0xff]
        %v4027 = vld [vmem:[%s3436 + $0x12] sm:$0xff]
        %v4028 = vld [vmem:[%s3436 + $0x22] sm:$0xff]
        %v4029 = vld [vmem:[%s3436 + $0x32] sm:$0xff]
        %v4030 = vld [vmem:[%s3436 + $0x42] sm:$0xff]
        %v4031 = vld [vmem:[%s3436 + $0x52] sm:$0xff]
        %v4032 = vld [vmem:[%s3436 + $0x62] sm:$0xff]
        %v4033 = vld [vmem:[%s3436 + $0x72] sm:$0xff]
        %s4034 = scalar_lea.vmem %s4, 200
        %v4035 = vld [vmem:[%s4034] sm:$0xff]
        %v4037 = vsel %vm382, %v4026, 0
        %v4040 = vsel %vm382, %v4027, 0
        %v4043 = vsel %vm382, %v4028, 0
        %v4046 = vsel %vm382, %v4029, 0
        %v4049 = vsel %vm382, %v4030, 0
        %v4052 = vsel %vm382, %v4031, 0
        %v4055 = vsel %vm382, %v4032, 0
        %v4058 = vsel %vm382, %v4033, 0
        %4060 = vmatprep.subr.mxu0 0.0
        %4061 = vmatpush1.msra.mxu0 0.0
        %4062 = vmatprep.subr.mxu0 0.0
        %4063 = vmatpush1.msra.mxu0 0.0
        %4064 = vmatprep.subr.mxu0 0.0
        %4065 = vmatpush1.msra.mxu0 0.0
        %4066 = vmatprep.subr.mxu0 0.0
        %4067 = vmatpush1.msra.mxu0 0.0
        %4068 = vmatprep.subr.mxu0 0.0
        %4069 = vmatpush1.msra.mxu0 0.0
        %4070 = vmatprep.subr.mxu0 0.0
        %4071 = vmatpush1.msra.mxu0 0.0
        %4072 = vmatprep.subr.mxu0 0.0
        %4073 = vmatpush1.msra.mxu0 0.0
        %4074 = vmatprep.subr.mxu0 0.0
        %4075 = vmatpush1.msra.mxu0 0.0
        %4076 = vmatprep.subr.mxu0 0.0
        %4077 = vmatpush1.msra.mxu0 0.0
        %4078 = vmatprep.subr.mxu0 0.0
        %4079 = vmatpush1.msra.mxu0 0.0
        %4080 = vmatprep.subr.mxu0 0.0
        %4081 = vmatpush1.msra.mxu0 0.0
        %4082 = vmatprep.subr.mxu0 0.0
        %4083 = vmatpush1.msra.mxu0 0.0
        %4084 = vmatprep.subr.mxu0 0.0
        %4085 = vmatpush1.msra.mxu0 0.0
        %4086 = vmatprep.subr.mxu0 0.0
        %4087 = vmatpush1.msra.mxu0 0.0
        %4088 = vmatprep.subr.mxu0 0.0
        %4089 = vmatpush1.msra.mxu0 0.0
        %4090 = vmatprep.subr.mxu0 0.0
        %4091 = vmatpush1.msra.mxu0 %v4035
        %4092 = vmatprep.subr.mxu0 0.0
        %4093 = vmatpush2.msra.mxu0 0.0
        %4094 = vmatprep.subr.mxu0 0.0
        %4095 = vmatpush2.msra.mxu0 0.0
        %4096 = vmatprep.subr.mxu0 0.0
        %4097 = vmatpush2.msra.mxu0 0.0
        %4098 = vmatprep.subr.mxu0 0.0
        %4099 = vmatpush2.msra.mxu0 0.0
        %4100 = vmatprep.subr.mxu0 0.0
        %4101 = vmatpush2.msra.mxu0 0.0
        %4102 = vmatprep.subr.mxu0 0.0
        %4103 = vmatpush2.msra.mxu0 0.0
        %4104 = vmatprep.subr.mxu0 0.0
        %4105 = vmatpush2.msra.mxu0 0.0
        %4106 = vmatprep.subr.mxu0 0.0
        %4107 = vmatpush2.msra.mxu0 0.0
        %4108 = vmatprep.subr.mxu0 0.0
        %4109 = vmatpush2.msra.mxu0 0.0
        %4110 = vmatprep.subr.mxu0 0.0
        %4111 = vmatpush2.msra.mxu0 0.0
        %4112 = vmatprep.subr.mxu0 0.0
        %4113 = vmatpush2.msra.mxu0 0.0
        %4114 = vmatprep.subr.mxu0 0.0
        %4115 = vmatpush2.msra.mxu0 0.0
        %4116 = vmatprep.subr.mxu0 0.0
        %4117 = vmatpush2.msra.mxu0 0.0
        %4118 = vmatprep.subr.mxu0 0.0
        %4119 = vmatpush2.msra.mxu0 0.0
        %4120 = vmatprep.subr.mxu0 0.0
        %4121 = vmatpush2.msra.mxu0 0.0
        %4122 = vmatprep.subr.mxu0 0.0
        %4123 = vmatpush2.msra.mxu0 0.0
        %4124 = vmatprep.mubr.f32.mxu0 0.0
        %4125 = vmatmul.mubr.f32.gmra.mxu0 %v4037
        %v4126 = vpop.f32.mrf.mxu0
        %v4127 = vadd.f32 0.0, %v4126
        %v4128 = vpop.f32.mrf.mxu0
        %4129 = vmatprep.mubr.f32.mxu0 0.0
        %4130 = vmatmul.mubr.f32.gmra.mxu0 %v4040
        %v4131 = vpop.f32.mrf.mxu0
        %v4132 = vadd.f32 0.0, %v4131
        %v4133 = vpop.f32.mrf.mxu0
        %4134 = vmatprep.mubr.f32.mxu0 0.0
        %4135 = vmatmul.mubr.f32.gmra.mxu0 %v4043
        %v4136 = vpop.f32.mrf.mxu0
        %v4137 = vadd.f32 0.0, %v4136
        %v4138 = vpop.f32.mrf.mxu0
        %4139 = vmatprep.mubr.f32.mxu0 0.0
        %4140 = vmatmul.mubr.f32.gmra.mxu0 %v4046
        %v4141 = vpop.f32.mrf.mxu0
        %v4142 = vadd.f32 0.0, %v4141
        %v4143 = vpop.f32.mrf.mxu0
        %4144 = vmatprep.mubr.f32.mxu0 0.0
        %4145 = vmatmul.mubr.f32.gmra.mxu0 %v4049
        %v4146 = vpop.f32.mrf.mxu0
        %v4147 = vadd.f32 0.0, %v4146
        %v4148 = vpop.f32.mrf.mxu0
        %4149 = vmatprep.mubr.f32.mxu0 0.0
        %4150 = vmatmul.mubr.f32.gmra.mxu0 %v4052
        %v4151 = vpop.f32.mrf.mxu0
        %v4152 = vadd.f32 0.0, %v4151
        %v4153 = vpop.f32.mrf.mxu0
        %4154 = vmatprep.mubr.f32.mxu0 0.0
        %4155 = vmatmul.mubr.f32.gmra.mxu0 %v4055
        %v4156 = vpop.f32.mrf.mxu0
        %v4157 = vadd.f32 0.0, %v4156
        %v4158 = vpop.f32.mrf.mxu0
        %4159 = vmatprep.mubr.f32.mxu0 0.0
        %4160 = vmatmul.mubr.f32.gmra.mxu0 %v4058
        %v4161 = vpop.f32.mrf.mxu0
        %v4162 = vadd.f32 0.0, %v4161
        %v4163 = vpop.f32.mrf.mxu0
        %4164 = vdwg.mxu0
        %v4165 = vadd.f32 %v4018, %v4127
        %v4166 = vadd.f32 %v4019, %v4132
        %v4167 = vadd.f32 %v4020, %v4137
        %v4168 = vadd.f32 %v4021, %v4142
        %v4169 = vadd.f32 %v4022, %v4147
        %v4170 = vadd.f32 %v4023, %v4152
        %v4171 = vadd.f32 %v4024, %v4157
        %v4172 = vadd.f32 %v4025, %v4162
        %v4173 = vld [vmem:[%s3584 + $0x2] sm:$0xff]
        %v4174 = vld [vmem:[%s3584 + $0x12] sm:$0xff]
        %v4175 = vld [vmem:[%s3584 + $0x22] sm:$0xff]
        %v4176 = vld [vmem:[%s3584 + $0x32] sm:$0xff]
        %v4177 = vld [vmem:[%s3584 + $0x42] sm:$0xff]
        %v4178 = vld [vmem:[%s3584 + $0x52] sm:$0xff]
        %v4179 = vld [vmem:[%s3584 + $0x62] sm:$0xff]
        %v4180 = vld [vmem:[%s3584 + $0x72] sm:$0xff]
        %s4181 = scalar_lea.vmem %s4, 208
        %v4182 = vld [vmem:[%s4181] sm:$0xff]
        %v4184 = vsel %vm382, %v4173, 0
        %v4187 = vsel %vm382, %v4174, 0
        %v4190 = vsel %vm382, %v4175, 0
        %v4193 = vsel %vm382, %v4176, 0
        %v4196 = vsel %vm382, %v4177, 0
        %v4199 = vsel %vm382, %v4178, 0
        %v4202 = vsel %vm382, %v4179, 0
        %v4205 = vsel %vm382, %v4180, 0
        %4207 = vmatprep.subr.mxu0 0.0
        %4208 = vmatpush1.msra.mxu0 0.0
        %4209 = vmatprep.subr.mxu0 0.0
        %4210 = vmatpush1.msra.mxu0 0.0
        %4211 = vmatprep.subr.mxu0 0.0
        %4212 = vmatpush1.msra.mxu0 0.0
        %4213 = vmatprep.subr.mxu0 0.0
        %4214 = vmatpush1.msra.mxu0 0.0
        %4215 = vmatprep.subr.mxu0 0.0
        %4216 = vmatpush1.msra.mxu0 0.0
        %4217 = vmatprep.subr.mxu0 0.0
        %4218 = vmatpush1.msra.mxu0 0.0
        %4219 = vmatprep.subr.mxu0 0.0
        %4220 = vmatpush1.msra.mxu0 0.0
        %4221 = vmatprep.subr.mxu0 0.0
        %4222 = vmatpush1.msra.mxu0 0.0
        %4223 = vmatprep.subr.mxu0 0.0
        %4224 = vmatpush1.msra.mxu0 0.0
        %4225 = vmatprep.subr.mxu0 0.0
        %4226 = vmatpush1.msra.mxu0 0.0
        %4227 = vmatprep.subr.mxu0 0.0
        %4228 = vmatpush1.msra.mxu0 0.0
        %4229 = vmatprep.subr.mxu0 0.0
        %4230 = vmatpush1.msra.mxu0 0.0
        %4231 = vmatprep.subr.mxu0 0.0
        %4232 = vmatpush1.msra.mxu0 0.0
        %4233 = vmatprep.subr.mxu0 0.0
        %4234 = vmatpush1.msra.mxu0 0.0
        %4235 = vmatprep.subr.mxu0 0.0
        %4236 = vmatpush1.msra.mxu0 0.0
        %4237 = vmatprep.subr.mxu0 0.0
        %4238 = vmatpush1.msra.mxu0 %v4182
        %4239 = vmatprep.subr.mxu0 0.0
        %4240 = vmatpush2.msra.mxu0 0.0
        %4241 = vmatprep.subr.mxu0 0.0
        %4242 = vmatpush2.msra.mxu0 0.0
        %4243 = vmatprep.subr.mxu0 0.0
        %4244 = vmatpush2.msra.mxu0 0.0
        %4245 = vmatprep.subr.mxu0 0.0
        %4246 = vmatpush2.msra.mxu0 0.0
        %4247 = vmatprep.subr.mxu0 0.0
        %4248 = vmatpush2.msra.mxu0 0.0
        %4249 = vmatprep.subr.mxu0 0.0
        %4250 = vmatpush2.msra.mxu0 0.0
        %4251 = vmatprep.subr.mxu0 0.0
        %4252 = vmatpush2.msra.mxu0 0.0
        %4253 = vmatprep.subr.mxu0 0.0
        %4254 = vmatpush2.msra.mxu0 0.0
        %4255 = vmatprep.subr.mxu0 0.0
        %4256 = vmatpush2.msra.mxu0 0.0
        %4257 = vmatprep.subr.mxu0 0.0
        %4258 = vmatpush2.msra.mxu0 0.0
        %4259 = vmatprep.subr.mxu0 0.0
        %4260 = vmatpush2.msra.mxu0 0.0
        %4261 = vmatprep.subr.mxu0 0.0
        %4262 = vmatpush2.msra.mxu0 0.0
        %4263 = vmatprep.subr.mxu0 0.0
        %4264 = vmatpush2.msra.mxu0 0.0
        %4265 = vmatprep.subr.mxu0 0.0
        %4266 = vmatpush2.msra.mxu0 0.0
        %4267 = vmatprep.subr.mxu0 0.0
        %4268 = vmatpush2.msra.mxu0 0.0
        %4269 = vmatprep.subr.mxu0 0.0
        %4270 = vmatpush2.msra.mxu0 0.0
        %4271 = vmatprep.mubr.f32.mxu0 0.0
        %4272 = vmatmul.mubr.f32.gmra.mxu0 %v4184
        %v4273 = vpop.f32.mrf.mxu0
        %v4274 = vadd.f32 0.0, %v4273
        %v4275 = vpop.f32.mrf.mxu0
        %4276 = vmatprep.mubr.f32.mxu0 0.0
        %4277 = vmatmul.mubr.f32.gmra.mxu0 %v4187
        %v4278 = vpop.f32.mrf.mxu0
        %v4279 = vadd.f32 0.0, %v4278
        %v4280 = vpop.f32.mrf.mxu0
        %4281 = vmatprep.mubr.f32.mxu0 0.0
        %4282 = vmatmul.mubr.f32.gmra.mxu0 %v4190
        %v4283 = vpop.f32.mrf.mxu0
        %v4284 = vadd.f32 0.0, %v4283
        %v4285 = vpop.f32.mrf.mxu0
        %4286 = vmatprep.mubr.f32.mxu0 0.0
        %4287 = vmatmul.mubr.f32.gmra.mxu0 %v4193
        %v4288 = vpop.f32.mrf.mxu0
        %v4289 = vadd.f32 0.0, %v4288
        %v4290 = vpop.f32.mrf.mxu0
        %4291 = vmatprep.mubr.f32.mxu0 0.0
        %4292 = vmatmul.mubr.f32.gmra.mxu0 %v4196
        %v4293 = vpop.f32.mrf.mxu0
        %v4294 = vadd.f32 0.0, %v4293
        %v4295 = vpop.f32.mrf.mxu0
        %4296 = vmatprep.mubr.f32.mxu0 0.0
        %4297 = vmatmul.mubr.f32.gmra.mxu0 %v4199
        %v4298 = vpop.f32.mrf.mxu0
        %v4299 = vadd.f32 0.0, %v4298
        %v4300 = vpop.f32.mrf.mxu0
        %4301 = vmatprep.mubr.f32.mxu0 0.0
        %4302 = vmatmul.mubr.f32.gmra.mxu0 %v4202
        %v4303 = vpop.f32.mrf.mxu0
        %v4304 = vadd.f32 0.0, %v4303
        %v4305 = vpop.f32.mrf.mxu0
        %4306 = vmatprep.mubr.f32.mxu0 0.0
        %4307 = vmatmul.mubr.f32.gmra.mxu0 %v4205
        %v4308 = vpop.f32.mrf.mxu0
        %v4309 = vadd.f32 0.0, %v4308
        %v4310 = vpop.f32.mrf.mxu0
        %4311 = vdwg.mxu0
        %v4312 = vadd.f32 %v4165, %v4274
        %v4313 = vadd.f32 %v4166, %v4279
        %v4314 = vadd.f32 %v4167, %v4284
        %v4315 = vadd.f32 %v4168, %v4289
        %v4316 = vadd.f32 %v4169, %v4294
        %v4317 = vadd.f32 %v4170, %v4299
        %v4318 = vadd.f32 %v4171, %v4304
        %v4319 = vadd.f32 %v4172, %v4309
        %v4320 = vld [vmem:[%s3436 + $0x3] sm:$0xff]
        %v4321 = vld [vmem:[%s3436 + $0x13] sm:$0xff]
        %v4322 = vld [vmem:[%s3436 + $0x23] sm:$0xff]
        %v4323 = vld [vmem:[%s3436 + $0x33] sm:$0xff]
        %v4324 = vld [vmem:[%s3436 + $0x43] sm:$0xff]
        %v4325 = vld [vmem:[%s3436 + $0x53] sm:$0xff]
        %v4326 = vld [vmem:[%s3436 + $0x63] sm:$0xff]
        %v4327 = vld [vmem:[%s3436 + $0x73] sm:$0xff]
        %s4328 = scalar_lea.vmem %s4, 216
        %v4329 = vld [vmem:[%s4328] sm:$0xff]
        %v4331 = vsel %vm382, %v4320, 0
        %v4334 = vsel %vm382, %v4321, 0
        %v4337 = vsel %vm382, %v4322, 0
        %v4340 = vsel %vm382, %v4323, 0
        %v4343 = vsel %vm382, %v4324, 0
        %v4346 = vsel %vm382, %v4325, 0
        %v4349 = vsel %vm382, %v4326, 0
        %v4352 = vsel %vm382, %v4327, 0
        %4354 = vmatprep.subr.mxu0 0.0
        %4355 = vmatpush1.msra.mxu0 0.0
        %4356 = vmatprep.subr.mxu0 0.0
        %4357 = vmatpush1.msra.mxu0 0.0
        %4358 = vmatprep.subr.mxu0 0.0
        %4359 = vmatpush1.msra.mxu0 0.0
        %4360 = vmatprep.subr.mxu0 0.0
        %4361 = vmatpush1.msra.mxu0 0.0
        %4362 = vmatprep.subr.mxu0 0.0
        %4363 = vmatpush1.msra.mxu0 0.0
        %4364 = vmatprep.subr.mxu0 0.0
        %4365 = vmatpush1.msra.mxu0 0.0
        %4366 = vmatprep.subr.mxu0 0.0
        %4367 = vmatpush1.msra.mxu0 0.0
        %4368 = vmatprep.subr.mxu0 0.0
        %4369 = vmatpush1.msra.mxu0 0.0
        %4370 = vmatprep.subr.mxu0 0.0
        %4371 = vmatpush1.msra.mxu0 0.0
        %4372 = vmatprep.subr.mxu0 0.0
        %4373 = vmatpush1.msra.mxu0 0.0
        %4374 = vmatprep.subr.mxu0 0.0
        %4375 = vmatpush1.msra.mxu0 0.0
        %4376 = vmatprep.subr.mxu0 0.0
        %4377 = vmatpush1.msra.mxu0 0.0
        %4378 = vmatprep.subr.mxu0 0.0
        %4379 = vmatpush1.msra.mxu0 0.0
        %4380 = vmatprep.subr.mxu0 0.0
        %4381 = vmatpush1.msra.mxu0 0.0
        %4382 = vmatprep.subr.mxu0 0.0
        %4383 = vmatpush1.msra.mxu0 0.0
        %4384 = vmatprep.subr.mxu0 0.0
        %4385 = vmatpush1.msra.mxu0 %v4329
        %4386 = vmatprep.subr.mxu0 0.0
        %4387 = vmatpush2.msra.mxu0 0.0
        %4388 = vmatprep.subr.mxu0 0.0
        %4389 = vmatpush2.msra.mxu0 0.0
        %4390 = vmatprep.subr.mxu0 0.0
        %4391 = vmatpush2.msra.mxu0 0.0
        %4392 = vmatprep.subr.mxu0 0.0
        %4393 = vmatpush2.msra.mxu0 0.0
        %4394 = vmatprep.subr.mxu0 0.0
        %4395 = vmatpush2.msra.mxu0 0.0
        %4396 = vmatprep.subr.mxu0 0.0
        %4397 = vmatpush2.msra.mxu0 0.0
        %4398 = vmatprep.subr.mxu0 0.0
        %4399 = vmatpush2.msra.mxu0 0.0
        %4400 = vmatprep.subr.mxu0 0.0
        %4401 = vmatpush2.msra.mxu0 0.0
        %4402 = vmatprep.subr.mxu0 0.0
        %4403 = vmatpush2.msra.mxu0 0.0
        %4404 = vmatprep.subr.mxu0 0.0
        %4405 = vmatpush2.msra.mxu0 0.0
        %4406 = vmatprep.subr.mxu0 0.0
        %4407 = vmatpush2.msra.mxu0 0.0
        %4408 = vmatprep.subr.mxu0 0.0
        %4409 = vmatpush2.msra.mxu0 0.0
        %4410 = vmatprep.subr.mxu0 0.0
        %4411 = vmatpush2.msra.mxu0 0.0
        %4412 = vmatprep.subr.mxu0 0.0
        %4413 = vmatpush2.msra.mxu0 0.0
        %4414 = vmatprep.subr.mxu0 0.0
        %4415 = vmatpush2.msra.mxu0 0.0
        %4416 = vmatprep.subr.mxu0 0.0
        %4417 = vmatpush2.msra.mxu0 0.0
        %4418 = vmatprep.mubr.f32.mxu0 0.0
        %4419 = vmatmul.mubr.f32.gmra.mxu0 %v4331
        %v4420 = vpop.f32.mrf.mxu0
        %v4421 = vadd.f32 0.0, %v4420
        %v4422 = vpop.f32.mrf.mxu0
        %4423 = vmatprep.mubr.f32.mxu0 0.0
        %4424 = vmatmul.mubr.f32.gmra.mxu0 %v4334
        %v4425 = vpop.f32.mrf.mxu0
        %v4426 = vadd.f32 0.0, %v4425
        %v4427 = vpop.f32.mrf.mxu0
        %4428 = vmatprep.mubr.f32.mxu0 0.0
        %4429 = vmatmul.mubr.f32.gmra.mxu0 %v4337
        %v4430 = vpop.f32.mrf.mxu0
        %v4431 = vadd.f32 0.0, %v4430
        %v4432 = vpop.f32.mrf.mxu0
        %4433 = vmatprep.mubr.f32.mxu0 0.0
        %4434 = vmatmul.mubr.f32.gmra.mxu0 %v4340
        %v4435 = vpop.f32.mrf.mxu0
        %v4436 = vadd.f32 0.0, %v4435
        %v4437 = vpop.f32.mrf.mxu0
        %4438 = vmatprep.mubr.f32.mxu0 0.0
        %4439 = vmatmul.mubr.f32.gmra.mxu0 %v4343
        %v4440 = vpop.f32.mrf.mxu0
        %v4441 = vadd.f32 0.0, %v4440
        %v4442 = vpop.f32.mrf.mxu0
        %4443 = vmatprep.mubr.f32.mxu0 0.0
        %4444 = vmatmul.mubr.f32.gmra.mxu0 %v4346
        %v4445 = vpop.f32.mrf.mxu0
        %v4446 = vadd.f32 0.0, %v4445
        %v4447 = vpop.f32.mrf.mxu0
        %4448 = vmatprep.mubr.f32.mxu0 0.0
        %4449 = vmatmul.mubr.f32.gmra.mxu0 %v4349
        %v4450 = vpop.f32.mrf.mxu0
        %v4451 = vadd.f32 0.0, %v4450
        %v4452 = vpop.f32.mrf.mxu0
        %4453 = vmatprep.mubr.f32.mxu0 0.0
        %4454 = vmatmul.mubr.f32.gmra.mxu0 %v4352
        %v4455 = vpop.f32.mrf.mxu0
        %v4456 = vadd.f32 0.0, %v4455
        %v4457 = vpop.f32.mrf.mxu0
        %4458 = vdwg.mxu0
        %v4459 = vadd.f32 %v4312, %v4421
        %v4460 = vadd.f32 %v4313, %v4426
        %v4461 = vadd.f32 %v4314, %v4431
        %v4462 = vadd.f32 %v4315, %v4436
        %v4463 = vadd.f32 %v4316, %v4441
        %v4464 = vadd.f32 %v4317, %v4446
        %v4465 = vadd.f32 %v4318, %v4451
        %v4466 = vadd.f32 %v4319, %v4456
        %s4467 = scalar_lea.vmem %s347, 32
        %v4468 = vld [vmem:[%s4467] sm:$0xff]
        %v4469 = vld [vmem:[%s4467 + $0x10] sm:$0xff]
        %v4470 = vld [vmem:[%s4467 + $0x20] sm:$0xff]
        %v4471 = vld [vmem:[%s4467 + $0x30] sm:$0xff]
        %v4472 = vld [vmem:[%s4467 + $0x40] sm:$0xff]
        %v4473 = vld [vmem:[%s4467 + $0x50] sm:$0xff]
        %v4474 = vld [vmem:[%s4467 + $0x60] sm:$0xff]
        %v4475 = vld [vmem:[%s4467 + $0x70] sm:$0xff]
        %s4476 = scalar_lea.vmem %s4, 224
        %v4477 = vld [vmem:[%s4476] sm:$0xff]
        %v4479 = vsel %vm382, %v4468, 0
        %v4482 = vsel %vm382, %v4469, 0
        %v4485 = vsel %vm382, %v4470, 0
        %v4488 = vsel %vm382, %v4471, 0
        %v4491 = vsel %vm382, %v4472, 0
        %v4494 = vsel %vm382, %v4473, 0
        %v4497 = vsel %vm382, %v4474, 0
        %v4500 = vsel %vm382, %v4475, 0
        %4502 = vmatprep.subr.mxu0 0.0
        %4503 = vmatpush1.msra.mxu0 0.0
        %4504 = vmatprep.subr.mxu0 0.0
        %4505 = vmatpush1.msra.mxu0 0.0
        %4506 = vmatprep.subr.mxu0 0.0
        %4507 = vmatpush1.msra.mxu0 0.0
        %4508 = vmatprep.subr.mxu0 0.0
        %4509 = vmatpush1.msra.mxu0 0.0
        %4510 = vmatprep.subr.mxu0 0.0
        %4511 = vmatpush1.msra.mxu0 0.0
        %4512 = vmatprep.subr.mxu0 0.0
        %4513 = vmatpush1.msra.mxu0 0.0
        %4514 = vmatprep.subr.mxu0 0.0
        %4515 = vmatpush1.msra.mxu0 0.0
        %4516 = vmatprep.subr.mxu0 0.0
        %4517 = vmatpush1.msra.mxu0 0.0
        %4518 = vmatprep.subr.mxu0 0.0
        %4519 = vmatpush1.msra.mxu0 0.0
        %4520 = vmatprep.subr.mxu0 0.0
        %4521 = vmatpush1.msra.mxu0 0.0
        %4522 = vmatprep.subr.mxu0 0.0
        %4523 = vmatpush1.msra.mxu0 0.0
        %4524 = vmatprep.subr.mxu0 0.0
        %4525 = vmatpush1.msra.mxu0 0.0
        %4526 = vmatprep.subr.mxu0 0.0
        %4527 = vmatpush1.msra.mxu0 0.0
        %4528 = vmatprep.subr.mxu0 0.0
        %4529 = vmatpush1.msra.mxu0 0.0
        %4530 = vmatprep.subr.mxu0 0.0
        %4531 = vmatpush1.msra.mxu0 0.0
        %4532 = vmatprep.subr.mxu0 0.0
        %4533 = vmatpush1.msra.mxu0 %v4477
        %4534 = vmatprep.subr.mxu0 0.0
        %4535 = vmatpush2.msra.mxu0 0.0
        %4536 = vmatprep.subr.mxu0 0.0
        %4537 = vmatpush2.msra.mxu0 0.0
        %4538 = vmatprep.subr.mxu0 0.0
        %4539 = vmatpush2.msra.mxu0 0.0
        %4540 = vmatprep.subr.mxu0 0.0
        %4541 = vmatpush2.msra.mxu0 0.0
        %4542 = vmatprep.subr.mxu0 0.0
        %4543 = vmatpush2.msra.mxu0 0.0
        %4544 = vmatprep.subr.mxu0 0.0
        %4545 = vmatpush2.msra.mxu0 0.0
        %4546 = vmatprep.subr.mxu0 0.0
        %4547 = vmatpush2.msra.mxu0 0.0
        %4548 = vmatprep.subr.mxu0 0.0
        %4549 = vmatpush2.msra.mxu0 0.0
        %4550 = vmatprep.subr.mxu0 0.0
        %4551 = vmatpush2.msra.mxu0 0.0
        %4552 = vmatprep.subr.mxu0 0.0
        %4553 = vmatpush2.msra.mxu0 0.0
        %4554 = vmatprep.subr.mxu0 0.0
        %4555 = vmatpush2.msra.mxu0 0.0
        %4556 = vmatprep.subr.mxu0 0.0
        %4557 = vmatpush2.msra.mxu0 0.0
        %4558 = vmatprep.subr.mxu0 0.0
        %4559 = vmatpush2.msra.mxu0 0.0
        %4560 = vmatprep.subr.mxu0 0.0
        %4561 = vmatpush2.msra.mxu0 0.0
        %4562 = vmatprep.subr.mxu0 0.0
        %4563 = vmatpush2.msra.mxu0 0.0
        %4564 = vmatprep.subr.mxu0 0.0
        %4565 = vmatpush2.msra.mxu0 0.0
        %4566 = vmatprep.mubr.f32.mxu0 0.0
        %4567 = vmatmul.mubr.f32.gmra.mxu0 %v4479
        %v4568 = vpop.f32.mrf.mxu0
        %v4569 = vadd.f32 0.0, %v4568
        %v4570 = vpop.f32.mrf.mxu0
        %4571 = vmatprep.mubr.f32.mxu0 0.0
        %4572 = vmatmul.mubr.f32.gmra.mxu0 %v4482
        %v4573 = vpop.f32.mrf.mxu0
        %v4574 = vadd.f32 0.0, %v4573
        %v4575 = vpop.f32.mrf.mxu0
        %4576 = vmatprep.mubr.f32.mxu0 0.0
        %4577 = vmatmul.mubr.f32.gmra.mxu0 %v4485
        %v4578 = vpop.f32.mrf.mxu0
        %v4579 = vadd.f32 0.0, %v4578
        %v4580 = vpop.f32.mrf.mxu0
        %4581 = vmatprep.mubr.f32.mxu0 0.0
        %4582 = vmatmul.mubr.f32.gmra.mxu0 %v4488
        %v4583 = vpop.f32.mrf.mxu0
        %v4584 = vadd.f32 0.0, %v4583
        %v4585 = vpop.f32.mrf.mxu0
        %4586 = vmatprep.mubr.f32.mxu0 0.0
        %4587 = vmatmul.mubr.f32.gmra.mxu0 %v4491
        %v4588 = vpop.f32.mrf.mxu0
        %v4589 = vadd.f32 0.0, %v4588
        %v4590 = vpop.f32.mrf.mxu0
        %4591 = vmatprep.mubr.f32.mxu0 0.0
        %4592 = vmatmul.mubr.f32.gmra.mxu0 %v4494
        %v4593 = vpop.f32.mrf.mxu0
        %v4594 = vadd.f32 0.0, %v4593
        %v4595 = vpop.f32.mrf.mxu0
        %4596 = vmatprep.mubr.f32.mxu0 0.0
        %4597 = vmatmul.mubr.f32.gmra.mxu0 %v4497
        %v4598 = vpop.f32.mrf.mxu0
        %v4599 = vadd.f32 0.0, %v4598
        %v4600 = vpop.f32.mrf.mxu0
        %4601 = vmatprep.mubr.f32.mxu0 0.0
        %4602 = vmatmul.mubr.f32.gmra.mxu0 %v4500
        %v4603 = vpop.f32.mrf.mxu0
        %v4604 = vadd.f32 0.0, %v4603
        %v4605 = vpop.f32.mrf.mxu0
        %4606 = vdwg.mxu0
        %v4607 = vadd.f32 %v4459, %v4569
        %v4608 = vadd.f32 %v4460, %v4574
        %v4609 = vadd.f32 %v4461, %v4579
        %v4610 = vadd.f32 %v4462, %v4584
        %v4611 = vadd.f32 %v4463, %v4589
        %v4612 = vadd.f32 %v4464, %v4594
        %v4613 = vadd.f32 %v4465, %v4599
        %v4614 = vadd.f32 %v4466, %v4604
        %s4615 = scalar_lea.vmem %s352, 32
        %v4616 = vld [vmem:[%s4615] sm:$0xff]
        %v4617 = vld [vmem:[%s4615 + $0x10] sm:$0xff]
        %v4618 = vld [vmem:[%s4615 + $0x20] sm:$0xff]
        %v4619 = vld [vmem:[%s4615 + $0x30] sm:$0xff]
        %v4620 = vld [vmem:[%s4615 + $0x40] sm:$0xff]
        %v4621 = vld [vmem:[%s4615 + $0x50] sm:$0xff]
        %v4622 = vld [vmem:[%s4615 + $0x60] sm:$0xff]
        %v4623 = vld [vmem:[%s4615 + $0x70] sm:$0xff]
        %s4624 = scalar_lea.vmem %s4, 232
        %v4625 = vld [vmem:[%s4624] sm:$0xff]
        %v4627 = vsel %vm382, %v4616, 0
        %v4630 = vsel %vm382, %v4617, 0
        %v4633 = vsel %vm382, %v4618, 0
        %v4636 = vsel %vm382, %v4619, 0
        %v4639 = vsel %vm382, %v4620, 0
        %v4642 = vsel %vm382, %v4621, 0
        %v4645 = vsel %vm382, %v4622, 0
        %v4648 = vsel %vm382, %v4623, 0
        %4650 = vmatprep.subr.mxu0 0.0
        %4651 = vmatpush1.msra.mxu0 0.0
        %4652 = vmatprep.subr.mxu0 0.0
        %4653 = vmatpush1.msra.mxu0 0.0
        %4654 = vmatprep.subr.mxu0 0.0
        %4655 = vmatpush1.msra.mxu0 0.0
        %4656 = vmatprep.subr.mxu0 0.0
        %4657 = vmatpush1.msra.mxu0 0.0
        %4658 = vmatprep.subr.mxu0 0.0
        %4659 = vmatpush1.msra.mxu0 0.0
        %4660 = vmatprep.subr.mxu0 0.0
        %4661 = vmatpush1.msra.mxu0 0.0
        %4662 = vmatprep.subr.mxu0 0.0
        %4663 = vmatpush1.msra.mxu0 0.0
        %4664 = vmatprep.subr.mxu0 0.0
        %4665 = vmatpush1.msra.mxu0 0.0
        %4666 = vmatprep.subr.mxu0 0.0
        %4667 = vmatpush1.msra.mxu0 0.0
        %4668 = vmatprep.subr.mxu0 0.0
        %4669 = vmatpush1.msra.mxu0 0.0
        %4670 = vmatprep.subr.mxu0 0.0
        %4671 = vmatpush1.msra.mxu0 0.0
        %4672 = vmatprep.subr.mxu0 0.0
        %4673 = vmatpush1.msra.mxu0 0.0
        %4674 = vmatprep.subr.mxu0 0.0
        %4675 = vmatpush1.msra.mxu0 0.0
        %4676 = vmatprep.subr.mxu0 0.0
        %4677 = vmatpush1.msra.mxu0 0.0
        %4678 = vmatprep.subr.mxu0 0.0
        %4679 = vmatpush1.msra.mxu0 0.0
        %4680 = vmatprep.subr.mxu0 0.0
        %4681 = vmatpush1.msra.mxu0 %v4625
        %4682 = vmatprep.subr.mxu0 0.0
        %4683 = vmatpush2.msra.mxu0 0.0
        %4684 = vmatprep.subr.mxu0 0.0
        %4685 = vmatpush2.msra.mxu0 0.0
        %4686 = vmatprep.subr.mxu0 0.0
        %4687 = vmatpush2.msra.mxu0 0.0
        %4688 = vmatprep.subr.mxu0 0.0
        %4689 = vmatpush2.msra.mxu0 0.0
        %4690 = vmatprep.subr.mxu0 0.0
        %4691 = vmatpush2.msra.mxu0 0.0
        %4692 = vmatprep.subr.mxu0 0.0
        %4693 = vmatpush2.msra.mxu0 0.0
        %4694 = vmatprep.subr.mxu0 0.0
        %4695 = vmatpush2.msra.mxu0 0.0
        %4696 = vmatprep.subr.mxu0 0.0
        %4697 = vmatpush2.msra.mxu0 0.0
        %4698 = vmatprep.subr.mxu0 0.0
        %4699 = vmatpush2.msra.mxu0 0.0
        %4700 = vmatprep.subr.mxu0 0.0
        %4701 = vmatpush2.msra.mxu0 0.0
        %4702 = vmatprep.subr.mxu0 0.0
        %4703 = vmatpush2.msra.mxu0 0.0
        %4704 = vmatprep.subr.mxu0 0.0
        %4705 = vmatpush2.msra.mxu0 0.0
        %4706 = vmatprep.subr.mxu0 0.0
        %4707 = vmatpush2.msra.mxu0 0.0
        %4708 = vmatprep.subr.mxu0 0.0
        %4709 = vmatpush2.msra.mxu0 0.0
        %4710 = vmatprep.subr.mxu0 0.0
        %4711 = vmatpush2.msra.mxu0 0.0
        %4712 = vmatprep.subr.mxu0 0.0
        %4713 = vmatpush2.msra.mxu0 0.0
        %4714 = vmatprep.mubr.f32.mxu0 0.0
        %4715 = vmatmul.mubr.f32.gmra.mxu0 %v4627
        %v4716 = vpop.f32.mrf.mxu0
        %v4717 = vadd.f32 0.0, %v4716
        %v4718 = vpop.f32.mrf.mxu0
        %4719 = vmatprep.mubr.f32.mxu0 0.0
        %4720 = vmatmul.mubr.f32.gmra.mxu0 %v4630
        %v4721 = vpop.f32.mrf.mxu0
        %v4722 = vadd.f32 0.0, %v4721
        %v4723 = vpop.f32.mrf.mxu0
        %4724 = vmatprep.mubr.f32.mxu0 0.0
        %4725 = vmatmul.mubr.f32.gmra.mxu0 %v4633
        %v4726 = vpop.f32.mrf.mxu0
        %v4727 = vadd.f32 0.0, %v4726
        %v4728 = vpop.f32.mrf.mxu0
        %4729 = vmatprep.mubr.f32.mxu0 0.0
        %4730 = vmatmul.mubr.f32.gmra.mxu0 %v4636
        %v4731 = vpop.f32.mrf.mxu0
        %v4732 = vadd.f32 0.0, %v4731
        %v4733 = vpop.f32.mrf.mxu0
        %4734 = vmatprep.mubr.f32.mxu0 0.0
        %4735 = vmatmul.mubr.f32.gmra.mxu0 %v4639
        %v4736 = vpop.f32.mrf.mxu0
        %v4737 = vadd.f32 0.0, %v4736
        %v4738 = vpop.f32.mrf.mxu0
        %4739 = vmatprep.mubr.f32.mxu0 0.0
        %4740 = vmatmul.mubr.f32.gmra.mxu0 %v4642
        %v4741 = vpop.f32.mrf.mxu0
        %v4742 = vadd.f32 0.0, %v4741
        %v4743 = vpop.f32.mrf.mxu0
        %4744 = vmatprep.mubr.f32.mxu0 0.0
        %4745 = vmatmul.mubr.f32.gmra.mxu0 %v4645
        %v4746 = vpop.f32.mrf.mxu0
        %v4747 = vadd.f32 0.0, %v4746
        %v4748 = vpop.f32.mrf.mxu0
        %4749 = vmatprep.mubr.f32.mxu0 0.0
        %4750 = vmatmul.mubr.f32.gmra.mxu0 %v4648
        %v4751 = vpop.f32.mrf.mxu0
        %v4752 = vadd.f32 0.0, %v4751
        %v4753 = vpop.f32.mrf.mxu0
        %4754 = vdwg.mxu0
        %v4755 = vadd.f32 %v4607, %v4717
        %v4756 = vadd.f32 %v4608, %v4722
        %v4757 = vadd.f32 %v4609, %v4727
        %v4758 = vadd.f32 %v4610, %v4732
        %v4759 = vadd.f32 %v4611, %v4737
        %v4760 = vadd.f32 %v4612, %v4742
        %v4761 = vadd.f32 %v4613, %v4747
        %v4762 = vadd.f32 %v4614, %v4752
        %v4763 = vld [vmem:[%s4467 + $0x1] sm:$0xff]
        %v4764 = vld [vmem:[%s4467 + $0x11] sm:$0xff]
        %v4765 = vld [vmem:[%s4467 + $0x21] sm:$0xff]
        %v4766 = vld [vmem:[%s4467 + $0x31] sm:$0xff]
        %v4767 = vld [vmem:[%s4467 + $0x41] sm:$0xff]
        %v4768 = vld [vmem:[%s4467 + $0x51] sm:$0xff]
        %v4769 = vld [vmem:[%s4467 + $0x61] sm:$0xff]
        %v4770 = vld [vmem:[%s4467 + $0x71] sm:$0xff]
        %s4771 = scalar_lea.vmem %s4, 240
        %v4772 = vld [vmem:[%s4771] sm:$0xff]
        %v4774 = vsel %vm382, %v4763, 0
        %v4777 = vsel %vm382, %v4764, 0
        %v4780 = vsel %vm382, %v4765, 0
        %v4783 = vsel %vm382, %v4766, 0
        %v4786 = vsel %vm382, %v4767, 0
        %v4789 = vsel %vm382, %v4768, 0
        %v4792 = vsel %vm382, %v4769, 0
        %v4795 = vsel %vm382, %v4770, 0
        %4797 = vmatprep.subr.mxu0 0.0
        %4798 = vmatpush1.msra.mxu0 0.0
        %4799 = vmatprep.subr.mxu0 0.0
        %4800 = vmatpush1.msra.mxu0 0.0
        %4801 = vmatprep.subr.mxu0 0.0
        %4802 = vmatpush1.msra.mxu0 0.0
        %4803 = vmatprep.subr.mxu0 0.0
        %4804 = vmatpush1.msra.mxu0 0.0
        %4805 = vmatprep.subr.mxu0 0.0
        %4806 = vmatpush1.msra.mxu0 0.0
        %4807 = vmatprep.subr.mxu0 0.0
        %4808 = vmatpush1.msra.mxu0 0.0
        %4809 = vmatprep.subr.mxu0 0.0
        %4810 = vmatpush1.msra.mxu0 0.0
        %4811 = vmatprep.subr.mxu0 0.0
        %4812 = vmatpush1.msra.mxu0 0.0
        %4813 = vmatprep.subr.mxu0 0.0
        %4814 = vmatpush1.msra.mxu0 0.0
        %4815 = vmatprep.subr.mxu0 0.0
        %4816 = vmatpush1.msra.mxu0 0.0
        %4817 = vmatprep.subr.mxu0 0.0
        %4818 = vmatpush1.msra.mxu0 0.0
        %4819 = vmatprep.subr.mxu0 0.0
        %4820 = vmatpush1.msra.mxu0 0.0
        %4821 = vmatprep.subr.mxu0 0.0
        %4822 = vmatpush1.msra.mxu0 0.0
        %4823 = vmatprep.subr.mxu0 0.0
        %4824 = vmatpush1.msra.mxu0 0.0
        %4825 = vmatprep.subr.mxu0 0.0
        %4826 = vmatpush1.msra.mxu0 0.0
        %4827 = vmatprep.subr.mxu0 0.0
        %4828 = vmatpush1.msra.mxu0 %v4772
        %4829 = vmatprep.subr.mxu0 0.0
        %4830 = vmatpush2.msra.mxu0 0.0
        %4831 = vmatprep.subr.mxu0 0.0
        %4832 = vmatpush2.msra.mxu0 0.0
        %4833 = vmatprep.subr.mxu0 0.0
        %4834 = vmatpush2.msra.mxu0 0.0
        %4835 = vmatprep.subr.mxu0 0.0
        %4836 = vmatpush2.msra.mxu0 0.0
        %4837 = vmatprep.subr.mxu0 0.0
        %4838 = vmatpush2.msra.mxu0 0.0
        %4839 = vmatprep.subr.mxu0 0.0
        %4840 = vmatpush2.msra.mxu0 0.0
        %4841 = vmatprep.subr.mxu0 0.0
        %4842 = vmatpush2.msra.mxu0 0.0
        %4843 = vmatprep.subr.mxu0 0.0
        %4844 = vmatpush2.msra.mxu0 0.0
        %4845 = vmatprep.subr.mxu0 0.0
        %4846 = vmatpush2.msra.mxu0 0.0
        %4847 = vmatprep.subr.mxu0 0.0
        %4848 = vmatpush2.msra.mxu0 0.0
        %4849 = vmatprep.subr.mxu0 0.0
        %4850 = vmatpush2.msra.mxu0 0.0
        %4851 = vmatprep.subr.mxu0 0.0
        %4852 = vmatpush2.msra.mxu0 0.0
        %4853 = vmatprep.subr.mxu0 0.0
        %4854 = vmatpush2.msra.mxu0 0.0
        %4855 = vmatprep.subr.mxu0 0.0
        %4856 = vmatpush2.msra.mxu0 0.0
        %4857 = vmatprep.subr.mxu0 0.0
        %4858 = vmatpush2.msra.mxu0 0.0
        %4859 = vmatprep.subr.mxu0 0.0
        %4860 = vmatpush2.msra.mxu0 0.0
        %4861 = vmatprep.mubr.f32.mxu0 0.0
        %4862 = vmatmul.mubr.f32.gmra.mxu0 %v4774
        %v4863 = vpop.f32.mrf.mxu0
        %v4864 = vadd.f32 0.0, %v4863
        %v4865 = vpop.f32.mrf.mxu0
        %4866 = vmatprep.mubr.f32.mxu0 0.0
        %4867 = vmatmul.mubr.f32.gmra.mxu0 %v4777
        %v4868 = vpop.f32.mrf.mxu0
        %v4869 = vadd.f32 0.0, %v4868
        %v4870 = vpop.f32.mrf.mxu0
        %4871 = vmatprep.mubr.f32.mxu0 0.0
        %4872 = vmatmul.mubr.f32.gmra.mxu0 %v4780
        %v4873 = vpop.f32.mrf.mxu0
        %v4874 = vadd.f32 0.0, %v4873
        %v4875 = vpop.f32.mrf.mxu0
        %4876 = vmatprep.mubr.f32.mxu0 0.0
        %4877 = vmatmul.mubr.f32.gmra.mxu0 %v4783
        %v4878 = vpop.f32.mrf.mxu0
        %v4879 = vadd.f32 0.0, %v4878
        %v4880 = vpop.f32.mrf.mxu0
        %4881 = vmatprep.mubr.f32.mxu0 0.0
        %4882 = vmatmul.mubr.f32.gmra.mxu0 %v4786
        %v4883 = vpop.f32.mrf.mxu0
        %v4884 = vadd.f32 0.0, %v4883
        %v4885 = vpop.f32.mrf.mxu0
        %4886 = vmatprep.mubr.f32.mxu0 0.0
        %4887 = vmatmul.mubr.f32.gmra.mxu0 %v4789
        %v4888 = vpop.f32.mrf.mxu0
        %v4889 = vadd.f32 0.0, %v4888
        %v4890 = vpop.f32.mrf.mxu0
        %4891 = vmatprep.mubr.f32.mxu0 0.0
        %4892 = vmatmul.mubr.f32.gmra.mxu0 %v4792
        %v4893 = vpop.f32.mrf.mxu0
        %v4894 = vadd.f32 0.0, %v4893
        %v4895 = vpop.f32.mrf.mxu0
        %4896 = vmatprep.mubr.f32.mxu0 0.0
        %4897 = vmatmul.mubr.f32.gmra.mxu0 %v4795
        %v4898 = vpop.f32.mrf.mxu0
        %v4899 = vadd.f32 0.0, %v4898
        %v4900 = vpop.f32.mrf.mxu0
        %4901 = vdwg.mxu0
        %v4902 = vadd.f32 %v4755, %v4864
        %v4903 = vadd.f32 %v4756, %v4869
        %v4904 = vadd.f32 %v4757, %v4874
        %v4905 = vadd.f32 %v4758, %v4879
        %v4906 = vadd.f32 %v4759, %v4884
        %v4907 = vadd.f32 %v4760, %v4889
        %v4908 = vadd.f32 %v4761, %v4894
        %v4909 = vadd.f32 %v4762, %v4899
        %v4910 = vld [vmem:[%s4615 + $0x1] sm:$0xff]
        %v4911 = vld [vmem:[%s4615 + $0x11] sm:$0xff]
        %v4912 = vld [vmem:[%s4615 + $0x21] sm:$0xff]
        %v4913 = vld [vmem:[%s4615 + $0x31] sm:$0xff]
        %v4914 = vld [vmem:[%s4615 + $0x41] sm:$0xff]
        %v4915 = vld [vmem:[%s4615 + $0x51] sm:$0xff]
        %v4916 = vld [vmem:[%s4615 + $0x61] sm:$0xff]
        %v4917 = vld [vmem:[%s4615 + $0x71] sm:$0xff]
        %s4918 = scalar_lea.vmem %s4, 248
        %v4919 = vld [vmem:[%s4918] sm:$0xff]
        %v4921 = vsel %vm382, %v4910, 0
        %v4924 = vsel %vm382, %v4911, 0
        %v4927 = vsel %vm382, %v4912, 0
        %v4930 = vsel %vm382, %v4913, 0
        %v4933 = vsel %vm382, %v4914, 0
        %v4936 = vsel %vm382, %v4915, 0
        %v4939 = vsel %vm382, %v4916, 0
        %v4942 = vsel %vm382, %v4917, 0
        %4944 = vmatprep.subr.mxu0 0.0
        %4945 = vmatpush1.msra.mxu0 0.0
        %4946 = vmatprep.subr.mxu0 0.0
        %4947 = vmatpush1.msra.mxu0 0.0
        %4948 = vmatprep.subr.mxu0 0.0
        %4949 = vmatpush1.msra.mxu0 0.0
        %4950 = vmatprep.subr.mxu0 0.0
        %4951 = vmatpush1.msra.mxu0 0.0
        %4952 = vmatprep.subr.mxu0 0.0
        %4953 = vmatpush1.msra.mxu0 0.0
        %4954 = vmatprep.subr.mxu0 0.0
        %4955 = vmatpush1.msra.mxu0 0.0
        %4956 = vmatprep.subr.mxu0 0.0
        %4957 = vmatpush1.msra.mxu0 0.0
        %4958 = vmatprep.subr.mxu0 0.0
        %4959 = vmatpush1.msra.mxu0 0.0
        %4960 = vmatprep.subr.mxu0 0.0
        %4961 = vmatpush1.msra.mxu0 0.0
        %4962 = vmatprep.subr.mxu0 0.0
        %4963 = vmatpush1.msra.mxu0 0.0
        %4964 = vmatprep.subr.mxu0 0.0
        %4965 = vmatpush1.msra.mxu0 0.0
        %4966 = vmatprep.subr.mxu0 0.0
        %4967 = vmatpush1.msra.mxu0 0.0
        %4968 = vmatprep.subr.mxu0 0.0
        %4969 = vmatpush1.msra.mxu0 0.0
        %4970 = vmatprep.subr.mxu0 0.0
        %4971 = vmatpush1.msra.mxu0 0.0
        %4972 = vmatprep.subr.mxu0 0.0
        %4973 = vmatpush1.msra.mxu0 0.0
        %4974 = vmatprep.subr.mxu0 0.0
        %4975 = vmatpush1.msra.mxu0 %v4919
        %4976 = vmatprep.subr.mxu0 0.0
        %4977 = vmatpush2.msra.mxu0 0.0
        %4978 = vmatprep.subr.mxu0 0.0
        %4979 = vmatpush2.msra.mxu0 0.0
        %4980 = vmatprep.subr.mxu0 0.0
        %4981 = vmatpush2.msra.mxu0 0.0
        %4982 = vmatprep.subr.mxu0 0.0
        %4983 = vmatpush2.msra.mxu0 0.0
        %4984 = vmatprep.subr.mxu0 0.0
        %4985 = vmatpush2.msra.mxu0 0.0
        %4986 = vmatprep.subr.mxu0 0.0
        %4987 = vmatpush2.msra.mxu0 0.0
        %4988 = vmatprep.subr.mxu0 0.0
        %4989 = vmatpush2.msra.mxu0 0.0
        %4990 = vmatprep.subr.mxu0 0.0
        %4991 = vmatpush2.msra.mxu0 0.0
        %4992 = vmatprep.subr.mxu0 0.0
        %4993 = vmatpush2.msra.mxu0 0.0
        %4994 = vmatprep.subr.mxu0 0.0
        %4995 = vmatpush2.msra.mxu0 0.0
        %4996 = vmatprep.subr.mxu0 0.0
        %4997 = vmatpush2.msra.mxu0 0.0
        %4998 = vmatprep.subr.mxu0 0.0
        %4999 = vmatpush2.msra.mxu0 0.0
        %5000 = vmatprep.subr.mxu0 0.0
        %5001 = vmatpush2.msra.mxu0 0.0
        %5002 = vmatprep.subr.mxu0 0.0
        %5003 = vmatpush2.msra.mxu0 0.0
        %5004 = vmatprep.subr.mxu0 0.0
        %5005 = vmatpush2.msra.mxu0 0.0
        %5006 = vmatprep.subr.mxu0 0.0
        %5007 = vmatpush2.msra.mxu0 0.0
        %5008 = vmatprep.mubr.f32.mxu0 0.0
        %5009 = vmatmul.mubr.f32.gmra.mxu0 %v4921
        %v5010 = vpop.f32.mrf.mxu0
        %v5011 = vadd.f32 0.0, %v5010
        %v5012 = vpop.f32.mrf.mxu0
        %5013 = vmatprep.mubr.f32.mxu0 0.0
        %5014 = vmatmul.mubr.f32.gmra.mxu0 %v4924
        %v5015 = vpop.f32.mrf.mxu0
        %v5016 = vadd.f32 0.0, %v5015
        %v5017 = vpop.f32.mrf.mxu0
        %5018 = vmatprep.mubr.f32.mxu0 0.0
        %5019 = vmatmul.mubr.f32.gmra.mxu0 %v4927
        %v5020 = vpop.f32.mrf.mxu0
        %v5021 = vadd.f32 0.0, %v5020
        %v5022 = vpop.f32.mrf.mxu0
        %5023 = vmatprep.mubr.f32.mxu0 0.0
        %5024 = vmatmul.mubr.f32.gmra.mxu0 %v4930
        %v5025 = vpop.f32.mrf.mxu0
        %v5026 = vadd.f32 0.0, %v5025
        %v5027 = vpop.f32.mrf.mxu0
        %5028 = vmatprep.mubr.f32.mxu0 0.0
        %5029 = vmatmul.mubr.f32.gmra.mxu0 %v4933
        %v5030 = vpop.f32.mrf.mxu0
        %v5031 = vadd.f32 0.0, %v5030
        %v5032 = vpop.f32.mrf.mxu0
        %5033 = vmatprep.mubr.f32.mxu0 0.0
        %5034 = vmatmul.mubr.f32.gmra.mxu0 %v4936
        %v5035 = vpop.f32.mrf.mxu0
        %v5036 = vadd.f32 0.0, %v5035
        %v5037 = vpop.f32.mrf.mxu0
        %5038 = vmatprep.mubr.f32.mxu0 0.0
        %5039 = vmatmul.mubr.f32.gmra.mxu0 %v4939
        %v5040 = vpop.f32.mrf.mxu0
        %v5041 = vadd.f32 0.0, %v5040
        %v5042 = vpop.f32.mrf.mxu0
        %5043 = vmatprep.mubr.f32.mxu0 0.0
        %5044 = vmatmul.mubr.f32.gmra.mxu0 %v4942
        %v5045 = vpop.f32.mrf.mxu0
        %v5046 = vadd.f32 0.0, %v5045
        %v5047 = vpop.f32.mrf.mxu0
        %5048 = vdwg.mxu0
        %v5049 = vadd.f32 %v4902, %v5011
        %v5050 = vadd.f32 %v4903, %v5016
        %v5051 = vadd.f32 %v4904, %v5021
        %v5052 = vadd.f32 %v4905, %v5026
        %v5053 = vadd.f32 %v4906, %v5031
        %v5054 = vadd.f32 %v4907, %v5036
        %v5055 = vadd.f32 %v4908, %v5041
        %v5056 = vadd.f32 %v4909, %v5046
        %v5057 = vld [vmem:[%s4467 + $0x2] sm:$0xff]
        %v5058 = vld [vmem:[%s4467 + $0x12] sm:$0xff]
        %v5059 = vld [vmem:[%s4467 + $0x22] sm:$0xff]
        %v5060 = vld [vmem:[%s4467 + $0x32] sm:$0xff]
        %v5061 = vld [vmem:[%s4467 + $0x42] sm:$0xff]
        %v5062 = vld [vmem:[%s4467 + $0x52] sm:$0xff]
        %v5063 = vld [vmem:[%s4467 + $0x62] sm:$0xff]
        %v5064 = vld [vmem:[%s4467 + $0x72] sm:$0xff]
        %s5065 = scalar_lea.vmem %s4, 256
        %v5066 = vld [vmem:[%s5065] sm:$0xff]
        %v5068 = vsel %vm382, %v5057, 0
        %v5071 = vsel %vm382, %v5058, 0
        %v5074 = vsel %vm382, %v5059, 0
        %v5077 = vsel %vm382, %v5060, 0
        %v5080 = vsel %vm382, %v5061, 0
        %v5083 = vsel %vm382, %v5062, 0
        %v5086 = vsel %vm382, %v5063, 0
        %v5089 = vsel %vm382, %v5064, 0
        %5091 = vmatprep.subr.mxu0 0.0
        %5092 = vmatpush1.msra.mxu0 0.0
        %5093 = vmatprep.subr.mxu0 0.0
        %5094 = vmatpush1.msra.mxu0 0.0
        %5095 = vmatprep.subr.mxu0 0.0
        %5096 = vmatpush1.msra.mxu0 0.0
        %5097 = vmatprep.subr.mxu0 0.0
        %5098 = vmatpush1.msra.mxu0 0.0
        %5099 = vmatprep.subr.mxu0 0.0
        %5100 = vmatpush1.msra.mxu0 0.0
        %5101 = vmatprep.subr.mxu0 0.0
        %5102 = vmatpush1.msra.mxu0 0.0
        %5103 = vmatprep.subr.mxu0 0.0
        %5104 = vmatpush1.msra.mxu0 0.0
        %5105 = vmatprep.subr.mxu0 0.0
        %5106 = vmatpush1.msra.mxu0 0.0
        %5107 = vmatprep.subr.mxu0 0.0
        %5108 = vmatpush1.msra.mxu0 0.0
        %5109 = vmatprep.subr.mxu0 0.0
        %5110 = vmatpush1.msra.mxu0 0.0
        %5111 = vmatprep.subr.mxu0 0.0
        %5112 = vmatpush1.msra.mxu0 0.0
        %5113 = vmatprep.subr.mxu0 0.0
        %5114 = vmatpush1.msra.mxu0 0.0
        %5115 = vmatprep.subr.mxu0 0.0
        %5116 = vmatpush1.msra.mxu0 0.0
        %5117 = vmatprep.subr.mxu0 0.0
        %5118 = vmatpush1.msra.mxu0 0.0
        %5119 = vmatprep.subr.mxu0 0.0
        %5120 = vmatpush1.msra.mxu0 0.0
        %5121 = vmatprep.subr.mxu0 0.0
        %5122 = vmatpush1.msra.mxu0 %v5066
        %5123 = vmatprep.subr.mxu0 0.0
        %5124 = vmatpush2.msra.mxu0 0.0
        %5125 = vmatprep.subr.mxu0 0.0
        %5126 = vmatpush2.msra.mxu0 0.0
        %5127 = vmatprep.subr.mxu0 0.0
        %5128 = vmatpush2.msra.mxu0 0.0
        %5129 = vmatprep.subr.mxu0 0.0
        %5130 = vmatpush2.msra.mxu0 0.0
        %5131 = vmatprep.subr.mxu0 0.0
        %5132 = vmatpush2.msra.mxu0 0.0
        %5133 = vmatprep.subr.mxu0 0.0
        %5134 = vmatpush2.msra.mxu0 0.0
        %5135 = vmatprep.subr.mxu0 0.0
        %5136 = vmatpush2.msra.mxu0 0.0
        %5137 = vmatprep.subr.mxu0 0.0
        %5138 = vmatpush2.msra.mxu0 0.0
        %5139 = vmatprep.subr.mxu0 0.0
        %5140 = vmatpush2.msra.mxu0 0.0
        %5141 = vmatprep.subr.mxu0 0.0
        %5142 = vmatpush2.msra.mxu0 0.0
        %5143 = vmatprep.subr.mxu0 0.0
        %5144 = vmatpush2.msra.mxu0 0.0
        %5145 = vmatprep.subr.mxu0 0.0
        %5146 = vmatpush2.msra.mxu0 0.0
        %5147 = vmatprep.subr.mxu0 0.0
        %5148 = vmatpush2.msra.mxu0 0.0
        %5149 = vmatprep.subr.mxu0 0.0
        %5150 = vmatpush2.msra.mxu0 0.0
        %5151 = vmatprep.subr.mxu0 0.0
        %5152 = vmatpush2.msra.mxu0 0.0
        %5153 = vmatprep.subr.mxu0 0.0
        %5154 = vmatpush2.msra.mxu0 0.0
        %5155 = vmatprep.mubr.f32.mxu0 0.0
        %5156 = vmatmul.mubr.f32.gmra.mxu0 %v5068
        %v5157 = vpop.f32.mrf.mxu0
        %v5158 = vadd.f32 0.0, %v5157
        %v5159 = vpop.f32.mrf.mxu0
        %5160 = vmatprep.mubr.f32.mxu0 0.0
        %5161 = vmatmul.mubr.f32.gmra.mxu0 %v5071
        %v5162 = vpop.f32.mrf.mxu0
        %v5163 = vadd.f32 0.0, %v5162
        %v5164 = vpop.f32.mrf.mxu0
        %5165 = vmatprep.mubr.f32.mxu0 0.0
        %5166 = vmatmul.mubr.f32.gmra.mxu0 %v5074
        %v5167 = vpop.f32.mrf.mxu0
        %v5168 = vadd.f32 0.0, %v5167
        %v5169 = vpop.f32.mrf.mxu0
        %5170 = vmatprep.mubr.f32.mxu0 0.0
        %5171 = vmatmul.mubr.f32.gmra.mxu0 %v5077
        %v5172 = vpop.f32.mrf.mxu0
        %v5173 = vadd.f32 0.0, %v5172
        %v5174 = vpop.f32.mrf.mxu0
        %5175 = vmatprep.mubr.f32.mxu0 0.0
        %5176 = vmatmul.mubr.f32.gmra.mxu0 %v5080
        %v5177 = vpop.f32.mrf.mxu0
        %v5178 = vadd.f32 0.0, %v5177
        %v5179 = vpop.f32.mrf.mxu0
        %5180 = vmatprep.mubr.f32.mxu0 0.0
        %5181 = vmatmul.mubr.f32.gmra.mxu0 %v5083
        %v5182 = vpop.f32.mrf.mxu0
        %v5183 = vadd.f32 0.0, %v5182
        %v5184 = vpop.f32.mrf.mxu0
        %5185 = vmatprep.mubr.f32.mxu0 0.0
        %5186 = vmatmul.mubr.f32.gmra.mxu0 %v5086
        %v5187 = vpop.f32.mrf.mxu0
        %v5188 = vadd.f32 0.0, %v5187
        %v5189 = vpop.f32.mrf.mxu0
        %5190 = vmatprep.mubr.f32.mxu0 0.0
        %5191 = vmatmul.mubr.f32.gmra.mxu0 %v5089
        %v5192 = vpop.f32.mrf.mxu0
        %v5193 = vadd.f32 0.0, %v5192
        %v5194 = vpop.f32.mrf.mxu0
        %5195 = vdwg.mxu0
        %v5196 = vadd.f32 %v5049, %v5158
        %v5197 = vadd.f32 %v5050, %v5163
        %v5198 = vadd.f32 %v5051, %v5168
        %v5199 = vadd.f32 %v5052, %v5173
        %v5200 = vadd.f32 %v5053, %v5178
        %v5201 = vadd.f32 %v5054, %v5183
        %v5202 = vadd.f32 %v5055, %v5188
        %v5203 = vadd.f32 %v5056, %v5193
        %v5204 = vld [vmem:[%s4615 + $0x2] sm:$0xff]
        %v5205 = vld [vmem:[%s4615 + $0x12] sm:$0xff]
        %v5206 = vld [vmem:[%s4615 + $0x22] sm:$0xff]
        %v5207 = vld [vmem:[%s4615 + $0x32] sm:$0xff]
        %v5208 = vld [vmem:[%s4615 + $0x42] sm:$0xff]
        %v5209 = vld [vmem:[%s4615 + $0x52] sm:$0xff]
        %v5210 = vld [vmem:[%s4615 + $0x62] sm:$0xff]
        %v5211 = vld [vmem:[%s4615 + $0x72] sm:$0xff]
        %s5212 = scalar_lea.vmem %s4, 264
        %v5213 = vld [vmem:[%s5212] sm:$0xff]
        %v5215 = vsel %vm382, %v5204, 0
        %v5218 = vsel %vm382, %v5205, 0
        %v5221 = vsel %vm382, %v5206, 0
        %v5224 = vsel %vm382, %v5207, 0
        %v5227 = vsel %vm382, %v5208, 0
        %v5230 = vsel %vm382, %v5209, 0
        %v5233 = vsel %vm382, %v5210, 0
        %v5236 = vsel %vm382, %v5211, 0
        %5238 = vmatprep.subr.mxu0 0.0
        %5239 = vmatpush1.msra.mxu0 0.0
        %5240 = vmatprep.subr.mxu0 0.0
        %5241 = vmatpush1.msra.mxu0 0.0
        %5242 = vmatprep.subr.mxu0 0.0
        %5243 = vmatpush1.msra.mxu0 0.0
        %5244 = vmatprep.subr.mxu0 0.0
        %5245 = vmatpush1.msra.mxu0 0.0
        %5246 = vmatprep.subr.mxu0 0.0
        %5247 = vmatpush1.msra.mxu0 0.0
        %5248 = vmatprep.subr.mxu0 0.0
        %5249 = vmatpush1.msra.mxu0 0.0
        %5250 = vmatprep.subr.mxu0 0.0
        %5251 = vmatpush1.msra.mxu0 0.0
        %5252 = vmatprep.subr.mxu0 0.0
        %5253 = vmatpush1.msra.mxu0 0.0
        %5254 = vmatprep.subr.mxu0 0.0
        %5255 = vmatpush1.msra.mxu0 0.0
        %5256 = vmatprep.subr.mxu0 0.0
        %5257 = vmatpush1.msra.mxu0 0.0
        %5258 = vmatprep.subr.mxu0 0.0
        %5259 = vmatpush1.msra.mxu0 0.0
        %5260 = vmatprep.subr.mxu0 0.0
        %5261 = vmatpush1.msra.mxu0 0.0
        %5262 = vmatprep.subr.mxu0 0.0
        %5263 = vmatpush1.msra.mxu0 0.0
        %5264 = vmatprep.subr.mxu0 0.0
        %5265 = vmatpush1.msra.mxu0 0.0
        %5266 = vmatprep.subr.mxu0 0.0
        %5267 = vmatpush1.msra.mxu0 0.0
        %5268 = vmatprep.subr.mxu0 0.0
        %5269 = vmatpush1.msra.mxu0 %v5213
        %5270 = vmatprep.subr.mxu0 0.0
        %5271 = vmatpush2.msra.mxu0 0.0
        %5272 = vmatprep.subr.mxu0 0.0
        %5273 = vmatpush2.msra.mxu0 0.0
        %5274 = vmatprep.subr.mxu0 0.0
        %5275 = vmatpush2.msra.mxu0 0.0
        %5276 = vmatprep.subr.mxu0 0.0
        %5277 = vmatpush2.msra.mxu0 0.0
        %5278 = vmatprep.subr.mxu0 0.0
        %5279 = vmatpush2.msra.mxu0 0.0
        %5280 = vmatprep.subr.mxu0 0.0
        %5281 = vmatpush2.msra.mxu0 0.0
        %5282 = vmatprep.subr.mxu0 0.0
        %5283 = vmatpush2.msra.mxu0 0.0
        %5284 = vmatprep.subr.mxu0 0.0
        %5285 = vmatpush2.msra.mxu0 0.0
        %5286 = vmatprep.subr.mxu0 0.0
        %5287 = vmatpush2.msra.mxu0 0.0
        %5288 = vmatprep.subr.mxu0 0.0
        %5289 = vmatpush2.msra.mxu0 0.0
        %5290 = vmatprep.subr.mxu0 0.0
        %5291 = vmatpush2.msra.mxu0 0.0
        %5292 = vmatprep.subr.mxu0 0.0
        %5293 = vmatpush2.msra.mxu0 0.0
        %5294 = vmatprep.subr.mxu0 0.0
        %5295 = vmatpush2.msra.mxu0 0.0
        %5296 = vmatprep.subr.mxu0 0.0
        %5297 = vmatpush2.msra.mxu0 0.0
        %5298 = vmatprep.subr.mxu0 0.0
        %5299 = vmatpush2.msra.mxu0 0.0
        %5300 = vmatprep.subr.mxu0 0.0
        %5301 = vmatpush2.msra.mxu0 0.0
        %5302 = vmatprep.mubr.f32.mxu0 0.0
        %5303 = vmatmul.mubr.f32.gmra.mxu0 %v5215
        %v5304 = vpop.f32.mrf.mxu0
        %v5305 = vadd.f32 0.0, %v5304
        %v5306 = vpop.f32.mrf.mxu0
        %5307 = vmatprep.mubr.f32.mxu0 0.0
        %5308 = vmatmul.mubr.f32.gmra.mxu0 %v5218
        %v5309 = vpop.f32.mrf.mxu0
        %v5310 = vadd.f32 0.0, %v5309
        %v5311 = vpop.f32.mrf.mxu0
        %5312 = vmatprep.mubr.f32.mxu0 0.0
        %5313 = vmatmul.mubr.f32.gmra.mxu0 %v5221
        %v5314 = vpop.f32.mrf.mxu0
        %v5315 = vadd.f32 0.0, %v5314
        %v5316 = vpop.f32.mrf.mxu0
        %5317 = vmatprep.mubr.f32.mxu0 0.0
        %5318 = vmatmul.mubr.f32.gmra.mxu0 %v5224
        %v5319 = vpop.f32.mrf.mxu0
        %v5320 = vadd.f32 0.0, %v5319
        %v5321 = vpop.f32.mrf.mxu0
        %5322 = vmatprep.mubr.f32.mxu0 0.0
        %5323 = vmatmul.mubr.f32.gmra.mxu0 %v5227
        %v5324 = vpop.f32.mrf.mxu0
        %v5325 = vadd.f32 0.0, %v5324
        %v5326 = vpop.f32.mrf.mxu0
        %5327 = vmatprep.mubr.f32.mxu0 0.0
        %5328 = vmatmul.mubr.f32.gmra.mxu0 %v5230
        %v5329 = vpop.f32.mrf.mxu0
        %v5330 = vadd.f32 0.0, %v5329
        %v5331 = vpop.f32.mrf.mxu0
        %5332 = vmatprep.mubr.f32.mxu0 0.0
        %5333 = vmatmul.mubr.f32.gmra.mxu0 %v5233
        %v5334 = vpop.f32.mrf.mxu0
        %v5335 = vadd.f32 0.0, %v5334
        %v5336 = vpop.f32.mrf.mxu0
        %5337 = vmatprep.mubr.f32.mxu0 0.0
        %5338 = vmatmul.mubr.f32.gmra.mxu0 %v5236
        %v5339 = vpop.f32.mrf.mxu0
        %v5340 = vadd.f32 0.0, %v5339
        %v5341 = vpop.f32.mrf.mxu0
        %5342 = vdwg.mxu0
        %v5343 = vadd.f32 %v5196, %v5305
        %v5344 = vadd.f32 %v5197, %v5310
        %v5345 = vadd.f32 %v5198, %v5315
        %v5346 = vadd.f32 %v5199, %v5320
        %v5347 = vadd.f32 %v5200, %v5325
        %v5348 = vadd.f32 %v5201, %v5330
        %v5349 = vadd.f32 %v5202, %v5335
        %v5350 = vadd.f32 %v5203, %v5340
        %v5351 = vld [vmem:[%s4467 + $0x3] sm:$0xff]
        %v5352 = vld [vmem:[%s4467 + $0x13] sm:$0xff]
        %v5353 = vld [vmem:[%s4467 + $0x23] sm:$0xff]
        %v5354 = vld [vmem:[%s4467 + $0x33] sm:$0xff]
        %v5355 = vld [vmem:[%s4467 + $0x43] sm:$0xff]
        %v5356 = vld [vmem:[%s4467 + $0x53] sm:$0xff]
        %v5357 = vld [vmem:[%s4467 + $0x63] sm:$0xff]
        %v5358 = vld [vmem:[%s4467 + $0x73] sm:$0xff]
        %s5359 = scalar_lea.vmem %s4, 272
        %v5360 = vld [vmem:[%s5359] sm:$0xff]
        %v5362 = vsel %vm382, %v5351, 0
        %v5365 = vsel %vm382, %v5352, 0
        %v5368 = vsel %vm382, %v5353, 0
        %v5371 = vsel %vm382, %v5354, 0
        %v5374 = vsel %vm382, %v5355, 0
        %v5377 = vsel %vm382, %v5356, 0
        %v5380 = vsel %vm382, %v5357, 0
        %v5383 = vsel %vm382, %v5358, 0
        %5385 = vmatprep.subr.mxu0 0.0
        %5386 = vmatpush1.msra.mxu0 0.0
        %5387 = vmatprep.subr.mxu0 0.0
        %5388 = vmatpush1.msra.mxu0 0.0
        %5389 = vmatprep.subr.mxu0 0.0
        %5390 = vmatpush1.msra.mxu0 0.0
        %5391 = vmatprep.subr.mxu0 0.0
        %5392 = vmatpush1.msra.mxu0 0.0
        %5393 = vmatprep.subr.mxu0 0.0
        %5394 = vmatpush1.msra.mxu0 0.0
        %5395 = vmatprep.subr.mxu0 0.0
        %5396 = vmatpush1.msra.mxu0 0.0
        %5397 = vmatprep.subr.mxu0 0.0
        %5398 = vmatpush1.msra.mxu0 0.0
        %5399 = vmatprep.subr.mxu0 0.0
        %5400 = vmatpush1.msra.mxu0 0.0
        %5401 = vmatprep.subr.mxu0 0.0
        %5402 = vmatpush1.msra.mxu0 0.0
        %5403 = vmatprep.subr.mxu0 0.0
        %5404 = vmatpush1.msra.mxu0 0.0
        %5405 = vmatprep.subr.mxu0 0.0
        %5406 = vmatpush1.msra.mxu0 0.0
        %5407 = vmatprep.subr.mxu0 0.0
        %5408 = vmatpush1.msra.mxu0 0.0
        %5409 = vmatprep.subr.mxu0 0.0
        %5410 = vmatpush1.msra.mxu0 0.0
        %5411 = vmatprep.subr.mxu0 0.0
        %5412 = vmatpush1.msra.mxu0 0.0
        %5413 = vmatprep.subr.mxu0 0.0
        %5414 = vmatpush1.msra.mxu0 0.0
        %5415 = vmatprep.subr.mxu0 0.0
        %5416 = vmatpush1.msra.mxu0 %v5360
        %5417 = vmatprep.subr.mxu0 0.0
        %5418 = vmatpush2.msra.mxu0 0.0
        %5419 = vmatprep.subr.mxu0 0.0
        %5420 = vmatpush2.msra.mxu0 0.0
        %5421 = vmatprep.subr.mxu0 0.0
        %5422 = vmatpush2.msra.mxu0 0.0
        %5423 = vmatprep.subr.mxu0 0.0
        %5424 = vmatpush2.msra.mxu0 0.0
        %5425 = vmatprep.subr.mxu0 0.0
        %5426 = vmatpush2.msra.mxu0 0.0
        %5427 = vmatprep.subr.mxu0 0.0
        %5428 = vmatpush2.msra.mxu0 0.0
        %5429 = vmatprep.subr.mxu0 0.0
        %5430 = vmatpush2.msra.mxu0 0.0
        %5431 = vmatprep.subr.mxu0 0.0
        %5432 = vmatpush2.msra.mxu0 0.0
        %5433 = vmatprep.subr.mxu0 0.0
        %5434 = vmatpush2.msra.mxu0 0.0
        %5435 = vmatprep.subr.mxu0 0.0
        %5436 = vmatpush2.msra.mxu0 0.0
        %5437 = vmatprep.subr.mxu0 0.0
        %5438 = vmatpush2.msra.mxu0 0.0
        %5439 = vmatprep.subr.mxu0 0.0
        %5440 = vmatpush2.msra.mxu0 0.0
        %5441 = vmatprep.subr.mxu0 0.0
        %5442 = vmatpush2.msra.mxu0 0.0
        %5443 = vmatprep.subr.mxu0 0.0
        %5444 = vmatpush2.msra.mxu0 0.0
        %5445 = vmatprep.subr.mxu0 0.0
        %5446 = vmatpush2.msra.mxu0 0.0
        %5447 = vmatprep.subr.mxu0 0.0
        %5448 = vmatpush2.msra.mxu0 0.0
        %5449 = vmatprep.mubr.f32.mxu0 0.0
        %5450 = vmatmul.mubr.f32.gmra.mxu0 %v5362
        %v5451 = vpop.f32.mrf.mxu0
        %v5452 = vadd.f32 0.0, %v5451
        %v5453 = vpop.f32.mrf.mxu0
        %5454 = vmatprep.mubr.f32.mxu0 0.0
        %5455 = vmatmul.mubr.f32.gmra.mxu0 %v5365
        %v5456 = vpop.f32.mrf.mxu0
        %v5457 = vadd.f32 0.0, %v5456
        %v5458 = vpop.f32.mrf.mxu0
        %5459 = vmatprep.mubr.f32.mxu0 0.0
        %5460 = vmatmul.mubr.f32.gmra.mxu0 %v5368
        %v5461 = vpop.f32.mrf.mxu0
        %v5462 = vadd.f32 0.0, %v5461
        %v5463 = vpop.f32.mrf.mxu0
        %5464 = vmatprep.mubr.f32.mxu0 0.0
        %5465 = vmatmul.mubr.f32.gmra.mxu0 %v5371
        %v5466 = vpop.f32.mrf.mxu0
        %v5467 = vadd.f32 0.0, %v5466
        %v5468 = vpop.f32.mrf.mxu0
        %5469 = vmatprep.mubr.f32.mxu0 0.0
        %5470 = vmatmul.mubr.f32.gmra.mxu0 %v5374
        %v5471 = vpop.f32.mrf.mxu0
        %v5472 = vadd.f32 0.0, %v5471
        %v5473 = vpop.f32.mrf.mxu0
        %5474 = vmatprep.mubr.f32.mxu0 0.0
        %5475 = vmatmul.mubr.f32.gmra.mxu0 %v5377
        %v5476 = vpop.f32.mrf.mxu0
        %v5477 = vadd.f32 0.0, %v5476
        %v5478 = vpop.f32.mrf.mxu0
        %5479 = vmatprep.mubr.f32.mxu0 0.0
        %5480 = vmatmul.mubr.f32.gmra.mxu0 %v5380
        %v5481 = vpop.f32.mrf.mxu0
        %v5482 = vadd.f32 0.0, %v5481
        %v5483 = vpop.f32.mrf.mxu0
        %5484 = vmatprep.mubr.f32.mxu0 0.0
        %5485 = vmatmul.mubr.f32.gmra.mxu0 %v5383
        %v5486 = vpop.f32.mrf.mxu0
        %v5487 = vadd.f32 0.0, %v5486
        %v5488 = vpop.f32.mrf.mxu0
        %5489 = vdwg.mxu0
        %v5490 = vadd.f32 %v5343, %v5452
        %v5491 = vadd.f32 %v5344, %v5457
        %v5492 = vadd.f32 %v5345, %v5462
        %v5493 = vadd.f32 %v5346, %v5467
        %v5494 = vadd.f32 %v5347, %v5472
        %v5495 = vadd.f32 %v5348, %v5477
        %v5496 = vadd.f32 %v5349, %v5482
        %v5497 = vadd.f32 %v5350, %v5487
        %s5498 = scalar_lea.vmem %s357, 32
        %v5499 = vld [vmem:[%s5498] sm:$0xff]
        %v5500 = vld [vmem:[%s5498 + $0x10] sm:$0xff]
        %v5501 = vld [vmem:[%s5498 + $0x20] sm:$0xff]
        %v5502 = vld [vmem:[%s5498 + $0x30] sm:$0xff]
        %v5503 = vld [vmem:[%s5498 + $0x40] sm:$0xff]
        %v5504 = vld [vmem:[%s5498 + $0x50] sm:$0xff]
        %v5505 = vld [vmem:[%s5498 + $0x60] sm:$0xff]
        %v5506 = vld [vmem:[%s5498 + $0x70] sm:$0xff]
        %s5507 = scalar_lea.vmem %s4, 280
        %v5508 = vld [vmem:[%s5507] sm:$0xff]
        %v5510 = vsel %vm382, %v5499, 0
        %v5513 = vsel %vm382, %v5500, 0
        %v5516 = vsel %vm382, %v5501, 0
        %v5519 = vsel %vm382, %v5502, 0
        %v5522 = vsel %vm382, %v5503, 0
        %v5525 = vsel %vm382, %v5504, 0
        %v5528 = vsel %vm382, %v5505, 0
        %v5531 = vsel %vm382, %v5506, 0
        %5533 = vmatprep.subr.mxu0 0.0
        %5534 = vmatpush1.msra.mxu0 0.0
        %5535 = vmatprep.subr.mxu0 0.0
        %5536 = vmatpush1.msra.mxu0 0.0
        %5537 = vmatprep.subr.mxu0 0.0
        %5538 = vmatpush1.msra.mxu0 0.0
        %5539 = vmatprep.subr.mxu0 0.0
        %5540 = vmatpush1.msra.mxu0 0.0
        %5541 = vmatprep.subr.mxu0 0.0
        %5542 = vmatpush1.msra.mxu0 0.0
        %5543 = vmatprep.subr.mxu0 0.0
        %5544 = vmatpush1.msra.mxu0 0.0
        %5545 = vmatprep.subr.mxu0 0.0
        %5546 = vmatpush1.msra.mxu0 0.0
        %5547 = vmatprep.subr.mxu0 0.0
        %5548 = vmatpush1.msra.mxu0 0.0
        %5549 = vmatprep.subr.mxu0 0.0
        %5550 = vmatpush1.msra.mxu0 0.0
        %5551 = vmatprep.subr.mxu0 0.0
        %5552 = vmatpush1.msra.mxu0 0.0
        %5553 = vmatprep.subr.mxu0 0.0
        %5554 = vmatpush1.msra.mxu0 0.0
        %5555 = vmatprep.subr.mxu0 0.0
        %5556 = vmatpush1.msra.mxu0 0.0
        %5557 = vmatprep.subr.mxu0 0.0
        %5558 = vmatpush1.msra.mxu0 0.0
        %5559 = vmatprep.subr.mxu0 0.0
        %5560 = vmatpush1.msra.mxu0 0.0
        %5561 = vmatprep.subr.mxu0 0.0
        %5562 = vmatpush1.msra.mxu0 0.0
        %5563 = vmatprep.subr.mxu0 0.0
        %5564 = vmatpush1.msra.mxu0 %v5508
        %5565 = vmatprep.subr.mxu0 0.0
        %5566 = vmatpush2.msra.mxu0 0.0
        %5567 = vmatprep.subr.mxu0 0.0
        %5568 = vmatpush2.msra.mxu0 0.0
        %5569 = vmatprep.subr.mxu0 0.0
        %5570 = vmatpush2.msra.mxu0 0.0
        %5571 = vmatprep.subr.mxu0 0.0
        %5572 = vmatpush2.msra.mxu0 0.0
        %5573 = vmatprep.subr.mxu0 0.0
        %5574 = vmatpush2.msra.mxu0 0.0
        %5575 = vmatprep.subr.mxu0 0.0
        %5576 = vmatpush2.msra.mxu0 0.0
        %5577 = vmatprep.subr.mxu0 0.0
        %5578 = vmatpush2.msra.mxu0 0.0
        %5579 = vmatprep.subr.mxu0 0.0
        %5580 = vmatpush2.msra.mxu0 0.0
        %5581 = vmatprep.subr.mxu0 0.0
        %5582 = vmatpush2.msra.mxu0 0.0
        %5583 = vmatprep.subr.mxu0 0.0
        %5584 = vmatpush2.msra.mxu0 0.0
        %5585 = vmatprep.subr.mxu0 0.0
        %5586 = vmatpush2.msra.mxu0 0.0
        %5587 = vmatprep.subr.mxu0 0.0
        %5588 = vmatpush2.msra.mxu0 0.0
        %5589 = vmatprep.subr.mxu0 0.0
        %5590 = vmatpush2.msra.mxu0 0.0
        %5591 = vmatprep.subr.mxu0 0.0
        %5592 = vmatpush2.msra.mxu0 0.0
        %5593 = vmatprep.subr.mxu0 0.0
        %5594 = vmatpush2.msra.mxu0 0.0
        %5595 = vmatprep.subr.mxu0 0.0
        %5596 = vmatpush2.msra.mxu0 0.0
        %5597 = vmatprep.mubr.f32.mxu0 0.0
        %5598 = vmatmul.mubr.f32.gmra.mxu0 %v5510
        %v5599 = vpop.f32.mrf.mxu0
        %v5600 = vadd.f32 0.0, %v5599
        %v5601 = vpop.f32.mrf.mxu0
        %5602 = vmatprep.mubr.f32.mxu0 0.0
        %5603 = vmatmul.mubr.f32.gmra.mxu0 %v5513
        %v5604 = vpop.f32.mrf.mxu0
        %v5605 = vadd.f32 0.0, %v5604
        %v5606 = vpop.f32.mrf.mxu0
        %5607 = vmatprep.mubr.f32.mxu0 0.0
        %5608 = vmatmul.mubr.f32.gmra.mxu0 %v5516
        %v5609 = vpop.f32.mrf.mxu0
        %v5610 = vadd.f32 0.0, %v5609
        %v5611 = vpop.f32.mrf.mxu0
        %5612 = vmatprep.mubr.f32.mxu0 0.0
        %5613 = vmatmul.mubr.f32.gmra.mxu0 %v5519
        %v5614 = vpop.f32.mrf.mxu0
        %v5615 = vadd.f32 0.0, %v5614
        %v5616 = vpop.f32.mrf.mxu0
        %5617 = vmatprep.mubr.f32.mxu0 0.0
        %5618 = vmatmul.mubr.f32.gmra.mxu0 %v5522
        %v5619 = vpop.f32.mrf.mxu0
        %v5620 = vadd.f32 0.0, %v5619
        %v5621 = vpop.f32.mrf.mxu0
        %5622 = vmatprep.mubr.f32.mxu0 0.0
        %5623 = vmatmul.mubr.f32.gmra.mxu0 %v5525
        %v5624 = vpop.f32.mrf.mxu0
        %v5625 = vadd.f32 0.0, %v5624
        %v5626 = vpop.f32.mrf.mxu0
        %5627 = vmatprep.mubr.f32.mxu0 0.0
        %5628 = vmatmul.mubr.f32.gmra.mxu0 %v5528
        %v5629 = vpop.f32.mrf.mxu0
        %v5630 = vadd.f32 0.0, %v5629
        %v5631 = vpop.f32.mrf.mxu0
        %5632 = vmatprep.mubr.f32.mxu0 0.0
        %5633 = vmatmul.mubr.f32.gmra.mxu0 %v5531
        %v5634 = vpop.f32.mrf.mxu0
        %v5635 = vadd.f32 0.0, %v5634
        %v5636 = vpop.f32.mrf.mxu0
        %5637 = vdwg.mxu0
        %v5638 = vadd.f32 %v5490, %v5600
        %v5639 = vadd.f32 %v5491, %v5605
        %v5640 = vadd.f32 %v5492, %v5610
        %v5641 = vadd.f32 %v5493, %v5615
        %v5642 = vadd.f32 %v5494, %v5620
        %v5643 = vadd.f32 %v5495, %v5625
        %v5644 = vadd.f32 %v5496, %v5630
        %v5645 = vadd.f32 %v5497, %v5635
        %s5646 = scalar_lea.vmem %s362, 32
        %v5647 = vld [vmem:[%s5646] sm:$0xff]
        %v5648 = vld [vmem:[%s5646 + $0x10] sm:$0xff]
        %v5649 = vld [vmem:[%s5646 + $0x20] sm:$0xff]
        %v5650 = vld [vmem:[%s5646 + $0x30] sm:$0xff]
        %v5651 = vld [vmem:[%s5646 + $0x40] sm:$0xff]
        %v5652 = vld [vmem:[%s5646 + $0x50] sm:$0xff]
        %v5653 = vld [vmem:[%s5646 + $0x60] sm:$0xff]
        %v5654 = vld [vmem:[%s5646 + $0x70] sm:$0xff]
        %s5655 = scalar_lea.vmem %s4, 288
        %v5656 = vld [vmem:[%s5655] sm:$0xff]
        %v5658 = vsel %vm382, %v5647, 0
        %v5661 = vsel %vm382, %v5648, 0
        %v5664 = vsel %vm382, %v5649, 0
        %v5667 = vsel %vm382, %v5650, 0
        %v5670 = vsel %vm382, %v5651, 0
        %v5673 = vsel %vm382, %v5652, 0
        %v5676 = vsel %vm382, %v5653, 0
        %v5679 = vsel %vm382, %v5654, 0
        %5681 = vmatprep.subr.mxu0 0.0
        %5682 = vmatpush1.msra.mxu0 0.0
        %5683 = vmatprep.subr.mxu0 0.0
        %5684 = vmatpush1.msra.mxu0 0.0
        %5685 = vmatprep.subr.mxu0 0.0
        %5686 = vmatpush1.msra.mxu0 0.0
        %5687 = vmatprep.subr.mxu0 0.0
        %5688 = vmatpush1.msra.mxu0 0.0
        %5689 = vmatprep.subr.mxu0 0.0
        %5690 = vmatpush1.msra.mxu0 0.0
        %5691 = vmatprep.subr.mxu0 0.0
        %5692 = vmatpush1.msra.mxu0 0.0
        %5693 = vmatprep.subr.mxu0 0.0
        %5694 = vmatpush1.msra.mxu0 0.0
        %5695 = vmatprep.subr.mxu0 0.0
        %5696 = vmatpush1.msra.mxu0 0.0
        %5697 = vmatprep.subr.mxu0 0.0
        %5698 = vmatpush1.msra.mxu0 0.0
        %5699 = vmatprep.subr.mxu0 0.0
        %5700 = vmatpush1.msra.mxu0 0.0
        %5701 = vmatprep.subr.mxu0 0.0
        %5702 = vmatpush1.msra.mxu0 0.0
        %5703 = vmatprep.subr.mxu0 0.0
        %5704 = vmatpush1.msra.mxu0 0.0
        %5705 = vmatprep.subr.mxu0 0.0
        %5706 = vmatpush1.msra.mxu0 0.0
        %5707 = vmatprep.subr.mxu0 0.0
        %5708 = vmatpush1.msra.mxu0 0.0
        %5709 = vmatprep.subr.mxu0 0.0
        %5710 = vmatpush1.msra.mxu0 0.0
        %5711 = vmatprep.subr.mxu0 0.0
        %5712 = vmatpush1.msra.mxu0 %v5656
        %5713 = vmatprep.subr.mxu0 0.0
        %5714 = vmatpush2.msra.mxu0 0.0
        %5715 = vmatprep.subr.mxu0 0.0
        %5716 = vmatpush2.msra.mxu0 0.0
        %5717 = vmatprep.subr.mxu0 0.0
        %5718 = vmatpush2.msra.mxu0 0.0
        %5719 = vmatprep.subr.mxu0 0.0
        %5720 = vmatpush2.msra.mxu0 0.0
        %5721 = vmatprep.subr.mxu0 0.0
        %5722 = vmatpush2.msra.mxu0 0.0
        %5723 = vmatprep.subr.mxu0 0.0
        %5724 = vmatpush2.msra.mxu0 0.0
        %5725 = vmatprep.subr.mxu0 0.0
        %5726 = vmatpush2.msra.mxu0 0.0
        %5727 = vmatprep.subr.mxu0 0.0
        %5728 = vmatpush2.msra.mxu0 0.0
        %5729 = vmatprep.subr.mxu0 0.0
        %5730 = vmatpush2.msra.mxu0 0.0
        %5731 = vmatprep.subr.mxu0 0.0
        %5732 = vmatpush2.msra.mxu0 0.0
        %5733 = vmatprep.subr.mxu0 0.0
        %5734 = vmatpush2.msra.mxu0 0.0
        %5735 = vmatprep.subr.mxu0 0.0
        %5736 = vmatpush2.msra.mxu0 0.0
        %5737 = vmatprep.subr.mxu0 0.0
        %5738 = vmatpush2.msra.mxu0 0.0
        %5739 = vmatprep.subr.mxu0 0.0
        %5740 = vmatpush2.msra.mxu0 0.0
        %5741 = vmatprep.subr.mxu0 0.0
        %5742 = vmatpush2.msra.mxu0 0.0
        %5743 = vmatprep.subr.mxu0 0.0
        %5744 = vmatpush2.msra.mxu0 0.0
        %5745 = vmatprep.mubr.f32.mxu0 0.0
        %5746 = vmatmul.mubr.f32.gmra.mxu0 %v5658
        %v5747 = vpop.f32.mrf.mxu0
        %v5748 = vadd.f32 0.0, %v5747
        %v5749 = vpop.f32.mrf.mxu0
        %5750 = vmatprep.mubr.f32.mxu0 0.0
        %5751 = vmatmul.mubr.f32.gmra.mxu0 %v5661
        %v5752 = vpop.f32.mrf.mxu0
        %v5753 = vadd.f32 0.0, %v5752
        %v5754 = vpop.f32.mrf.mxu0
        %5755 = vmatprep.mubr.f32.mxu0 0.0
        %5756 = vmatmul.mubr.f32.gmra.mxu0 %v5664
        %v5757 = vpop.f32.mrf.mxu0
        %v5758 = vadd.f32 0.0, %v5757
        %v5759 = vpop.f32.mrf.mxu0
        %5760 = vmatprep.mubr.f32.mxu0 0.0
        %5761 = vmatmul.mubr.f32.gmra.mxu0 %v5667
        %v5762 = vpop.f32.mrf.mxu0
        %v5763 = vadd.f32 0.0, %v5762
        %v5764 = vpop.f32.mrf.mxu0
        %5765 = vmatprep.mubr.f32.mxu0 0.0
        %5766 = vmatmul.mubr.f32.gmra.mxu0 %v5670
        %v5767 = vpop.f32.mrf.mxu0
        %v5768 = vadd.f32 0.0, %v5767
        %v5769 = vpop.f32.mrf.mxu0
        %5770 = vmatprep.mubr.f32.mxu0 0.0
        %5771 = vmatmul.mubr.f32.gmra.mxu0 %v5673
        %v5772 = vpop.f32.mrf.mxu0
        %v5773 = vadd.f32 0.0, %v5772
        %v5774 = vpop.f32.mrf.mxu0
        %5775 = vmatprep.mubr.f32.mxu0 0.0
        %5776 = vmatmul.mubr.f32.gmra.mxu0 %v5676
        %v5777 = vpop.f32.mrf.mxu0
        %v5778 = vadd.f32 0.0, %v5777
        %v5779 = vpop.f32.mrf.mxu0
        %5780 = vmatprep.mubr.f32.mxu0 0.0
        %5781 = vmatmul.mubr.f32.gmra.mxu0 %v5679
        %v5782 = vpop.f32.mrf.mxu0
        %v5783 = vadd.f32 0.0, %v5782
        %v5784 = vpop.f32.mrf.mxu0
        %5785 = vdwg.mxu0
        %v5786 = vadd.f32 %v5638, %v5748
        %v5787 = vadd.f32 %v5639, %v5753
        %v5788 = vadd.f32 %v5640, %v5758
        %v5789 = vadd.f32 %v5641, %v5763
        %v5790 = vadd.f32 %v5642, %v5768
        %v5791 = vadd.f32 %v5643, %v5773
        %v5792 = vadd.f32 %v5644, %v5778
        %v5793 = vadd.f32 %v5645, %v5783
        %v5794 = vld [vmem:[%s5498 + $0x1] sm:$0xff]
        %v5795 = vld [vmem:[%s5498 + $0x11] sm:$0xff]
        %v5796 = vld [vmem:[%s5498 + $0x21] sm:$0xff]
        %v5797 = vld [vmem:[%s5498 + $0x31] sm:$0xff]
        %v5798 = vld [vmem:[%s5498 + $0x41] sm:$0xff]
        %v5799 = vld [vmem:[%s5498 + $0x51] sm:$0xff]
        %v5800 = vld [vmem:[%s5498 + $0x61] sm:$0xff]
        %v5801 = vld [vmem:[%s5498 + $0x71] sm:$0xff]
        %s5802 = scalar_lea.vmem %s4, 296
        %v5803 = vld [vmem:[%s5802] sm:$0xff]
        %v5805 = vsel %vm382, %v5794, 0
        %v5808 = vsel %vm382, %v5795, 0
        %v5811 = vsel %vm382, %v5796, 0
        %v5814 = vsel %vm382, %v5797, 0
        %v5817 = vsel %vm382, %v5798, 0
        %v5820 = vsel %vm382, %v5799, 0
        %v5823 = vsel %vm382, %v5800, 0
        %v5826 = vsel %vm382, %v5801, 0
        %5828 = vmatprep.subr.mxu0 0.0
        %5829 = vmatpush1.msra.mxu0 0.0
        %5830 = vmatprep.subr.mxu0 0.0
        %5831 = vmatpush1.msra.mxu0 0.0
        %5832 = vmatprep.subr.mxu0 0.0
        %5833 = vmatpush1.msra.mxu0 0.0
        %5834 = vmatprep.subr.mxu0 0.0
        %5835 = vmatpush1.msra.mxu0 0.0
        %5836 = vmatprep.subr.mxu0 0.0
        %5837 = vmatpush1.msra.mxu0 0.0
        %5838 = vmatprep.subr.mxu0 0.0
        %5839 = vmatpush1.msra.mxu0 0.0
        %5840 = vmatprep.subr.mxu0 0.0
        %5841 = vmatpush1.msra.mxu0 0.0
        %5842 = vmatprep.subr.mxu0 0.0
        %5843 = vmatpush1.msra.mxu0 0.0
        %5844 = vmatprep.subr.mxu0 0.0
        %5845 = vmatpush1.msra.mxu0 0.0
        %5846 = vmatprep.subr.mxu0 0.0
        %5847 = vmatpush1.msra.mxu0 0.0
        %5848 = vmatprep.subr.mxu0 0.0
        %5849 = vmatpush1.msra.mxu0 0.0
        %5850 = vmatprep.subr.mxu0 0.0
        %5851 = vmatpush1.msra.mxu0 0.0
        %5852 = vmatprep.subr.mxu0 0.0
        %5853 = vmatpush1.msra.mxu0 0.0
        %5854 = vmatprep.subr.mxu0 0.0
        %5855 = vmatpush1.msra.mxu0 0.0
        %5856 = vmatprep.subr.mxu0 0.0
        %5857 = vmatpush1.msra.mxu0 0.0
        %5858 = vmatprep.subr.mxu0 0.0
        %5859 = vmatpush1.msra.mxu0 %v5803
        %5860 = vmatprep.subr.mxu0 0.0
        %5861 = vmatpush2.msra.mxu0 0.0
        %5862 = vmatprep.subr.mxu0 0.0
        %5863 = vmatpush2.msra.mxu0 0.0
        %5864 = vmatprep.subr.mxu0 0.0
        %5865 = vmatpush2.msra.mxu0 0.0
        %5866 = vmatprep.subr.mxu0 0.0
        %5867 = vmatpush2.msra.mxu0 0.0
        %5868 = vmatprep.subr.mxu0 0.0
        %5869 = vmatpush2.msra.mxu0 0.0
        %5870 = vmatprep.subr.mxu0 0.0
        %5871 = vmatpush2.msra.mxu0 0.0
        %5872 = vmatprep.subr.mxu0 0.0
        %5873 = vmatpush2.msra.mxu0 0.0
        %5874 = vmatprep.subr.mxu0 0.0
        %5875 = vmatpush2.msra.mxu0 0.0
        %5876 = vmatprep.subr.mxu0 0.0
        %5877 = vmatpush2.msra.mxu0 0.0
        %5878 = vmatprep.subr.mxu0 0.0
        %5879 = vmatpush2.msra.mxu0 0.0
        %5880 = vmatprep.subr.mxu0 0.0
        %5881 = vmatpush2.msra.mxu0 0.0
        %5882 = vmatprep.subr.mxu0 0.0
        %5883 = vmatpush2.msra.mxu0 0.0
        %5884 = vmatprep.subr.mxu0 0.0
        %5885 = vmatpush2.msra.mxu0 0.0
        %5886 = vmatprep.subr.mxu0 0.0
        %5887 = vmatpush2.msra.mxu0 0.0
        %5888 = vmatprep.subr.mxu0 0.0
        %5889 = vmatpush2.msra.mxu0 0.0
        %5890 = vmatprep.subr.mxu0 0.0
        %5891 = vmatpush2.msra.mxu0 0.0
        %5892 = vmatprep.mubr.f32.mxu0 0.0
        %5893 = vmatmul.mubr.f32.gmra.mxu0 %v5805
        %v5894 = vpop.f32.mrf.mxu0
        %v5895 = vadd.f32 0.0, %v5894
        %v5896 = vpop.f32.mrf.mxu0
        %5897 = vmatprep.mubr.f32.mxu0 0.0
        %5898 = vmatmul.mubr.f32.gmra.mxu0 %v5808
        %v5899 = vpop.f32.mrf.mxu0
        %v5900 = vadd.f32 0.0, %v5899
        %v5901 = vpop.f32.mrf.mxu0
        %5902 = vmatprep.mubr.f32.mxu0 0.0
        %5903 = vmatmul.mubr.f32.gmra.mxu0 %v5811
        %v5904 = vpop.f32.mrf.mxu0
        %v5905 = vadd.f32 0.0, %v5904
        %v5906 = vpop.f32.mrf.mxu0
        %5907 = vmatprep.mubr.f32.mxu0 0.0
        %5908 = vmatmul.mubr.f32.gmra.mxu0 %v5814
        %v5909 = vpop.f32.mrf.mxu0
        %v5910 = vadd.f32 0.0, %v5909
        %v5911 = vpop.f32.mrf.mxu0
        %5912 = vmatprep.mubr.f32.mxu0 0.0
        %5913 = vmatmul.mubr.f32.gmra.mxu0 %v5817
        %v5914 = vpop.f32.mrf.mxu0
        %v5915 = vadd.f32 0.0, %v5914
        %v5916 = vpop.f32.mrf.mxu0
        %5917 = vmatprep.mubr.f32.mxu0 0.0
        %5918 = vmatmul.mubr.f32.gmra.mxu0 %v5820
        %v5919 = vpop.f32.mrf.mxu0
        %v5920 = vadd.f32 0.0, %v5919
        %v5921 = vpop.f32.mrf.mxu0
        %5922 = vmatprep.mubr.f32.mxu0 0.0
        %5923 = vmatmul.mubr.f32.gmra.mxu0 %v5823
        %v5924 = vpop.f32.mrf.mxu0
        %v5925 = vadd.f32 0.0, %v5924
        %v5926 = vpop.f32.mrf.mxu0
        %5927 = vmatprep.mubr.f32.mxu0 0.0
        %5928 = vmatmul.mubr.f32.gmra.mxu0 %v5826
        %v5929 = vpop.f32.mrf.mxu0
        %v5930 = vadd.f32 0.0, %v5929
        %v5931 = vpop.f32.mrf.mxu0
        %5932 = vdwg.mxu0
        %v5933 = vadd.f32 %v5786, %v5895
        %v5934 = vadd.f32 %v5787, %v5900
        %v5935 = vadd.f32 %v5788, %v5905
        %v5936 = vadd.f32 %v5789, %v5910
        %v5937 = vadd.f32 %v5790, %v5915
        %v5938 = vadd.f32 %v5791, %v5920
        %v5939 = vadd.f32 %v5792, %v5925
        %v5940 = vadd.f32 %v5793, %v5930
        %v5941 = vld [vmem:[%s5646 + $0x1] sm:$0xff]
        %v5942 = vld [vmem:[%s5646 + $0x11] sm:$0xff]
        %v5943 = vld [vmem:[%s5646 + $0x21] sm:$0xff]
        %v5944 = vld [vmem:[%s5646 + $0x31] sm:$0xff]
        %v5945 = vld [vmem:[%s5646 + $0x41] sm:$0xff]
        %v5946 = vld [vmem:[%s5646 + $0x51] sm:$0xff]
        %v5947 = vld [vmem:[%s5646 + $0x61] sm:$0xff]
        %v5948 = vld [vmem:[%s5646 + $0x71] sm:$0xff]
        %s5949 = scalar_lea.vmem %s4, 304
        %v5950 = vld [vmem:[%s5949] sm:$0xff]
        %v5952 = vsel %vm382, %v5941, 0
        %v5955 = vsel %vm382, %v5942, 0
        %v5958 = vsel %vm382, %v5943, 0
        %v5961 = vsel %vm382, %v5944, 0
        %v5964 = vsel %vm382, %v5945, 0
        %v5967 = vsel %vm382, %v5946, 0
        %v5970 = vsel %vm382, %v5947, 0
        %v5973 = vsel %vm382, %v5948, 0
        %5975 = vmatprep.subr.mxu0 0.0
        %5976 = vmatpush1.msra.mxu0 0.0
        %5977 = vmatprep.subr.mxu0 0.0
        %5978 = vmatpush1.msra.mxu0 0.0
        %5979 = vmatprep.subr.mxu0 0.0
        %5980 = vmatpush1.msra.mxu0 0.0
        %5981 = vmatprep.subr.mxu0 0.0
        %5982 = vmatpush1.msra.mxu0 0.0
        %5983 = vmatprep.subr.mxu0 0.0
        %5984 = vmatpush1.msra.mxu0 0.0
        %5985 = vmatprep.subr.mxu0 0.0
        %5986 = vmatpush1.msra.mxu0 0.0
        %5987 = vmatprep.subr.mxu0 0.0
        %5988 = vmatpush1.msra.mxu0 0.0
        %5989 = vmatprep.subr.mxu0 0.0
        %5990 = vmatpush1.msra.mxu0 0.0
        %5991 = vmatprep.subr.mxu0 0.0
        %5992 = vmatpush1.msra.mxu0 0.0
        %5993 = vmatprep.subr.mxu0 0.0
        %5994 = vmatpush1.msra.mxu0 0.0
        %5995 = vmatprep.subr.mxu0 0.0
        %5996 = vmatpush1.msra.mxu0 0.0
        %5997 = vmatprep.subr.mxu0 0.0
        %5998 = vmatpush1.msra.mxu0 0.0
        %5999 = vmatprep.subr.mxu0 0.0
        %6000 = vmatpush1.msra.mxu0 0.0
        %6001 = vmatprep.subr.mxu0 0.0
        %6002 = vmatpush1.msra.mxu0 0.0
        %6003 = vmatprep.subr.mxu0 0.0
        %6004 = vmatpush1.msra.mxu0 0.0
        %6005 = vmatprep.subr.mxu0 0.0
        %6006 = vmatpush1.msra.mxu0 %v5950
        %6007 = vmatprep.subr.mxu0 0.0
        %6008 = vmatpush2.msra.mxu0 0.0
        %6009 = vmatprep.subr.mxu0 0.0
        %6010 = vmatpush2.msra.mxu0 0.0
        %6011 = vmatprep.subr.mxu0 0.0
        %6012 = vmatpush2.msra.mxu0 0.0
        %6013 = vmatprep.subr.mxu0 0.0
        %6014 = vmatpush2.msra.mxu0 0.0
        %6015 = vmatprep.subr.mxu0 0.0
        %6016 = vmatpush2.msra.mxu0 0.0
        %6017 = vmatprep.subr.mxu0 0.0
        %6018 = vmatpush2.msra.mxu0 0.0
        %6019 = vmatprep.subr.mxu0 0.0
        %6020 = vmatpush2.msra.mxu0 0.0
        %6021 = vmatprep.subr.mxu0 0.0
        %6022 = vmatpush2.msra.mxu0 0.0
        %6023 = vmatprep.subr.mxu0 0.0
        %6024 = vmatpush2.msra.mxu0 0.0
        %6025 = vmatprep.subr.mxu0 0.0
        %6026 = vmatpush2.msra.mxu0 0.0
        %6027 = vmatprep.subr.mxu0 0.0
        %6028 = vmatpush2.msra.mxu0 0.0
        %6029 = vmatprep.subr.mxu0 0.0
        %6030 = vmatpush2.msra.mxu0 0.0
        %6031 = vmatprep.subr.mxu0 0.0
        %6032 = vmatpush2.msra.mxu0 0.0
        %6033 = vmatprep.subr.mxu0 0.0
        %6034 = vmatpush2.msra.mxu0 0.0
        %6035 = vmatprep.subr.mxu0 0.0
        %6036 = vmatpush2.msra.mxu0 0.0
        %6037 = vmatprep.subr.mxu0 0.0
        %6038 = vmatpush2.msra.mxu0 0.0
        %6039 = vmatprep.mubr.f32.mxu0 0.0
        %6040 = vmatmul.mubr.f32.gmra.mxu0 %v5952
        %v6041 = vpop.f32.mrf.mxu0
        %v6042 = vadd.f32 0.0, %v6041
        %v6043 = vpop.f32.mrf.mxu0
        %6044 = vmatprep.mubr.f32.mxu0 0.0
        %6045 = vmatmul.mubr.f32.gmra.mxu0 %v5955
        %v6046 = vpop.f32.mrf.mxu0
        %v6047 = vadd.f32 0.0, %v6046
        %v6048 = vpop.f32.mrf.mxu0
        %6049 = vmatprep.mubr.f32.mxu0 0.0
        %6050 = vmatmul.mubr.f32.gmra.mxu0 %v5958
        %v6051 = vpop.f32.mrf.mxu0
        %v6052 = vadd.f32 0.0, %v6051
        %v6053 = vpop.f32.mrf.mxu0
        %6054 = vmatprep.mubr.f32.mxu0 0.0
        %6055 = vmatmul.mubr.f32.gmra.mxu0 %v5961
        %v6056 = vpop.f32.mrf.mxu0
        %v6057 = vadd.f32 0.0, %v6056
        %v6058 = vpop.f32.mrf.mxu0
        %6059 = vmatprep.mubr.f32.mxu0 0.0
        %6060 = vmatmul.mubr.f32.gmra.mxu0 %v5964
        %v6061 = vpop.f32.mrf.mxu0
        %v6062 = vadd.f32 0.0, %v6061
        %v6063 = vpop.f32.mrf.mxu0
        %6064 = vmatprep.mubr.f32.mxu0 0.0
        %6065 = vmatmul.mubr.f32.gmra.mxu0 %v5967
        %v6066 = vpop.f32.mrf.mxu0
        %v6067 = vadd.f32 0.0, %v6066
        %v6068 = vpop.f32.mrf.mxu0
        %6069 = vmatprep.mubr.f32.mxu0 0.0
        %6070 = vmatmul.mubr.f32.gmra.mxu0 %v5970
        %v6071 = vpop.f32.mrf.mxu0
        %v6072 = vadd.f32 0.0, %v6071
        %v6073 = vpop.f32.mrf.mxu0
        %6074 = vmatprep.mubr.f32.mxu0 0.0
        %6075 = vmatmul.mubr.f32.gmra.mxu0 %v5973
        %v6076 = vpop.f32.mrf.mxu0
        %v6077 = vadd.f32 0.0, %v6076
        %v6078 = vpop.f32.mrf.mxu0
        %6079 = vdwg.mxu0
        %v6080 = vadd.f32 %v5933, %v6042
        %v6081 = vadd.f32 %v5934, %v6047
        %v6082 = vadd.f32 %v5935, %v6052
        %v6083 = vadd.f32 %v5936, %v6057
        %v6084 = vadd.f32 %v5937, %v6062
        %v6085 = vadd.f32 %v5938, %v6067
        %v6086 = vadd.f32 %v5939, %v6072
        %v6087 = vadd.f32 %v5940, %v6077
        %v6088 = vld [vmem:[%s5498 + $0x2] sm:$0xff]
        %v6089 = vld [vmem:[%s5498 + $0x12] sm:$0xff]
        %v6090 = vld [vmem:[%s5498 + $0x22] sm:$0xff]
        %v6091 = vld [vmem:[%s5498 + $0x32] sm:$0xff]
        %v6092 = vld [vmem:[%s5498 + $0x42] sm:$0xff]
        %v6093 = vld [vmem:[%s5498 + $0x52] sm:$0xff]
        %v6094 = vld [vmem:[%s5498 + $0x62] sm:$0xff]
        %v6095 = vld [vmem:[%s5498 + $0x72] sm:$0xff]
        %s6096 = scalar_lea.vmem %s4, 312
        %v6097 = vld [vmem:[%s6096] sm:$0xff]
        %v6099 = vsel %vm382, %v6088, 0
        %v6102 = vsel %vm382, %v6089, 0
        %v6105 = vsel %vm382, %v6090, 0
        %v6108 = vsel %vm382, %v6091, 0
        %v6111 = vsel %vm382, %v6092, 0
        %v6114 = vsel %vm382, %v6093, 0
        %v6117 = vsel %vm382, %v6094, 0
        %v6120 = vsel %vm382, %v6095, 0
        %6122 = vmatprep.subr.mxu0 0.0
        %6123 = vmatpush1.msra.mxu0 0.0
        %6124 = vmatprep.subr.mxu0 0.0
        %6125 = vmatpush1.msra.mxu0 0.0
        %6126 = vmatprep.subr.mxu0 0.0
        %6127 = vmatpush1.msra.mxu0 0.0
        %6128 = vmatprep.subr.mxu0 0.0
        %6129 = vmatpush1.msra.mxu0 0.0
        %6130 = vmatprep.subr.mxu0 0.0
        %6131 = vmatpush1.msra.mxu0 0.0
        %6132 = vmatprep.subr.mxu0 0.0
        %6133 = vmatpush1.msra.mxu0 0.0
        %6134 = vmatprep.subr.mxu0 0.0
        %6135 = vmatpush1.msra.mxu0 0.0
        %6136 = vmatprep.subr.mxu0 0.0
        %6137 = vmatpush1.msra.mxu0 0.0
        %6138 = vmatprep.subr.mxu0 0.0
        %6139 = vmatpush1.msra.mxu0 0.0
        %6140 = vmatprep.subr.mxu0 0.0
        %6141 = vmatpush1.msra.mxu0 0.0
        %6142 = vmatprep.subr.mxu0 0.0
        %6143 = vmatpush1.msra.mxu0 0.0
        %6144 = vmatprep.subr.mxu0 0.0
        %6145 = vmatpush1.msra.mxu0 0.0
        %6146 = vmatprep.subr.mxu0 0.0
        %6147 = vmatpush1.msra.mxu0 0.0
        %6148 = vmatprep.subr.mxu0 0.0
        %6149 = vmatpush1.msra.mxu0 0.0
        %6150 = vmatprep.subr.mxu0 0.0
        %6151 = vmatpush1.msra.mxu0 0.0
        %6152 = vmatprep.subr.mxu0 0.0
        %6153 = vmatpush1.msra.mxu0 %v6097
        %6154 = vmatprep.subr.mxu0 0.0
        %6155 = vmatpush2.msra.mxu0 0.0
        %6156 = vmatprep.subr.mxu0 0.0
        %6157 = vmatpush2.msra.mxu0 0.0
        %6158 = vmatprep.subr.mxu0 0.0
        %6159 = vmatpush2.msra.mxu0 0.0
        %6160 = vmatprep.subr.mxu0 0.0
        %6161 = vmatpush2.msra.mxu0 0.0
        %6162 = vmatprep.subr.mxu0 0.0
        %6163 = vmatpush2.msra.mxu0 0.0
        %6164 = vmatprep.subr.mxu0 0.0
        %6165 = vmatpush2.msra.mxu0 0.0
        %6166 = vmatprep.subr.mxu0 0.0
        %6167 = vmatpush2.msra.mxu0 0.0
        %6168 = vmatprep.subr.mxu0 0.0
        %6169 = vmatpush2.msra.mxu0 0.0
        %6170 = vmatprep.subr.mxu0 0.0
        %6171 = vmatpush2.msra.mxu0 0.0
        %6172 = vmatprep.subr.mxu0 0.0
        %6173 = vmatpush2.msra.mxu0 0.0
        %6174 = vmatprep.subr.mxu0 0.0
        %6175 = vmatpush2.msra.mxu0 0.0
        %6176 = vmatprep.subr.mxu0 0.0
        %6177 = vmatpush2.msra.mxu0 0.0
        %6178 = vmatprep.subr.mxu0 0.0
        %6179 = vmatpush2.msra.mxu0 0.0
        %6180 = vmatprep.subr.mxu0 0.0
        %6181 = vmatpush2.msra.mxu0 0.0
        %6182 = vmatprep.subr.mxu0 0.0
        %6183 = vmatpush2.msra.mxu0 0.0
        %6184 = vmatprep.subr.mxu0 0.0
        %6185 = vmatpush2.msra.mxu0 0.0
        %6186 = vmatprep.mubr.f32.mxu0 0.0
        %6187 = vmatmul.mubr.f32.gmra.mxu0 %v6099
        %v6188 = vpop.f32.mrf.mxu0
        %v6189 = vadd.f32 0.0, %v6188
        %v6190 = vpop.f32.mrf.mxu0
        %6191 = vmatprep.mubr.f32.mxu0 0.0
        %6192 = vmatmul.mubr.f32.gmra.mxu0 %v6102
        %v6193 = vpop.f32.mrf.mxu0
        %v6194 = vadd.f32 0.0, %v6193
        %v6195 = vpop.f32.mrf.mxu0
        %6196 = vmatprep.mubr.f32.mxu0 0.0
        %6197 = vmatmul.mubr.f32.gmra.mxu0 %v6105
        %v6198 = vpop.f32.mrf.mxu0
        %v6199 = vadd.f32 0.0, %v6198
        %v6200 = vpop.f32.mrf.mxu0
        %6201 = vmatprep.mubr.f32.mxu0 0.0
        %6202 = vmatmul.mubr.f32.gmra.mxu0 %v6108
        %v6203 = vpop.f32.mrf.mxu0
        %v6204 = vadd.f32 0.0, %v6203
        %v6205 = vpop.f32.mrf.mxu0
        %6206 = vmatprep.mubr.f32.mxu0 0.0
        %6207 = vmatmul.mubr.f32.gmra.mxu0 %v6111
        %v6208 = vpop.f32.mrf.mxu0
        %v6209 = vadd.f32 0.0, %v6208
        %v6210 = vpop.f32.mrf.mxu0
        %6211 = vmatprep.mubr.f32.mxu0 0.0
        %6212 = vmatmul.mubr.f32.gmra.mxu0 %v6114
        %v6213 = vpop.f32.mrf.mxu0
        %v6214 = vadd.f32 0.0, %v6213
        %v6215 = vpop.f32.mrf.mxu0
        %6216 = vmatprep.mubr.f32.mxu0 0.0
        %6217 = vmatmul.mubr.f32.gmra.mxu0 %v6117
        %v6218 = vpop.f32.mrf.mxu0
        %v6219 = vadd.f32 0.0, %v6218
        %v6220 = vpop.f32.mrf.mxu0
        %6221 = vmatprep.mubr.f32.mxu0 0.0
        %6222 = vmatmul.mubr.f32.gmra.mxu0 %v6120
        %v6223 = vpop.f32.mrf.mxu0
        %v6224 = vadd.f32 0.0, %v6223
        %v6225 = vpop.f32.mrf.mxu0
        %6226 = vdwg.mxu0
        %v6227 = vadd.f32 %v6080, %v6189
        %v6228 = vadd.f32 %v6081, %v6194
        %v6229 = vadd.f32 %v6082, %v6199
        %v6230 = vadd.f32 %v6083, %v6204
        %v6231 = vadd.f32 %v6084, %v6209
        %v6232 = vadd.f32 %v6085, %v6214
        %v6233 = vadd.f32 %v6086, %v6219
        %v6234 = vadd.f32 %v6087, %v6224
        %v6235 = vld [vmem:[%s5646 + $0x2] sm:$0xff]
        %v6236 = vld [vmem:[%s5646 + $0x12] sm:$0xff]
        %v6237 = vld [vmem:[%s5646 + $0x22] sm:$0xff]
        %v6238 = vld [vmem:[%s5646 + $0x32] sm:$0xff]
        %v6239 = vld [vmem:[%s5646 + $0x42] sm:$0xff]
        %v6240 = vld [vmem:[%s5646 + $0x52] sm:$0xff]
        %v6241 = vld [vmem:[%s5646 + $0x62] sm:$0xff]
        %v6242 = vld [vmem:[%s5646 + $0x72] sm:$0xff]
        %s6243 = scalar_lea.vmem %s4, 320
        %v6244 = vld [vmem:[%s6243] sm:$0xff]
        %v6246 = vsel %vm382, %v6235, 0
        %v6249 = vsel %vm382, %v6236, 0
        %v6252 = vsel %vm382, %v6237, 0
        %v6255 = vsel %vm382, %v6238, 0
        %v6258 = vsel %vm382, %v6239, 0
        %v6261 = vsel %vm382, %v6240, 0
        %v6264 = vsel %vm382, %v6241, 0
        %v6267 = vsel %vm382, %v6242, 0
        %6269 = vmatprep.subr.mxu0 0.0
        %6270 = vmatpush1.msra.mxu0 0.0
        %6271 = vmatprep.subr.mxu0 0.0
        %6272 = vmatpush1.msra.mxu0 0.0
        %6273 = vmatprep.subr.mxu0 0.0
        %6274 = vmatpush1.msra.mxu0 0.0
        %6275 = vmatprep.subr.mxu0 0.0
        %6276 = vmatpush1.msra.mxu0 0.0
        %6277 = vmatprep.subr.mxu0 0.0
        %6278 = vmatpush1.msra.mxu0 0.0
        %6279 = vmatprep.subr.mxu0 0.0
        %6280 = vmatpush1.msra.mxu0 0.0
        %6281 = vmatprep.subr.mxu0 0.0
        %6282 = vmatpush1.msra.mxu0 0.0
        %6283 = vmatprep.subr.mxu0 0.0
        %6284 = vmatpush1.msra.mxu0 0.0
        %6285 = vmatprep.subr.mxu0 0.0
        %6286 = vmatpush1.msra.mxu0 0.0
        %6287 = vmatprep.subr.mxu0 0.0
        %6288 = vmatpush1.msra.mxu0 0.0
        %6289 = vmatprep.subr.mxu0 0.0
        %6290 = vmatpush1.msra.mxu0 0.0
        %6291 = vmatprep.subr.mxu0 0.0
        %6292 = vmatpush1.msra.mxu0 0.0
        %6293 = vmatprep.subr.mxu0 0.0
        %6294 = vmatpush1.msra.mxu0 0.0
        %6295 = vmatprep.subr.mxu0 0.0
        %6296 = vmatpush1.msra.mxu0 0.0
        %6297 = vmatprep.subr.mxu0 0.0
        %6298 = vmatpush1.msra.mxu0 0.0
        %6299 = vmatprep.subr.mxu0 0.0
        %6300 = vmatpush1.msra.mxu0 %v6244
        %6301 = vmatprep.subr.mxu0 0.0
        %6302 = vmatpush2.msra.mxu0 0.0
        %6303 = vmatprep.subr.mxu0 0.0
        %6304 = vmatpush2.msra.mxu0 0.0
        %6305 = vmatprep.subr.mxu0 0.0
        %6306 = vmatpush2.msra.mxu0 0.0
        %6307 = vmatprep.subr.mxu0 0.0
        %6308 = vmatpush2.msra.mxu0 0.0
        %6309 = vmatprep.subr.mxu0 0.0
        %6310 = vmatpush2.msra.mxu0 0.0
        %6311 = vmatprep.subr.mxu0 0.0
        %6312 = vmatpush2.msra.mxu0 0.0
        %6313 = vmatprep.subr.mxu0 0.0
        %6314 = vmatpush2.msra.mxu0 0.0
        %6315 = vmatprep.subr.mxu0 0.0
        %6316 = vmatpush2.msra.mxu0 0.0
        %6317 = vmatprep.subr.mxu0 0.0
        %6318 = vmatpush2.msra.mxu0 0.0
        %6319 = vmatprep.subr.mxu0 0.0
        %6320 = vmatpush2.msra.mxu0 0.0
        %6321 = vmatprep.subr.mxu0 0.0
        %6322 = vmatpush2.msra.mxu0 0.0
        %6323 = vmatprep.subr.mxu0 0.0
        %6324 = vmatpush2.msra.mxu0 0.0
        %6325 = vmatprep.subr.mxu0 0.0
        %6326 = vmatpush2.msra.mxu0 0.0
        %6327 = vmatprep.subr.mxu0 0.0
        %6328 = vmatpush2.msra.mxu0 0.0
        %6329 = vmatprep.subr.mxu0 0.0
        %6330 = vmatpush2.msra.mxu0 0.0
        %6331 = vmatprep.subr.mxu0 0.0
        %6332 = vmatpush2.msra.mxu0 0.0
        %6333 = vmatprep.mubr.f32.mxu0 0.0
        %6334 = vmatmul.mubr.f32.gmra.mxu0 %v6246
        %v6335 = vpop.f32.mrf.mxu0
        %v6336 = vadd.f32 0.0, %v6335
        %v6337 = vpop.f32.mrf.mxu0
        %6338 = vmatprep.mubr.f32.mxu0 0.0
        %6339 = vmatmul.mubr.f32.gmra.mxu0 %v6249
        %v6340 = vpop.f32.mrf.mxu0
        %v6341 = vadd.f32 0.0, %v6340
        %v6342 = vpop.f32.mrf.mxu0
        %6343 = vmatprep.mubr.f32.mxu0 0.0
        %6344 = vmatmul.mubr.f32.gmra.mxu0 %v6252
        %v6345 = vpop.f32.mrf.mxu0
        %v6346 = vadd.f32 0.0, %v6345
        %v6347 = vpop.f32.mrf.mxu0
        %6348 = vmatprep.mubr.f32.mxu0 0.0
        %6349 = vmatmul.mubr.f32.gmra.mxu0 %v6255
        %v6350 = vpop.f32.mrf.mxu0
        %v6351 = vadd.f32 0.0, %v6350
        %v6352 = vpop.f32.mrf.mxu0
        %6353 = vmatprep.mubr.f32.mxu0 0.0
        %6354 = vmatmul.mubr.f32.gmra.mxu0 %v6258
        %v6355 = vpop.f32.mrf.mxu0
        %v6356 = vadd.f32 0.0, %v6355
        %v6357 = vpop.f32.mrf.mxu0
        %6358 = vmatprep.mubr.f32.mxu0 0.0
        %6359 = vmatmul.mubr.f32.gmra.mxu0 %v6261
        %v6360 = vpop.f32.mrf.mxu0
        %v6361 = vadd.f32 0.0, %v6360
        %v6362 = vpop.f32.mrf.mxu0
        %6363 = vmatprep.mubr.f32.mxu0 0.0
        %6364 = vmatmul.mubr.f32.gmra.mxu0 %v6264
        %v6365 = vpop.f32.mrf.mxu0
        %v6366 = vadd.f32 0.0, %v6365
        %v6367 = vpop.f32.mrf.mxu0
        %6368 = vmatprep.mubr.f32.mxu0 0.0
        %6369 = vmatmul.mubr.f32.gmra.mxu0 %v6267
        %v6370 = vpop.f32.mrf.mxu0
        %v6371 = vadd.f32 0.0, %v6370
        %v6372 = vpop.f32.mrf.mxu0
        %6373 = vdwg.mxu0
        %v6374 = vadd.f32 %v6227, %v6336
        %v6375 = vadd.f32 %v6228, %v6341
        %v6376 = vadd.f32 %v6229, %v6346
        %v6377 = vadd.f32 %v6230, %v6351
        %v6378 = vadd.f32 %v6231, %v6356
        %v6379 = vadd.f32 %v6232, %v6361
        %v6380 = vadd.f32 %v6233, %v6366
        %v6381 = vadd.f32 %v6234, %v6371
        %v6382 = vld [vmem:[%s5498 + $0x3] sm:$0xff]
        %v6383 = vld [vmem:[%s5498 + $0x13] sm:$0xff]
        %v6384 = vld [vmem:[%s5498 + $0x23] sm:$0xff]
        %v6385 = vld [vmem:[%s5498 + $0x33] sm:$0xff]
        %v6386 = vld [vmem:[%s5498 + $0x43] sm:$0xff]
        %v6387 = vld [vmem:[%s5498 + $0x53] sm:$0xff]
        %v6388 = vld [vmem:[%s5498 + $0x63] sm:$0xff]
        %v6389 = vld [vmem:[%s5498 + $0x73] sm:$0xff]
        %s6390 = scalar_lea.vmem %s4, 328
        %v6391 = vld [vmem:[%s6390] sm:$0xff]
        %v6393 = vsel %vm382, %v6382, 0
        %v6396 = vsel %vm382, %v6383, 0
        %v6399 = vsel %vm382, %v6384, 0
        %v6402 = vsel %vm382, %v6385, 0
        %v6405 = vsel %vm382, %v6386, 0
        %v6408 = vsel %vm382, %v6387, 0
        %v6411 = vsel %vm382, %v6388, 0
        %v6414 = vsel %vm382, %v6389, 0
        %6416 = vmatprep.subr.mxu0 0.0
        %6417 = vmatpush1.msra.mxu0 0.0
        %6418 = vmatprep.subr.mxu0 0.0
        %6419 = vmatpush1.msra.mxu0 0.0
        %6420 = vmatprep.subr.mxu0 0.0
        %6421 = vmatpush1.msra.mxu0 0.0
        %6422 = vmatprep.subr.mxu0 0.0
        %6423 = vmatpush1.msra.mxu0 0.0
        %6424 = vmatprep.subr.mxu0 0.0
        %6425 = vmatpush1.msra.mxu0 0.0
        %6426 = vmatprep.subr.mxu0 0.0
        %6427 = vmatpush1.msra.mxu0 0.0
        %6428 = vmatprep.subr.mxu0 0.0
        %6429 = vmatpush1.msra.mxu0 0.0
        %6430 = vmatprep.subr.mxu0 0.0
        %6431 = vmatpush1.msra.mxu0 0.0
        %6432 = vmatprep.subr.mxu0 0.0
        %6433 = vmatpush1.msra.mxu0 0.0
        %6434 = vmatprep.subr.mxu0 0.0
        %6435 = vmatpush1.msra.mxu0 0.0
        %6436 = vmatprep.subr.mxu0 0.0
        %6437 = vmatpush1.msra.mxu0 0.0
        %6438 = vmatprep.subr.mxu0 0.0
        %6439 = vmatpush1.msra.mxu0 0.0
        %6440 = vmatprep.subr.mxu0 0.0
        %6441 = vmatpush1.msra.mxu0 0.0
        %6442 = vmatprep.subr.mxu0 0.0
        %6443 = vmatpush1.msra.mxu0 0.0
        %6444 = vmatprep.subr.mxu0 0.0
        %6445 = vmatpush1.msra.mxu0 0.0
        %6446 = vmatprep.subr.mxu0 0.0
        %6447 = vmatpush1.msra.mxu0 %v6391
        %6448 = vmatprep.subr.mxu0 0.0
        %6449 = vmatpush2.msra.mxu0 0.0
        %6450 = vmatprep.subr.mxu0 0.0
        %6451 = vmatpush2.msra.mxu0 0.0
        %6452 = vmatprep.subr.mxu0 0.0
        %6453 = vmatpush2.msra.mxu0 0.0
        %6454 = vmatprep.subr.mxu0 0.0
        %6455 = vmatpush2.msra.mxu0 0.0
        %6456 = vmatprep.subr.mxu0 0.0
        %6457 = vmatpush2.msra.mxu0 0.0
        %6458 = vmatprep.subr.mxu0 0.0
        %6459 = vmatpush2.msra.mxu0 0.0
        %6460 = vmatprep.subr.mxu0 0.0
        %6461 = vmatpush2.msra.mxu0 0.0
        %6462 = vmatprep.subr.mxu0 0.0
        %6463 = vmatpush2.msra.mxu0 0.0
        %6464 = vmatprep.subr.mxu0 0.0
        %6465 = vmatpush2.msra.mxu0 0.0
        %6466 = vmatprep.subr.mxu0 0.0
        %6467 = vmatpush2.msra.mxu0 0.0
        %6468 = vmatprep.subr.mxu0 0.0
        %6469 = vmatpush2.msra.mxu0 0.0
        %6470 = vmatprep.subr.mxu0 0.0
        %6471 = vmatpush2.msra.mxu0 0.0
        %6472 = vmatprep.subr.mxu0 0.0
        %6473 = vmatpush2.msra.mxu0 0.0
        %6474 = vmatprep.subr.mxu0 0.0
        %6475 = vmatpush2.msra.mxu0 0.0
        %6476 = vmatprep.subr.mxu0 0.0
        %6477 = vmatpush2.msra.mxu0 0.0
        %6478 = vmatprep.subr.mxu0 0.0
        %6479 = vmatpush2.msra.mxu0 0.0
        %6480 = vmatprep.mubr.f32.mxu0 0.0
        %6481 = vmatmul.mubr.f32.gmra.mxu0 %v6393
        %v6482 = vpop.f32.mrf.mxu0
        %v6483 = vadd.f32 0.0, %v6482
        %v6484 = vpop.f32.mrf.mxu0
        %6485 = vmatprep.mubr.f32.mxu0 0.0
        %6486 = vmatmul.mubr.f32.gmra.mxu0 %v6396
        %v6487 = vpop.f32.mrf.mxu0
        %v6488 = vadd.f32 0.0, %v6487
        %v6489 = vpop.f32.mrf.mxu0
        %6490 = vmatprep.mubr.f32.mxu0 0.0
        %6491 = vmatmul.mubr.f32.gmra.mxu0 %v6399
        %v6492 = vpop.f32.mrf.mxu0
        %v6493 = vadd.f32 0.0, %v6492
        %v6494 = vpop.f32.mrf.mxu0
        %6495 = vmatprep.mubr.f32.mxu0 0.0
        %6496 = vmatmul.mubr.f32.gmra.mxu0 %v6402
        %v6497 = vpop.f32.mrf.mxu0
        %v6498 = vadd.f32 0.0, %v6497
        %v6499 = vpop.f32.mrf.mxu0
        %6500 = vmatprep.mubr.f32.mxu0 0.0
        %6501 = vmatmul.mubr.f32.gmra.mxu0 %v6405
        %v6502 = vpop.f32.mrf.mxu0
        %v6503 = vadd.f32 0.0, %v6502
        %v6504 = vpop.f32.mrf.mxu0
        %6505 = vmatprep.mubr.f32.mxu0 0.0
        %6506 = vmatmul.mubr.f32.gmra.mxu0 %v6408
        %v6507 = vpop.f32.mrf.mxu0
        %v6508 = vadd.f32 0.0, %v6507
        %v6509 = vpop.f32.mrf.mxu0
        %6510 = vmatprep.mubr.f32.mxu0 0.0
        %6511 = vmatmul.mubr.f32.gmra.mxu0 %v6411
        %v6512 = vpop.f32.mrf.mxu0
        %v6513 = vadd.f32 0.0, %v6512
        %v6514 = vpop.f32.mrf.mxu0
        %6515 = vmatprep.mubr.f32.mxu0 0.0
        %6516 = vmatmul.mubr.f32.gmra.mxu0 %v6414
        %v6517 = vpop.f32.mrf.mxu0
        %v6518 = vadd.f32 0.0, %v6517
        %v6519 = vpop.f32.mrf.mxu0
        %6520 = vdwg.mxu0
        %v6521 = vadd.f32 %v6374, %v6483
        %v6522 = vadd.f32 %v6375, %v6488
        %v6523 = vadd.f32 %v6376, %v6493
        %v6524 = vadd.f32 %v6377, %v6498
        %v6525 = vadd.f32 %v6378, %v6503
        %v6526 = vadd.f32 %v6379, %v6508
        %v6527 = vadd.f32 %v6380, %v6513
        %v6528 = vadd.f32 %v6381, %v6518
        %s6529 = scalar_lea.vmem %s347, 48
        %v6530 = vld [vmem:[%s6529] sm:$0xff]
        %v6531 = vld [vmem:[%s6529 + $0x10] sm:$0xff]
        %v6532 = vld [vmem:[%s6529 + $0x20] sm:$0xff]
        %v6533 = vld [vmem:[%s6529 + $0x30] sm:$0xff]
        %v6534 = vld [vmem:[%s6529 + $0x40] sm:$0xff]
        %v6535 = vld [vmem:[%s6529 + $0x50] sm:$0xff]
        %v6536 = vld [vmem:[%s6529 + $0x60] sm:$0xff]
        %v6537 = vld [vmem:[%s6529 + $0x70] sm:$0xff]
        %s6538 = scalar_lea.vmem %s4, 336
        %v6539 = vld [vmem:[%s6538] sm:$0xff]
        %v6541 = vsel %vm382, %v6530, 0
        %v6544 = vsel %vm382, %v6531, 0
        %v6547 = vsel %vm382, %v6532, 0
        %v6550 = vsel %vm382, %v6533, 0
        %v6553 = vsel %vm382, %v6534, 0
        %v6556 = vsel %vm382, %v6535, 0
        %v6559 = vsel %vm382, %v6536, 0
        %v6562 = vsel %vm382, %v6537, 0
        %6564 = vmatprep.subr.mxu0 0.0
        %6565 = vmatpush1.msra.mxu0 0.0
        %6566 = vmatprep.subr.mxu0 0.0
        %6567 = vmatpush1.msra.mxu0 0.0
        %6568 = vmatprep.subr.mxu0 0.0
        %6569 = vmatpush1.msra.mxu0 0.0
        %6570 = vmatprep.subr.mxu0 0.0
        %6571 = vmatpush1.msra.mxu0 0.0
        %6572 = vmatprep.subr.mxu0 0.0
        %6573 = vmatpush1.msra.mxu0 0.0
        %6574 = vmatprep.subr.mxu0 0.0
        %6575 = vmatpush1.msra.mxu0 0.0
        %6576 = vmatprep.subr.mxu0 0.0
        %6577 = vmatpush1.msra.mxu0 0.0
        %6578 = vmatprep.subr.mxu0 0.0
        %6579 = vmatpush1.msra.mxu0 0.0
        %6580 = vmatprep.subr.mxu0 0.0
        %6581 = vmatpush1.msra.mxu0 0.0
        %6582 = vmatprep.subr.mxu0 0.0
        %6583 = vmatpush1.msra.mxu0 0.0
        %6584 = vmatprep.subr.mxu0 0.0
        %6585 = vmatpush1.msra.mxu0 0.0
        %6586 = vmatprep.subr.mxu0 0.0
        %6587 = vmatpush1.msra.mxu0 0.0
        %6588 = vmatprep.subr.mxu0 0.0
        %6589 = vmatpush1.msra.mxu0 0.0
        %6590 = vmatprep.subr.mxu0 0.0
        %6591 = vmatpush1.msra.mxu0 0.0
        %6592 = vmatprep.subr.mxu0 0.0
        %6593 = vmatpush1.msra.mxu0 0.0
        %6594 = vmatprep.subr.mxu0 0.0
        %6595 = vmatpush1.msra.mxu0 %v6539
        %6596 = vmatprep.subr.mxu0 0.0
        %6597 = vmatpush2.msra.mxu0 0.0
        %6598 = vmatprep.subr.mxu0 0.0
        %6599 = vmatpush2.msra.mxu0 0.0
        %6600 = vmatprep.subr.mxu0 0.0
        %6601 = vmatpush2.msra.mxu0 0.0
        %6602 = vmatprep.subr.mxu0 0.0
        %6603 = vmatpush2.msra.mxu0 0.0
        %6604 = vmatprep.subr.mxu0 0.0
        %6605 = vmatpush2.msra.mxu0 0.0
        %6606 = vmatprep.subr.mxu0 0.0
        %6607 = vmatpush2.msra.mxu0 0.0
        %6608 = vmatprep.subr.mxu0 0.0
        %6609 = vmatpush2.msra.mxu0 0.0
        %6610 = vmatprep.subr.mxu0 0.0
        %6611 = vmatpush2.msra.mxu0 0.0
        %6612 = vmatprep.subr.mxu0 0.0
        %6613 = vmatpush2.msra.mxu0 0.0
        %6614 = vmatprep.subr.mxu0 0.0
        %6615 = vmatpush2.msra.mxu0 0.0
        %6616 = vmatprep.subr.mxu0 0.0
        %6617 = vmatpush2.msra.mxu0 0.0
        %6618 = vmatprep.subr.mxu0 0.0
        %6619 = vmatpush2.msra.mxu0 0.0
        %6620 = vmatprep.subr.mxu0 0.0
        %6621 = vmatpush2.msra.mxu0 0.0
        %6622 = vmatprep.subr.mxu0 0.0
        %6623 = vmatpush2.msra.mxu0 0.0
        %6624 = vmatprep.subr.mxu0 0.0
        %6625 = vmatpush2.msra.mxu0 0.0
        %6626 = vmatprep.subr.mxu0 0.0
        %6627 = vmatpush2.msra.mxu0 0.0
        %6628 = vmatprep.mubr.f32.mxu0 0.0
        %6629 = vmatmul.mubr.f32.gmra.mxu0 %v6541
        %v6630 = vpop.f32.mrf.mxu0
        %v6631 = vadd.f32 0.0, %v6630
        %v6632 = vpop.f32.mrf.mxu0
        %6633 = vmatprep.mubr.f32.mxu0 0.0
        %6634 = vmatmul.mubr.f32.gmra.mxu0 %v6544
        %v6635 = vpop.f32.mrf.mxu0
        %v6636 = vadd.f32 0.0, %v6635
        %v6637 = vpop.f32.mrf.mxu0
        %6638 = vmatprep.mubr.f32.mxu0 0.0
        %6639 = vmatmul.mubr.f32.gmra.mxu0 %v6547
        %v6640 = vpop.f32.mrf.mxu0
        %v6641 = vadd.f32 0.0, %v6640
        %v6642 = vpop.f32.mrf.mxu0
        %6643 = vmatprep.mubr.f32.mxu0 0.0
        %6644 = vmatmul.mubr.f32.gmra.mxu0 %v6550
        %v6645 = vpop.f32.mrf.mxu0
        %v6646 = vadd.f32 0.0, %v6645
        %v6647 = vpop.f32.mrf.mxu0
        %6648 = vmatprep.mubr.f32.mxu0 0.0
        %6649 = vmatmul.mubr.f32.gmra.mxu0 %v6553
        %v6650 = vpop.f32.mrf.mxu0
        %v6651 = vadd.f32 0.0, %v6650
        %v6652 = vpop.f32.mrf.mxu0
        %6653 = vmatprep.mubr.f32.mxu0 0.0
        %6654 = vmatmul.mubr.f32.gmra.mxu0 %v6556
        %v6655 = vpop.f32.mrf.mxu0
        %v6656 = vadd.f32 0.0, %v6655
        %v6657 = vpop.f32.mrf.mxu0
        %6658 = vmatprep.mubr.f32.mxu0 0.0
        %6659 = vmatmul.mubr.f32.gmra.mxu0 %v6559
        %v6660 = vpop.f32.mrf.mxu0
        %v6661 = vadd.f32 0.0, %v6660
        %v6662 = vpop.f32.mrf.mxu0
        %6663 = vmatprep.mubr.f32.mxu0 0.0
        %6664 = vmatmul.mubr.f32.gmra.mxu0 %v6562
        %v6665 = vpop.f32.mrf.mxu0
        %v6666 = vadd.f32 0.0, %v6665
        %v6667 = vpop.f32.mrf.mxu0
        %6668 = vdwg.mxu0
        %v6669 = vadd.f32 %v6521, %v6631
        %v6670 = vadd.f32 %v6522, %v6636
        %v6671 = vadd.f32 %v6523, %v6641
        %v6672 = vadd.f32 %v6524, %v6646
        %v6673 = vadd.f32 %v6525, %v6651
        %v6674 = vadd.f32 %v6526, %v6656
        %v6675 = vadd.f32 %v6527, %v6661
        %v6676 = vadd.f32 %v6528, %v6666
        %s6677 = scalar_lea.vmem %s352, 48
        %v6678 = vld [vmem:[%s6677] sm:$0xff]
        %v6679 = vld [vmem:[%s6677 + $0x10] sm:$0xff]
        %v6680 = vld [vmem:[%s6677 + $0x20] sm:$0xff]
        %v6681 = vld [vmem:[%s6677 + $0x30] sm:$0xff]
        %v6682 = vld [vmem:[%s6677 + $0x40] sm:$0xff]
        %v6683 = vld [vmem:[%s6677 + $0x50] sm:$0xff]
        %v6684 = vld [vmem:[%s6677 + $0x60] sm:$0xff]
        %v6685 = vld [vmem:[%s6677 + $0x70] sm:$0xff]
        %s6686 = scalar_lea.vmem %s4, 344
        %v6687 = vld [vmem:[%s6686] sm:$0xff]
        %v6689 = vsel %vm382, %v6678, 0
        %v6692 = vsel %vm382, %v6679, 0
        %v6695 = vsel %vm382, %v6680, 0
        %v6698 = vsel %vm382, %v6681, 0
        %v6701 = vsel %vm382, %v6682, 0
        %v6704 = vsel %vm382, %v6683, 0
        %v6707 = vsel %vm382, %v6684, 0
        %v6710 = vsel %vm382, %v6685, 0
        %6712 = vmatprep.subr.mxu0 0.0
        %6713 = vmatpush1.msra.mxu0 0.0
        %6714 = vmatprep.subr.mxu0 0.0
        %6715 = vmatpush1.msra.mxu0 0.0
        %6716 = vmatprep.subr.mxu0 0.0
        %6717 = vmatpush1.msra.mxu0 0.0
        %6718 = vmatprep.subr.mxu0 0.0
        %6719 = vmatpush1.msra.mxu0 0.0
        %6720 = vmatprep.subr.mxu0 0.0
        %6721 = vmatpush1.msra.mxu0 0.0
        %6722 = vmatprep.subr.mxu0 0.0
        %6723 = vmatpush1.msra.mxu0 0.0
        %6724 = vmatprep.subr.mxu0 0.0
        %6725 = vmatpush1.msra.mxu0 0.0
        %6726 = vmatprep.subr.mxu0 0.0
        %6727 = vmatpush1.msra.mxu0 0.0
        %6728 = vmatprep.subr.mxu0 0.0
        %6729 = vmatpush1.msra.mxu0 0.0
        %6730 = vmatprep.subr.mxu0 0.0
        %6731 = vmatpush1.msra.mxu0 0.0
        %6732 = vmatprep.subr.mxu0 0.0
        %6733 = vmatpush1.msra.mxu0 0.0
        %6734 = vmatprep.subr.mxu0 0.0
        %6735 = vmatpush1.msra.mxu0 0.0
        %6736 = vmatprep.subr.mxu0 0.0
        %6737 = vmatpush1.msra.mxu0 0.0
        %6738 = vmatprep.subr.mxu0 0.0
        %6739 = vmatpush1.msra.mxu0 0.0
        %6740 = vmatprep.subr.mxu0 0.0
        %6741 = vmatpush1.msra.mxu0 0.0
        %6742 = vmatprep.subr.mxu0 0.0
        %6743 = vmatpush1.msra.mxu0 %v6687
        %6744 = vmatprep.subr.mxu0 0.0
        %6745 = vmatpush2.msra.mxu0 0.0
        %6746 = vmatprep.subr.mxu0 0.0
        %6747 = vmatpush2.msra.mxu0 0.0
        %6748 = vmatprep.subr.mxu0 0.0
        %6749 = vmatpush2.msra.mxu0 0.0
        %6750 = vmatprep.subr.mxu0 0.0
        %6751 = vmatpush2.msra.mxu0 0.0
        %6752 = vmatprep.subr.mxu0 0.0
        %6753 = vmatpush2.msra.mxu0 0.0
        %6754 = vmatprep.subr.mxu0 0.0
        %6755 = vmatpush2.msra.mxu0 0.0
        %6756 = vmatprep.subr.mxu0 0.0
        %6757 = vmatpush2.msra.mxu0 0.0
        %6758 = vmatprep.subr.mxu0 0.0
        %6759 = vmatpush2.msra.mxu0 0.0
        %6760 = vmatprep.subr.mxu0 0.0
        %6761 = vmatpush2.msra.mxu0 0.0
        %6762 = vmatprep.subr.mxu0 0.0
        %6763 = vmatpush2.msra.mxu0 0.0
        %6764 = vmatprep.subr.mxu0 0.0
        %6765 = vmatpush2.msra.mxu0 0.0
        %6766 = vmatprep.subr.mxu0 0.0
        %6767 = vmatpush2.msra.mxu0 0.0
        %6768 = vmatprep.subr.mxu0 0.0
        %6769 = vmatpush2.msra.mxu0 0.0
        %6770 = vmatprep.subr.mxu0 0.0
        %6771 = vmatpush2.msra.mxu0 0.0
        %6772 = vmatprep.subr.mxu0 0.0
        %6773 = vmatpush2.msra.mxu0 0.0
        %6774 = vmatprep.subr.mxu0 0.0
        %6775 = vmatpush2.msra.mxu0 0.0
        %6776 = vmatprep.mubr.f32.mxu0 0.0
        %6777 = vmatmul.mubr.f32.gmra.mxu0 %v6689
        %v6778 = vpop.f32.mrf.mxu0
        %v6779 = vadd.f32 0.0, %v6778
        %v6780 = vpop.f32.mrf.mxu0
        %6781 = vmatprep.mubr.f32.mxu0 0.0
        %6782 = vmatmul.mubr.f32.gmra.mxu0 %v6692
        %v6783 = vpop.f32.mrf.mxu0
        %v6784 = vadd.f32 0.0, %v6783
        %v6785 = vpop.f32.mrf.mxu0
        %6786 = vmatprep.mubr.f32.mxu0 0.0
        %6787 = vmatmul.mubr.f32.gmra.mxu0 %v6695
        %v6788 = vpop.f32.mrf.mxu0
        %v6789 = vadd.f32 0.0, %v6788
        %v6790 = vpop.f32.mrf.mxu0
        %6791 = vmatprep.mubr.f32.mxu0 0.0
        %6792 = vmatmul.mubr.f32.gmra.mxu0 %v6698
        %v6793 = vpop.f32.mrf.mxu0
        %v6794 = vadd.f32 0.0, %v6793
        %v6795 = vpop.f32.mrf.mxu0
        %6796 = vmatprep.mubr.f32.mxu0 0.0
        %6797 = vmatmul.mubr.f32.gmra.mxu0 %v6701
        %v6798 = vpop.f32.mrf.mxu0
        %v6799 = vadd.f32 0.0, %v6798
        %v6800 = vpop.f32.mrf.mxu0
        %6801 = vmatprep.mubr.f32.mxu0 0.0
        %6802 = vmatmul.mubr.f32.gmra.mxu0 %v6704
        %v6803 = vpop.f32.mrf.mxu0
        %v6804 = vadd.f32 0.0, %v6803
        %v6805 = vpop.f32.mrf.mxu0
        %6806 = vmatprep.mubr.f32.mxu0 0.0
        %6807 = vmatmul.mubr.f32.gmra.mxu0 %v6707
        %v6808 = vpop.f32.mrf.mxu0
        %v6809 = vadd.f32 0.0, %v6808
        %v6810 = vpop.f32.mrf.mxu0
        %6811 = vmatprep.mubr.f32.mxu0 0.0
        %6812 = vmatmul.mubr.f32.gmra.mxu0 %v6710
        %v6813 = vpop.f32.mrf.mxu0
        %v6814 = vadd.f32 0.0, %v6813
        %v6815 = vpop.f32.mrf.mxu0
        %6816 = vdwg.mxu0
        %v6817 = vadd.f32 %v6669, %v6779
        %v6818 = vadd.f32 %v6670, %v6784
        %v6819 = vadd.f32 %v6671, %v6789
        %v6820 = vadd.f32 %v6672, %v6794
        %v6821 = vadd.f32 %v6673, %v6799
        %v6822 = vadd.f32 %v6674, %v6804
        %v6823 = vadd.f32 %v6675, %v6809
        %v6824 = vadd.f32 %v6676, %v6814
        %v6825 = vld [vmem:[%s6529 + $0x1] sm:$0xff]
        %v6826 = vld [vmem:[%s6529 + $0x11] sm:$0xff]
        %v6827 = vld [vmem:[%s6529 + $0x21] sm:$0xff]
        %v6828 = vld [vmem:[%s6529 + $0x31] sm:$0xff]
        %v6829 = vld [vmem:[%s6529 + $0x41] sm:$0xff]
        %v6830 = vld [vmem:[%s6529 + $0x51] sm:$0xff]
        %v6831 = vld [vmem:[%s6529 + $0x61] sm:$0xff]
        %v6832 = vld [vmem:[%s6529 + $0x71] sm:$0xff]
        %s6833 = scalar_lea.vmem %s4, 352
        %v6834 = vld [vmem:[%s6833] sm:$0xff]
        %v6836 = vsel %vm382, %v6825, 0
        %v6839 = vsel %vm382, %v6826, 0
        %v6842 = vsel %vm382, %v6827, 0
        %v6845 = vsel %vm382, %v6828, 0
        %v6848 = vsel %vm382, %v6829, 0
        %v6851 = vsel %vm382, %v6830, 0
        %v6854 = vsel %vm382, %v6831, 0
        %v6857 = vsel %vm382, %v6832, 0
        %6859 = vmatprep.subr.mxu0 0.0
        %6860 = vmatpush1.msra.mxu0 0.0
        %6861 = vmatprep.subr.mxu0 0.0
        %6862 = vmatpush1.msra.mxu0 0.0
        %6863 = vmatprep.subr.mxu0 0.0
        %6864 = vmatpush1.msra.mxu0 0.0
        %6865 = vmatprep.subr.mxu0 0.0
        %6866 = vmatpush1.msra.mxu0 0.0
        %6867 = vmatprep.subr.mxu0 0.0
        %6868 = vmatpush1.msra.mxu0 0.0
        %6869 = vmatprep.subr.mxu0 0.0
        %6870 = vmatpush1.msra.mxu0 0.0
        %6871 = vmatprep.subr.mxu0 0.0
        %6872 = vmatpush1.msra.mxu0 0.0
        %6873 = vmatprep.subr.mxu0 0.0
        %6874 = vmatpush1.msra.mxu0 0.0
        %6875 = vmatprep.subr.mxu0 0.0
        %6876 = vmatpush1.msra.mxu0 0.0
        %6877 = vmatprep.subr.mxu0 0.0
        %6878 = vmatpush1.msra.mxu0 0.0
        %6879 = vmatprep.subr.mxu0 0.0
        %6880 = vmatpush1.msra.mxu0 0.0
        %6881 = vmatprep.subr.mxu0 0.0
        %6882 = vmatpush1.msra.mxu0 0.0
        %6883 = vmatprep.subr.mxu0 0.0
        %6884 = vmatpush1.msra.mxu0 0.0
        %6885 = vmatprep.subr.mxu0 0.0
        %6886 = vmatpush1.msra.mxu0 0.0
        %6887 = vmatprep.subr.mxu0 0.0
        %6888 = vmatpush1.msra.mxu0 0.0
        %6889 = vmatprep.subr.mxu0 0.0
        %6890 = vmatpush1.msra.mxu0 %v6834
        %6891 = vmatprep.subr.mxu0 0.0
        %6892 = vmatpush2.msra.mxu0 0.0
        %6893 = vmatprep.subr.mxu0 0.0
        %6894 = vmatpush2.msra.mxu0 0.0
        %6895 = vmatprep.subr.mxu0 0.0
        %6896 = vmatpush2.msra.mxu0 0.0
        %6897 = vmatprep.subr.mxu0 0.0
        %6898 = vmatpush2.msra.mxu0 0.0
        %6899 = vmatprep.subr.mxu0 0.0
        %6900 = vmatpush2.msra.mxu0 0.0
        %6901 = vmatprep.subr.mxu0 0.0
        %6902 = vmatpush2.msra.mxu0 0.0
        %6903 = vmatprep.subr.mxu0 0.0
        %6904 = vmatpush2.msra.mxu0 0.0
        %6905 = vmatprep.subr.mxu0 0.0
        %6906 = vmatpush2.msra.mxu0 0.0
        %6907 = vmatprep.subr.mxu0 0.0
        %6908 = vmatpush2.msra.mxu0 0.0
        %6909 = vmatprep.subr.mxu0 0.0
        %6910 = vmatpush2.msra.mxu0 0.0
        %6911 = vmatprep.subr.mxu0 0.0
        %6912 = vmatpush2.msra.mxu0 0.0
        %6913 = vmatprep.subr.mxu0 0.0
        %6914 = vmatpush2.msra.mxu0 0.0
        %6915 = vmatprep.subr.mxu0 0.0
        %6916 = vmatpush2.msra.mxu0 0.0
        %6917 = vmatprep.subr.mxu0 0.0
        %6918 = vmatpush2.msra.mxu0 0.0
        %6919 = vmatprep.subr.mxu0 0.0
        %6920 = vmatpush2.msra.mxu0 0.0
        %6921 = vmatprep.subr.mxu0 0.0
        %6922 = vmatpush2.msra.mxu0 0.0
        %6923 = vmatprep.mubr.f32.mxu0 0.0
        %6924 = vmatmul.mubr.f32.gmra.mxu0 %v6836
        %v6925 = vpop.f32.mrf.mxu0
        %v6926 = vadd.f32 0.0, %v6925
        %v6927 = vpop.f32.mrf.mxu0
        %6928 = vmatprep.mubr.f32.mxu0 0.0
        %6929 = vmatmul.mubr.f32.gmra.mxu0 %v6839
        %v6930 = vpop.f32.mrf.mxu0
        %v6931 = vadd.f32 0.0, %v6930
        %v6932 = vpop.f32.mrf.mxu0
        %6933 = vmatprep.mubr.f32.mxu0 0.0
        %6934 = vmatmul.mubr.f32.gmra.mxu0 %v6842
        %v6935 = vpop.f32.mrf.mxu0
        %v6936 = vadd.f32 0.0, %v6935
        %v6937 = vpop.f32.mrf.mxu0
        %6938 = vmatprep.mubr.f32.mxu0 0.0
        %6939 = vmatmul.mubr.f32.gmra.mxu0 %v6845
        %v6940 = vpop.f32.mrf.mxu0
        %v6941 = vadd.f32 0.0, %v6940
        %v6942 = vpop.f32.mrf.mxu0
        %6943 = vmatprep.mubr.f32.mxu0 0.0
        %6944 = vmatmul.mubr.f32.gmra.mxu0 %v6848
        %v6945 = vpop.f32.mrf.mxu0
        %v6946 = vadd.f32 0.0, %v6945
        %v6947 = vpop.f32.mrf.mxu0
        %6948 = vmatprep.mubr.f32.mxu0 0.0
        %6949 = vmatmul.mubr.f32.gmra.mxu0 %v6851
        %v6950 = vpop.f32.mrf.mxu0
        %v6951 = vadd.f32 0.0, %v6950
        %v6952 = vpop.f32.mrf.mxu0
        %6953 = vmatprep.mubr.f32.mxu0 0.0
        %6954 = vmatmul.mubr.f32.gmra.mxu0 %v6854
        %v6955 = vpop.f32.mrf.mxu0
        %v6956 = vadd.f32 0.0, %v6955
        %v6957 = vpop.f32.mrf.mxu0
        %6958 = vmatprep.mubr.f32.mxu0 0.0
        %6959 = vmatmul.mubr.f32.gmra.mxu0 %v6857
        %v6960 = vpop.f32.mrf.mxu0
        %v6961 = vadd.f32 0.0, %v6960
        %v6962 = vpop.f32.mrf.mxu0
        %6963 = vdwg.mxu0
        %v6964 = vadd.f32 %v6817, %v6926
        %v6965 = vadd.f32 %v6818, %v6931
        %v6966 = vadd.f32 %v6819, %v6936
        %v6967 = vadd.f32 %v6820, %v6941
        %v6968 = vadd.f32 %v6821, %v6946
        %v6969 = vadd.f32 %v6822, %v6951
        %v6970 = vadd.f32 %v6823, %v6956
        %v6971 = vadd.f32 %v6824, %v6961
        %v6972 = vld [vmem:[%s6677 + $0x1] sm:$0xff]
        %v6973 = vld [vmem:[%s6677 + $0x11] sm:$0xff]
        %v6974 = vld [vmem:[%s6677 + $0x21] sm:$0xff]
        %v6975 = vld [vmem:[%s6677 + $0x31] sm:$0xff]
        %v6976 = vld [vmem:[%s6677 + $0x41] sm:$0xff]
        %v6977 = vld [vmem:[%s6677 + $0x51] sm:$0xff]
        %v6978 = vld [vmem:[%s6677 + $0x61] sm:$0xff]
        %v6979 = vld [vmem:[%s6677 + $0x71] sm:$0xff]
        %s6980 = scalar_lea.vmem %s4, 360
        %v6981 = vld [vmem:[%s6980] sm:$0xff]
        %v6983 = vsel %vm382, %v6972, 0
        %v6986 = vsel %vm382, %v6973, 0
        %v6989 = vsel %vm382, %v6974, 0
        %v6992 = vsel %vm382, %v6975, 0
        %v6995 = vsel %vm382, %v6976, 0
        %v6998 = vsel %vm382, %v6977, 0
        %v7001 = vsel %vm382, %v6978, 0
        %v7004 = vsel %vm382, %v6979, 0
        %7006 = vmatprep.subr.mxu0 0.0
        %7007 = vmatpush1.msra.mxu0 0.0
        %7008 = vmatprep.subr.mxu0 0.0
        %7009 = vmatpush1.msra.mxu0 0.0
        %7010 = vmatprep.subr.mxu0 0.0
        %7011 = vmatpush1.msra.mxu0 0.0
        %7012 = vmatprep.subr.mxu0 0.0
        %7013 = vmatpush1.msra.mxu0 0.0
        %7014 = vmatprep.subr.mxu0 0.0
        %7015 = vmatpush1.msra.mxu0 0.0
        %7016 = vmatprep.subr.mxu0 0.0
        %7017 = vmatpush1.msra.mxu0 0.0
        %7018 = vmatprep.subr.mxu0 0.0
        %7019 = vmatpush1.msra.mxu0 0.0
        %7020 = vmatprep.subr.mxu0 0.0
        %7021 = vmatpush1.msra.mxu0 0.0
        %7022 = vmatprep.subr.mxu0 0.0
        %7023 = vmatpush1.msra.mxu0 0.0
        %7024 = vmatprep.subr.mxu0 0.0
        %7025 = vmatpush1.msra.mxu0 0.0
        %7026 = vmatprep.subr.mxu0 0.0
        %7027 = vmatpush1.msra.mxu0 0.0
        %7028 = vmatprep.subr.mxu0 0.0
        %7029 = vmatpush1.msra.mxu0 0.0
        %7030 = vmatprep.subr.mxu0 0.0
        %7031 = vmatpush1.msra.mxu0 0.0
        %7032 = vmatprep.subr.mxu0 0.0
        %7033 = vmatpush1.msra.mxu0 0.0
        %7034 = vmatprep.subr.mxu0 0.0
        %7035 = vmatpush1.msra.mxu0 0.0
        %7036 = vmatprep.subr.mxu0 0.0
        %7037 = vmatpush1.msra.mxu0 %v6981
        %7038 = vmatprep.subr.mxu0 0.0
        %7039 = vmatpush2.msra.mxu0 0.0
        %7040 = vmatprep.subr.mxu0 0.0
        %7041 = vmatpush2.msra.mxu0 0.0
        %7042 = vmatprep.subr.mxu0 0.0
        %7043 = vmatpush2.msra.mxu0 0.0
        %7044 = vmatprep.subr.mxu0 0.0
        %7045 = vmatpush2.msra.mxu0 0.0
        %7046 = vmatprep.subr.mxu0 0.0
        %7047 = vmatpush2.msra.mxu0 0.0
        %7048 = vmatprep.subr.mxu0 0.0
        %7049 = vmatpush2.msra.mxu0 0.0
        %7050 = vmatprep.subr.mxu0 0.0
        %7051 = vmatpush2.msra.mxu0 0.0
        %7052 = vmatprep.subr.mxu0 0.0
        %7053 = vmatpush2.msra.mxu0 0.0
        %7054 = vmatprep.subr.mxu0 0.0
        %7055 = vmatpush2.msra.mxu0 0.0
        %7056 = vmatprep.subr.mxu0 0.0
        %7057 = vmatpush2.msra.mxu0 0.0
        %7058 = vmatprep.subr.mxu0 0.0
        %7059 = vmatpush2.msra.mxu0 0.0
        %7060 = vmatprep.subr.mxu0 0.0
        %7061 = vmatpush2.msra.mxu0 0.0
        %7062 = vmatprep.subr.mxu0 0.0
        %7063 = vmatpush2.msra.mxu0 0.0
        %7064 = vmatprep.subr.mxu0 0.0
        %7065 = vmatpush2.msra.mxu0 0.0
        %7066 = vmatprep.subr.mxu0 0.0
        %7067 = vmatpush2.msra.mxu0 0.0
        %7068 = vmatprep.subr.mxu0 0.0
        %7069 = vmatpush2.msra.mxu0 0.0
        %7070 = vmatprep.mubr.f32.mxu0 0.0
        %7071 = vmatmul.mubr.f32.gmra.mxu0 %v6983
        %v7072 = vpop.f32.mrf.mxu0
        %v7073 = vadd.f32 0.0, %v7072
        %v7074 = vpop.f32.mrf.mxu0
        %7075 = vmatprep.mubr.f32.mxu0 0.0
        %7076 = vmatmul.mubr.f32.gmra.mxu0 %v6986
        %v7077 = vpop.f32.mrf.mxu0
        %v7078 = vadd.f32 0.0, %v7077
        %v7079 = vpop.f32.mrf.mxu0
        %7080 = vmatprep.mubr.f32.mxu0 0.0
        %7081 = vmatmul.mubr.f32.gmra.mxu0 %v6989
        %v7082 = vpop.f32.mrf.mxu0
        %v7083 = vadd.f32 0.0, %v7082
        %v7084 = vpop.f32.mrf.mxu0
        %7085 = vmatprep.mubr.f32.mxu0 0.0
        %7086 = vmatmul.mubr.f32.gmra.mxu0 %v6992
        %v7087 = vpop.f32.mrf.mxu0
        %v7088 = vadd.f32 0.0, %v7087
        %v7089 = vpop.f32.mrf.mxu0
        %7090 = vmatprep.mubr.f32.mxu0 0.0
        %7091 = vmatmul.mubr.f32.gmra.mxu0 %v6995
        %v7092 = vpop.f32.mrf.mxu0
        %v7093 = vadd.f32 0.0, %v7092
        %v7094 = vpop.f32.mrf.mxu0
        %7095 = vmatprep.mubr.f32.mxu0 0.0
        %7096 = vmatmul.mubr.f32.gmra.mxu0 %v6998
        %v7097 = vpop.f32.mrf.mxu0
        %v7098 = vadd.f32 0.0, %v7097
        %v7099 = vpop.f32.mrf.mxu0
        %7100 = vmatprep.mubr.f32.mxu0 0.0
        %7101 = vmatmul.mubr.f32.gmra.mxu0 %v7001
        %v7102 = vpop.f32.mrf.mxu0
        %v7103 = vadd.f32 0.0, %v7102
        %v7104 = vpop.f32.mrf.mxu0
        %7105 = vmatprep.mubr.f32.mxu0 0.0
        %7106 = vmatmul.mubr.f32.gmra.mxu0 %v7004
        %v7107 = vpop.f32.mrf.mxu0
        %v7108 = vadd.f32 0.0, %v7107
        %v7109 = vpop.f32.mrf.mxu0
        %7110 = vdwg.mxu0
        %v7111 = vadd.f32 %v6964, %v7073
        %v7112 = vadd.f32 %v6965, %v7078
        %v7113 = vadd.f32 %v6966, %v7083
        %v7114 = vadd.f32 %v6967, %v7088
        %v7115 = vadd.f32 %v6968, %v7093
        %v7116 = vadd.f32 %v6969, %v7098
        %v7117 = vadd.f32 %v6970, %v7103
        %v7118 = vadd.f32 %v6971, %v7108
        %v7119 = vld [vmem:[%s6529 + $0x2] sm:$0xff]
        %v7120 = vld [vmem:[%s6529 + $0x12] sm:$0xff]
        %v7121 = vld [vmem:[%s6529 + $0x22] sm:$0xff]
        %v7122 = vld [vmem:[%s6529 + $0x32] sm:$0xff]
        %v7123 = vld [vmem:[%s6529 + $0x42] sm:$0xff]
        %v7124 = vld [vmem:[%s6529 + $0x52] sm:$0xff]
        %v7125 = vld [vmem:[%s6529 + $0x62] sm:$0xff]
        %v7126 = vld [vmem:[%s6529 + $0x72] sm:$0xff]
        %s7127 = scalar_lea.vmem %s4, 368
        %v7128 = vld [vmem:[%s7127] sm:$0xff]
        %v7130 = vsel %vm382, %v7119, 0
        %v7133 = vsel %vm382, %v7120, 0
        %v7136 = vsel %vm382, %v7121, 0
        %v7139 = vsel %vm382, %v7122, 0
        %v7142 = vsel %vm382, %v7123, 0
        %v7145 = vsel %vm382, %v7124, 0
        %v7148 = vsel %vm382, %v7125, 0
        %v7151 = vsel %vm382, %v7126, 0
        %7153 = vmatprep.subr.mxu0 0.0
        %7154 = vmatpush1.msra.mxu0 0.0
        %7155 = vmatprep.subr.mxu0 0.0
        %7156 = vmatpush1.msra.mxu0 0.0
        %7157 = vmatprep.subr.mxu0 0.0
        %7158 = vmatpush1.msra.mxu0 0.0
        %7159 = vmatprep.subr.mxu0 0.0
        %7160 = vmatpush1.msra.mxu0 0.0
        %7161 = vmatprep.subr.mxu0 0.0
        %7162 = vmatpush1.msra.mxu0 0.0
        %7163 = vmatprep.subr.mxu0 0.0
        %7164 = vmatpush1.msra.mxu0 0.0
        %7165 = vmatprep.subr.mxu0 0.0
        %7166 = vmatpush1.msra.mxu0 0.0
        %7167 = vmatprep.subr.mxu0 0.0
        %7168 = vmatpush1.msra.mxu0 0.0
        %7169 = vmatprep.subr.mxu0 0.0
        %7170 = vmatpush1.msra.mxu0 0.0
        %7171 = vmatprep.subr.mxu0 0.0
        %7172 = vmatpush1.msra.mxu0 0.0
        %7173 = vmatprep.subr.mxu0 0.0
        %7174 = vmatpush1.msra.mxu0 0.0
        %7175 = vmatprep.subr.mxu0 0.0
        %7176 = vmatpush1.msra.mxu0 0.0
        %7177 = vmatprep.subr.mxu0 0.0
        %7178 = vmatpush1.msra.mxu0 0.0
        %7179 = vmatprep.subr.mxu0 0.0
        %7180 = vmatpush1.msra.mxu0 0.0
        %7181 = vmatprep.subr.mxu0 0.0
        %7182 = vmatpush1.msra.mxu0 0.0
        %7183 = vmatprep.subr.mxu0 0.0
        %7184 = vmatpush1.msra.mxu0 %v7128
        %7185 = vmatprep.subr.mxu0 0.0
        %7186 = vmatpush2.msra.mxu0 0.0
        %7187 = vmatprep.subr.mxu0 0.0
        %7188 = vmatpush2.msra.mxu0 0.0
        %7189 = vmatprep.subr.mxu0 0.0
        %7190 = vmatpush2.msra.mxu0 0.0
        %7191 = vmatprep.subr.mxu0 0.0
        %7192 = vmatpush2.msra.mxu0 0.0
        %7193 = vmatprep.subr.mxu0 0.0
        %7194 = vmatpush2.msra.mxu0 0.0
        %7195 = vmatprep.subr.mxu0 0.0
        %7196 = vmatpush2.msra.mxu0 0.0
        %7197 = vmatprep.subr.mxu0 0.0
        %7198 = vmatpush2.msra.mxu0 0.0
        %7199 = vmatprep.subr.mxu0 0.0
        %7200 = vmatpush2.msra.mxu0 0.0
        %7201 = vmatprep.subr.mxu0 0.0
        %7202 = vmatpush2.msra.mxu0 0.0
        %7203 = vmatprep.subr.mxu0 0.0
        %7204 = vmatpush2.msra.mxu0 0.0
        %7205 = vmatprep.subr.mxu0 0.0
        %7206 = vmatpush2.msra.mxu0 0.0
        %7207 = vmatprep.subr.mxu0 0.0
        %7208 = vmatpush2.msra.mxu0 0.0
        %7209 = vmatprep.subr.mxu0 0.0
        %7210 = vmatpush2.msra.mxu0 0.0
        %7211 = vmatprep.subr.mxu0 0.0
        %7212 = vmatpush2.msra.mxu0 0.0
        %7213 = vmatprep.subr.mxu0 0.0
        %7214 = vmatpush2.msra.mxu0 0.0
        %7215 = vmatprep.subr.mxu0 0.0
        %7216 = vmatpush2.msra.mxu0 0.0
        %7217 = vmatprep.mubr.f32.mxu0 0.0
        %7218 = vmatmul.mubr.f32.gmra.mxu0 %v7130
        %v7219 = vpop.f32.mrf.mxu0
        %v7220 = vadd.f32 0.0, %v7219
        %v7221 = vpop.f32.mrf.mxu0
        %7222 = vmatprep.mubr.f32.mxu0 0.0
        %7223 = vmatmul.mubr.f32.gmra.mxu0 %v7133
        %v7224 = vpop.f32.mrf.mxu0
        %v7225 = vadd.f32 0.0, %v7224
        %v7226 = vpop.f32.mrf.mxu0
        %7227 = vmatprep.mubr.f32.mxu0 0.0
        %7228 = vmatmul.mubr.f32.gmra.mxu0 %v7136
        %v7229 = vpop.f32.mrf.mxu0
        %v7230 = vadd.f32 0.0, %v7229
        %v7231 = vpop.f32.mrf.mxu0
        %7232 = vmatprep.mubr.f32.mxu0 0.0
        %7233 = vmatmul.mubr.f32.gmra.mxu0 %v7139
        %v7234 = vpop.f32.mrf.mxu0
        %v7235 = vadd.f32 0.0, %v7234
        %v7236 = vpop.f32.mrf.mxu0
        %7237 = vmatprep.mubr.f32.mxu0 0.0
        %7238 = vmatmul.mubr.f32.gmra.mxu0 %v7142
        %v7239 = vpop.f32.mrf.mxu0
        %v7240 = vadd.f32 0.0, %v7239
        %v7241 = vpop.f32.mrf.mxu0
        %7242 = vmatprep.mubr.f32.mxu0 0.0
        %7243 = vmatmul.mubr.f32.gmra.mxu0 %v7145
        %v7244 = vpop.f32.mrf.mxu0
        %v7245 = vadd.f32 0.0, %v7244
        %v7246 = vpop.f32.mrf.mxu0
        %7247 = vmatprep.mubr.f32.mxu0 0.0
        %7248 = vmatmul.mubr.f32.gmra.mxu0 %v7148
        %v7249 = vpop.f32.mrf.mxu0
        %v7250 = vadd.f32 0.0, %v7249
        %v7251 = vpop.f32.mrf.mxu0
        %7252 = vmatprep.mubr.f32.mxu0 0.0
        %7253 = vmatmul.mubr.f32.gmra.mxu0 %v7151
        %v7254 = vpop.f32.mrf.mxu0
        %v7255 = vadd.f32 0.0, %v7254
        %v7256 = vpop.f32.mrf.mxu0
        %7257 = vdwg.mxu0
        %v7258 = vadd.f32 %v7111, %v7220
        %v7259 = vadd.f32 %v7112, %v7225
        %v7260 = vadd.f32 %v7113, %v7230
        %v7261 = vadd.f32 %v7114, %v7235
        %v7262 = vadd.f32 %v7115, %v7240
        %v7263 = vadd.f32 %v7116, %v7245
        %v7264 = vadd.f32 %v7117, %v7250
        %v7265 = vadd.f32 %v7118, %v7255
        %v7266 = vld [vmem:[%s6677 + $0x2] sm:$0xff]
        %v7267 = vld [vmem:[%s6677 + $0x12] sm:$0xff]
        %v7268 = vld [vmem:[%s6677 + $0x22] sm:$0xff]
        %v7269 = vld [vmem:[%s6677 + $0x32] sm:$0xff]
        %v7270 = vld [vmem:[%s6677 + $0x42] sm:$0xff]
        %v7271 = vld [vmem:[%s6677 + $0x52] sm:$0xff]
        %v7272 = vld [vmem:[%s6677 + $0x62] sm:$0xff]
        %v7273 = vld [vmem:[%s6677 + $0x72] sm:$0xff]
        %s7274 = scalar_lea.vmem %s4, 376
        %v7275 = vld [vmem:[%s7274] sm:$0xff]
        %v7277 = vsel %vm382, %v7266, 0
        %v7280 = vsel %vm382, %v7267, 0
        %v7283 = vsel %vm382, %v7268, 0
        %v7286 = vsel %vm382, %v7269, 0
        %v7289 = vsel %vm382, %v7270, 0
        %v7292 = vsel %vm382, %v7271, 0
        %v7295 = vsel %vm382, %v7272, 0
        %v7298 = vsel %vm382, %v7273, 0
        %7300 = vmatprep.subr.mxu0 0.0
        %7301 = vmatpush1.msra.mxu0 0.0
        %7302 = vmatprep.subr.mxu0 0.0
        %7303 = vmatpush1.msra.mxu0 0.0
        %7304 = vmatprep.subr.mxu0 0.0
        %7305 = vmatpush1.msra.mxu0 0.0
        %7306 = vmatprep.subr.mxu0 0.0
        %7307 = vmatpush1.msra.mxu0 0.0
        %7308 = vmatprep.subr.mxu0 0.0
        %7309 = vmatpush1.msra.mxu0 0.0
        %7310 = vmatprep.subr.mxu0 0.0
        %7311 = vmatpush1.msra.mxu0 0.0
        %7312 = vmatprep.subr.mxu0 0.0
        %7313 = vmatpush1.msra.mxu0 0.0
        %7314 = vmatprep.subr.mxu0 0.0
        %7315 = vmatpush1.msra.mxu0 0.0
        %7316 = vmatprep.subr.mxu0 0.0
        %7317 = vmatpush1.msra.mxu0 0.0
        %7318 = vmatprep.subr.mxu0 0.0
        %7319 = vmatpush1.msra.mxu0 0.0
        %7320 = vmatprep.subr.mxu0 0.0
        %7321 = vmatpush1.msra.mxu0 0.0
        %7322 = vmatprep.subr.mxu0 0.0
        %7323 = vmatpush1.msra.mxu0 0.0
        %7324 = vmatprep.subr.mxu0 0.0
        %7325 = vmatpush1.msra.mxu0 0.0
        %7326 = vmatprep.subr.mxu0 0.0
        %7327 = vmatpush1.msra.mxu0 0.0
        %7328 = vmatprep.subr.mxu0 0.0
        %7329 = vmatpush1.msra.mxu0 0.0
        %7330 = vmatprep.subr.mxu0 0.0
        %7331 = vmatpush1.msra.mxu0 %v7275
        %7332 = vmatprep.subr.mxu0 0.0
        %7333 = vmatpush2.msra.mxu0 0.0
        %7334 = vmatprep.subr.mxu0 0.0
        %7335 = vmatpush2.msra.mxu0 0.0
        %7336 = vmatprep.subr.mxu0 0.0
        %7337 = vmatpush2.msra.mxu0 0.0
        %7338 = vmatprep.subr.mxu0 0.0
        %7339 = vmatpush2.msra.mxu0 0.0
        %7340 = vmatprep.subr.mxu0 0.0
        %7341 = vmatpush2.msra.mxu0 0.0
        %7342 = vmatprep.subr.mxu0 0.0
        %7343 = vmatpush2.msra.mxu0 0.0
        %7344 = vmatprep.subr.mxu0 0.0
        %7345 = vmatpush2.msra.mxu0 0.0
        %7346 = vmatprep.subr.mxu0 0.0
        %7347 = vmatpush2.msra.mxu0 0.0
        %7348 = vmatprep.subr.mxu0 0.0
        %7349 = vmatpush2.msra.mxu0 0.0
        %7350 = vmatprep.subr.mxu0 0.0
        %7351 = vmatpush2.msra.mxu0 0.0
        %7352 = vmatprep.subr.mxu0 0.0
        %7353 = vmatpush2.msra.mxu0 0.0
        %7354 = vmatprep.subr.mxu0 0.0
        %7355 = vmatpush2.msra.mxu0 0.0
        %7356 = vmatprep.subr.mxu0 0.0
        %7357 = vmatpush2.msra.mxu0 0.0
        %7358 = vmatprep.subr.mxu0 0.0
        %7359 = vmatpush2.msra.mxu0 0.0
        %7360 = vmatprep.subr.mxu0 0.0
        %7361 = vmatpush2.msra.mxu0 0.0
        %7362 = vmatprep.subr.mxu0 0.0
        %7363 = vmatpush2.msra.mxu0 0.0
        %7364 = vmatprep.mubr.f32.mxu0 0.0
        %7365 = vmatmul.mubr.f32.gmra.mxu0 %v7277
        %v7366 = vpop.f32.mrf.mxu0
        %v7367 = vadd.f32 0.0, %v7366
        %v7368 = vpop.f32.mrf.mxu0
        %7369 = vmatprep.mubr.f32.mxu0 0.0
        %7370 = vmatmul.mubr.f32.gmra.mxu0 %v7280
        %v7371 = vpop.f32.mrf.mxu0
        %v7372 = vadd.f32 0.0, %v7371
        %v7373 = vpop.f32.mrf.mxu0
        %7374 = vmatprep.mubr.f32.mxu0 0.0
        %7375 = vmatmul.mubr.f32.gmra.mxu0 %v7283
        %v7376 = vpop.f32.mrf.mxu0
        %v7377 = vadd.f32 0.0, %v7376
        %v7378 = vpop.f32.mrf.mxu0
        %7379 = vmatprep.mubr.f32.mxu0 0.0
        %7380 = vmatmul.mubr.f32.gmra.mxu0 %v7286
        %v7381 = vpop.f32.mrf.mxu0
        %v7382 = vadd.f32 0.0, %v7381
        %v7383 = vpop.f32.mrf.mxu0
        %7384 = vmatprep.mubr.f32.mxu0 0.0
        %7385 = vmatmul.mubr.f32.gmra.mxu0 %v7289
        %v7386 = vpop.f32.mrf.mxu0
        %v7387 = vadd.f32 0.0, %v7386
        %v7388 = vpop.f32.mrf.mxu0
        %7389 = vmatprep.mubr.f32.mxu0 0.0
        %7390 = vmatmul.mubr.f32.gmra.mxu0 %v7292
        %v7391 = vpop.f32.mrf.mxu0
        %v7392 = vadd.f32 0.0, %v7391
        %v7393 = vpop.f32.mrf.mxu0
        %7394 = vmatprep.mubr.f32.mxu0 0.0
        %7395 = vmatmul.mubr.f32.gmra.mxu0 %v7295
        %v7396 = vpop.f32.mrf.mxu0
        %v7397 = vadd.f32 0.0, %v7396
        %v7398 = vpop.f32.mrf.mxu0
        %7399 = vmatprep.mubr.f32.mxu0 0.0
        %7400 = vmatmul.mubr.f32.gmra.mxu0 %v7298
        %v7401 = vpop.f32.mrf.mxu0
        %v7402 = vadd.f32 0.0, %v7401
        %v7403 = vpop.f32.mrf.mxu0
        %7404 = vdwg.mxu0
        %v7405 = vadd.f32 %v7258, %v7367
        %v7406 = vadd.f32 %v7259, %v7372
        %v7407 = vadd.f32 %v7260, %v7377
        %v7408 = vadd.f32 %v7261, %v7382
        %v7409 = vadd.f32 %v7262, %v7387
        %v7410 = vadd.f32 %v7263, %v7392
        %v7411 = vadd.f32 %v7264, %v7397
        %v7412 = vadd.f32 %v7265, %v7402
        %v7413 = vld [vmem:[%s6529 + $0x3] sm:$0xff]
        %v7414 = vld [vmem:[%s6529 + $0x13] sm:$0xff]
        %v7415 = vld [vmem:[%s6529 + $0x23] sm:$0xff]
        %v7416 = vld [vmem:[%s6529 + $0x33] sm:$0xff]
        %v7417 = vld [vmem:[%s6529 + $0x43] sm:$0xff]
        %v7418 = vld [vmem:[%s6529 + $0x53] sm:$0xff]
        %v7419 = vld [vmem:[%s6529 + $0x63] sm:$0xff]
        %v7420 = vld [vmem:[%s6529 + $0x73] sm:$0xff]
        %s7421 = scalar_lea.vmem %s4, 384
        %v7422 = vld [vmem:[%s7421] sm:$0xff]
        %v7424 = vsel %vm382, %v7413, 0
        %v7427 = vsel %vm382, %v7414, 0
        %v7430 = vsel %vm382, %v7415, 0
        %v7433 = vsel %vm382, %v7416, 0
        %v7436 = vsel %vm382, %v7417, 0
        %v7439 = vsel %vm382, %v7418, 0
        %v7442 = vsel %vm382, %v7419, 0
        %v7445 = vsel %vm382, %v7420, 0
        %7447 = vmatprep.subr.mxu0 0.0
        %7448 = vmatpush1.msra.mxu0 0.0
        %7449 = vmatprep.subr.mxu0 0.0
        %7450 = vmatpush1.msra.mxu0 0.0
        %7451 = vmatprep.subr.mxu0 0.0
        %7452 = vmatpush1.msra.mxu0 0.0
        %7453 = vmatprep.subr.mxu0 0.0
        %7454 = vmatpush1.msra.mxu0 0.0
        %7455 = vmatprep.subr.mxu0 0.0
        %7456 = vmatpush1.msra.mxu0 0.0
        %7457 = vmatprep.subr.mxu0 0.0
        %7458 = vmatpush1.msra.mxu0 0.0
        %7459 = vmatprep.subr.mxu0 0.0
        %7460 = vmatpush1.msra.mxu0 0.0
        %7461 = vmatprep.subr.mxu0 0.0
        %7462 = vmatpush1.msra.mxu0 0.0
        %7463 = vmatprep.subr.mxu0 0.0
        %7464 = vmatpush1.msra.mxu0 0.0
        %7465 = vmatprep.subr.mxu0 0.0
        %7466 = vmatpush1.msra.mxu0 0.0
        %7467 = vmatprep.subr.mxu0 0.0
        %7468 = vmatpush1.msra.mxu0 0.0
        %7469 = vmatprep.subr.mxu0 0.0
        %7470 = vmatpush1.msra.mxu0 0.0
        %7471 = vmatprep.subr.mxu0 0.0
        %7472 = vmatpush1.msra.mxu0 0.0
        %7473 = vmatprep.subr.mxu0 0.0
        %7474 = vmatpush1.msra.mxu0 0.0
        %7475 = vmatprep.subr.mxu0 0.0
        %7476 = vmatpush1.msra.mxu0 0.0
        %7477 = vmatprep.subr.mxu0 0.0
        %7478 = vmatpush1.msra.mxu0 %v7422
        %7479 = vmatprep.subr.mxu0 0.0
        %7480 = vmatpush2.msra.mxu0 0.0
        %7481 = vmatprep.subr.mxu0 0.0
        %7482 = vmatpush2.msra.mxu0 0.0
        %7483 = vmatprep.subr.mxu0 0.0
        %7484 = vmatpush2.msra.mxu0 0.0
        %7485 = vmatprep.subr.mxu0 0.0
        %7486 = vmatpush2.msra.mxu0 0.0
        %7487 = vmatprep.subr.mxu0 0.0
        %7488 = vmatpush2.msra.mxu0 0.0
        %7489 = vmatprep.subr.mxu0 0.0
        %7490 = vmatpush2.msra.mxu0 0.0
        %7491 = vmatprep.subr.mxu0 0.0
        %7492 = vmatpush2.msra.mxu0 0.0
        %7493 = vmatprep.subr.mxu0 0.0
        %7494 = vmatpush2.msra.mxu0 0.0
        %7495 = vmatprep.subr.mxu0 0.0
        %7496 = vmatpush2.msra.mxu0 0.0
        %7497 = vmatprep.subr.mxu0 0.0
        %7498 = vmatpush2.msra.mxu0 0.0
        %7499 = vmatprep.subr.mxu0 0.0
        %7500 = vmatpush2.msra.mxu0 0.0
        %7501 = vmatprep.subr.mxu0 0.0
        %7502 = vmatpush2.msra.mxu0 0.0
        %7503 = vmatprep.subr.mxu0 0.0
        %7504 = vmatpush2.msra.mxu0 0.0
        %7505 = vmatprep.subr.mxu0 0.0
        %7506 = vmatpush2.msra.mxu0 0.0
        %7507 = vmatprep.subr.mxu0 0.0
        %7508 = vmatpush2.msra.mxu0 0.0
        %7509 = vmatprep.subr.mxu0 0.0
        %7510 = vmatpush2.msra.mxu0 0.0
        %7511 = vmatprep.mubr.f32.mxu0 0.0
        %7512 = vmatmul.mubr.f32.gmra.mxu0 %v7424
        %v7513 = vpop.f32.mrf.mxu0
        %v7514 = vadd.f32 0.0, %v7513
        %v7515 = vpop.f32.mrf.mxu0
        %7516 = vmatprep.mubr.f32.mxu0 0.0
        %7517 = vmatmul.mubr.f32.gmra.mxu0 %v7427
        %v7518 = vpop.f32.mrf.mxu0
        %v7519 = vadd.f32 0.0, %v7518
        %v7520 = vpop.f32.mrf.mxu0
        %7521 = vmatprep.mubr.f32.mxu0 0.0
        %7522 = vmatmul.mubr.f32.gmra.mxu0 %v7430
        %v7523 = vpop.f32.mrf.mxu0
        %v7524 = vadd.f32 0.0, %v7523
        %v7525 = vpop.f32.mrf.mxu0
        %7526 = vmatprep.mubr.f32.mxu0 0.0
        %7527 = vmatmul.mubr.f32.gmra.mxu0 %v7433
        %v7528 = vpop.f32.mrf.mxu0
        %v7529 = vadd.f32 0.0, %v7528
        %v7530 = vpop.f32.mrf.mxu0
        %7531 = vmatprep.mubr.f32.mxu0 0.0
        %7532 = vmatmul.mubr.f32.gmra.mxu0 %v7436
        %v7533 = vpop.f32.mrf.mxu0
        %v7534 = vadd.f32 0.0, %v7533
        %v7535 = vpop.f32.mrf.mxu0
        %7536 = vmatprep.mubr.f32.mxu0 0.0
        %7537 = vmatmul.mubr.f32.gmra.mxu0 %v7439
        %v7538 = vpop.f32.mrf.mxu0
        %v7539 = vadd.f32 0.0, %v7538
        %v7540 = vpop.f32.mrf.mxu0
        %7541 = vmatprep.mubr.f32.mxu0 0.0
        %7542 = vmatmul.mubr.f32.gmra.mxu0 %v7442
        %v7543 = vpop.f32.mrf.mxu0
        %v7544 = vadd.f32 0.0, %v7543
        %v7545 = vpop.f32.mrf.mxu0
        %7546 = vmatprep.mubr.f32.mxu0 0.0
        %7547 = vmatmul.mubr.f32.gmra.mxu0 %v7445
        %v7548 = vpop.f32.mrf.mxu0
        %v7549 = vadd.f32 0.0, %v7548
        %v7550 = vpop.f32.mrf.mxu0
        %7551 = vdwg.mxu0
        %v7552 = vadd.f32 %v7405, %v7514
        %v7553 = vadd.f32 %v7406, %v7519
        %v7554 = vadd.f32 %v7407, %v7524
        %v7555 = vadd.f32 %v7408, %v7529
        %v7556 = vadd.f32 %v7409, %v7534
        %v7557 = vadd.f32 %v7410, %v7539
        %v7558 = vadd.f32 %v7411, %v7544
        %v7559 = vadd.f32 %v7412, %v7549
        %v7560 = vld [vmem:[%s5] sm:$0x1]
        %v7562 = vlaneseq
        %v7563 = vshrl.u32 %v7562, 7
        %v7564 = vsub.s32 0, %v7563
        %v7565 = vrot.slane %v7560, %v7564
        %v7567 = vadd.f32 %v7552, %v7565
        %v7568 = vadd.f32 %v7553, %v7565
        %v7569 = vadd.f32 %v7554, %v7565
        %v7570 = vadd.f32 %v7555, %v7565
        %v7571 = vadd.f32 %v7556, %v7565
        %v7572 = vadd.f32 %v7557, %v7565
        %v7573 = vadd.f32 %v7558, %v7565
        %v7574 = vadd.f32 %v7559, %v7565
        %v7575 = vmax.f32 %v7567, 0.0
        %v7576 = vmax.f32 %v7568, 0.0
        %v7577 = vmax.f32 %v7569, 0.0
        %v7578 = vmax.f32 %v7570, 0.0
        %v7579 = vmax.f32 %v7571, 0.0
        %v7580 = vmax.f32 %v7572, 0.0
        %v7581 = vmax.f32 %v7573, 0.0
        %v7582 = vmax.f32 %v7574, 0.0
        %v7583 = vld [vmem:[%s6] sm:$0xff]
        %v7584 = vld [vmem:[%s6 + $0x8] sm:$0xff]
        %v7585 = vld [vmem:[%s6 + $0x10] sm:$0xff]
        %v7586 = vld [vmem:[%s6 + $0x18] sm:$0xff]
        %v7587 = vld [vmem:[%s6 + $0x20] sm:$0xff]
        %v7588 = vld [vmem:[%s6 + $0x28] sm:$0xff]
        %v7589 = vld [vmem:[%s6 + $0x30] sm:$0xff]
        %v7590 = vld [vmem:[%s6 + $0x38] sm:$0xff]
        %v7591 = vld [vmem:[%s6 + $0x40] sm:$0xff]
        %v7592 = vld [vmem:[%s6 + $0x48] sm:$0xff]
        %v7593 = vld [vmem:[%s6 + $0x50] sm:$0xff]
        %v7594 = vld [vmem:[%s6 + $0x58] sm:$0xff]
        %v7595 = vld [vmem:[%s6 + $0x60] sm:$0xff]
        %v7596 = vld [vmem:[%s6 + $0x68] sm:$0xff]
        %v7597 = vld [vmem:[%s6 + $0x70] sm:$0xff]
        %v7598 = vld [vmem:[%s6 + $0x78] sm:$0xff]
        %v7599 = vld [vmem:[%s6 + $0x80] sm:$0xff]
        %v7600 = vld [vmem:[%s6 + $0x88] sm:$0xff]
        %v7601 = vld [vmem:[%s6 + $0x90] sm:$0xff]
        %v7602 = vld [vmem:[%s6 + $0x98] sm:$0xff]
        %v7603 = vld [vmem:[%s6 + $0xa0] sm:$0xff]
        %v7604 = vld [vmem:[%s6 + $0xa8] sm:$0xff]
        %v7605 = vld [vmem:[%s6 + $0xb0] sm:$0xff]
        %v7606 = vld [vmem:[%s6 + $0xb8] sm:$0xff]
        %v7607 = vld [vmem:[%s6 + $0xc0] sm:$0xff]
        %v7608 = vld [vmem:[%s6 + $0xc8] sm:$0xff]
        %v7609 = vld [vmem:[%s6 + $0xd0] sm:$0xff]
        %v7610 = vld [vmem:[%s6 + $0xd8] sm:$0xff]
        %v7611 = vld [vmem:[%s6 + $0xe0] sm:$0xff]
        %v7612 = vld [vmem:[%s6 + $0xe8] sm:$0xff]
        %v7613 = vld [vmem:[%s6 + $0xf0] sm:$0xff]
        %v7614 = vld [vmem:[%s6 + $0xf8] sm:$0xff]
        %v7615 = vld [vmem:[%s6 + $0x100] sm:$0xff]
        %v7616 = vld [vmem:[%s6 + $0x108] sm:$0xff]
        %v7617 = vld [vmem:[%s6 + $0x110] sm:$0xff]
        %v7618 = vld [vmem:[%s6 + $0x118] sm:$0xff]
        %v7619 = vld [vmem:[%s6 + $0x120] sm:$0xff]
        %v7620 = vld [vmem:[%s6 + $0x128] sm:$0xff]
        %v7621 = vld [vmem:[%s6 + $0x130] sm:$0xff]
        %v7622 = vld [vmem:[%s6 + $0x138] sm:$0xff]
        %v7623 = vld [vmem:[%s6 + $0x140] sm:$0xff]
        %v7624 = vld [vmem:[%s6 + $0x148] sm:$0xff]
        %v7625 = vld [vmem:[%s6 + $0x150] sm:$0xff]
        %v7626 = vld [vmem:[%s6 + $0x158] sm:$0xff]
        %v7627 = vld [vmem:[%s6 + $0x160] sm:$0xff]
        %v7628 = vld [vmem:[%s6 + $0x168] sm:$0xff]
        %v7629 = vld [vmem:[%s6 + $0x170] sm:$0xff]
        %v7630 = vld [vmem:[%s6 + $0x178] sm:$0xff]
        %v7631 = vld [vmem:[%s6 + $0x180] sm:$0xff]
        %v7632 = vld [vmem:[%s6 + $0x188] sm:$0xff]
        %v7633 = vld [vmem:[%s6 + $0x190] sm:$0xff]
        %v7634 = vld [vmem:[%s6 + $0x198] sm:$0xff]
        %v7635 = vld [vmem:[%s6 + $0x1a0] sm:$0xff]
        %v7636 = vld [vmem:[%s6 + $0x1a8] sm:$0xff]
        %v7637 = vld [vmem:[%s6 + $0x1b0] sm:$0xff]
        %v7638 = vld [vmem:[%s6 + $0x1b8] sm:$0xff]
        %v7639 = vld [vmem:[%s6 + $0x1c0] sm:$0xff]
        %v7640 = vld [vmem:[%s6 + $0x1c8] sm:$0xff]
        %v7641 = vld [vmem:[%s6 + $0x1d0] sm:$0xff]
        %v7642 = vld [vmem:[%s6 + $0x1d8] sm:$0xff]
        %v7643 = vld [vmem:[%s6 + $0x1e0] sm:$0xff]
        %v7644 = vld [vmem:[%s6 + $0x1e8] sm:$0xff]
        %v7645 = vld [vmem:[%s6 + $0x1f0] sm:$0xff]
        %v7646 = vld [vmem:[%s6 + $0x1f8] sm:$0xff]
        %v7647 = vld [vmem:[%s6 + $0x200] sm:$0xff]
        %v7648 = vld [vmem:[%s6 + $0x208] sm:$0xff]
        %v7649 = vld [vmem:[%s6 + $0x210] sm:$0xff]
        %v7650 = vld [vmem:[%s6 + $0x218] sm:$0xff]
        %v7651 = vld [vmem:[%s6 + $0x220] sm:$0xff]
        %v7652 = vld [vmem:[%s6 + $0x228] sm:$0xff]
        %v7653 = vld [vmem:[%s6 + $0x230] sm:$0xff]
        %v7654 = vld [vmem:[%s6 + $0x238] sm:$0xff]
        %v7655 = vld [vmem:[%s6 + $0x240] sm:$0xff]
        %v7656 = vld [vmem:[%s6 + $0x248] sm:$0xff]
        %v7657 = vld [vmem:[%s6 + $0x250] sm:$0xff]
        %v7658 = vld [vmem:[%s6 + $0x258] sm:$0xff]
        %v7659 = vld [vmem:[%s6 + $0x260] sm:$0xff]
        %v7660 = vld [vmem:[%s6 + $0x268] sm:$0xff]
        %v7661 = vld [vmem:[%s6 + $0x270] sm:$0xff]
        %v7662 = vld [vmem:[%s6 + $0x278] sm:$0xff]
        %v7663 = vld [vmem:[%s6 + $0x280] sm:$0xff]
        %v7664 = vld [vmem:[%s6 + $0x288] sm:$0xff]
        %v7665 = vld [vmem:[%s6 + $0x290] sm:$0xff]
        %v7666 = vld [vmem:[%s6 + $0x298] sm:$0xff]
        %v7667 = vld [vmem:[%s6 + $0x2a0] sm:$0xff]
        %v7668 = vld [vmem:[%s6 + $0x2a8] sm:$0xff]
        %v7669 = vld [vmem:[%s6 + $0x2b0] sm:$0xff]
        %v7670 = vld [vmem:[%s6 + $0x2b8] sm:$0xff]
        %v7671 = vld [vmem:[%s6 + $0x2c0] sm:$0xff]
        %v7672 = vld [vmem:[%s6 + $0x2c8] sm:$0xff]
        %v7673 = vld [vmem:[%s6 + $0x2d0] sm:$0xff]
        %v7674 = vld [vmem:[%s6 + $0x2d8] sm:$0xff]
        %v7675 = vld [vmem:[%s6 + $0x2e0] sm:$0xff]
        %v7676 = vld [vmem:[%s6 + $0x2e8] sm:$0xff]
        %v7677 = vld [vmem:[%s6 + $0x2f0] sm:$0xff]
        %v7678 = vld [vmem:[%s6 + $0x2f8] sm:$0xff]
        %v7679 = vld [vmem:[%s6 + $0x300] sm:$0xff]
        %v7680 = vld [vmem:[%s6 + $0x308] sm:$0xff]
        %v7681 = vld [vmem:[%s6 + $0x310] sm:$0xff]
        %v7682 = vld [vmem:[%s6 + $0x318] sm:$0xff]
        %v7683 = vld [vmem:[%s6 + $0x320] sm:$0xff]
        %v7684 = vld [vmem:[%s6 + $0x328] sm:$0xff]
        %v7685 = vld [vmem:[%s6 + $0x330] sm:$0xff]
        %v7686 = vld [vmem:[%s6 + $0x338] sm:$0xff]
        %v7687 = vld [vmem:[%s6 + $0x340] sm:$0xff]
        %v7688 = vld [vmem:[%s6 + $0x348] sm:$0xff]
        %v7689 = vld [vmem:[%s6 + $0x350] sm:$0xff]
        %v7690 = vld [vmem:[%s6 + $0x358] sm:$0xff]
        %v7691 = vld [vmem:[%s6 + $0x360] sm:$0xff]
        %v7692 = vld [vmem:[%s6 + $0x368] sm:$0xff]
        %v7693 = vld [vmem:[%s6 + $0x370] sm:$0xff]
        %v7694 = vld [vmem:[%s6 + $0x378] sm:$0xff]
        %v7695 = vld [vmem:[%s6 + $0x380] sm:$0xff]
        %v7696 = vld [vmem:[%s6 + $0x388] sm:$0xff]
        %v7697 = vld [vmem:[%s6 + $0x390] sm:$0xff]
        %v7698 = vld [vmem:[%s6 + $0x398] sm:$0xff]
        %v7699 = vld [vmem:[%s6 + $0x3a0] sm:$0xff]
        %v7700 = vld [vmem:[%s6 + $0x3a8] sm:$0xff]
        %v7701 = vld [vmem:[%s6 + $0x3b0] sm:$0xff]
        %v7702 = vld [vmem:[%s6 + $0x3b8] sm:$0xff]
        %v7703 = vld [vmem:[%s6 + $0x3c0] sm:$0xff]
        %v7704 = vld [vmem:[%s6 + $0x3c8] sm:$0xff]
        %v7705 = vld [vmem:[%s6 + $0x3d0] sm:$0xff]
        %v7706 = vld [vmem:[%s6 + $0x3d8] sm:$0xff]
        %v7707 = vld [vmem:[%s6 + $0x3e0] sm:$0xff]
        %v7708 = vld [vmem:[%s6 + $0x3e8] sm:$0xff]
        %v7709 = vld [vmem:[%s6 + $0x3f0] sm:$0xff]
        %v7710 = vld [vmem:[%s6 + $0x3f8] sm:$0xff]
        %vm7711 = vcmask 523264
        %v7713 = vsel %vm7711, %v7575, 0
        %v7716 = vsel %vm7711, %v7576, 0
        %v7719 = vsel %vm7711, %v7577, 0
        %v7722 = vsel %vm7711, %v7578, 0
        %v7725 = vsel %vm7711, %v7579, 0
        %v7728 = vsel %vm7711, %v7580, 0
        %v7731 = vsel %vm7711, %v7581, 0
        %v7734 = vsel %vm7711, %v7582, 0
        %7736 = vmatprep.subr.mxu0 0.0
        %7737 = vmatpush1.msra.mxu0 0.0
        %7738 = vmatprep.subr.mxu0 0.0
        %7739 = vmatpush1.msra.mxu0 0.0
        %7740 = vmatprep.subr.mxu0 0.0
        %7741 = vmatpush1.msra.mxu0 0.0
        %7742 = vmatprep.subr.mxu0 0.0
        %7743 = vmatpush1.msra.mxu0 0.0
        %7744 = vmatprep.subr.mxu0 0.0
        %7745 = vmatpush1.msra.mxu0 0.0
        %7746 = vmatprep.subr.mxu0 0.0
        %7747 = vmatpush1.msra.mxu0 0.0
        %7748 = vmatprep.subr.mxu0 0.0
        %7749 = vmatpush1.msra.mxu0 0.0
        %7750 = vmatprep.subr.mxu0 0.0
        %7751 = vmatpush1.msra.mxu0 0.0
        %7752 = vmatprep.subr.mxu0 %v7696
        %7753 = vmatpush1.msra.mxu0 %v7695
        %7754 = vmatprep.subr.mxu0 %v7680
        %7755 = vmatpush1.msra.mxu0 %v7679
        %7756 = vmatprep.subr.mxu0 %v7664
        %7757 = vmatpush1.msra.mxu0 %v7663
        %7758 = vmatprep.subr.mxu0 %v7648
        %7759 = vmatpush1.msra.mxu0 %v7647
        %7760 = vmatprep.subr.mxu0 %v7632
        %7761 = vmatpush1.msra.mxu0 %v7631
        %7762 = vmatprep.subr.mxu0 %v7616
        %7763 = vmatpush1.msra.mxu0 %v7615
        %7764 = vmatprep.subr.mxu0 %v7600
        %7765 = vmatpush1.msra.mxu0 %v7599
        %7766 = vmatprep.subr.mxu0 %v7584
        %7767 = vmatpush1.msra.mxu0 %v7583
        %7768 = vmatprep.subr.mxu0 0.0
        %7769 = vmatpush2.msra.mxu0 0.0
        %7770 = vmatprep.subr.mxu0 0.0
        %7771 = vmatpush2.msra.mxu0 0.0
        %7772 = vmatprep.subr.mxu0 0.0
        %7773 = vmatpush2.msra.mxu0 0.0
        %7774 = vmatprep.subr.mxu0 0.0
        %7775 = vmatpush2.msra.mxu0 0.0
        %7776 = vmatprep.subr.mxu0 0.0
        %7777 = vmatpush2.msra.mxu0 0.0
        %7778 = vmatprep.subr.mxu0 0.0
        %7779 = vmatpush2.msra.mxu0 0.0
        %7780 = vmatprep.subr.mxu0 0.0
        %7781 = vmatpush2.msra.mxu0 0.0
        %7782 = vmatprep.subr.mxu0 0.0
        %7783 = vmatpush2.msra.mxu0 0.0
        %7784 = vmatprep.subr.mxu0 0.0
        %7785 = vmatpush2.msra.mxu0 0.0
        %7786 = vmatprep.subr.mxu0 0.0
        %7787 = vmatpush2.msra.mxu0 0.0
        %7788 = vmatprep.subr.mxu0 0.0
        %7789 = vmatpush2.msra.mxu0 0.0
        %7790 = vmatprep.subr.mxu0 0.0
        %7791 = vmatpush2.msra.mxu0 0.0
        %7792 = vmatprep.subr.mxu0 0.0
        %7793 = vmatpush2.msra.mxu0 0.0
        %7794 = vmatprep.subr.mxu0 0.0
        %7795 = vmatpush2.msra.mxu0 0.0
        %7796 = vmatprep.subr.mxu0 0.0
        %7797 = vmatpush2.msra.mxu0 0.0
        %7798 = vmatprep.subr.mxu0 0.0
        %7799 = vmatpush2.msra.mxu0 0.0
        %7800 = vmatprep.mubr.f32.mxu0 0.0
        %7801 = vmatmul.mubr.f32.gmra.mxu0 %v7713
        %v7802 = vpop.f32.mrf.mxu0
        %v7803 = vadd.f32 0.0, %v7802
        %v7804 = vpop.f32.mrf.mxu0
        %v7805 = vadd.f32 0.0, %v7804
        %7806 = vmatprep.mubr.f32.mxu0 0.0
        %7807 = vmatmul.mubr.f32.gmra.mxu0 %v7716
        %v7808 = vpop.f32.mrf.mxu0
        %v7809 = vadd.f32 0.0, %v7808
        %v7810 = vpop.f32.mrf.mxu0
        %v7811 = vadd.f32 0.0, %v7810
        %7812 = vmatprep.mubr.f32.mxu0 0.0
        %7813 = vmatmul.mubr.f32.gmra.mxu0 %v7719
        %v7814 = vpop.f32.mrf.mxu0
        %v7815 = vadd.f32 0.0, %v7814
        %v7816 = vpop.f32.mrf.mxu0
        %v7817 = vadd.f32 0.0, %v7816
        %7818 = vmatprep.mubr.f32.mxu0 0.0
        %7819 = vmatmul.mubr.f32.gmra.mxu0 %v7722
        %v7820 = vpop.f32.mrf.mxu0
        %v7821 = vadd.f32 0.0, %v7820
        %v7822 = vpop.f32.mrf.mxu0
        %v7823 = vadd.f32 0.0, %v7822
        %7824 = vmatprep.mubr.f32.mxu0 0.0
        %7825 = vmatmul.mubr.f32.gmra.mxu0 %v7725
        %v7826 = vpop.f32.mrf.mxu0
        %v7827 = vadd.f32 0.0, %v7826
        %v7828 = vpop.f32.mrf.mxu0
        %v7829 = vadd.f32 0.0, %v7828
        %7830 = vmatprep.mubr.f32.mxu0 0.0
        %7831 = vmatmul.mubr.f32.gmra.mxu0 %v7728
        %v7832 = vpop.f32.mrf.mxu0
        %v7833 = vadd.f32 0.0, %v7832
        %v7834 = vpop.f32.mrf.mxu0
        %v7835 = vadd.f32 0.0, %v7834
        %7836 = vmatprep.mubr.f32.mxu0 0.0
        %7837 = vmatmul.mubr.f32.gmra.mxu0 %v7731
        %v7838 = vpop.f32.mrf.mxu0
        %v7839 = vadd.f32 0.0, %v7838
        %v7840 = vpop.f32.mrf.mxu0
        %v7841 = vadd.f32 0.0, %v7840
        %7842 = vmatprep.mubr.f32.mxu0 0.0
        %7843 = vmatmul.mubr.f32.gmra.mxu0 %v7734
        %v7844 = vpop.f32.mrf.mxu0
        %v7845 = vadd.f32 0.0, %v7844
        %v7846 = vpop.f32.mrf.mxu0
        %v7847 = vadd.f32 0.0, %v7846
        %7848 = vdwg.mxu0
        %7849 = vmatprep.subr.mxu0 0.0
        %7850 = vmatpush1.msra.mxu0 0.0
        %7851 = vmatprep.subr.mxu0 0.0
        %7852 = vmatpush1.msra.mxu0 0.0
        %7853 = vmatprep.subr.mxu0 0.0
        %7854 = vmatpush1.msra.mxu0 0.0
        %7855 = vmatprep.subr.mxu0 0.0
        %7856 = vmatpush1.msra.mxu0 0.0
        %7857 = vmatprep.subr.mxu0 0.0
        %7858 = vmatpush1.msra.mxu0 0.0
        %7859 = vmatprep.subr.mxu0 0.0
        %7860 = vmatpush1.msra.mxu0 0.0
        %7861 = vmatprep.subr.mxu0 0.0
        %7862 = vmatpush1.msra.mxu0 0.0
        %7863 = vmatprep.subr.mxu0 0.0
        %7864 = vmatpush1.msra.mxu0 0.0
        %7865 = vmatprep.subr.mxu0 %v7698
        %7866 = vmatpush1.msra.mxu0 %v7697
        %7867 = vmatprep.subr.mxu0 %v7682
        %7868 = vmatpush1.msra.mxu0 %v7681
        %7869 = vmatprep.subr.mxu0 %v7666
        %7870 = vmatpush1.msra.mxu0 %v7665
        %7871 = vmatprep.subr.mxu0 %v7650
        %7872 = vmatpush1.msra.mxu0 %v7649
        %7873 = vmatprep.subr.mxu0 %v7634
        %7874 = vmatpush1.msra.mxu0 %v7633
        %7875 = vmatprep.subr.mxu0 %v7618
        %7876 = vmatpush1.msra.mxu0 %v7617
        %7877 = vmatprep.subr.mxu0 %v7602
        %7878 = vmatpush1.msra.mxu0 %v7601
        %7879 = vmatprep.subr.mxu0 %v7586
        %7880 = vmatpush1.msra.mxu0 %v7585
        %7881 = vmatprep.subr.mxu0 0.0
        %7882 = vmatpush2.msra.mxu0 0.0
        %7883 = vmatprep.subr.mxu0 0.0
        %7884 = vmatpush2.msra.mxu0 0.0
        %7885 = vmatprep.subr.mxu0 0.0
        %7886 = vmatpush2.msra.mxu0 0.0
        %7887 = vmatprep.subr.mxu0 0.0
        %7888 = vmatpush2.msra.mxu0 0.0
        %7889 = vmatprep.subr.mxu0 0.0
        %7890 = vmatpush2.msra.mxu0 0.0
        %7891 = vmatprep.subr.mxu0 0.0
        %7892 = vmatpush2.msra.mxu0 0.0
        %7893 = vmatprep.subr.mxu0 0.0
        %7894 = vmatpush2.msra.mxu0 0.0
        %7895 = vmatprep.subr.mxu0 0.0
        %7896 = vmatpush2.msra.mxu0 0.0
        %7897 = vmatprep.subr.mxu0 0.0
        %7898 = vmatpush2.msra.mxu0 0.0
        %7899 = vmatprep.subr.mxu0 0.0
        %7900 = vmatpush2.msra.mxu0 0.0
        %7901 = vmatprep.subr.mxu0 0.0
        %7902 = vmatpush2.msra.mxu0 0.0
        %7903 = vmatprep.subr.mxu0 0.0
        %7904 = vmatpush2.msra.mxu0 0.0
        %7905 = vmatprep.subr.mxu0 0.0
        %7906 = vmatpush2.msra.mxu0 0.0
        %7907 = vmatprep.subr.mxu0 0.0
        %7908 = vmatpush2.msra.mxu0 0.0
        %7909 = vmatprep.subr.mxu0 0.0
        %7910 = vmatpush2.msra.mxu0 0.0
        %7911 = vmatprep.subr.mxu0 0.0
        %7912 = vmatpush2.msra.mxu0 0.0
        %7913 = vmatprep.mubr.f32.mxu0 0.0
        %7914 = vmatmul.mubr.f32.gmra.mxu0 %v7713
        %v7915 = vpop.f32.mrf.mxu0
        %v7916 = vadd.f32 0.0, %v7915
        %v7917 = vpop.f32.mrf.mxu0
        %v7918 = vadd.f32 0.0, %v7917
        %7919 = vmatprep.mubr.f32.mxu0 0.0
        %7920 = vmatmul.mubr.f32.gmra.mxu0 %v7716
        %v7921 = vpop.f32.mrf.mxu0
        %v7922 = vadd.f32 0.0, %v7921
        %v7923 = vpop.f32.mrf.mxu0
        %v7924 = vadd.f32 0.0, %v7923
        %7925 = vmatprep.mubr.f32.mxu0 0.0
        %7926 = vmatmul.mubr.f32.gmra.mxu0 %v7719
        %v7927 = vpop.f32.mrf.mxu0
        %v7928 = vadd.f32 0.0, %v7927
        %v7929 = vpop.f32.mrf.mxu0
        %v7930 = vadd.f32 0.0, %v7929
        %7931 = vmatprep.mubr.f32.mxu0 0.0
        %7932 = vmatmul.mubr.f32.gmra.mxu0 %v7722
        %v7933 = vpop.f32.mrf.mxu0
        %v7934 = vadd.f32 0.0, %v7933
        %v7935 = vpop.f32.mrf.mxu0
        %v7936 = vadd.f32 0.0, %v7935
        %7937 = vmatprep.mubr.f32.mxu0 0.0
        %7938 = vmatmul.mubr.f32.gmra.mxu0 %v7725
        %v7939 = vpop.f32.mrf.mxu0
        %v7940 = vadd.f32 0.0, %v7939
        %v7941 = vpop.f32.mrf.mxu0
        %v7942 = vadd.f32 0.0, %v7941
        %7943 = vmatprep.mubr.f32.mxu0 0.0
        %7944 = vmatmul.mubr.f32.gmra.mxu0 %v7728
        %v7945 = vpop.f32.mrf.mxu0
        %v7946 = vadd.f32 0.0, %v7945
        %v7947 = vpop.f32.mrf.mxu0
        %v7948 = vadd.f32 0.0, %v7947
        %7949 = vmatprep.mubr.f32.mxu0 0.0
        %7950 = vmatmul.mubr.f32.gmra.mxu0 %v7731
        %v7951 = vpop.f32.mrf.mxu0
        %v7952 = vadd.f32 0.0, %v7951
        %v7953 = vpop.f32.mrf.mxu0
        %v7954 = vadd.f32 0.0, %v7953
        %7955 = vmatprep.mubr.f32.mxu0 0.0
        %7956 = vmatmul.mubr.f32.gmra.mxu0 %v7734
        %v7957 = vpop.f32.mrf.mxu0
        %v7958 = vadd.f32 0.0, %v7957
        %v7959 = vpop.f32.mrf.mxu0
        %v7960 = vadd.f32 0.0, %v7959
        %7961 = vdwg.mxu0
        %7962 = vmatprep.subr.mxu0 0.0
        %7963 = vmatpush1.msra.mxu0 0.0
        %7964 = vmatprep.subr.mxu0 0.0
        %7965 = vmatpush1.msra.mxu0 0.0
        %7966 = vmatprep.subr.mxu0 0.0
        %7967 = vmatpush1.msra.mxu0 0.0
        %7968 = vmatprep.subr.mxu0 0.0
        %7969 = vmatpush1.msra.mxu0 0.0
        %7970 = vmatprep.subr.mxu0 0.0
        %7971 = vmatpush1.msra.mxu0 0.0
        %7972 = vmatprep.subr.mxu0 0.0
        %7973 = vmatpush1.msra.mxu0 0.0
        %7974 = vmatprep.subr.mxu0 0.0
        %7975 = vmatpush1.msra.mxu0 0.0
        %7976 = vmatprep.subr.mxu0 0.0
        %7977 = vmatpush1.msra.mxu0 0.0
        %7978 = vmatprep.subr.mxu0 %v7700
        %7979 = vmatpush1.msra.mxu0 %v7699
        %7980 = vmatprep.subr.mxu0 %v7684
        %7981 = vmatpush1.msra.mxu0 %v7683
        %7982 = vmatprep.subr.mxu0 %v7668
        %7983 = vmatpush1.msra.mxu0 %v7667
        %7984 = vmatprep.subr.mxu0 %v7652
        %7985 = vmatpush1.msra.mxu0 %v7651
        %7986 = vmatprep.subr.mxu0 %v7636
        %7987 = vmatpush1.msra.mxu0 %v7635
        %7988 = vmatprep.subr.mxu0 %v7620
        %7989 = vmatpush1.msra.mxu0 %v7619
        %7990 = vmatprep.subr.mxu0 %v7604
        %7991 = vmatpush1.msra.mxu0 %v7603
        %7992 = vmatprep.subr.mxu0 %v7588
        %7993 = vmatpush1.msra.mxu0 %v7587
        %7994 = vmatprep.subr.mxu0 0.0
        %7995 = vmatpush2.msra.mxu0 0.0
        %7996 = vmatprep.subr.mxu0 0.0
        %7997 = vmatpush2.msra.mxu0 0.0
        %7998 = vmatprep.subr.mxu0 0.0
        %7999 = vmatpush2.msra.mxu0 0.0
        %8000 = vmatprep.subr.mxu0 0.0
        %8001 = vmatpush2.msra.mxu0 0.0
        %8002 = vmatprep.subr.mxu0 0.0
        %8003 = vmatpush2.msra.mxu0 0.0
        %8004 = vmatprep.subr.mxu0 0.0
        %8005 = vmatpush2.msra.mxu0 0.0
        %8006 = vmatprep.subr.mxu0 0.0
        %8007 = vmatpush2.msra.mxu0 0.0
        %8008 = vmatprep.subr.mxu0 0.0
        %8009 = vmatpush2.msra.mxu0 0.0
        %8010 = vmatprep.subr.mxu0 0.0
        %8011 = vmatpush2.msra.mxu0 0.0
        %8012 = vmatprep.subr.mxu0 0.0
        %8013 = vmatpush2.msra.mxu0 0.0
        %8014 = vmatprep.subr.mxu0 0.0
        %8015 = vmatpush2.msra.mxu0 0.0
        %8016 = vmatprep.subr.mxu0 0.0
        %8017 = vmatpush2.msra.mxu0 0.0
        %8018 = vmatprep.subr.mxu0 0.0
        %8019 = vmatpush2.msra.mxu0 0.0
        %8020 = vmatprep.subr.mxu0 0.0
        %8021 = vmatpush2.msra.mxu0 0.0
        %8022 = vmatprep.subr.mxu0 0.0
        %8023 = vmatpush2.msra.mxu0 0.0
        %8024 = vmatprep.subr.mxu0 0.0
        %8025 = vmatpush2.msra.mxu0 0.0
        %8026 = vmatprep.mubr.f32.mxu0 0.0
        %8027 = vmatmul.mubr.f32.gmra.mxu0 %v7713
        %v8028 = vpop.f32.mrf.mxu0
        %v8029 = vadd.f32 0.0, %v8028
        %v8030 = vpop.f32.mrf.mxu0
        %v8031 = vadd.f32 0.0, %v8030
        %8032 = vmatprep.mubr.f32.mxu0 0.0
        %8033 = vmatmul.mubr.f32.gmra.mxu0 %v7716
        %v8034 = vpop.f32.mrf.mxu0
        %v8035 = vadd.f32 0.0, %v8034
        %v8036 = vpop.f32.mrf.mxu0
        %v8037 = vadd.f32 0.0, %v8036
        %8038 = vmatprep.mubr.f32.mxu0 0.0
        %8039 = vmatmul.mubr.f32.gmra.mxu0 %v7719
        %v8040 = vpop.f32.mrf.mxu0
        %v8041 = vadd.f32 0.0, %v8040
        %v8042 = vpop.f32.mrf.mxu0
        %v8043 = vadd.f32 0.0, %v8042
        %8044 = vmatprep.mubr.f32.mxu0 0.0
        %8045 = vmatmul.mubr.f32.gmra.mxu0 %v7722
        %v8046 = vpop.f32.mrf.mxu0
        %v8047 = vadd.f32 0.0, %v8046
        %v8048 = vpop.f32.mrf.mxu0
        %v8049 = vadd.f32 0.0, %v8048
        %8050 = vmatprep.mubr.f32.mxu0 0.0
        %8051 = vmatmul.mubr.f32.gmra.mxu0 %v7725
        %v8052 = vpop.f32.mrf.mxu0
        %v8053 = vadd.f32 0.0, %v8052
        %v8054 = vpop.f32.mrf.mxu0
        %v8055 = vadd.f32 0.0, %v8054
        %8056 = vmatprep.mubr.f32.mxu0 0.0
        %8057 = vmatmul.mubr.f32.gmra.mxu0 %v7728
        %v8058 = vpop.f32.mrf.mxu0
        %v8059 = vadd.f32 0.0, %v8058
        %v8060 = vpop.f32.mrf.mxu0
        %v8061 = vadd.f32 0.0, %v8060
        %8062 = vmatprep.mubr.f32.mxu0 0.0
        %8063 = vmatmul.mubr.f32.gmra.mxu0 %v7731
        %v8064 = vpop.f32.mrf.mxu0
        %v8065 = vadd.f32 0.0, %v8064
        %v8066 = vpop.f32.mrf.mxu0
        %v8067 = vadd.f32 0.0, %v8066
        %8068 = vmatprep.mubr.f32.mxu0 0.0
        %8069 = vmatmul.mubr.f32.gmra.mxu0 %v7734
        %v8070 = vpop.f32.mrf.mxu0
        %v8071 = vadd.f32 0.0, %v8070
        %v8072 = vpop.f32.mrf.mxu0
        %v8073 = vadd.f32 0.0, %v8072
        %8074 = vdwg.mxu0
        %8075 = vmatprep.subr.mxu0 0.0
        %8076 = vmatpush1.msra.mxu0 0.0
        %8077 = vmatprep.subr.mxu0 0.0
        %8078 = vmatpush1.msra.mxu0 0.0
        %8079 = vmatprep.subr.mxu0 0.0
        %8080 = vmatpush1.msra.mxu0 0.0
        %8081 = vmatprep.subr.mxu0 0.0
        %8082 = vmatpush1.msra.mxu0 0.0
        %8083 = vmatprep.subr.mxu0 0.0
        %8084 = vmatpush1.msra.mxu0 0.0
        %8085 = vmatprep.subr.mxu0 0.0
        %8086 = vmatpush1.msra.mxu0 0.0
        %8087 = vmatprep.subr.mxu0 0.0
        %8088 = vmatpush1.msra.mxu0 0.0
        %8089 = vmatprep.subr.mxu0 0.0
        %8090 = vmatpush1.msra.mxu0 0.0
        %8091 = vmatprep.subr.mxu0 %v7702
        %8092 = vmatpush1.msra.mxu0 %v7701
        %8093 = vmatprep.subr.mxu0 %v7686
        %8094 = vmatpush1.msra.mxu0 %v7685
        %8095 = vmatprep.subr.mxu0 %v7670
        %8096 = vmatpush1.msra.mxu0 %v7669
        %8097 = vmatprep.subr.mxu0 %v7654
        %8098 = vmatpush1.msra.mxu0 %v7653
        %8099 = vmatprep.subr.mxu0 %v7638
        %8100 = vmatpush1.msra.mxu0 %v7637
        %8101 = vmatprep.subr.mxu0 %v7622
        %8102 = vmatpush1.msra.mxu0 %v7621
        %8103 = vmatprep.subr.mxu0 %v7606
        %8104 = vmatpush1.msra.mxu0 %v7605
        %8105 = vmatprep.subr.mxu0 %v7590
        %8106 = vmatpush1.msra.mxu0 %v7589
        %8107 = vmatprep.subr.mxu0 0.0
        %8108 = vmatpush2.msra.mxu0 0.0
        %8109 = vmatprep.subr.mxu0 0.0
        %8110 = vmatpush2.msra.mxu0 0.0
        %8111 = vmatprep.subr.mxu0 0.0
        %8112 = vmatpush2.msra.mxu0 0.0
        %8113 = vmatprep.subr.mxu0 0.0
        %8114 = vmatpush2.msra.mxu0 0.0
        %8115 = vmatprep.subr.mxu0 0.0
        %8116 = vmatpush2.msra.mxu0 0.0
        %8117 = vmatprep.subr.mxu0 0.0
        %8118 = vmatpush2.msra.mxu0 0.0
        %8119 = vmatprep.subr.mxu0 0.0
        %8120 = vmatpush2.msra.mxu0 0.0
        %8121 = vmatprep.subr.mxu0 0.0
        %8122 = vmatpush2.msra.mxu0 0.0
        %8123 = vmatprep.subr.mxu0 0.0
        %8124 = vmatpush2.msra.mxu0 0.0
        %8125 = vmatprep.subr.mxu0 0.0
        %8126 = vmatpush2.msra.mxu0 0.0
        %8127 = vmatprep.subr.mxu0 0.0
        %8128 = vmatpush2.msra.mxu0 0.0
        %8129 = vmatprep.subr.mxu0 0.0
        %8130 = vmatpush2.msra.mxu0 0.0
        %8131 = vmatprep.subr.mxu0 0.0
        %8132 = vmatpush2.msra.mxu0 0.0
        %8133 = vmatprep.subr.mxu0 0.0
        %8134 = vmatpush2.msra.mxu0 0.0
        %8135 = vmatprep.subr.mxu0 0.0
        %8136 = vmatpush2.msra.mxu0 0.0
        %8137 = vmatprep.subr.mxu0 0.0
        %8138 = vmatpush2.msra.mxu0 0.0
        %8139 = vmatprep.mubr.f32.mxu0 0.0
        %8140 = vmatmul.mubr.f32.gmra.mxu0 %v7713
        %v8141 = vpop.f32.mrf.mxu0
        %v8142 = vadd.f32 0.0, %v8141
        %v8143 = vpop.f32.mrf.mxu0
        %v8144 = vadd.f32 0.0, %v8143
        %8145 = vmatprep.mubr.f32.mxu0 0.0
        %8146 = vmatmul.mubr.f32.gmra.mxu0 %v7716
        %v8147 = vpop.f32.mrf.mxu0
        %v8148 = vadd.f32 0.0, %v8147
        %v8149 = vpop.f32.mrf.mxu0
        %v8150 = vadd.f32 0.0, %v8149
        %8151 = vmatprep.mubr.f32.mxu0 0.0
        %8152 = vmatmul.mubr.f32.gmra.mxu0 %v7719
        %v8153 = vpop.f32.mrf.mxu0
        %v8154 = vadd.f32 0.0, %v8153
        %v8155 = vpop.f32.mrf.mxu0
        %v8156 = vadd.f32 0.0, %v8155
        %8157 = vmatprep.mubr.f32.mxu0 0.0
        %8158 = vmatmul.mubr.f32.gmra.mxu0 %v7722
        %v8159 = vpop.f32.mrf.mxu0
        %v8160 = vadd.f32 0.0, %v8159
        %v8161 = vpop.f32.mrf.mxu0
        %v8162 = vadd.f32 0.0, %v8161
        %8163 = vmatprep.mubr.f32.mxu0 0.0
        %8164 = vmatmul.mubr.f32.gmra.mxu0 %v7725
        %v8165 = vpop.f32.mrf.mxu0
        %v8166 = vadd.f32 0.0, %v8165
        %v8167 = vpop.f32.mrf.mxu0
        %v8168 = vadd.f32 0.0, %v8167
        %8169 = vmatprep.mubr.f32.mxu0 0.0
        %8170 = vmatmul.mubr.f32.gmra.mxu0 %v7728
        %v8171 = vpop.f32.mrf.mxu0
        %v8172 = vadd.f32 0.0, %v8171
        %v8173 = vpop.f32.mrf.mxu0
        %v8174 = vadd.f32 0.0, %v8173
        %8175 = vmatprep.mubr.f32.mxu0 0.0
        %8176 = vmatmul.mubr.f32.gmra.mxu0 %v7731
        %v8177 = vpop.f32.mrf.mxu0
        %v8178 = vadd.f32 0.0, %v8177
        %v8179 = vpop.f32.mrf.mxu0
        %v8180 = vadd.f32 0.0, %v8179
        %8181 = vmatprep.mubr.f32.mxu0 0.0
        %8182 = vmatmul.mubr.f32.gmra.mxu0 %v7734
        %v8183 = vpop.f32.mrf.mxu0
        %v8184 = vadd.f32 0.0, %v8183
        %v8185 = vpop.f32.mrf.mxu0
        %v8186 = vadd.f32 0.0, %v8185
        %8187 = vdwg.mxu0
        %8188 = vmatprep.subr.mxu0 0.0
        %8189 = vmatpush1.msra.mxu0 0.0
        %8190 = vmatprep.subr.mxu0 0.0
        %8191 = vmatpush1.msra.mxu0 0.0
        %8192 = vmatprep.subr.mxu0 0.0
        %8193 = vmatpush1.msra.mxu0 0.0
        %8194 = vmatprep.subr.mxu0 0.0
        %8195 = vmatpush1.msra.mxu0 0.0
        %8196 = vmatprep.subr.mxu0 0.0
        %8197 = vmatpush1.msra.mxu0 0.0
        %8198 = vmatprep.subr.mxu0 0.0
        %8199 = vmatpush1.msra.mxu0 0.0
        %8200 = vmatprep.subr.mxu0 0.0
        %8201 = vmatpush1.msra.mxu0 0.0
        %8202 = vmatprep.subr.mxu0 0.0
        %8203 = vmatpush1.msra.mxu0 0.0
        %8204 = vmatprep.subr.mxu0 %v7704
        %8205 = vmatpush1.msra.mxu0 %v7703
        %8206 = vmatprep.subr.mxu0 %v7688
        %8207 = vmatpush1.msra.mxu0 %v7687
        %8208 = vmatprep.subr.mxu0 %v7672
        %8209 = vmatpush1.msra.mxu0 %v7671
        %8210 = vmatprep.subr.mxu0 %v7656
        %8211 = vmatpush1.msra.mxu0 %v7655
        %8212 = vmatprep.subr.mxu0 %v7640
        %8213 = vmatpush1.msra.mxu0 %v7639
        %8214 = vmatprep.subr.mxu0 %v7624
        %8215 = vmatpush1.msra.mxu0 %v7623
        %8216 = vmatprep.subr.mxu0 %v7608
        %8217 = vmatpush1.msra.mxu0 %v7607
        %8218 = vmatprep.subr.mxu0 %v7592
        %8219 = vmatpush1.msra.mxu0 %v7591
        %8220 = vmatprep.subr.mxu0 0.0
        %8221 = vmatpush2.msra.mxu0 0.0
        %8222 = vmatprep.subr.mxu0 0.0
        %8223 = vmatpush2.msra.mxu0 0.0
        %8224 = vmatprep.subr.mxu0 0.0
        %8225 = vmatpush2.msra.mxu0 0.0
        %8226 = vmatprep.subr.mxu0 0.0
        %8227 = vmatpush2.msra.mxu0 0.0
        %8228 = vmatprep.subr.mxu0 0.0
        %8229 = vmatpush2.msra.mxu0 0.0
        %8230 = vmatprep.subr.mxu0 0.0
        %8231 = vmatpush2.msra.mxu0 0.0
        %8232 = vmatprep.subr.mxu0 0.0
        %8233 = vmatpush2.msra.mxu0 0.0
        %8234 = vmatprep.subr.mxu0 0.0
        %8235 = vmatpush2.msra.mxu0 0.0
        %8236 = vmatprep.subr.mxu0 0.0
        %8237 = vmatpush2.msra.mxu0 0.0
        %8238 = vmatprep.subr.mxu0 0.0
        %8239 = vmatpush2.msra.mxu0 0.0
        %8240 = vmatprep.subr.mxu0 0.0
        %8241 = vmatpush2.msra.mxu0 0.0
        %8242 = vmatprep.subr.mxu0 0.0
        %8243 = vmatpush2.msra.mxu0 0.0
        %8244 = vmatprep.subr.mxu0 0.0
        %8245 = vmatpush2.msra.mxu0 0.0
        %8246 = vmatprep.subr.mxu0 0.0
        %8247 = vmatpush2.msra.mxu0 0.0
        %8248 = vmatprep.subr.mxu0 0.0
        %8249 = vmatpush2.msra.mxu0 0.0
        %8250 = vmatprep.subr.mxu0 0.0
        %8251 = vmatpush2.msra.mxu0 0.0
        %8252 = vmatprep.mubr.f32.mxu0 0.0
        %8253 = vmatmul.mubr.f32.gmra.mxu0 %v7713
        %v8254 = vpop.f32.mrf.mxu0
        %v8255 = vadd.f32 0.0, %v8254
        %v8256 = vpop.f32.mrf.mxu0
        %v8257 = vadd.f32 0.0, %v8256
        %8258 = vmatprep.mubr.f32.mxu0 0.0
        %8259 = vmatmul.mubr.f32.gmra.mxu0 %v7716
        %v8260 = vpop.f32.mrf.mxu0
        %v8261 = vadd.f32 0.0, %v8260
        %v8262 = vpop.f32.mrf.mxu0
        %v8263 = vadd.f32 0.0, %v8262
        %8264 = vmatprep.mubr.f32.mxu0 0.0
        %8265 = vmatmul.mubr.f32.gmra.mxu0 %v7719
        %v8266 = vpop.f32.mrf.mxu0
        %v8267 = vadd.f32 0.0, %v8266
        %v8268 = vpop.f32.mrf.mxu0
        %v8269 = vadd.f32 0.0, %v8268
        %8270 = vmatprep.mubr.f32.mxu0 0.0
        %8271 = vmatmul.mubr.f32.gmra.mxu0 %v7722
        %v8272 = vpop.f32.mrf.mxu0
        %v8273 = vadd.f32 0.0, %v8272
        %v8274 = vpop.f32.mrf.mxu0
        %v8275 = vadd.f32 0.0, %v8274
        %8276 = vmatprep.mubr.f32.mxu0 0.0
        %8277 = vmatmul.mubr.f32.gmra.mxu0 %v7725
        %v8278 = vpop.f32.mrf.mxu0
        %v8279 = vadd.f32 0.0, %v8278
        %v8280 = vpop.f32.mrf.mxu0
        %v8281 = vadd.f32 0.0, %v8280
        %8282 = vmatprep.mubr.f32.mxu0 0.0
        %8283 = vmatmul.mubr.f32.gmra.mxu0 %v7728
        %v8284 = vpop.f32.mrf.mxu0
        %v8285 = vadd.f32 0.0, %v8284
        %v8286 = vpop.f32.mrf.mxu0
        %v8287 = vadd.f32 0.0, %v8286
        %8288 = vmatprep.mubr.f32.mxu0 0.0
        %8289 = vmatmul.mubr.f32.gmra.mxu0 %v7731
        %v8290 = vpop.f32.mrf.mxu0
        %v8291 = vadd.f32 0.0, %v8290
        %v8292 = vpop.f32.mrf.mxu0
        %v8293 = vadd.f32 0.0, %v8292
        %8294 = vmatprep.mubr.f32.mxu0 0.0
        %8295 = vmatmul.mubr.f32.gmra.mxu0 %v7734
        %v8296 = vpop.f32.mrf.mxu0
        %v8297 = vadd.f32 0.0, %v8296
        %v8298 = vpop.f32.mrf.mxu0
        %v8299 = vadd.f32 0.0, %v8298
        %8300 = vdwg.mxu0
        %8301 = vmatprep.subr.mxu0 0.0
        %8302 = vmatpush1.msra.mxu0 0.0
        %8303 = vmatprep.subr.mxu0 0.0
        %8304 = vmatpush1.msra.mxu0 0.0
        %8305 = vmatprep.subr.mxu0 0.0
        %8306 = vmatpush1.msra.mxu0 0.0
        %8307 = vmatprep.subr.mxu0 0.0
        %8308 = vmatpush1.msra.mxu0 0.0
        %8309 = vmatprep.subr.mxu0 0.0
        %8310 = vmatpush1.msra.mxu0 0.0
        %8311 = vmatprep.subr.mxu0 0.0
        %8312 = vmatpush1.msra.mxu0 0.0
        %8313 = vmatprep.subr.mxu0 0.0
        %8314 = vmatpush1.msra.mxu0 0.0
        %8315 = vmatprep.subr.mxu0 0.0
        %8316 = vmatpush1.msra.mxu0 0.0
        %8317 = vmatprep.subr.mxu0 %v7706
        %8318 = vmatpush1.msra.mxu0 %v7705
        %8319 = vmatprep.subr.mxu0 %v7690
        %8320 = vmatpush1.msra.mxu0 %v7689
        %8321 = vmatprep.subr.mxu0 %v7674
        %8322 = vmatpush1.msra.mxu0 %v7673
        %8323 = vmatprep.subr.mxu0 %v7658
        %8324 = vmatpush1.msra.mxu0 %v7657
        %8325 = vmatprep.subr.mxu0 %v7642
        %8326 = vmatpush1.msra.mxu0 %v7641
        %8327 = vmatprep.subr.mxu0 %v7626
        %8328 = vmatpush1.msra.mxu0 %v7625
        %8329 = vmatprep.subr.mxu0 %v7610
        %8330 = vmatpush1.msra.mxu0 %v7609
        %8331 = vmatprep.subr.mxu0 %v7594
        %8332 = vmatpush1.msra.mxu0 %v7593
        %8333 = vmatprep.subr.mxu0 0.0
        %8334 = vmatpush2.msra.mxu0 0.0
        %8335 = vmatprep.subr.mxu0 0.0
        %8336 = vmatpush2.msra.mxu0 0.0
        %8337 = vmatprep.subr.mxu0 0.0
        %8338 = vmatpush2.msra.mxu0 0.0
        %8339 = vmatprep.subr.mxu0 0.0
        %8340 = vmatpush2.msra.mxu0 0.0
        %8341 = vmatprep.subr.mxu0 0.0
        %8342 = vmatpush2.msra.mxu0 0.0
        %8343 = vmatprep.subr.mxu0 0.0
        %8344 = vmatpush2.msra.mxu0 0.0
        %8345 = vmatprep.subr.mxu0 0.0
        %8346 = vmatpush2.msra.mxu0 0.0
        %8347 = vmatprep.subr.mxu0 0.0
        %8348 = vmatpush2.msra.mxu0 0.0
        %8349 = vmatprep.subr.mxu0 0.0
        %8350 = vmatpush2.msra.mxu0 0.0
        %8351 = vmatprep.subr.mxu0 0.0
        %8352 = vmatpush2.msra.mxu0 0.0
        %8353 = vmatprep.subr.mxu0 0.0
        %8354 = vmatpush2.msra.mxu0 0.0
        %8355 = vmatprep.subr.mxu0 0.0
        %8356 = vmatpush2.msra.mxu0 0.0
        %8357 = vmatprep.subr.mxu0 0.0
        %8358 = vmatpush2.msra.mxu0 0.0
        %8359 = vmatprep.subr.mxu0 0.0
        %8360 = vmatpush2.msra.mxu0 0.0
        %8361 = vmatprep.subr.mxu0 0.0
        %8362 = vmatpush2.msra.mxu0 0.0
        %8363 = vmatprep.subr.mxu0 0.0
        %8364 = vmatpush2.msra.mxu0 0.0
        %8365 = vmatprep.mubr.f32.mxu0 0.0
        %8366 = vmatmul.mubr.f32.gmra.mxu0 %v7713
        %v8367 = vpop.f32.mrf.mxu0
        %v8368 = vadd.f32 0.0, %v8367
        %v8369 = vpop.f32.mrf.mxu0
        %v8370 = vadd.f32 0.0, %v8369
        %8371 = vmatprep.mubr.f32.mxu0 0.0
        %8372 = vmatmul.mubr.f32.gmra.mxu0 %v7716
        %v8373 = vpop.f32.mrf.mxu0
        %v8374 = vadd.f32 0.0, %v8373
        %v8375 = vpop.f32.mrf.mxu0
        %v8376 = vadd.f32 0.0, %v8375
        %8377 = vmatprep.mubr.f32.mxu0 0.0
        %8378 = vmatmul.mubr.f32.gmra.mxu0 %v7719
        %v8379 = vpop.f32.mrf.mxu0
        %v8380 = vadd.f32 0.0, %v8379
        %v8381 = vpop.f32.mrf.mxu0
        %v8382 = vadd.f32 0.0, %v8381
        %8383 = vmatprep.mubr.f32.mxu0 0.0
        %8384 = vmatmul.mubr.f32.gmra.mxu0 %v7722
        %v8385 = vpop.f32.mrf.mxu0
        %v8386 = vadd.f32 0.0, %v8385
        %v8387 = vpop.f32.mrf.mxu0
        %v8388 = vadd.f32 0.0, %v8387
        %8389 = vmatprep.mubr.f32.mxu0 0.0
        %8390 = vmatmul.mubr.f32.gmra.mxu0 %v7725
        %v8391 = vpop.f32.mrf.mxu0
        %v8392 = vadd.f32 0.0, %v8391
        %v8393 = vpop.f32.mrf.mxu0
        %v8394 = vadd.f32 0.0, %v8393
        %8395 = vmatprep.mubr.f32.mxu0 0.0
        %8396 = vmatmul.mubr.f32.gmra.mxu0 %v7728
        %v8397 = vpop.f32.mrf.mxu0
        %v8398 = vadd.f32 0.0, %v8397
        %v8399 = vpop.f32.mrf.mxu0
        %v8400 = vadd.f32 0.0, %v8399
        %8401 = vmatprep.mubr.f32.mxu0 0.0
        %8402 = vmatmul.mubr.f32.gmra.mxu0 %v7731
        %v8403 = vpop.f32.mrf.mxu0
        %v8404 = vadd.f32 0.0, %v8403
        %v8405 = vpop.f32.mrf.mxu0
        %v8406 = vadd.f32 0.0, %v8405
        %8407 = vmatprep.mubr.f32.mxu0 0.0
        %8408 = vmatmul.mubr.f32.gmra.mxu0 %v7734
        %v8409 = vpop.f32.mrf.mxu0
        %v8410 = vadd.f32 0.0, %v8409
        %v8411 = vpop.f32.mrf.mxu0
        %v8412 = vadd.f32 0.0, %v8411
        %8413 = vdwg.mxu0
        %8414 = vmatprep.subr.mxu0 0.0
        %8415 = vmatpush1.msra.mxu0 0.0
        %8416 = vmatprep.subr.mxu0 0.0
        %8417 = vmatpush1.msra.mxu0 0.0
        %8418 = vmatprep.subr.mxu0 0.0
        %8419 = vmatpush1.msra.mxu0 0.0
        %8420 = vmatprep.subr.mxu0 0.0
        %8421 = vmatpush1.msra.mxu0 0.0
        %8422 = vmatprep.subr.mxu0 0.0
        %8423 = vmatpush1.msra.mxu0 0.0
        %8424 = vmatprep.subr.mxu0 0.0
        %8425 = vmatpush1.msra.mxu0 0.0
        %8426 = vmatprep.subr.mxu0 0.0
        %8427 = vmatpush1.msra.mxu0 0.0
        %8428 = vmatprep.subr.mxu0 0.0
        %8429 = vmatpush1.msra.mxu0 0.0
        %8430 = vmatprep.subr.mxu0 %v7708
        %8431 = vmatpush1.msra.mxu0 %v7707
        %8432 = vmatprep.subr.mxu0 %v7692
        %8433 = vmatpush1.msra.mxu0 %v7691
        %8434 = vmatprep.subr.mxu0 %v7676
        %8435 = vmatpush1.msra.mxu0 %v7675
        %8436 = vmatprep.subr.mxu0 %v7660
        %8437 = vmatpush1.msra.mxu0 %v7659
        %8438 = vmatprep.subr.mxu0 %v7644
        %8439 = vmatpush1.msra.mxu0 %v7643
        %8440 = vmatprep.subr.mxu0 %v7628
        %8441 = vmatpush1.msra.mxu0 %v7627
        %8442 = vmatprep.subr.mxu0 %v7612
        %8443 = vmatpush1.msra.mxu0 %v7611
        %8444 = vmatprep.subr.mxu0 %v7596
        %8445 = vmatpush1.msra.mxu0 %v7595
        %8446 = vmatprep.subr.mxu0 0.0
        %8447 = vmatpush2.msra.mxu0 0.0
        %8448 = vmatprep.subr.mxu0 0.0
        %8449 = vmatpush2.msra.mxu0 0.0
        %8450 = vmatprep.subr.mxu0 0.0
        %8451 = vmatpush2.msra.mxu0 0.0
        %8452 = vmatprep.subr.mxu0 0.0
        %8453 = vmatpush2.msra.mxu0 0.0
        %8454 = vmatprep.subr.mxu0 0.0
        %8455 = vmatpush2.msra.mxu0 0.0
        %8456 = vmatprep.subr.mxu0 0.0
        %8457 = vmatpush2.msra.mxu0 0.0
        %8458 = vmatprep.subr.mxu0 0.0
        %8459 = vmatpush2.msra.mxu0 0.0
        %8460 = vmatprep.subr.mxu0 0.0
        %8461 = vmatpush2.msra.mxu0 0.0
        %8462 = vmatprep.subr.mxu0 0.0
        %8463 = vmatpush2.msra.mxu0 0.0
        %8464 = vmatprep.subr.mxu0 0.0
        %8465 = vmatpush2.msra.mxu0 0.0
        %8466 = vmatprep.subr.mxu0 0.0
        %8467 = vmatpush2.msra.mxu0 0.0
        %8468 = vmatprep.subr.mxu0 0.0
        %8469 = vmatpush2.msra.mxu0 0.0
        %8470 = vmatprep.subr.mxu0 0.0
        %8471 = vmatpush2.msra.mxu0 0.0
        %8472 = vmatprep.subr.mxu0 0.0
        %8473 = vmatpush2.msra.mxu0 0.0
        %8474 = vmatprep.subr.mxu0 0.0
        %8475 = vmatpush2.msra.mxu0 0.0
        %8476 = vmatprep.subr.mxu0 0.0
        %8477 = vmatpush2.msra.mxu0 0.0
        %8478 = vmatprep.mubr.f32.mxu0 0.0
        %8479 = vmatmul.mubr.f32.gmra.mxu0 %v7713
        %v8480 = vpop.f32.mrf.mxu0
        %v8481 = vadd.f32 0.0, %v8480
        %v8482 = vpop.f32.mrf.mxu0
        %v8483 = vadd.f32 0.0, %v8482
        %8484 = vmatprep.mubr.f32.mxu0 0.0
        %8485 = vmatmul.mubr.f32.gmra.mxu0 %v7716
        %v8486 = vpop.f32.mrf.mxu0
        %v8487 = vadd.f32 0.0, %v8486
        %v8488 = vpop.f32.mrf.mxu0
        %v8489 = vadd.f32 0.0, %v8488
        %8490 = vmatprep.mubr.f32.mxu0 0.0
        %8491 = vmatmul.mubr.f32.gmra.mxu0 %v7719
        %v8492 = vpop.f32.mrf.mxu0
        %v8493 = vadd.f32 0.0, %v8492
        %v8494 = vpop.f32.mrf.mxu0
        %v8495 = vadd.f32 0.0, %v8494
        %8496 = vmatprep.mubr.f32.mxu0 0.0
        %8497 = vmatmul.mubr.f32.gmra.mxu0 %v7722
        %v8498 = vpop.f32.mrf.mxu0
        %v8499 = vadd.f32 0.0, %v8498
        %v8500 = vpop.f32.mrf.mxu0
        %v8501 = vadd.f32 0.0, %v8500
        %8502 = vmatprep.mubr.f32.mxu0 0.0
        %8503 = vmatmul.mubr.f32.gmra.mxu0 %v7725
        %v8504 = vpop.f32.mrf.mxu0
        %v8505 = vadd.f32 0.0, %v8504
        %v8506 = vpop.f32.mrf.mxu0
        %v8507 = vadd.f32 0.0, %v8506
        %8508 = vmatprep.mubr.f32.mxu0 0.0
        %8509 = vmatmul.mubr.f32.gmra.mxu0 %v7728
        %v8510 = vpop.f32.mrf.mxu0
        %v8511 = vadd.f32 0.0, %v8510
        %v8512 = vpop.f32.mrf.mxu0
        %v8513 = vadd.f32 0.0, %v8512
        %8514 = vmatprep.mubr.f32.mxu0 0.0
        %8515 = vmatmul.mubr.f32.gmra.mxu0 %v7731
        %v8516 = vpop.f32.mrf.mxu0
        %v8517 = vadd.f32 0.0, %v8516
        %v8518 = vpop.f32.mrf.mxu0
        %v8519 = vadd.f32 0.0, %v8518
        %8520 = vmatprep.mubr.f32.mxu0 0.0
        %8521 = vmatmul.mubr.f32.gmra.mxu0 %v7734
        %v8522 = vpop.f32.mrf.mxu0
        %v8523 = vadd.f32 0.0, %v8522
        %v8524 = vpop.f32.mrf.mxu0
        %v8525 = vadd.f32 0.0, %v8524
        %8526 = vdwg.mxu0
        %8527 = vmatprep.subr.mxu0 0.0
        %8528 = vmatpush1.msra.mxu0 0.0
        %8529 = vmatprep.subr.mxu0 0.0
        %8530 = vmatpush1.msra.mxu0 0.0
        %8531 = vmatprep.subr.mxu0 0.0
        %8532 = vmatpush1.msra.mxu0 0.0
        %8533 = vmatprep.subr.mxu0 0.0
        %8534 = vmatpush1.msra.mxu0 0.0
        %8535 = vmatprep.subr.mxu0 0.0
        %8536 = vmatpush1.msra.mxu0 0.0
        %8537 = vmatprep.subr.mxu0 0.0
        %8538 = vmatpush1.msra.mxu0 0.0
        %8539 = vmatprep.subr.mxu0 0.0
        %8540 = vmatpush1.msra.mxu0 0.0
        %8541 = vmatprep.subr.mxu0 0.0
        %8542 = vmatpush1.msra.mxu0 0.0
        %8543 = vmatprep.subr.mxu0 %v7710
        %8544 = vmatpush1.msra.mxu0 %v7709
        %8545 = vmatprep.subr.mxu0 %v7694
        %8546 = vmatpush1.msra.mxu0 %v7693
        %8547 = vmatprep.subr.mxu0 %v7678
        %8548 = vmatpush1.msra.mxu0 %v7677
        %8549 = vmatprep.subr.mxu0 %v7662
        %8550 = vmatpush1.msra.mxu0 %v7661
        %8551 = vmatprep.subr.mxu0 %v7646
        %8552 = vmatpush1.msra.mxu0 %v7645
        %8553 = vmatprep.subr.mxu0 %v7630
        %8554 = vmatpush1.msra.mxu0 %v7629
        %8555 = vmatprep.subr.mxu0 %v7614
        %8556 = vmatpush1.msra.mxu0 %v7613
        %8557 = vmatprep.subr.mxu0 %v7598
        %8558 = vmatpush1.msra.mxu0 %v7597
        %8559 = vmatprep.subr.mxu0 0.0
        %8560 = vmatpush2.msra.mxu0 0.0
        %8561 = vmatprep.subr.mxu0 0.0
        %8562 = vmatpush2.msra.mxu0 0.0
        %8563 = vmatprep.subr.mxu0 0.0
        %8564 = vmatpush2.msra.mxu0 0.0
        %8565 = vmatprep.subr.mxu0 0.0
        %8566 = vmatpush2.msra.mxu0 0.0
        %8567 = vmatprep.subr.mxu0 0.0
        %8568 = vmatpush2.msra.mxu0 0.0
        %8569 = vmatprep.subr.mxu0 0.0
        %8570 = vmatpush2.msra.mxu0 0.0
        %8571 = vmatprep.subr.mxu0 0.0
        %8572 = vmatpush2.msra.mxu0 0.0
        %8573 = vmatprep.subr.mxu0 0.0
        %8574 = vmatpush2.msra.mxu0 0.0
        %8575 = vmatprep.subr.mxu0 0.0
        %8576 = vmatpush2.msra.mxu0 0.0
        %8577 = vmatprep.subr.mxu0 0.0
        %8578 = vmatpush2.msra.mxu0 0.0
        %8579 = vmatprep.subr.mxu0 0.0
        %8580 = vmatpush2.msra.mxu0 0.0
        %8581 = vmatprep.subr.mxu0 0.0
        %8582 = vmatpush2.msra.mxu0 0.0
        %8583 = vmatprep.subr.mxu0 0.0
        %8584 = vmatpush2.msra.mxu0 0.0
        %8585 = vmatprep.subr.mxu0 0.0
        %8586 = vmatpush2.msra.mxu0 0.0
        %8587 = vmatprep.subr.mxu0 0.0
        %8588 = vmatpush2.msra.mxu0 0.0
        %8589 = vmatprep.subr.mxu0 0.0
        %8590 = vmatpush2.msra.mxu0 0.0
        %8591 = vmatprep.mubr.f32.mxu0 0.0
        %8592 = vmatmul.mubr.f32.gmra.mxu0 %v7713
        %v8593 = vpop.f32.mrf.mxu0
        %v8594 = vadd.f32 0.0, %v8593
        %v8595 = vpop.f32.mrf.mxu0
        %v8596 = vadd.f32 0.0, %v8595
        %8597 = vmatprep.mubr.f32.mxu0 0.0
        %8598 = vmatmul.mubr.f32.gmra.mxu0 %v7716
        %v8599 = vpop.f32.mrf.mxu0
        %v8600 = vadd.f32 0.0, %v8599
        %v8601 = vpop.f32.mrf.mxu0
        %v8602 = vadd.f32 0.0, %v8601
        %8603 = vmatprep.mubr.f32.mxu0 0.0
        %8604 = vmatmul.mubr.f32.gmra.mxu0 %v7719
        %v8605 = vpop.f32.mrf.mxu0
        %v8606 = vadd.f32 0.0, %v8605
        %v8607 = vpop.f32.mrf.mxu0
        %v8608 = vadd.f32 0.0, %v8607
        %8609 = vmatprep.mubr.f32.mxu0 0.0
        %8610 = vmatmul.mubr.f32.gmra.mxu0 %v7722
        %v8611 = vpop.f32.mrf.mxu0
        %v8612 = vadd.f32 0.0, %v8611
        %v8613 = vpop.f32.mrf.mxu0
        %v8614 = vadd.f32 0.0, %v8613
        %8615 = vmatprep.mubr.f32.mxu0 0.0
        %8616 = vmatmul.mubr.f32.gmra.mxu0 %v7725
        %v8617 = vpop.f32.mrf.mxu0
        %v8618 = vadd.f32 0.0, %v8617
        %v8619 = vpop.f32.mrf.mxu0
        %v8620 = vadd.f32 0.0, %v8619
        %8621 = vmatprep.mubr.f32.mxu0 0.0
        %8622 = vmatmul.mubr.f32.gmra.mxu0 %v7728
        %v8623 = vpop.f32.mrf.mxu0
        %v8624 = vadd.f32 0.0, %v8623
        %v8625 = vpop.f32.mrf.mxu0
        %v8626 = vadd.f32 0.0, %v8625
        %8627 = vmatprep.mubr.f32.mxu0 0.0
        %8628 = vmatmul.mubr.f32.gmra.mxu0 %v7731
        %v8629 = vpop.f32.mrf.mxu0
        %v8630 = vadd.f32 0.0, %v8629
        %v8631 = vpop.f32.mrf.mxu0
        %v8632 = vadd.f32 0.0, %v8631
        %8633 = vmatprep.mubr.f32.mxu0 0.0
        %8634 = vmatmul.mubr.f32.gmra.mxu0 %v7734
        %v8635 = vpop.f32.mrf.mxu0
        %v8636 = vadd.f32 0.0, %v8635
        %v8637 = vpop.f32.mrf.mxu0
        %v8638 = vadd.f32 0.0, %v8637
        %8639 = vdwg.mxu0
        %v8640 = vlaneseq
        %v8641 = vshrl.u32 %v8640, 7
        %v8642 = vadd.s32 %v8641, 8
        %v8643 = vadd.s32 %v8641, 16
        %v8644 = vadd.s32 %v8641, 24
        %v8645 = vadd.s32 %v8641, 32
        %v8646 = vadd.s32 %v8641, 40
        %v8647 = vadd.s32 %v8641, 48
        %v8648 = vadd.s32 %v8641, 56
        %v8649 = vlaneseq
        %v8650 = vand.u32 %v8649, 127
        %v8651 = vadd.s32 %v8650, 128
        %v8652 = vadd.s32 %v8650, 256
        %v8653 = vadd.s32 %v8650, 384
        %v8654 = vadd.s32 %v8650, 512
        %v8655 = vadd.s32 %v8650, 640
        %v8656 = vadd.s32 %v8650, 768
        %v8657 = vadd.s32 %v8650, 896
        %v8658 = vadd.s32 %v8650, 1024
        %v8659 = vadd.s32 %v8650, 1152
        %v8660 = vadd.s32 %v8650, 1280
        %v8661 = vadd.s32 %v8650, 1408
        %v8662 = vadd.s32 %v8650, 1536
        %v8663 = vadd.s32 %v8650, 1664
        %v8664 = vadd.s32 %v8650, 1792
        %v8665 = vadd.s32 %v8650, 1920
        %v8666 = vmul.u32 %v8641, 32
        %v8667 = vmul.u32 %v8642, 32
        %v8668 = vmul.u32 %v8643, 32
        %v8669 = vmul.u32 %v8644, 32
        %v8670 = vmul.u32 %v8645, 32
        %v8671 = vmul.u32 %v8646, 32
        %v8672 = vmul.u32 %v8647, 32
        %v8673 = vmul.u32 %v8648, 32
        %vm8674 = vcmp.ge.s32.totalorder %v8650, %v8666
        %vm8675 = vcmp.ge.s32.totalorder %v8651, %v8666
        %vm8676 = vcmp.ge.s32.totalorder %v8652, %v8666
        %vm8677 = vcmp.ge.s32.totalorder %v8653, %v8666
        %vm8678 = vcmp.ge.s32.totalorder %v8654, %v8666
        %vm8679 = vcmp.ge.s32.totalorder %v8655, %v8666
        %vm8680 = vcmp.ge.s32.totalorder %v8656, %v8666
        %vm8681 = vcmp.ge.s32.totalorder %v8657, %v8666
        %vm8682 = vcmp.ge.s32.totalorder %v8658, %v8666
        %vm8683 = vcmp.ge.s32.totalorder %v8659, %v8666
        %vm8684 = vcmp.ge.s32.totalorder %v8660, %v8666
        %vm8685 = vcmp.ge.s32.totalorder %v8661, %v8666
        %vm8686 = vcmp.ge.s32.totalorder %v8662, %v8666
        %vm8687 = vcmp.ge.s32.totalorder %v8663, %v8666
        %vm8688 = vcmp.ge.s32.totalorder %v8664, %v8666
        %vm8689 = vcmp.ge.s32.totalorder %v8665, %v8666
        %vm8690 = vcmp.ge.s32.totalorder %v8650, %v8667
        %vm8691 = vcmp.ge.s32.totalorder %v8651, %v8667
        %vm8692 = vcmp.ge.s32.totalorder %v8652, %v8667
        %vm8693 = vcmp.ge.s32.totalorder %v8653, %v8667
        %vm8694 = vcmp.ge.s32.totalorder %v8654, %v8667
        %vm8695 = vcmp.ge.s32.totalorder %v8655, %v8667
        %vm8696 = vcmp.ge.s32.totalorder %v8656, %v8667
        %vm8697 = vcmp.ge.s32.totalorder %v8657, %v8667
        %vm8698 = vcmp.ge.s32.totalorder %v8658, %v8667
        %vm8699 = vcmp.ge.s32.totalorder %v8659, %v8667
        %vm8700 = vcmp.ge.s32.totalorder %v8660, %v8667
        %vm8701 = vcmp.ge.s32.totalorder %v8661, %v8667
        %vm8702 = vcmp.ge.s32.totalorder %v8662, %v8667
        %vm8703 = vcmp.ge.s32.totalorder %v8663, %v8667
        %vm8704 = vcmp.ge.s32.totalorder %v8664, %v8667
        %vm8705 = vcmp.ge.s32.totalorder %v8665, %v8667
        %vm8706 = vcmp.ge.s32.totalorder %v8650, %v8668
        %vm8707 = vcmp.ge.s32.totalorder %v8651, %v8668
        %vm8708 = vcmp.ge.s32.totalorder %v8652, %v8668
        %vm8709 = vcmp.ge.s32.totalorder %v8653, %v8668
        %vm8710 = vcmp.ge.s32.totalorder %v8654, %v8668
        %vm8711 = vcmp.ge.s32.totalorder %v8655, %v8668
        %vm8712 = vcmp.ge.s32.totalorder %v8656, %v8668
        %vm8713 = vcmp.ge.s32.totalorder %v8657, %v8668
        %vm8714 = vcmp.ge.s32.totalorder %v8658, %v8668
        %vm8715 = vcmp.ge.s32.totalorder %v8659, %v8668
        %vm8716 = vcmp.ge.s32.totalorder %v8660, %v8668
        %vm8717 = vcmp.ge.s32.totalorder %v8661, %v8668
        %vm8718 = vcmp.ge.s32.totalorder %v8662, %v8668
        %vm8719 = vcmp.ge.s32.totalorder %v8663, %v8668
        %vm8720 = vcmp.ge.s32.totalorder %v8664, %v8668
        %vm8721 = vcmp.ge.s32.totalorder %v8665, %v8668
        %vm8722 = vcmp.ge.s32.totalorder %v8650, %v8669
        %vm8723 = vcmp.ge.s32.totalorder %v8651, %v8669
        %vm8724 = vcmp.ge.s32.totalorder %v8652, %v8669
        %vm8725 = vcmp.ge.s32.totalorder %v8653, %v8669
        %vm8726 = vcmp.ge.s32.totalorder %v8654, %v8669
        %vm8727 = vcmp.ge.s32.totalorder %v8655, %v8669
        %vm8728 = vcmp.ge.s32.totalorder %v8656, %v8669
        %vm8729 = vcmp.ge.s32.totalorder %v8657, %v8669
        %vm8730 = vcmp.ge.s32.totalorder %v8658, %v8669
        %vm8731 = vcmp.ge.s32.totalorder %v8659, %v8669
        %vm8732 = vcmp.ge.s32.totalorder %v8660, %v8669
        %vm8733 = vcmp.ge.s32.totalorder %v8661, %v8669
        %vm8734 = vcmp.ge.s32.totalorder %v8662, %v8669
        %vm8735 = vcmp.ge.s32.totalorder %v8663, %v8669
        %vm8736 = vcmp.ge.s32.totalorder %v8664, %v8669
        %vm8737 = vcmp.ge.s32.totalorder %v8665, %v8669
        %vm8738 = vcmp.ge.s32.totalorder %v8650, %v8670
        %vm8739 = vcmp.ge.s32.totalorder %v8651, %v8670
        %vm8740 = vcmp.ge.s32.totalorder %v8652, %v8670
        %vm8741 = vcmp.ge.s32.totalorder %v8653, %v8670
        %vm8742 = vcmp.ge.s32.totalorder %v8654, %v8670
        %vm8743 = vcmp.ge.s32.totalorder %v8655, %v8670
        %vm8744 = vcmp.ge.s32.totalorder %v8656, %v8670
        %vm8745 = vcmp.ge.s32.totalorder %v8657, %v8670
        %vm8746 = vcmp.ge.s32.totalorder %v8658, %v8670
        %vm8747 = vcmp.ge.s32.totalorder %v8659, %v8670
        %vm8748 = vcmp.ge.s32.totalorder %v8660, %v8670
        %vm8749 = vcmp.ge.s32.totalorder %v8661, %v8670
        %vm8750 = vcmp.ge.s32.totalorder %v8662, %v8670
        %vm8751 = vcmp.ge.s32.totalorder %v8663, %v8670
        %vm8752 = vcmp.ge.s32.totalorder %v8664, %v8670
        %vm8753 = vcmp.ge.s32.totalorder %v8665, %v8670
        %vm8754 = vcmp.ge.s32.totalorder %v8650, %v8671
        %vm8755 = vcmp.ge.s32.totalorder %v8651, %v8671
        %vm8756 = vcmp.ge.s32.totalorder %v8652, %v8671
        %vm8757 = vcmp.ge.s32.totalorder %v8653, %v8671
        %vm8758 = vcmp.ge.s32.totalorder %v8654, %v8671
        %vm8759 = vcmp.ge.s32.totalorder %v8655, %v8671
        %vm8760 = vcmp.ge.s32.totalorder %v8656, %v8671
        %vm8761 = vcmp.ge.s32.totalorder %v8657, %v8671
        %vm8762 = vcmp.ge.s32.totalorder %v8658, %v8671
        %vm8763 = vcmp.ge.s32.totalorder %v8659, %v8671
        %vm8764 = vcmp.ge.s32.totalorder %v8660, %v8671
        %vm8765 = vcmp.ge.s32.totalorder %v8661, %v8671
        %vm8766 = vcmp.ge.s32.totalorder %v8662, %v8671
        %vm8767 = vcmp.ge.s32.totalorder %v8663, %v8671
        %vm8768 = vcmp.ge.s32.totalorder %v8664, %v8671
        %vm8769 = vcmp.ge.s32.totalorder %v8665, %v8671
        %vm8770 = vcmp.ge.s32.totalorder %v8650, %v8672
        %vm8771 = vcmp.ge.s32.totalorder %v8651, %v8672
        %vm8772 = vcmp.ge.s32.totalorder %v8652, %v8672
        %vm8773 = vcmp.ge.s32.totalorder %v8653, %v8672
        %vm8774 = vcmp.ge.s32.totalorder %v8654, %v8672
        %vm8775 = vcmp.ge.s32.totalorder %v8655, %v8672
        %vm8776 = vcmp.ge.s32.totalorder %v8656, %v8672
        %vm8777 = vcmp.ge.s32.totalorder %v8657, %v8672
        %vm8778 = vcmp.ge.s32.totalorder %v8658, %v8672
        %vm8779 = vcmp.ge.s32.totalorder %v8659, %v8672
        %vm8780 = vcmp.ge.s32.totalorder %v8660, %v8672
        %vm8781 = vcmp.ge.s32.totalorder %v8661, %v8672
        %vm8782 = vcmp.ge.s32.totalorder %v8662, %v8672
        %vm8783 = vcmp.ge.s32.totalorder %v8663, %v8672
        %vm8784 = vcmp.ge.s32.totalorder %v8664, %v8672
        %vm8785 = vcmp.ge.s32.totalorder %v8665, %v8672
        %vm8786 = vcmp.ge.s32.totalorder %v8650, %v8673
        %vm8787 = vcmp.ge.s32.totalorder %v8651, %v8673
        %vm8788 = vcmp.ge.s32.totalorder %v8652, %v8673
        %vm8789 = vcmp.ge.s32.totalorder %v8653, %v8673
        %vm8790 = vcmp.ge.s32.totalorder %v8654, %v8673
        %vm8791 = vcmp.ge.s32.totalorder %v8655, %v8673
        %vm8792 = vcmp.ge.s32.totalorder %v8656, %v8673
        %vm8793 = vcmp.ge.s32.totalorder %v8657, %v8673
        %vm8794 = vcmp.ge.s32.totalorder %v8658, %v8673
        %vm8795 = vcmp.ge.s32.totalorder %v8659, %v8673
        %vm8796 = vcmp.ge.s32.totalorder %v8660, %v8673
        %vm8797 = vcmp.ge.s32.totalorder %v8661, %v8673
        %vm8798 = vcmp.ge.s32.totalorder %v8662, %v8673
        %vm8799 = vcmp.ge.s32.totalorder %v8663, %v8673
        %vm8800 = vcmp.ge.s32.totalorder %v8664, %v8673
        %vm8801 = vcmp.ge.s32.totalorder %v8665, %v8673
        %v8802 = vadd.s32 %v8641, 1
        %v8803 = vadd.s32 %v8642, 1
        %v8804 = vadd.s32 %v8643, 1
        %v8805 = vadd.s32 %v8644, 1
        %v8806 = vadd.s32 %v8645, 1
        %v8807 = vadd.s32 %v8646, 1
        %v8808 = vadd.s32 %v8647, 1
        %v8809 = vadd.s32 %v8648, 1
        %v8810 = vmul.u32 %v8802, 32
        %v8811 = vmul.u32 %v8803, 32
        %v8812 = vmul.u32 %v8804, 32
        %v8813 = vmul.u32 %v8805, 32
        %v8814 = vmul.u32 %v8806, 32
        %v8815 = vmul.u32 %v8807, 32
        %v8816 = vmul.u32 %v8808, 32
        %v8817 = vmul.u32 %v8809, 32
        %vm8818 = vcmp.lt.s32.totalorder %v8650, %v8810
        %vm8819 = vcmp.lt.s32.totalorder %v8651, %v8810
        %vm8820 = vcmp.lt.s32.totalorder %v8652, %v8810
        %vm8821 = vcmp.lt.s32.totalorder %v8653, %v8810
        %vm8822 = vcmp.lt.s32.totalorder %v8654, %v8810
        %vm8823 = vcmp.lt.s32.totalorder %v8655, %v8810
        %vm8824 = vcmp.lt.s32.totalorder %v8656, %v8810
        %vm8825 = vcmp.lt.s32.totalorder %v8657, %v8810
        %vm8826 = vcmp.lt.s32.totalorder %v8658, %v8810
        %vm8827 = vcmp.lt.s32.totalorder %v8659, %v8810
        %vm8828 = vcmp.lt.s32.totalorder %v8660, %v8810
        %vm8829 = vcmp.lt.s32.totalorder %v8661, %v8810
        %vm8830 = vcmp.lt.s32.totalorder %v8662, %v8810
        %vm8831 = vcmp.lt.s32.totalorder %v8663, %v8810
        %vm8832 = vcmp.lt.s32.totalorder %v8664, %v8810
        %vm8833 = vcmp.lt.s32.totalorder %v8665, %v8810
        %vm8834 = vcmp.lt.s32.totalorder %v8650, %v8811
        %vm8835 = vcmp.lt.s32.totalorder %v8651, %v8811
        %vm8836 = vcmp.lt.s32.totalorder %v8652, %v8811
        %vm8837 = vcmp.lt.s32.totalorder %v8653, %v8811
        %vm8838 = vcmp.lt.s32.totalorder %v8654, %v8811
        %vm8839 = vcmp.lt.s32.totalorder %v8655, %v8811
        %vm8840 = vcmp.lt.s32.totalorder %v8656, %v8811
        %vm8841 = vcmp.lt.s32.totalorder %v8657, %v8811
        %vm8842 = vcmp.lt.s32.totalorder %v8658, %v8811
        %vm8843 = vcmp.lt.s32.totalorder %v8659, %v8811
        %vm8844 = vcmp.lt.s32.totalorder %v8660, %v8811
        %vm8845 = vcmp.lt.s32.totalorder %v8661, %v8811
        %vm8846 = vcmp.lt.s32.totalorder %v8662, %v8811
        %vm8847 = vcmp.lt.s32.totalorder %v8663, %v8811
        %vm8848 = vcmp.lt.s32.totalorder %v8664, %v8811
        %vm8849 = vcmp.lt.s32.totalorder %v8665, %v8811
        %vm8850 = vcmp.lt.s32.totalorder %v8650, %v8812
        %vm8851 = vcmp.lt.s32.totalorder %v8651, %v8812
        %vm8852 = vcmp.lt.s32.totalorder %v8652, %v8812
        %vm8853 = vcmp.lt.s32.totalorder %v8653, %v8812
        %vm8854 = vcmp.lt.s32.totalorder %v8654, %v8812
        %vm8855 = vcmp.lt.s32.totalorder %v8655, %v8812
        %vm8856 = vcmp.lt.s32.totalorder %v8656, %v8812
        %vm8857 = vcmp.lt.s32.totalorder %v8657, %v8812
        %vm8858 = vcmp.lt.s32.totalorder %v8658, %v8812
        %vm8859 = vcmp.lt.s32.totalorder %v8659, %v8812
        %vm8860 = vcmp.lt.s32.totalorder %v8660, %v8812
        %vm8861 = vcmp.lt.s32.totalorder %v8661, %v8812
        %vm8862 = vcmp.lt.s32.totalorder %v8662, %v8812
        %vm8863 = vcmp.lt.s32.totalorder %v8663, %v8812
        %vm8864 = vcmp.lt.s32.totalorder %v8664, %v8812
        %vm8865 = vcmp.lt.s32.totalorder %v8665, %v8812
        %vm8866 = vcmp.lt.s32.totalorder %v8650, %v8813
        %vm8867 = vcmp.lt.s32.totalorder %v8651, %v8813
        %vm8868 = vcmp.lt.s32.totalorder %v8652, %v8813
        %vm8869 = vcmp.lt.s32.totalorder %v8653, %v8813
        %vm8870 = vcmp.lt.s32.totalorder %v8654, %v8813
        %vm8871 = vcmp.lt.s32.totalorder %v8655, %v8813
        %vm8872 = vcmp.lt.s32.totalorder %v8656, %v8813
        %vm8873 = vcmp.lt.s32.totalorder %v8657, %v8813
        %vm8874 = vcmp.lt.s32.totalorder %v8658, %v8813
        %vm8875 = vcmp.lt.s32.totalorder %v8659, %v8813
        %vm8876 = vcmp.lt.s32.totalorder %v8660, %v8813
        %vm8877 = vcmp.lt.s32.totalorder %v8661, %v8813
        %vm8878 = vcmp.lt.s32.totalorder %v8662, %v8813
        %vm8879 = vcmp.lt.s32.totalorder %v8663, %v8813
        %vm8880 = vcmp.lt.s32.totalorder %v8664, %v8813
        %vm8881 = vcmp.lt.s32.totalorder %v8665, %v8813
        %vm8882 = vcmp.lt.s32.totalorder %v8650, %v8814
        %vm8883 = vcmp.lt.s32.totalorder %v8651, %v8814
        %vm8884 = vcmp.lt.s32.totalorder %v8652, %v8814
        %vm8885 = vcmp.lt.s32.totalorder %v8653, %v8814
        %vm8886 = vcmp.lt.s32.totalorder %v8654, %v8814
        %vm8887 = vcmp.lt.s32.totalorder %v8655, %v8814
        %vm8888 = vcmp.lt.s32.totalorder %v8656, %v8814
        %vm8889 = vcmp.lt.s32.totalorder %v8657, %v8814
        %vm8890 = vcmp.lt.s32.totalorder %v8658, %v8814
        %vm8891 = vcmp.lt.s32.totalorder %v8659, %v8814
        %vm8892 = vcmp.lt.s32.totalorder %v8660, %v8814
        %vm8893 = vcmp.lt.s32.totalorder %v8661, %v8814
        %vm8894 = vcmp.lt.s32.totalorder %v8662, %v8814
        %vm8895 = vcmp.lt.s32.totalorder %v8663, %v8814
        %vm8896 = vcmp.lt.s32.totalorder %v8664, %v8814
        %vm8897 = vcmp.lt.s32.totalorder %v8665, %v8814
        %vm8898 = vcmp.lt.s32.totalorder %v8650, %v8815
        %vm8899 = vcmp.lt.s32.totalorder %v8651, %v8815
        %vm8900 = vcmp.lt.s32.totalorder %v8652, %v8815
        %vm8901 = vcmp.lt.s32.totalorder %v8653, %v8815
        %vm8902 = vcmp.lt.s32.totalorder %v8654, %v8815
        %vm8903 = vcmp.lt.s32.totalorder %v8655, %v8815
        %vm8904 = vcmp.lt.s32.totalorder %v8656, %v8815
        %vm8905 = vcmp.lt.s32.totalorder %v8657, %v8815
        %vm8906 = vcmp.lt.s32.totalorder %v8658, %v8815
        %vm8907 = vcmp.lt.s32.totalorder %v8659, %v8815
        %vm8908 = vcmp.lt.s32.totalorder %v8660, %v8815
        %vm8909 = vcmp.lt.s32.totalorder %v8661, %v8815
        %vm8910 = vcmp.lt.s32.totalorder %v8662, %v8815
        %vm8911 = vcmp.lt.s32.totalorder %v8663, %v8815
        %vm8912 = vcmp.lt.s32.totalorder %v8664, %v8815
        %vm8913 = vcmp.lt.s32.totalorder %v8665, %v8815
        %vm8914 = vcmp.lt.s32.totalorder %v8650, %v8816
        %vm8915 = vcmp.lt.s32.totalorder %v8651, %v8816
        %vm8916 = vcmp.lt.s32.totalorder %v8652, %v8816
        %vm8917 = vcmp.lt.s32.totalorder %v8653, %v8816
        %vm8918 = vcmp.lt.s32.totalorder %v8654, %v8816
        %vm8919 = vcmp.lt.s32.totalorder %v8655, %v8816
        %vm8920 = vcmp.lt.s32.totalorder %v8656, %v8816
        %vm8921 = vcmp.lt.s32.totalorder %v8657, %v8816
        %vm8922 = vcmp.lt.s32.totalorder %v8658, %v8816
        %vm8923 = vcmp.lt.s32.totalorder %v8659, %v8816
        %vm8924 = vcmp.lt.s32.totalorder %v8660, %v8816
        %vm8925 = vcmp.lt.s32.totalorder %v8661, %v8816
        %vm8926 = vcmp.lt.s32.totalorder %v8662, %v8816
        %vm8927 = vcmp.lt.s32.totalorder %v8663, %v8816
        %vm8928 = vcmp.lt.s32.totalorder %v8664, %v8816
        %vm8929 = vcmp.lt.s32.totalorder %v8665, %v8816
        %vm8930 = vcmp.lt.s32.totalorder %v8650, %v8817
        %vm8931 = vcmp.lt.s32.totalorder %v8651, %v8817
        %vm8932 = vcmp.lt.s32.totalorder %v8652, %v8817
        %vm8933 = vcmp.lt.s32.totalorder %v8653, %v8817
        %vm8934 = vcmp.lt.s32.totalorder %v8654, %v8817
        %vm8935 = vcmp.lt.s32.totalorder %v8655, %v8817
        %vm8936 = vcmp.lt.s32.totalorder %v8656, %v8817
        %vm8937 = vcmp.lt.s32.totalorder %v8657, %v8817
        %vm8938 = vcmp.lt.s32.totalorder %v8658, %v8817
        %vm8939 = vcmp.lt.s32.totalorder %v8659, %v8817
        %vm8940 = vcmp.lt.s32.totalorder %v8660, %v8817
        %vm8941 = vcmp.lt.s32.totalorder %v8661, %v8817
        %vm8942 = vcmp.lt.s32.totalorder %v8662, %v8817
        %vm8943 = vcmp.lt.s32.totalorder %v8663, %v8817
        %vm8944 = vcmp.lt.s32.totalorder %v8664, %v8817
        %vm8945 = vcmp.lt.s32.totalorder %v8665, %v8817
        %vm8946 = vmand %vm8674, %vm8818
        %vm8947 = vmand %vm8675, %vm8819
        %vm8948 = vmand %vm8676, %vm8820
        %vm8949 = vmand %vm8677, %vm8821
        %vm8950 = vmand %vm8678, %vm8822
        %vm8951 = vmand %vm8679, %vm8823
        %vm8952 = vmand %vm8680, %vm8824
        %vm8953 = vmand %vm8681, %vm8825
        %vm8954 = vmand %vm8682, %vm8826
        %vm8955 = vmand %vm8683, %vm8827
        %vm8956 = vmand %vm8684, %vm8828
        %vm8957 = vmand %vm8685, %vm8829
        %vm8958 = vmand %vm8686, %vm8830
        %vm8959 = vmand %vm8687, %vm8831
        %vm8960 = vmand %vm8688, %vm8832
        %vm8961 = vmand %vm8689, %vm8833
        %vm8962 = vmand %vm8690, %vm8834
        %vm8963 = vmand %vm8691, %vm8835
        %vm8964 = vmand %vm8692, %vm8836
        %vm8965 = vmand %vm8693, %vm8837
        %vm8966 = vmand %vm8694, %vm8838
        %vm8967 = vmand %vm8695, %vm8839
        %vm8968 = vmand %vm8696, %vm8840
        %vm8969 = vmand %vm8697, %vm8841
        %vm8970 = vmand %vm8698, %vm8842
        %vm8971 = vmand %vm8699, %vm8843
        %vm8972 = vmand %vm8700, %vm8844
        %vm8973 = vmand %vm8701, %vm8845
        %vm8974 = vmand %vm8702, %vm8846
        %vm8975 = vmand %vm8703, %vm8847
        %vm8976 = vmand %vm8704, %vm8848
        %vm8977 = vmand %vm8705, %vm8849
        %vm8978 = vmand %vm8706, %vm8850
        %vm8979 = vmand %vm8707, %vm8851
        %vm8980 = vmand %vm8708, %vm8852
        %vm8981 = vmand %vm8709, %vm8853
        %vm8982 = vmand %vm8710, %vm8854
        %vm8983 = vmand %vm8711, %vm8855
        %vm8984 = vmand %vm8712, %vm8856
        %vm8985 = vmand %vm8713, %vm8857
        %vm8986 = vmand %vm8714, %vm8858
        %vm8987 = vmand %vm8715, %vm8859
        %vm8988 = vmand %vm8716, %vm8860
        %vm8989 = vmand %vm8717, %vm8861
        %vm8990 = vmand %vm8718, %vm8862
        %vm8991 = vmand %vm8719, %vm8863
        %vm8992 = vmand %vm8720, %vm8864
        %vm8993 = vmand %vm8721, %vm8865
        %vm8994 = vmand %vm8722, %vm8866
        %vm8995 = vmand %vm8723, %vm8867
        %vm8996 = vmand %vm8724, %vm8868
        %vm8997 = vmand %vm8725, %vm8869
        %vm8998 = vmand %vm8726, %vm8870
        %vm8999 = vmand %vm8727, %vm8871
        %vm9000 = vmand %vm8728, %vm8872
        %vm9001 = vmand %vm8729, %vm8873
        %vm9002 = vmand %vm8730, %vm8874
        %vm9003 = vmand %vm8731, %vm8875
        %vm9004 = vmand %vm8732, %vm8876
        %vm9005 = vmand %vm8733, %vm8877
        %vm9006 = vmand %vm8734, %vm8878
        %vm9007 = vmand %vm8735, %vm8879
        %vm9008 = vmand %vm8736, %vm8880
        %vm9009 = vmand %vm8737, %vm8881
        %vm9010 = vmand %vm8738, %vm8882
        %vm9011 = vmand %vm8739, %vm8883
        %vm9012 = vmand %vm8740, %vm8884
        %vm9013 = vmand %vm8741, %vm8885
        %vm9014 = vmand %vm8742, %vm8886
        %vm9015 = vmand %vm8743, %vm8887
        %vm9016 = vmand %vm8744, %vm8888
        %vm9017 = vmand %vm8745, %vm8889
        %vm9018 = vmand %vm8746, %vm8890
        %vm9019 = vmand %vm8747, %vm8891
        %vm9020 = vmand %vm8748, %vm8892
        %vm9021 = vmand %vm8749, %vm8893
        %vm9022 = vmand %vm8750, %vm8894
        %vm9023 = vmand %vm8751, %vm8895
        %vm9024 = vmand %vm8752, %vm8896
        %vm9025 = vmand %vm8753, %vm8897
        %vm9026 = vmand %vm8754, %vm8898
        %vm9027 = vmand %vm8755, %vm8899
        %vm9028 = vmand %vm8756, %vm8900
        %vm9029 = vmand %vm8757, %vm8901
        %vm9030 = vmand %vm8758, %vm8902
        %vm9031 = vmand %vm8759, %vm8903
        %vm9032 = vmand %vm8760, %vm8904
        %vm9033 = vmand %vm8761, %vm8905
        %vm9034 = vmand %vm8762, %vm8906
        %vm9035 = vmand %vm8763, %vm8907
        %vm9036 = vmand %vm8764, %vm8908
        %vm9037 = vmand %vm8765, %vm8909
        %vm9038 = vmand %vm8766, %vm8910
        %vm9039 = vmand %vm8767, %vm8911
        %vm9040 = vmand %vm8768, %vm8912
        %vm9041 = vmand %vm8769, %vm8913
        %vm9042 = vmand %vm8770, %vm8914
        %vm9043 = vmand %vm8771, %vm8915
        %vm9044 = vmand %vm8772, %vm8916
        %vm9045 = vmand %vm8773, %vm8917
        %vm9046 = vmand %vm8774, %vm8918
        %vm9047 = vmand %vm8775, %vm8919
        %vm9048 = vmand %vm8776, %vm8920
        %vm9049 = vmand %vm8777, %vm8921
        %vm9050 = vmand %vm8778, %vm8922
        %vm9051 = vmand %vm8779, %vm8923
        %vm9052 = vmand %vm8780, %vm8924
        %vm9053 = vmand %vm8781, %vm8925
        %vm9054 = vmand %vm8782, %vm8926
        %vm9055 = vmand %vm8783, %vm8927
        %vm9056 = vmand %vm8784, %vm8928
        %vm9057 = vmand %vm8785, %vm8929
        %vm9058 = vmand %vm8786, %vm8930
        %vm9059 = vmand %vm8787, %vm8931
        %vm9060 = vmand %vm8788, %vm8932
        %vm9061 = vmand %vm8789, %vm8933
        %vm9062 = vmand %vm8790, %vm8934
        %vm9063 = vmand %vm8791, %vm8935
        %vm9064 = vmand %vm8792, %vm8936
        %vm9065 = vmand %vm8793, %vm8937
        %vm9066 = vmand %vm8794, %vm8938
        %vm9067 = vmand %vm8795, %vm8939
        %vm9068 = vmand %vm8796, %vm8940
        %vm9069 = vmand %vm8797, %vm8941
        %vm9070 = vmand %vm8798, %vm8942
        %vm9071 = vmand %vm8799, %vm8943
        %vm9072 = vmand %vm8800, %vm8944
        %vm9073 = vmand %vm8801, %vm8945
        %v9074 = vsel %vm8946, %v7803, 0.0
        %v9075 = vsel %vm8947, %v7805, 0.0
        %v9076 = vsel %vm8948, %v7916, 0.0
        %v9077 = vsel %vm8949, %v7918, 0.0
        %v9078 = vsel %vm8950, %v8029, 0.0
        %v9079 = vsel %vm8951, %v8031, 0.0
        %v9080 = vsel %vm8952, %v8142, 0.0
        %v9081 = vsel %vm8953, %v8144, 0.0
        %v9082 = vsel %vm8954, %v8255, 0.0
        %v9083 = vsel %vm8955, %v8257, 0.0
        %v9084 = vsel %vm8956, %v8368, 0.0
        %v9085 = vsel %vm8957, %v8370, 0.0
        %v9086 = vsel %vm8958, %v8481, 0.0
        %v9087 = vsel %vm8959, %v8483, 0.0
        %v9088 = vsel %vm8960, %v8594, 0.0
        %v9089 = vsel %vm8961, %v8596, 0.0
        %v9090 = vsel %vm8962, %v7809, 0.0
        %v9091 = vsel %vm8963, %v7811, 0.0
        %v9092 = vsel %vm8964, %v7922, 0.0
        %v9093 = vsel %vm8965, %v7924, 0.0
        %v9094 = vsel %vm8966, %v8035, 0.0
        %v9095 = vsel %vm8967, %v8037, 0.0
        %v9096 = vsel %vm8968, %v8148, 0.0
        %v9097 = vsel %vm8969, %v8150, 0.0
        %v9098 = vsel %vm8970, %v8261, 0.0
        %v9099 = vsel %vm8971, %v8263, 0.0
        %v9100 = vsel %vm8972, %v8374, 0.0
        %v9101 = vsel %vm8973, %v8376, 0.0
        %v9102 = vsel %vm8974, %v8487, 0.0
        %v9103 = vsel %vm8975, %v8489, 0.0
        %v9104 = vsel %vm8976, %v8600, 0.0
        %v9105 = vsel %vm8977, %v8602, 0.0
        %v9106 = vsel %vm8978, %v7815, 0.0
        %v9107 = vsel %vm8979, %v7817, 0.0
        %v9108 = vsel %vm8980, %v7928, 0.0
        %v9109 = vsel %vm8981, %v7930, 0.0
        %v9110 = vsel %vm8982, %v8041, 0.0
        %v9111 = vsel %vm8983, %v8043, 0.0
        %v9112 = vsel %vm8984, %v8154, 0.0
        %v9113 = vsel %vm8985, %v8156, 0.0
        %v9114 = vsel %vm8986, %v8267, 0.0
        %v9115 = vsel %vm8987, %v8269, 0.0
        %v9116 = vsel %vm8988, %v8380, 0.0
        %v9117 = vsel %vm8989, %v8382, 0.0
        %v9118 = vsel %vm8990, %v8493, 0.0
        %v9119 = vsel %vm8991, %v8495, 0.0
        %v9120 = vsel %vm8992, %v8606, 0.0
        %v9121 = vsel %vm8993, %v8608, 0.0
        %v9122 = vsel %vm8994, %v7821, 0.0
        %v9123 = vsel %vm8995, %v7823, 0.0
        %v9124 = vsel %vm8996, %v7934, 0.0
        %v9125 = vsel %vm8997, %v7936, 0.0
        %v9126 = vsel %vm8998, %v8047, 0.0
        %v9127 = vsel %vm8999, %v8049, 0.0
        %v9128 = vsel %vm9000, %v8160, 0.0
        %v9129 = vsel %vm9001, %v8162, 0.0
        %v9130 = vsel %vm9002, %v8273, 0.0
        %v9131 = vsel %vm9003, %v8275, 0.0
        %v9132 = vsel %vm9004, %v8386, 0.0
        %v9133 = vsel %vm9005, %v8388, 0.0
        %v9134 = vsel %vm9006, %v8499, 0.0
        %v9135 = vsel %vm9007, %v8501, 0.0
        %v9136 = vsel %vm9008, %v8612, 0.0
        %v9137 = vsel %vm9009, %v8614, 0.0
        %v9138 = vsel %vm9010, %v7827, 0.0
        %v9139 = vsel %vm9011, %v7829, 0.0
        %v9140 = vsel %vm9012, %v7940, 0.0
        %v9141 = vsel %vm9013, %v7942, 0.0
        %v9142 = vsel %vm9014, %v8053, 0.0
        %v9143 = vsel %vm9015, %v8055, 0.0
        %v9144 = vsel %vm9016, %v8166, 0.0
        %v9145 = vsel %vm9017, %v8168, 0.0
        %v9146 = vsel %vm9018, %v8279, 0.0
        %v9147 = vsel %vm9019, %v8281, 0.0
        %v9148 = vsel %vm9020, %v8392, 0.0
        %v9149 = vsel %vm9021, %v8394, 0.0
        %v9150 = vsel %vm9022, %v8505, 0.0
        %v9151 = vsel %vm9023, %v8507, 0.0
        %v9152 = vsel %vm9024, %v8618, 0.0
        %v9153 = vsel %vm9025, %v8620, 0.0
        %v9154 = vsel %vm9026, %v7833, 0.0
        %v9155 = vsel %vm9027, %v7835, 0.0
        %v9156 = vsel %vm9028, %v7946, 0.0
        %v9157 = vsel %vm9029, %v7948, 0.0
        %v9158 = vsel %vm9030, %v8059, 0.0
        %v9159 = vsel %vm9031, %v8061, 0.0
        %v9160 = vsel %vm9032, %v8172, 0.0
        %v9161 = vsel %vm9033, %v8174, 0.0
        %v9162 = vsel %vm9034, %v8285, 0.0
        %v9163 = vsel %vm9035, %v8287, 0.0
        %v9164 = vsel %vm9036, %v8398, 0.0
        %v9165 = vsel %vm9037, %v8400, 0.0
        %v9166 = vsel %vm9038, %v8511, 0.0
        %v9167 = vsel %vm9039, %v8513, 0.0
        %v9168 = vsel %vm9040, %v8624, 0.0
        %v9169 = vsel %vm9041, %v8626, 0.0
        %v9170 = vsel %vm9042, %v7839, 0.0
        %v9171 = vsel %vm9043, %v7841, 0.0
        %v9172 = vsel %vm9044, %v7952, 0.0
        %v9173 = vsel %vm9045, %v7954, 0.0
        %v9174 = vsel %vm9046, %v8065, 0.0
        %v9175 = vsel %vm9047, %v8067, 0.0
        %v9176 = vsel %vm9048, %v8178, 0.0
        %v9177 = vsel %vm9049, %v8180, 0.0
        %v9178 = vsel %vm9050, %v8291, 0.0
        %v9179 = vsel %vm9051, %v8293, 0.0
        %v9180 = vsel %vm9052, %v8404, 0.0
        %v9181 = vsel %vm9053, %v8406, 0.0
        %v9182 = vsel %vm9054, %v8517, 0.0
        %v9183 = vsel %vm9055, %v8519, 0.0
        %v9184 = vsel %vm9056, %v8630, 0.0
        %v9185 = vsel %vm9057, %v8632, 0.0
        %v9186 = vsel %vm9058, %v7845, 0.0
        %v9187 = vsel %vm9059, %v7847, 0.0
        %v9188 = vsel %vm9060, %v7958, 0.0
        %v9189 = vsel %vm9061, %v7960, 0.0
        %v9190 = vsel %vm9062, %v8071, 0.0
        %v9191 = vsel %vm9063, %v8073, 0.0
        %v9192 = vsel %vm9064, %v8184, 0.0
        %v9193 = vsel %vm9065, %v8186, 0.0
        %v9194 = vsel %vm9066, %v8297, 0.0
        %v9195 = vsel %vm9067, %v8299, 0.0
        %v9196 = vsel %vm9068, %v8410, 0.0
        %v9197 = vsel %vm9069, %v8412, 0.0
        %v9198 = vsel %vm9070, %v8523, 0.0
        %v9199 = vsel %vm9071, %v8525, 0.0
        %v9200 = vsel %vm9072, %v8636, 0.0
        %v9201 = vsel %vm9073, %v8638, 0.0
        %v9202 = vadd.f32 %v9074, %v9090
        %v9203 = vadd.f32 %v9202, %v9106
        %v9204 = vadd.f32 %v9203, %v9122
        %v9205 = vadd.f32 %v9204, %v9138
        %v9206 = vadd.f32 %v9205, %v9154
        %v9207 = vadd.f32 %v9206, %v9170
        %v9208 = vadd.f32 %v9207, %v9186
        %v9209 = vrot.slane %v9208, 4
        %v9210 = vadd.f32 %v9208, %v9209
        %v9211 = vrot.slane %v9210, 2
        %v9212 = vadd.f32 %v9210, %v9211
        %v9213 = vrot.slane %v9212, 1
        %v9214 = vadd.f32 %v9212, %v9213
        %v9215 = vadd.f32 %v9075, %v9091
        %v9216 = vadd.f32 %v9215, %v9107
        %v9217 = vadd.f32 %v9216, %v9123
        %v9218 = vadd.f32 %v9217, %v9139
        %v9219 = vadd.f32 %v9218, %v9155
        %v9220 = vadd.f32 %v9219, %v9171
        %v9221 = vadd.f32 %v9220, %v9187
        %v9222 = vrot.slane %v9221, 4
        %v9223 = vadd.f32 %v9221, %v9222
        %v9224 = vrot.slane %v9223, 2
        %v9225 = vadd.f32 %v9223, %v9224
        %v9226 = vrot.slane %v9225, 1
        %v9227 = vadd.f32 %v9225, %v9226
        %v9228 = vadd.f32 %v9076, %v9092
        %v9229 = vadd.f32 %v9228, %v9108
        %v9230 = vadd.f32 %v9229, %v9124
        %v9231 = vadd.f32 %v9230, %v9140
        %v9232 = vadd.f32 %v9231, %v9156
        %v9233 = vadd.f32 %v9232, %v9172
        %v9234 = vadd.f32 %v9233, %v9188
        %v9235 = vrot.slane %v9234, 4
        %v9236 = vadd.f32 %v9234, %v9235
        %v9237 = vrot.slane %v9236, 2
        %v9238 = vadd.f32 %v9236, %v9237
        %v9239 = vrot.slane %v9238, 1
        %v9240 = vadd.f32 %v9238, %v9239
        %v9241 = vadd.f32 %v9077, %v9093
        %v9242 = vadd.f32 %v9241, %v9109
        %v9243 = vadd.f32 %v9242, %v9125
        %v9244 = vadd.f32 %v9243, %v9141
        %v9245 = vadd.f32 %v9244, %v9157
        %v9246 = vadd.f32 %v9245, %v9173
        %v9247 = vadd.f32 %v9246, %v9189
        %v9248 = vrot.slane %v9247, 4
        %v9249 = vadd.f32 %v9247, %v9248
        %v9250 = vrot.slane %v9249, 2
        %v9251 = vadd.f32 %v9249, %v9250
        %v9252 = vrot.slane %v9251, 1
        %v9253 = vadd.f32 %v9251, %v9252
        %v9254 = vadd.f32 %v9078, %v9094
        %v9255 = vadd.f32 %v9254, %v9110
        %v9256 = vadd.f32 %v9255, %v9126
        %v9257 = vadd.f32 %v9256, %v9142
        %v9258 = vadd.f32 %v9257, %v9158
        %v9259 = vadd.f32 %v9258, %v9174
        %v9260 = vadd.f32 %v9259, %v9190
        %v9261 = vrot.slane %v9260, 4
        %v9262 = vadd.f32 %v9260, %v9261
        %v9263 = vrot.slane %v9262, 2
        %v9264 = vadd.f32 %v9262, %v9263
        %v9265 = vrot.slane %v9264, 1
        %v9266 = vadd.f32 %v9264, %v9265
        %v9267 = vadd.f32 %v9079, %v9095
        %v9268 = vadd.f32 %v9267, %v9111
        %v9269 = vadd.f32 %v9268, %v9127
        %v9270 = vadd.f32 %v9269, %v9143
        %v9271 = vadd.f32 %v9270, %v9159
        %v9272 = vadd.f32 %v9271, %v9175
        %v9273 = vadd.f32 %v9272, %v9191
        %v9274 = vrot.slane %v9273, 4
        %v9275 = vadd.f32 %v9273, %v9274
        %v9276 = vrot.slane %v9275, 2
        %v9277 = vadd.f32 %v9275, %v9276
        %v9278 = vrot.slane %v9277, 1
        %v9279 = vadd.f32 %v9277, %v9278
        %v9280 = vadd.f32 %v9080, %v9096
        %v9281 = vadd.f32 %v9280, %v9112
        %v9282 = vadd.f32 %v9281, %v9128
        %v9283 = vadd.f32 %v9282, %v9144
        %v9284 = vadd.f32 %v9283, %v9160
        %v9285 = vadd.f32 %v9284, %v9176
        %v9286 = vadd.f32 %v9285, %v9192
        %v9287 = vrot.slane %v9286, 4
        %v9288 = vadd.f32 %v9286, %v9287
        %v9289 = vrot.slane %v9288, 2
        %v9290 = vadd.f32 %v9288, %v9289
        %v9291 = vrot.slane %v9290, 1
        %v9292 = vadd.f32 %v9290, %v9291
        %v9293 = vadd.f32 %v9081, %v9097
        %v9294 = vadd.f32 %v9293, %v9113
        %v9295 = vadd.f32 %v9294, %v9129
        %v9296 = vadd.f32 %v9295, %v9145
        %v9297 = vadd.f32 %v9296, %v9161
        %v9298 = vadd.f32 %v9297, %v9177
        %v9299 = vadd.f32 %v9298, %v9193
        %v9300 = vrot.slane %v9299, 4
        %v9301 = vadd.f32 %v9299, %v9300
        %v9302 = vrot.slane %v9301, 2
        %v9303 = vadd.f32 %v9301, %v9302
        %v9304 = vrot.slane %v9303, 1
        %v9305 = vadd.f32 %v9303, %v9304
        %v9306 = vadd.f32 %v9082, %v9098
        %v9307 = vadd.f32 %v9306, %v9114
        %v9308 = vadd.f32 %v9307, %v9130
        %v9309 = vadd.f32 %v9308, %v9146
        %v9310 = vadd.f32 %v9309, %v9162
        %v9311 = vadd.f32 %v9310, %v9178
        %v9312 = vadd.f32 %v9311, %v9194
        %v9313 = vrot.slane %v9312, 4
        %v9314 = vadd.f32 %v9312, %v9313
        %v9315 = vrot.slane %v9314, 2
        %v9316 = vadd.f32 %v9314, %v9315
        %v9317 = vrot.slane %v9316, 1
        %v9318 = vadd.f32 %v9316, %v9317
        %v9319 = vadd.f32 %v9083, %v9099
        %v9320 = vadd.f32 %v9319, %v9115
        %v9321 = vadd.f32 %v9320, %v9131
        %v9322 = vadd.f32 %v9321, %v9147
        %v9323 = vadd.f32 %v9322, %v9163
        %v9324 = vadd.f32 %v9323, %v9179
        %v9325 = vadd.f32 %v9324, %v9195
        %v9326 = vrot.slane %v9325, 4
        %v9327 = vadd.f32 %v9325, %v9326
        %v9328 = vrot.slane %v9327, 2
        %v9329 = vadd.f32 %v9327, %v9328
        %v9330 = vrot.slane %v9329, 1
        %v9331 = vadd.f32 %v9329, %v9330
        %v9332 = vadd.f32 %v9084, %v9100
        %v9333 = vadd.f32 %v9332, %v9116
        %v9334 = vadd.f32 %v9333, %v9132
        %v9335 = vadd.f32 %v9334, %v9148
        %v9336 = vadd.f32 %v9335, %v9164
        %v9337 = vadd.f32 %v9336, %v9180
        %v9338 = vadd.f32 %v9337, %v9196
        %v9339 = vrot.slane %v9338, 4
        %v9340 = vadd.f32 %v9338, %v9339
        %v9341 = vrot.slane %v9340, 2
        %v9342 = vadd.f32 %v9340, %v9341
        %v9343 = vrot.slane %v9342, 1
        %v9344 = vadd.f32 %v9342, %v9343
        %v9345 = vadd.f32 %v9085, %v9101
        %v9346 = vadd.f32 %v9345, %v9117
        %v9347 = vadd.f32 %v9346, %v9133
        %v9348 = vadd.f32 %v9347, %v9149
        %v9349 = vadd.f32 %v9348, %v9165
        %v9350 = vadd.f32 %v9349, %v9181
        %v9351 = vadd.f32 %v9350, %v9197
        %v9352 = vrot.slane %v9351, 4
        %v9353 = vadd.f32 %v9351, %v9352
        %v9354 = vrot.slane %v9353, 2
        %v9355 = vadd.f32 %v9353, %v9354
        %v9356 = vrot.slane %v9355, 1
        %v9357 = vadd.f32 %v9355, %v9356
        %v9358 = vadd.f32 %v9086, %v9102
        %v9359 = vadd.f32 %v9358, %v9118
        %v9360 = vadd.f32 %v9359, %v9134
        %v9361 = vadd.f32 %v9360, %v9150
        %v9362 = vadd.f32 %v9361, %v9166
        %v9363 = vadd.f32 %v9362, %v9182
        %v9364 = vadd.f32 %v9363, %v9198
        %v9365 = vrot.slane %v9364, 4
        %v9366 = vadd.f32 %v9364, %v9365
        %v9367 = vrot.slane %v9366, 2
        %v9368 = vadd.f32 %v9366, %v9367
        %v9369 = vrot.slane %v9368, 1
        %v9370 = vadd.f32 %v9368, %v9369
        %v9371 = vadd.f32 %v9087, %v9103
        %v9372 = vadd.f32 %v9371, %v9119
        %v9373 = vadd.f32 %v9372, %v9135
        %v9374 = vadd.f32 %v9373, %v9151
        %v9375 = vadd.f32 %v9374, %v9167
        %v9376 = vadd.f32 %v9375, %v9183
        %v9377 = vadd.f32 %v9376, %v9199
        %v9378 = vrot.slane %v9377, 4
        %v9379 = vadd.f32 %v9377, %v9378
        %v9380 = vrot.slane %v9379, 2
        %v9381 = vadd.f32 %v9379, %v9380
        %v9382 = vrot.slane %v9381, 1
        %v9383 = vadd.f32 %v9381, %v9382
        %v9384 = vadd.f32 %v9088, %v9104
        %v9385 = vadd.f32 %v9384, %v9120
        %v9386 = vadd.f32 %v9385, %v9136
        %v9387 = vadd.f32 %v9386, %v9152
        %v9388 = vadd.f32 %v9387, %v9168
        %v9389 = vadd.f32 %v9388, %v9184
        %v9390 = vadd.f32 %v9389, %v9200
        %v9391 = vrot.slane %v9390, 4
        %v9392 = vadd.f32 %v9390, %v9391
        %v9393 = vrot.slane %v9392, 2
        %v9394 = vadd.f32 %v9392, %v9393
        %v9395 = vrot.slane %v9394, 1
        %v9396 = vadd.f32 %v9394, %v9395
        %v9397 = vadd.f32 %v9089, %v9105
        %v9398 = vadd.f32 %v9397, %v9121
        %v9399 = vadd.f32 %v9398, %v9137
        %v9400 = vadd.f32 %v9399, %v9153
        %v9401 = vadd.f32 %v9400, %v9169
        %v9402 = vadd.f32 %v9401, %v9185
        %v9403 = vadd.f32 %v9402, %v9201
        %v9404 = vrot.slane %v9403, 4
        %v9405 = vadd.f32 %v9403, %v9404
        %v9406 = vrot.slane %v9405, 2
        %v9407 = vadd.f32 %v9405, %v9406
        %v9408 = vrot.slane %v9407, 1
        %v9409 = vadd.f32 %v9407, %v9408
        %9410 = vrot.lane.b32.xlu0 %v9214, 32
        %v9411 = vpop.permute.xlu0 %9410
        %9412 = vrot.lane.b32.xlu0 %v9227, 32
        %v9413 = vpop.permute.xlu0 %9412
        %9414 = vrot.lane.b32.xlu0 %v9240, 32
        %v9415 = vpop.permute.xlu0 %9414
        %9416 = vrot.lane.b32.xlu0 %v9253, 32
        %v9417 = vpop.permute.xlu0 %9416
        %9418 = vrot.lane.b32.xlu0 %v9266, 32
        %v9419 = vpop.permute.xlu0 %9418
        %9420 = vrot.lane.b32.xlu0 %v9279, 32
        %v9421 = vpop.permute.xlu0 %9420
        %9422 = vrot.lane.b32.xlu0 %v9292, 32
        %v9423 = vpop.permute.xlu0 %9422
        %9424 = vrot.lane.b32.xlu0 %v9305, 32
        %v9425 = vpop.permute.xlu0 %9424
        %9426 = vrot.lane.b32.xlu0 %v9318, 32
        %v9427 = vpop.permute.xlu0 %9426
        %9428 = vrot.lane.b32.xlu0 %v9331, 32
        %v9429 = vpop.permute.xlu0 %9428
        %9430 = vrot.lane.b32.xlu0 %v9344, 32
        %v9431 = vpop.permute.xlu0 %9430
        %9432 = vrot.lane.b32.xlu0 %v9357, 32
        %v9433 = vpop.permute.xlu0 %9432
        %9434 = vrot.lane.b32.xlu0 %v9370, 32
        %v9435 = vpop.permute.xlu0 %9434
        %9436 = vrot.lane.b32.xlu0 %v9383, 32
        %v9437 = vpop.permute.xlu0 %9436
        %9438 = vrot.lane.b32.xlu0 %v9396, 32
        %v9439 = vpop.permute.xlu0 %9438
        %9440 = vrot.lane.b32.xlu0 %v9409, 32
        %v9441 = vpop.permute.xlu0 %9440
        %vm9442 = vcmp.lt.s32.totalorder %v8650, 32
        %v9443 = vsel %vm9442, %v9439, %v9441
        %v9444 = vsel %vm9442, %v9437, %v9439
        %v9445 = vsel %vm9442, %v9435, %v9437
        %v9446 = vsel %vm9442, %v9433, %v9435
        %v9447 = vsel %vm9442, %v9431, %v9433
        %v9448 = vsel %vm9442, %v9429, %v9431
        %v9449 = vsel %vm9442, %v9427, %v9429
        %v9450 = vsel %vm9442, %v9425, %v9427
        %v9451 = vsel %vm9442, %v9423, %v9425
        %v9452 = vsel %vm9442, %v9421, %v9423
        %v9453 = vsel %vm9442, %v9419, %v9421
        %v9454 = vsel %vm9442, %v9417, %v9419
        %v9455 = vsel %vm9442, %v9415, %v9417
        %v9456 = vsel %vm9442, %v9413, %v9415
        %v9457 = vsel %vm9442, %v9411, %v9413
        %v9458 = vsel %vm9442, %v9441, %v9411
        %v9459 = vadd.f32 %v9214, %v9458
        %v9460 = vadd.f32 %v9227, %v9457
        %v9461 = vadd.f32 %v9240, %v9456
        %v9462 = vadd.f32 %v9253, %v9455
        %v9463 = vadd.f32 %v9266, %v9454
        %v9464 = vadd.f32 %v9279, %v9453
        %v9465 = vadd.f32 %v9292, %v9452
        %v9466 = vadd.f32 %v9305, %v9451
        %v9467 = vadd.f32 %v9318, %v9450
        %v9468 = vadd.f32 %v9331, %v9449
        %v9469 = vadd.f32 %v9344, %v9448
        %v9470 = vadd.f32 %v9357, %v9447
        %v9471 = vadd.f32 %v9370, %v9446
        %v9472 = vadd.f32 %v9383, %v9445
        %v9473 = vadd.f32 %v9396, %v9444
        %v9474 = vadd.f32 %v9409, %v9443
        %9475 = vrot.lane.b32.xlu0 %v9459, 64
        %v9476 = vpop.permute.xlu0 %9475
        %9477 = vrot.lane.b32.xlu0 %v9460, 64
        %v9478 = vpop.permute.xlu0 %9477
        %9479 = vrot.lane.b32.xlu0 %v9461, 64
        %v9480 = vpop.permute.xlu0 %9479
        %9481 = vrot.lane.b32.xlu0 %v9462, 64
        %v9482 = vpop.permute.xlu0 %9481
        %9483 = vrot.lane.b32.xlu0 %v9463, 64
        %v9484 = vpop.permute.xlu0 %9483
        %9485 = vrot.lane.b32.xlu0 %v9464, 64
        %v9486 = vpop.permute.xlu0 %9485
        %9487 = vrot.lane.b32.xlu0 %v9465, 64
        %v9488 = vpop.permute.xlu0 %9487
        %9489 = vrot.lane.b32.xlu0 %v9466, 64
        %v9490 = vpop.permute.xlu0 %9489
        %9491 = vrot.lane.b32.xlu0 %v9467, 64
        %v9492 = vpop.permute.xlu0 %9491
        %9493 = vrot.lane.b32.xlu0 %v9468, 64
        %v9494 = vpop.permute.xlu0 %9493
        %9495 = vrot.lane.b32.xlu0 %v9469, 64
        %v9496 = vpop.permute.xlu0 %9495
        %9497 = vrot.lane.b32.xlu0 %v9470, 64
        %v9498 = vpop.permute.xlu0 %9497
        %9499 = vrot.lane.b32.xlu0 %v9471, 64
        %v9500 = vpop.permute.xlu0 %9499
        %9501 = vrot.lane.b32.xlu0 %v9472, 64
        %v9502 = vpop.permute.xlu0 %9501
        %9503 = vrot.lane.b32.xlu0 %v9473, 64
        %v9504 = vpop.permute.xlu0 %9503
        %9505 = vrot.lane.b32.xlu0 %v9474, 64
        %v9506 = vpop.permute.xlu0 %9505
        %vm9507 = vcmp.lt.s32.totalorder %v8650, 64
        %v9508 = vsel %vm9507, %v9504, %v9506
        %v9509 = vsel %vm9507, %v9502, %v9504
        %v9510 = vsel %vm9507, %v9500, %v9502
        %v9511 = vsel %vm9507, %v9498, %v9500
        %v9512 = vsel %vm9507, %v9496, %v9498
        %v9513 = vsel %vm9507, %v9494, %v9496
        %v9514 = vsel %vm9507, %v9492, %v9494
        %v9515 = vsel %vm9507, %v9490, %v9492
        %v9516 = vsel %vm9507, %v9488, %v9490
        %v9517 = vsel %vm9507, %v9486, %v9488
        %v9518 = vsel %vm9507, %v9484, %v9486
        %v9519 = vsel %vm9507, %v9482, %v9484
        %v9520 = vsel %vm9507, %v9480, %v9482
        %v9521 = vsel %vm9507, %v9478, %v9480
        %v9522 = vsel %vm9507, %v9476, %v9478
        %v9523 = vsel %vm9507, %v9506, %v9476
        %v9524 = vadd.f32 %v9459, %v9523
        %v9525 = vadd.f32 %v9460, %v9522
        %v9526 = vadd.f32 %v9461, %v9521
        %v9527 = vadd.f32 %v9462, %v9520
        %v9528 = vadd.f32 %v9463, %v9519
        %v9529 = vadd.f32 %v9464, %v9518
        %v9530 = vadd.f32 %v9465, %v9517
        %v9531 = vadd.f32 %v9466, %v9516
        %v9532 = vadd.f32 %v9467, %v9515
        %v9533 = vadd.f32 %v9468, %v9514
        %v9534 = vadd.f32 %v9469, %v9513
        %v9535 = vadd.f32 %v9470, %v9512
        %v9536 = vadd.f32 %v9471, %v9511
        %v9537 = vadd.f32 %v9472, %v9510
        %v9538 = vadd.f32 %v9473, %v9509
        %v9539 = vadd.f32 %v9474, %v9508
        %v9540 = vadd.f32 %v9524, %v9539
        %v9541 = vadd.f32 %v9526, %v9525
        %v9542 = vadd.f32 %v9528, %v9527
        %v9543 = vadd.f32 %v9530, %v9529
        %v9544 = vadd.f32 %v9532, %v9531
        %v9545 = vadd.f32 %v9534, %v9533
        %v9546 = vadd.f32 %v9536, %v9535
        %v9547 = vadd.f32 %v9538, %v9537
        %v9548 = vadd.f32 %v9540, %v9547
        %v9549 = vadd.f32 %v9542, %v9541
        %v9550 = vadd.f32 %v9544, %v9543
        %v9551 = vadd.f32 %v9546, %v9545
        %v9552 = vadd.f32 %v9548, %v9551
        %v9553 = vadd.f32 %v9550, %v9549
        %v9554 = vadd.f32 %v9552, %v9553
        %v9555 = vld [vmem:[%s7] sm:$0x1]
        %v9556 = vadd.f32 %v9554, %v9555
        %vm9557 = vcmask 253952
        %9558 = vst.msk [vmem:[%s342] sm:$0x1] %vm9557, %v9556
        %s9559 = sand.u32 %s218, 1
        %s9560 = scalar_lea.sflag [#allocation3], %s9559
        %s9561 = sand.u32 %s218, 1
        %s9562 = scalar_lea.vmem [#allocation2], %s9561
        // Predicated region
        $region53: #{vision_core_forward.1} parent=51 // pred_check
          %p9563 = pneg %p228
        $region54: #{vision_core_forward.1} parent=51 // pred_check_branch
          %9565 = sbr.rel (%p9563) target = $region56
        $region55: #{vision_core_forward.1} parent=51 // pred_region
          %s9567 = ssub.s32 16, 16
          %9568 = vsyncadd %s9560, %s9567
          %s9569 = smul.addr %s22, 16
          %s9570 = scalar_lea.hbm %s8, %s9569
          %s9572 = sshll.u32 %s9562, 4
          %s9573 = int_to_ptr.vmem [resolvable:$true] %s9572
          %9575 = dma.vmem_to_hbm [thread:$0]  %s9573, 16, %s9570, %s9560
        $region56: #{vision_core_forward.1} parent=51 // pred_fallthru
          _
      $region52: #{vision_core_forward.1} parent=5 // pred_fallthru
        _
      %p9576 = scmp.le.s32.totalorder 2, %s17
      // Predicated region
      $region57: #{vision_core_forward.1} parent=5 // pred_check
        %p9577 = pneg %p9576
      $region58: #{vision_core_forward.1} parent=5 // pred_check_branch
        %9579 = sbr.rel (%p9577) target = $region60
      $region59: #{vision_core_forward.1} parent=5 // pred_region
        %s9580 = ssub.s32 %s17, 2
        // Predicated region
        $region61: #{vision_core_forward.1} parent=59 // pred_check
          %p9581 = pneg %p234
        $region62: #{vision_core_forward.1} parent=59 // pred_check_branch
          %9583 = sbr.rel (%p9581) target = $region64
        $region63: #{vision_core_forward.1} parent=59 // pred_region
          %s9584 = sand.u32 %s219, 1
          %s9585 = scalar_lea.sflag [#allocation3], %s9584
          %s9586 = sand.u32 %s219, 1
          %s9587 = scalar_lea.vmem [#allocation2], %s9586
          %9588 = dma.done %s9585, 16
        $region64: #{vision_core_forward.1} parent=59 // pred_fallthru
          _
      $region60: #{vision_core_forward.1} parent=5 // pred_fallthru
        _
    $region6: #{vision_core_forward.1} parent=1 // loop_footer
      %s21 = sadd.s32 1, %s17
    $region7: #{vision_core_forward.1} parent=1 // loop_footer_branch
      %16 = sbr.rel target = $region3
    $region8: #{vision_core_forward.1} parent=1 // loop_exit
      _
    %9589 = vsyncpa [#allocation3], 1
    %s9590 = scalar_lea.sflag [#allocation3], 1
    %9591 = vsyncpa %s9590, 1

</llo_original>
